<compile_context>
chip_gen: v5e
topology: v5e:2x2
jax: 0.10.0
libtpu: 0.0.40
codegen_flags: <defaults>
</compile_context>

<pallas_src>
import functools

import jax
import jax.numpy as jnp
from jax.experimental import pallas as pl
from jax.experimental.pallas import tpu as pltpu


# -----------------------------------------------------------------------------
# Model configuration (small, deterministic)
# -----------------------------------------------------------------------------
LOW_DIM = 16
MID_DIM = 32
HIGH_DIM = 64            # encoder.high_level_dim
TRANS_DIM = HIGH_DIM // 2
NUM_CLASSES = 4


# -----------------------------------------------------------------------------
# Small helpers used inside kernels (pure trace-time functions)
# -----------------------------------------------------------------------------
def _bf16_dot(a, w_ref):
    """MXU matmul with bf16 operands and f32 accumulation."""
    return jnp.dot(a.astype(jnp.bfloat16), w_ref[...].astype(jnp.bfloat16),
                   preferred_element_type=jnp.float32)


def _attend(q, k, v, scale):
    """softmax(q k^T * scale) v, all per-batch 2-D, f32 softmax, bf16 MXU operands."""
    s = jax.lax.dot_general(q.astype(jnp.bfloat16), k.astype(jnp.bfloat16),
                            dimension_numbers=(((1,), (1,)), ((), ())),
                            preferred_element_type=jnp.float32) * scale
    s = s - jnp.max(s, axis=-1, keepdims=True)
    e = jnp.exp(s)
    p = e * pl.reciprocal(jnp.sum(e, axis=-1, keepdims=True), approx=True)
    return jnp.dot(p.astype(jnp.bfloat16), v.astype(jnp.bfloat16),
                   preferred_element_type=jnp.float32)


# -----------------------------------------------------------------------------
# Pallas kernels
# -----------------------------------------------------------------------------
def _linear_kernel(x_ref, w_ref, b_ref, o_ref, *, relu):
    """(tm, K) x (K, N) + bias (+ ReLU)."""
    acc = _bf16_dot(x_ref[...], w_ref) + b_ref[...]
    if relu:
        acc = jnp.maximum(acc, 0.0)
    o_ref[...] = acc.astype(o_ref.dtype)


def _linear2_kernel(x_ref, w1_ref, b1_ref, w2_ref, b2_ref, o_ref,
                    *, relu1, relu2, residual):
    """Two chained matmuls fused in one launch; optional residual add of the
    first-stage output (encoder patch-embed + MLP block pattern)."""
    h = _bf16_dot(x_ref[...], w1_ref) + b1_ref[...]
    if relu1:
        h = jnp.maximum(h, 0.0)
    y = _bf16_dot(h, w2_ref) + b2_ref[...]
    if relu2:
        y = jnp.maximum(y, 0.0)
    if residual:
        y = h + y
    o_ref[...] = y.astype(o_ref.dtype)


def _conv3x3_kernel(*refs, relu):
    """3x3 conv as 9 accumulated (tm, C) x (C, Cout) matmuls; no im2col concat.

    refs = 9 shifted-tap inputs, weight (9, C, Cout), bias (1, Cout), output.
    """
    tap_refs = refs[:9]
    w_ref, b_ref, o_ref = refs[9], refs[10], refs[11]
    acc = jnp.dot(tap_refs[0][...].astype(jnp.bfloat16),
                  w_ref[0].astype(jnp.bfloat16),
                  preferred_element_type=jnp.float32)
    for t in range(1, 9):
        acc = acc + jnp.dot(tap_refs[t][...].astype(jnp.bfloat16),
                            w_ref[t].astype(jnp.bfloat16),
                            preferred_element_type=jnp.float32)
    acc = acc + b_ref[...]
    if relu:
        acc = jnp.maximum(acc, 0.0)
    o_ref[...] = acc.astype(o_ref.dtype)


def _ilc_ctx_kernel(x_ref, wq1, bq1, wq2, bq2,
                    wk1g, wk1x, bk1, wk2, bk2,
                    wvg, wvx, bv, wout, bout, o_ref, *, scale):
    """ImageLevelContext (minus the 3x3 bottleneck), one batch element per grid step.

    kv_in = concat([broadcast(global_avg(x)), x]) is never materialized: the K/V
    projection weights are split into a global half and a local half.
    """
    x = x_ref[0]                                        # (L, C) f32
    xg = jnp.mean(x, axis=0, keepdims=True)             # (1, C) global pool

    # q = relu(relu(x @ q1 + b) @ q2 + b)
    q = jnp.maximum(_bf16_dot(x, wq1) + bq1[...], 0.0)
    q = jnp.maximum(_bf16_dot(q, wq2) + bq2[...], 0.0)
    # k, v from [global | local] halves
    k = jnp.maximum(_bf16_dot(xg, wk1g) + _bf16_dot(x, wk1x) + bk1[...], 0.0)
    k = jnp.maximum(_bf16_dot(k, wk2) + bk2[...], 0.0)
    v = jnp.maximum(_bf16_dot(xg, wvg) + _bf16_dot(x, wvx) + bv[...], 0.0)

    ctx = _attend(q, k, v, scale)                        # (L, T)
    ctx = jnp.maximum(_bf16_dot(ctx, wout) + bout[...], 0.0)   # (L, C)
    o_ref[0] = ctx.astype(o_ref.dtype)


def _slc_ctx_kernel(x_ref, il_ref,
                    wds1, bds1, wds2, bds2,
                    wq1, bq1, wq2, bq2,
                    wk1, bk1, wk2, bk2,
                    wv, bv, wout, bout,
                    o_ref, *, num_classes, scale):
    """decoder_stage1 + SemanticLevelContext (minus 3x3 bottleneck), fused.

    One batch element per grid step: class logits, argmax one-hot, per-class
    masked softmax aggregation and the attention all stay in VMEM/vregs.
    """
    feats = x_ref[0]                                     # (L, C) high-level feats
    il = il_ref[0]                                       # (L, C) feat_il

    # ---- decoder_stage1: conv1x1(+BN folded)+ReLU, Dropout2d(eval)=id, conv1x1 ----
    h = jnp.maximum(_bf16_dot(feats, wds1) + bds1[...], 0.0)
    preds = _bf16_dot(h, wds2) + bds2[...]               # (L, K)

    # ---- one-hot of per-pixel argmax (first-max tie break, like jnp.argmax) ----
    mx = jnp.max(preds, axis=-1, keepdims=True)
    iota = jax.lax.broadcasted_iota(jnp.int32, preds.shape, 1).astype(jnp.float32)
    cand = jnp.where(preds >= mx, iota, float(num_classes))
    first = jnp.min(cand, axis=-1, keepdims=True)
    onehot = (iota == first).astype(jnp.float32)         # (L, K)

    # ---- per-class softmax over member pixels (all f32) ----
    masked = jnp.where(onehot > 0.0, preds, -1e9)
    m = jnp.max(masked, axis=0, keepdims=True)           # (1, K)
    e = jnp.exp(masked - m) * onehot
    ssum = jnp.maximum(jnp.sum(e, axis=0, keepdims=True), 1e-12)
    wgt = e / ssum                                       # (L, K)

    # feats_sl = onehot @ (wgt^T @ feats) == (onehot @ wgt^T) @ feats
    pixw = jax.lax.dot_general(onehot.astype(jnp.bfloat16), wgt.astype(jnp.bfloat16),
                               dimension_numbers=(((1,), (1,)), ((), ())),
                               preferred_element_type=jnp.float32)   # (L, L)
    feats_sl = jnp.dot(pixw.astype(jnp.bfloat16), feats.astype(jnp.bfloat16),
                       preferred_element_type=jnp.float32)           # (L, C)

    # ---- self-attention: q from feat_il, k/v from class-aggregated feats ----
    q = jnp.maximum(_bf16_dot(il, wq1) + bq1[...], 0.0)
    q = jnp.maximum(_bf16_dot(q, wq2) + bq2[...], 0.0)
    k = jnp.maximum(_bf16_dot(feats_sl, wk1) + bk1[...], 0.0)
    k = jnp.maximum(_bf16_dot(k, wk2) + bk2[...], 0.0)
    v = jnp.maximum(_bf16_dot(feats_sl, wv) + bv[...], 0.0)

    ctx = _attend(q, k, v, scale)                         # (L, T)
    ctx = jnp.maximum(_bf16_dot(ctx, wout) + bout[...], 0.0)  # (L, C)
    o_ref[0] = ctx.astype(o_ref.dtype)


# -----------------------------------------------------------------------------
# Wrappers (tiling, padding, BlockSpecs)
# -----------------------------------------------------------------------------
def _tile_m(M):
    """Right-size the row tile: full block when small, 128-row tiles (>=2 blocks,
    good for v7x dual-TC) when M is large."""
    if M > 128:
        return 128
    if M == 128:
        return 64
    return M


def _pad_rows(x, tm):
    M = x.shape[0]
    mp = pl.cdiv(M, tm) * tm
    if mp != M:
        x = jnp.pad(x, ((0, mp - M), (0, 0)))
    return x, mp


def _b(wb):
    return wb[1].reshape(1, -1)


def pallas_linear(x, wb, relu=False):
    """x: (M, K) @ w + b, optional ReLU.  Grid over right-sized M tiles."""
    w, b = wb
    M, K = x.shape
    N = w.shape[1]
    tm = _tile_m(M)
    xp, mp = _pad_rows(x, tm)
    out = pl.pallas_call(
        functools.partial(_linear_kernel, relu=relu),
        out_shape=jax.ShapeDtypeStruct((mp, N), jnp.float32),
        grid=(mp // tm,),
        in_specs=[pl.BlockSpec((tm, K), lambda i: (i, 0)),
                  pl.BlockSpec((K, N), lambda i: (0, 0)),
                  pl.BlockSpec((1, N), lambda i: (0, 0))],
        out_specs=pl.BlockSpec((tm, N), lambda i: (i, 0)),
        compiler_params=pltpu.CompilerParams(dimension_semantics=("parallel",)),
    )(xp, w, b.reshape(1, N))
    return out[:M] if mp != M else out


def pallas_linear2(x, wb1, wb2, *, relu1, relu2, residual):
    """Fused x@w1+b1 (opt ReLU) -> @w2+b2 (opt ReLU) (+ optional residual of stage-1)."""
    w1, b1 = wb1
    w2, b2 = wb2
    M, K = x.shape
    Nmid = w1.shape[1]
    Nout = w2.shape[1]
    tm = _tile_m(M)
    xp, mp = _pad_rows(x, tm)
    out = pl.pallas_call(
        functools.partial(_linear2_kernel, relu1=relu1, relu2=relu2,
                          residual=residual),
        out_shape=jax.ShapeDtypeStruct((mp, Nout), jnp.float32),
        grid=(mp // tm,),
        in_specs=[pl.BlockSpec((tm, K), lambda i: (i, 0)),
                  pl.BlockSpec((K, Nmid), lambda i: (0, 0)),
                  pl.BlockSpec((1, Nmid), lambda i: (0, 0)),
                  pl.BlockSpec((Nmid, Nout), lambda i: (0, 0)),
                  pl.BlockSpec((1, Nout), lambda i: (0, 0))],
        out_specs=pl.BlockSpec((tm, Nout), lambda i: (i, 0)),
        compiler_params=pltpu.CompilerParams(dimension_semantics=("parallel",)),
    )(xp, w1, b1.reshape(1, Nmid), w2, b2.reshape(1, Nout))
    return out[:M] if mp != M else out


def conv1x1(x, wb, relu=False):
    N, H, W, C = x.shape
    out = pallas_linear(x.reshape(-1, C), wb, relu=relu)
    return out.reshape(N, H, W, wb[0].shape[1])


def conv3x3(x, wb, relu=True):
    """3x3 same-padding conv: 9 shifted views + one accumulating Pallas kernel."""
    w, b = wb                                       # w: (9*C, Cout)
    N, H, W, C = x.shape
    Cout = w.shape[1]
    w9 = w.reshape(9, C, Cout)
    xp = jnp.pad(x, ((0, 0), (1, 1), (1, 1), (0, 0)))
    taps = [xp[:, dy:dy + H, dx:dx + W, :].reshape(-1, C)
            for dy in range(3) for dx in range(3)]
    M = N * H * W
    tm = _tile_m(M)
    mp = pl.cdiv(M, tm) * tm
    if mp != M:
        taps = [jnp.pad(t, ((0, mp - M), (0, 0))) for t in taps]
    out = pl.pallas_call(
        functools.partial(_conv3x3_kernel, relu=relu),
        out_shape=jax.ShapeDtypeStruct((mp, Cout), jnp.float32),
        grid=(mp // tm,),
        in_specs=([pl.BlockSpec((tm, C), lambda i: (i, 0)) for _ in range(9)]
                  + [pl.BlockSpec((9, C, Cout), lambda i: (0, 0, 0)),
                     pl.BlockSpec((1, Cout), lambda i: (0, 0))]),
        out_specs=pl.BlockSpec((tm, Cout), lambda i: (i, 0)),
        compiler_params=pltpu.CompilerParams(dimension_semantics=("parallel",)),
    )(*taps, w9, b.reshape(1, Cout))
    out = out[:M] if mp != M else out
    return out.reshape(N, H, W, Cout)


def patchify(x, p):
    N, H, W, C = x.shape
    x = x.reshape(N, H // p, p, W // p, p, C)
    x = x.transpose(0, 1, 3, 2, 4, 5).reshape(N, H // p, W // p, p * p * C)
    return x


def upsample_nearest(x, factor):
    x = jnp.repeat(x, factor, axis=1)
    x = jnp.repeat(x, factor, axis=2)
    return x


# -----------------------------------------------------------------------------
# Parameters
# -----------------------------------------------------------------------------
def _dense(key, cin, cout, scale=0.05):
    kw, kb = jax.random.split(key)
    w = scale * jax.random.normal(kw, (cin, cout), jnp.float32)
    b = 0.01 * jax.random.normal(kb, (cout,), jnp.float32)
    return (w, b)


def init_params(key):
    names_shapes = [
        # synthetic Swin-style encoder (patch-merge + residual MLP stages)
        ("enc1_pe", 4 * 4 * 3, LOW_DIM), ("enc1_blk", LOW_DIM, LOW_DIM),
        ("enc2_pe", 4 * LOW_DIM, MID_DIM), ("enc2_blk", MID_DIM, MID_DIM),
        ("enc3_pe", 4 * MID_DIM, HIGH_DIM), ("enc3_blk", HIGH_DIM, HIGH_DIM),
        # ImageLevelContext (conv+BN folded); k1/v weights split [global|local]
        ("ilc_q1", HIGH_DIM, TRANS_DIM), ("ilc_q2", TRANS_DIM, TRANS_DIM),
        ("ilc_k1g", HIGH_DIM, TRANS_DIM), ("ilc_k1x", HIGH_DIM, TRANS_DIM),
        ("ilc_k2", TRANS_DIM, TRANS_DIM),
        ("ilc_vg", HIGH_DIM, TRANS_DIM), ("ilc_vx", HIGH_DIM, TRANS_DIM),
        ("ilc_out", TRANS_DIM, HIGH_DIM),
        ("ilc_bot", 9 * 2 * HIGH_DIM, HIGH_DIM),
        # decoder_stage1 (fused into the SLC kernel)
        ("ds1_1", HIGH_DIM, HIGH_DIM), ("ds1_2", HIGH_DIM, NUM_CLASSES),
        # SemanticLevelContext
        ("slc_q1", HIGH_DIM, TRANS_DIM), ("slc_q2", TRANS_DIM, TRANS_DIM),
        ("slc_k1", HIGH_DIM, TRANS_DIM), ("slc_k2", TRANS_DIM, TRANS_DIM),
        ("slc_v", HIGH_DIM, TRANS_DIM),
        ("slc_out", TRANS_DIM, HIGH_DIM),
        ("slc_bot", 9 * 2 * HIGH_DIM, LOW_DIM),     # output_dim = low_level_dim
        # decoder (simplified Swin decoder stand-in)
        ("dec1", HIGH_DIM + LOW_DIM, MID_DIM),
        ("dec2", 2 * MID_DIM, MID_DIM),
        ("dec3", MID_DIM + LOW_DIM, LOW_DIM),
        ("dec_out", LOW_DIM, NUM_CLASSES),
    ]
    keys = jax.random.split(key, len(names_shapes))
    return {name: _dense(k, cin, cout)
            for k, (name, cin, cout) in zip(keys, names_shapes)}


# -----------------------------------------------------------------------------
# Sub-modules
# -----------------------------------------------------------------------------
def _enc_stage(x_patch, pe_wb, blk_wb):
    """patch-embed (no ReLU) + residual MLP block, fused into one kernel."""
    N, H, W, C = x_patch.shape
    out = pallas_linear2(x_patch.reshape(-1, C), pe_wb, blk_wb,
                         relu1=False, relu2=True, residual=True)
    return out.reshape(N, H, W, pe_wb[0].shape[1])


def encoder(params, x_nhwc):
    """Returns (low_level, middle_level, high_level), all NHWC."""
    t = patchify(x_nhwc, 4)                                         # (N,16,16,48)
    low = _enc_stage(t, params["enc1_pe"], params["enc1_blk"])      # (N,16,16,16)
    t = patchify(low, 2)                                            # (N,8,8,64)
    mid = _enc_stage(t, params["enc2_pe"], params["enc2_blk"])      # (N,8,8,32)
    t = patchify(mid, 2)                                            # (N,4,4,128)
    high = _enc_stage(t, params["enc3_pe"], params["enc3_blk"])     # (N,4,4,64)
    return low, mid, high


def image_level_context(params, high):
    """high: (N,H,W,HIGH_DIM) -> feat_il (N,H,W,HIGH_DIM)."""
    N, H, W, C = high.shape
    L = H * W
    scale = float(TRANS_DIM) ** -0.5
    x = high.reshape(N, L, C)
    weight_args = [
        params["ilc_q1"][0], _b(params["ilc_q1"]),
        params["ilc_q2"][0], _b(params["ilc_q2"]),
        params["ilc_k1g"][0], params["ilc_k1x"][0], _b(params["ilc_k1x"]),
        params["ilc_k2"][0], _b(params["ilc_k2"]),
        params["ilc_vg"][0], params["ilc_vx"][0], _b(params["ilc_vx"]),
        params["ilc_out"][0], _b(params["ilc_out"]),
    ]
    in_specs = ([pl.BlockSpec((1, L, C), lambda b: (b, 0, 0))]
                + [pl.BlockSpec(w.shape, lambda b: (0, 0)) for w in weight_args])
    ctx = pl.pallas_call(
        functools.partial(_ilc_ctx_kernel, scale=scale),
        out_shape=jax.ShapeDtypeStruct((N, L, C), jnp.float32),
        grid=(N,),
        in_specs=in_specs,
        out_specs=pl.BlockSpec((1, L, C), lambda b: (b, 0, 0)),
        compiler_params=pltpu.CompilerParams(dimension_semantics=("parallel",)),
    )(x, *weight_args)
    ctx = ctx.reshape(N, H, W, C)
    # 3x3 bottleneck over concat([x, ctx])
    return conv3x3(jnp.concatenate([high, ctx], axis=-1), params["ilc_bot"],
                   relu=True)


def semantic_level_context(params, high, feat_il):
    """decoder_stage1 + SLC fused (pred is consumed only here, matching the
    reference forward), then the 3x3 bottleneck.  Output dim = LOW_DIM."""
    N, H, W, C = high.shape
    L = H * W
    scale = float(TRANS_DIM) ** -0.5
    x = high.reshape(N, L, C)
    il = feat_il.reshape(N, L, C)
    weight_args = [
        params["ds1_1"][0], _b(params["ds1_1"]),
        params["ds1_2"][0], _b(params["ds1_2"]),
        params["slc_q1"][0], _b(params["slc_q1"]),
        params["slc_q2"][0], _b(params["slc_q2"]),
        params["slc_k1"][0], _b(params["slc_k1"]),
        params["slc_k2"][0], _b(params["slc_k2"]),
        params["slc_v"][0], _b(params["slc_v"]),
        params["slc_out"][0], _b(params["slc_out"]),
    ]
    in_specs = ([pl.BlockSpec((1, L, C), lambda b: (b, 0, 0)),
                 pl.BlockSpec((1, L, C), lambda b: (b, 0, 0))]
                + [pl.BlockSpec(w.shape, lambda b: (0, 0)) for w in weight_args])
    ctx = pl.pallas_call(
        functools.partial(_slc_ctx_kernel, num_classes=NUM_CLASSES, scale=scale),
        out_shape=jax.ShapeDtypeStruct((N, L, C), jnp.float32),
        grid=(N,),
        in_specs=in_specs,
        out_specs=pl.BlockSpec((1, L, C), lambda b: (b, 0, 0)),
        compiler_params=pltpu.CompilerParams(dimension_semantics=("parallel",)),
    )(x, il, *weight_args)
    ctx = ctx.reshape(N, H, W, C)
    return conv3x3(jnp.concatenate([feat_il, ctx], axis=-1), params["slc_bot"],
                   relu=True)                                       # (N,H,W,LOW_DIM)


def decoder(params, low, mid, high, aspp):
    N = high.shape[0]
    t = jnp.concatenate([high, aspp], axis=-1)              # (N,4,4,80)
    t = conv1x1(t, params["dec1"], relu=True)                # -> 32
    t = upsample_nearest(t, 2)                               # (N,8,8,32)
    t = jnp.concatenate([t, mid], axis=-1)                   # 64
    t = conv1x1(t, params["dec2"], relu=True)                # -> 32
    t = upsample_nearest(t, 2)                               # (N,16,16,32)
    t = jnp.concatenate([t, low], axis=-1)                   # 48
    Hc, Wc, Cc = t.shape[1], t.shape[2], t.shape[3]
    # dec3 + dec_out fused into one kernel
    logits = pallas_linear2(t.reshape(-1, Cc), params["dec3"], params["dec_out"],
                            relu1=True, relu2=False, residual=False)
    logits = logits.reshape(N, Hc, Wc, NUM_CLASSES)
    return upsample_nearest(logits, 4)                       # (N,64,64,NUM_CLASSES)


# -----------------------------------------------------------------------------
# Full forward
# -----------------------------------------------------------------------------
def swin_deeplab_forward(params, x_nchw):
    """x_nchw: (N, 3, 64, 64) float32 -> segmentation logits (N, 64, 64, NUM_CLASSES)."""
    x = jnp.transpose(x_nchw, (0, 2, 3, 1)).astype(jnp.float32)   # NCHW -> NHWC

    low, mid, high = encoder(params, x)
    feat_il = image_level_context(params, high)
    # decoder_stage1 (pred) is computed inside the fused SLC kernel — in the
    # reference forward, pred only feeds slc_net.
    feat_sl = semantic_level_context(params, high, feat_il)
    out = decoder(params, low, mid, high, aspp=feat_sl)
    return out


if __name__ == "__main__":
    key = jax.random.PRNGKey(0)
    pkey, xkey = jax.random.split(key)
    params = init_params(pkey)
    x = jax.random.normal(xkey, (2, 3, 64, 64), jnp.float32)

    fwd = jax.jit(functools.partial(swin_deeplab_forward, params))
    out = fwd(x)
    jax.block_until_ready(out)
    assert out.shape == (2, 64, 64, NUM_CLASSES)
    assert jnp.all(jnp.isfinite(out))
    print("KERNEL_OK")
</pallas_src>

<mosaic_0001>
module attributes {stable_mosaic.version = 11 : i64} {
  func.func @_linear2_kernel(%arg0: i32, %arg1: memref<128x48xf32, #tpu.memory_space<vmem>>, %arg2: memref<48x16xf32, #tpu.memory_space<vmem>>, %arg3: memref<1x16xf32, #tpu.memory_space<vmem>>, %arg4: memref<16x16xf32, #tpu.memory_space<vmem>>, %arg5: memref<1x16xf32, #tpu.memory_space<vmem>>, %arg6: memref<128x16xf32, #tpu.memory_space<vmem>>) attributes {dimension_semantics = [#tpu.dimension_semantics<parallel>], iteration_bounds = array<i64: 4>, scalar_prefetch = 0 : i64, scratch_operands = 0 : i64, tpu.core_type = #tpu.core_type<tc>, window_params = [{transform_indices = @transform_0, window_bounds = array<i64: 128, 48>}, {pipeline_mode = #tpu.pipeline_mode<synchronous>, transform_indices = @transform_1, window_bounds = array<i64: 48, 16>}, {pipeline_mode = #tpu.pipeline_mode<synchronous>, transform_indices = @transform_2, window_bounds = array<i64: 1, 16>}, {pipeline_mode = #tpu.pipeline_mode<synchronous>, transform_indices = @transform_3, window_bounds = array<i64: 16, 16>}, {pipeline_mode = #tpu.pipeline_mode<synchronous>, transform_indices = @transform_4, window_bounds = array<i64: 1, 16>}, {transform_indices = @transform_5, window_bounds = array<i64: 128, 16>}]} {
    %c0 = arith.constant 0 : index
    %c0_0 = arith.constant 0 : index
    %0 = vector.load %arg1[%c0, %c0_0] : memref<128x48xf32, #tpu.memory_space<vmem>>, vector<128x48xf32>
    %1 = arith.truncf %0 : vector<128x48xf32> to vector<128x48xbf16>
    %c0_1 = arith.constant 0 : index
    %c0_2 = arith.constant 0 : index
    %2 = vector.load %arg2[%c0_1, %c0_2] : memref<48x16xf32, #tpu.memory_space<vmem>>, vector<48x16xf32>
    %3 = arith.truncf %2 : vector<48x16xf32> to vector<48x16xbf16>
    %cst = arith.constant dense<0.000000e+00> : vector<128x16xf32>
    %4 = tpu.matmul %1, %3, %cst {dimension_numbers = #tpu.dot_dimension_numbers<[1], [0], [0], [1], [0, 0, 1, 1], [], []>} : vector<128x48xbf16>, vector<48x16xbf16>, vector<128x16xf32> -> vector<128x16xf32>
    %c0_3 = arith.constant 0 : index
    %c0_4 = arith.constant 0 : index
    %5 = vector.load %arg3[%c0_3, %c0_4] : memref<1x16xf32, #tpu.memory_space<vmem>>, vector<1x16xf32>
    %6 = vector.broadcast %5 : vector<1x16xf32> to vector<128x16xf32>
    %7 = arith.addf %4, %6 : vector<128x16xf32>
    %8 = arith.truncf %7 : vector<128x16xf32> to vector<128x16xbf16>
    %c0_5 = arith.constant 0 : index
    %c0_6 = arith.constant 0 : index
    %9 = vector.load %arg4[%c0_5, %c0_6] : memref<16x16xf32, #tpu.memory_space<vmem>>, vector<16x16xf32>
    %10 = arith.truncf %9 : vector<16x16xf32> to vector<16x16xbf16>
    %cst_7 = arith.constant dense<0.000000e+00> : vector<128x16xf32>
    %11 = tpu.matmul %8, %10, %cst_7 {dimension_numbers = #tpu.dot_dimension_numbers<[1], [0], [0], [1], [0, 0, 1, 1], [], []>} : vector<128x16xbf16>, vector<16x16xbf16>, vector<128x16xf32> -> vector<128x16xf32>
    %c0_8 = arith.constant 0 : index
    %c0_9 = arith.constant 0 : index
    %12 = vector.load %arg5[%c0_8, %c0_9] : memref<1x16xf32, #tpu.memory_space<vmem>>, vector<1x16xf32>
    %13 = vector.broadcast %12 : vector<1x16xf32> to vector<128x16xf32>
    %14 = arith.addf %11, %13 : vector<128x16xf32>
    %cst_10 = arith.constant 0.000000e+00 : f32
    %15 = vector.broadcast %cst_10 : f32 to vector<128x16xf32>
    %16 = arith.maximumf %14, %15 : vector<128x16xf32>
    %17 = arith.addf %7, %16 : vector<128x16xf32>
    %c0_11 = arith.constant 0 : index
    %c0_12 = arith.constant 0 : index
    %18 = vector.load %arg6[%c0_11, %c0_12] : memref<128x16xf32, #tpu.memory_space<vmem>>, vector<128x16xf32>
    tpu.vector_store %arg6[%c0_11, %c0_12], %17 {strides = array<i32>} : memref<128x16xf32, #tpu.memory_space<vmem>>, vector<128x16xf32>,
    return
  }
  func.func @transform_0(%arg0: i32) -> (i32, i32) {
    %c0_i32 = arith.constant 0 : i32
    %c0_i32_0 = arith.constant 0 : i32
    return %arg0, %c0_i32 : i32, i32
  }
  func.func @transform_1(%arg0: i32) -> (i32, i32) {
    %c0_i32 = arith.constant 0 : i32
    %c0_i32_0 = arith.constant 0 : i32
    %c0_i32_1 = arith.constant 0 : i32
    return %c0_i32, %c0_i32_0 : i32, i32
  }
  func.func @transform_2(%arg0: i32) -> (i32, i32) {
    %c0_i32 = arith.constant 0 : i32
    %c0_i32_0 = arith.constant 0 : i32
    %c0_i32_1 = arith.constant 0 : i32
    return %c0_i32, %c0_i32_0 : i32, i32
  }
  func.func @transform_3(%arg0: i32) -> (i32, i32) {
    %c0_i32 = arith.constant 0 : i32
    %c0_i32_0 = arith.constant 0 : i32
    %c0_i32_1 = arith.constant 0 : i32
    return %c0_i32, %c0_i32_0 : i32, i32
  }
  func.func @transform_4(%arg0: i32) -> (i32, i32) {
    %c0_i32 = arith.constant 0 : i32
    %c0_i32_0 = arith.constant 0 : i32
    %c0_i32_1 = arith.constant 0 : i32
    return %c0_i32, %c0_i32_0 : i32, i32
  }
  func.func @transform_5(%arg0: i32) -> (i32, i32) {
    %c0_i32 = arith.constant 0 : i32
    %c0_i32_0 = arith.constant 0 : i32
    return %arg0, %c0_i32 : i32, i32
  }
}

module attributes {stable_mosaic.version = 11 : i64} {
  func.func @_linear2_kernel(%arg0: i32, %arg1: memref<64x64xf32, #tpu.memory_space<vmem>>, %arg2: memref<64x32xf32, #tpu.memory_space<vmem>>, %arg3: memref<1x32xf32, #tpu.memory_space<vmem>>, %arg4: memref<32x32xf32, #tpu.memory_space<vmem>>, %arg5: memref<1x32xf32, #tpu.memory_space<vmem>>, %arg6: memref<64x32xf32, #tpu.memory_space<vmem>>) attributes {dimension_semantics = [#tpu.dimension_semantics<parallel>], iteration_bounds = array<i64: 2>, scalar_prefetch = 0 : i64, scratch_operands = 0 : i64, tpu.core_type = #tpu.core_type<tc>, window_params = [{transform_indices = @transform_0, window_bounds = array<i64: 64, 64>}, {pipeline_mode = #tpu.pipeline_mode<synchronous>, transform_indices = @transform_1, window_bounds = array<i64: 64, 32>}, {pipeline_mode = #tpu.pipeline_mode<synchronous>, transform_indices = @transform_2, window_bounds = array<i64: 1, 32>}, {pipeline_mode = #tpu.pipeline_mode<synchronous>, transform_indices = @transform_3, window_bounds = array<i64: 32, 32>}, {pipeline_mode = #tpu.pipeline_mode<synchronous>, transform_indices = @transform_4, window_bounds = array<i64: 1, 32>}, {transform_indices = @transform_5, window_bounds = array<i64: 64, 32>}]} {
    %c0 = arith.constant 0 : index
    %c0_0 = arith.constant 0 : index
    %0 = vector.load %arg1[%c0, %c0_0] : memref<64x64xf32, #tpu.memory_space<vmem>>, vector<64x64xf32>
    %1 = arith.truncf %0 : vector<64x64xf32> to vector<64x64xbf16>
    %c0_1 = arith.constant 0 : index
    %c0_2 = arith.constant 0 : index
    %2 = vector.load %arg2[%c0_1, %c0_2] : memref<64x32xf32, #tpu.memory_space<vmem>>, vector<64x32xf32>
    %3 = arith.truncf %2 : vector<64x32xf32> to vector<64x32xbf16>
    %cst = arith.constant dense<0.000000e+00> : vector<64x32xf32>
    %4 = tpu.matmul %1, %3, %cst {dimension_numbers = #tpu.dot_dimension_numbers<[1], [0], [0], [1], [0, 0, 1, 1], [], []>} : vector<64x64xbf16>, vector<64x32xbf16>, vector<64x32xf32> -> vector<64x32xf32>
    %c0_3 = arith.constant 0 : index
    %c0_4 = arith.constant 0 : index
    %5 = vector.load %arg3[%c0_3, %c0_4] : memref<1x32xf32, #tpu.memory_space<vmem>>, vector<1x32xf32>
    %6 = vector.broadcast %5 : vector<1x32xf32> to vector<64x32xf32>
    %7 = arith.addf %4, %6 : vector<64x32xf32>
    %8 = arith.truncf %7 : vector<64x32xf32> to vector<64x32xbf16>
    %c0_5 = arith.constant 0 : index
    %c0_6 = arith.constant 0 : index
    %9 = vector.load %arg4[%c0_5, %c0_6] : memref<32x32xf32, #tpu.memory_space<vmem>>, vector<32x32xf32>
    %10 = arith.truncf %9 : vector<32x32xf32> to vector<32x32xbf16>
    %cst_7 = arith.constant dense<0.000000e+00> : vector<64x32xf32>
    %11 = tpu.matmul %8, %10, %cst_7 {dimension_numbers = #tpu.dot_dimension_numbers<[1], [0], [0], [1], [0, 0, 1, 1], [], []>} : vector<64x32xbf16>, vector<32x32xbf16>, vector<64x32xf32> -> vector<64x32xf32>
    %c0_8 = arith.constant 0 : index
    %c0_9 = arith.constant 0 : index
    %12 = vector.load %arg5[%c0_8, %c0_9] : memref<1x32xf32, #tpu.memory_space<vmem>>, vector<1x32xf32>
    %13 = vector.broadcast %12 : vector<1x32xf32> to vector<64x32xf32>
    %14 = arith.addf %11, %13 : vector<64x32xf32>
    %cst_10 = arith.constant 0.000000e+00 : f32
    %15 = vector.broadcast %cst_10 : f32 to vector<64x32xf32>
    %16 = arith.maximumf %14, %15 : vector<64x32xf32>
    %17 = arith.addf %7, %16 : vector<64x32xf32>
    %c0_11 = arith.constant 0 : index
    %c0_12 = arith.constant 0 : index
    %18 = vector.load %arg6[%c0_11, %c0_12] : memref<64x32xf32, #tpu.memory_space<vmem>>, vector<64x32xf32>
    tpu.vector_store %arg6[%c0_11, %c0_12], %17 {strides = array<i32>} : memref<64x32xf32, #tpu.memory_space<vmem>>, vector<64x32xf32>,
    return
  }
  func.func @transform_0(%arg0: i32) -> (i32, i32) {
    %c0_i32 = arith.constant 0 : i32
    %c0_i32_0 = arith.constant 0 : i32
    return %arg0, %c0_i32 : i32, i32
  }
  func.func @transform_1(%arg0: i32) -> (i32, i32) {
    %c0_i32 = arith.constant 0 : i32
    %c0_i32_0 = arith.constant 0 : i32
    %c0_i32_1 = arith.constant 0 : i32
    return %c0_i32, %c0_i32_0 : i32, i32
  }
  func.func @transform_2(%arg0: i32) -> (i32, i32) {
    %c0_i32 = arith.constant 0 : i32
    %c0_i32_0 = arith.constant 0 : i32
    %c0_i32_1 = arith.constant 0 : i32
    return %c0_i32, %c0_i32_0 : i32, i32
  }
  func.func @transform_3(%arg0: i32) -> (i32, i32) {
    %c0_i32 = arith.constant 0 : i32
    %c0_i32_0 = arith.constant 0 : i32
    %c0_i32_1 = arith.constant 0 : i32
    return %c0_i32, %c0_i32_0 : i32, i32
  }
  func.func @transform_4(%arg0: i32) -> (i32, i32) {
    %c0_i32 = arith.constant 0 : i32
    %c0_i32_0 = arith.constant 0 : i32
    %c0_i32_1 = arith.constant 0 : i32
    return %c0_i32, %c0_i32_0 : i32, i32
  }
  func.func @transform_5(%arg0: i32) -> (i32, i32) {
    %c0_i32 = arith.constant 0 : i32
    %c0_i32_0 = arith.constant 0 : i32
    return %arg0, %c0_i32 : i32, i32
  }
}

module attributes {stable_mosaic.version = 11 : i64} {
  func.func @_linear2_kernel(%arg0: i32, %arg1: memref<32x128xf32, #tpu.memory_space<vmem>>, %arg2: memref<128x64xf32, #tpu.memory_space<vmem>>, %arg3: memref<1x64xf32, #tpu.memory_space<vmem>>, %arg4: memref<64x64xf32, #tpu.memory_space<vmem>>, %arg5: memref<1x64xf32, #tpu.memory_space<vmem>>, %arg6: memref<32x64xf32, #tpu.memory_space<vmem>>) attributes {dimension_semantics = [#tpu.dimension_semantics<parallel>], iteration_bounds = array<i64: 1>, scalar_prefetch = 0 : i64, scratch_operands = 0 : i64, tpu.core_type = #tpu.core_type<tc>, window_params = [{transform_indices = @transform_0, window_bounds = array<i64: 32, 128>}, {pipeline_mode = #tpu.pipeline_mode<synchronous>, transform_indices = @transform_1, window_bounds = array<i64: 128, 64>}, {pipeline_mode = #tpu.pipeline_mode<synchronous>, transform_indices = @transform_2, window_bounds = array<i64: 1, 64>}, {pipeline_mode = #tpu.pipeline_mode<synchronous>, transform_indices = @transform_3, window_bounds = array<i64: 64, 64>}, {pipeline_mode = #tpu.pipeline_mode<synchronous>, transform_indices = @transform_4, window_bounds = array<i64: 1, 64>}, {transform_indices = @transform_5, window_bounds = array<i64: 32, 64>}]} {
    %c0 = arith.constant 0 : index
    %c0_0 = arith.constant 0 : index
    %0 = vector.load %arg1[%c0, %c0_0] : memref<32x128xf32, #tpu.memory_space<vmem>>, vector<32x128xf32>
    %1 = arith.truncf %0 : vector<32x128xf32> to vector<32x128xbf16>
    %c0_1 = arith.constant 0 : index
    %c0_2 = arith.constant 0 : index
    %2 = vector.load %arg2[%c0_1, %c0_2] : memref<128x64xf32, #tpu.memory_space<vmem>>, vector<128x64xf32>
    %3 = arith.truncf %2 : vector<128x64xf32> to vector<128x64xbf16>
    %cst = arith.constant dense<0.000000e+00> : vector<32x64xf32>
    %4 = tpu.matmul %1, %3, %cst {dimension_numbers = #tpu.dot_dimension_numbers<[1], [0], [0], [1], [0, 0, 1, 1], [], []>} : vector<32x128xbf16>, vector<128x64xbf16>, vector<32x64xf32> -> vector<32x64xf32>
    %c0_3 = arith.constant 0 : index
    %c0_4 = arith.constant 0 : index
    %5 = vector.load %arg3[%c0_3, %c0_4] : memref<1x64xf32, #tpu.memory_space<vmem>>, vector<1x64xf32>
    %6 = vector.broadcast %5 : vector<1x64xf32> to vector<32x64xf32>
    %7 = arith.addf %4, %6 : vector<32x64xf32>
    %8 = arith.truncf %7 : vector<32x64xf32> to vector<32x64xbf16>
    %c0_5 = arith.constant 0 : index
    %c0_6 = arith.constant 0 : index
    %9 = vector.load %arg4[%c0_5, %c0_6] : memref<64x64xf32, #tpu.memory_space<vmem>>, vector<64x64xf32>
    %10 = arith.truncf %9 : vector<64x64xf32> to vector<64x64xbf16>
    %cst_7 = arith.constant dense<0.000000e+00> : vector<32x64xf32>
    %11 = tpu.matmul %8, %10, %cst_7 {dimension_numbers = #tpu.dot_dimension_numbers<[1], [0], [0], [1], [0, 0, 1, 1], [], []>} : vector<32x64xbf16>, vector<64x64xbf16>, vector<32x64xf32> -> vector<32x64xf32>
    %c0_8 = arith.constant 0 : index
    %c0_9 = arith.constant 0 : index
    %12 = vector.load %arg5[%c0_8, %c0_9] : memref<1x64xf32, #tpu.memory_space<vmem>>, vector<1x64xf32>
    %13 = vector.broadcast %12 : vector<1x64xf32> to vector<32x64xf32>
    %14 = arith.addf %11, %13 : vector<32x64xf32>
    %cst_10 = arith.constant 0.000000e+00 : f32
    %15 = vector.broadcast %cst_10 : f32 to vector<32x64xf32>
    %16 = arith.maximumf %14, %15 : vector<32x64xf32>
    %17 = arith.addf %7, %16 : vector<32x64xf32>
    %c0_11 = arith.constant 0 : index
    %c0_12 = arith.constant 0 : index
    %18 = vector.load %arg6[%c0_11, %c0_12] : memref<32x64xf32, #tpu.memory_space<vmem>>, vector<32x64xf32>
    tpu.vector_store %arg6[%c0_11, %c0_12], %17 {strides = array<i32>} : memref<32x64xf32, #tpu.memory_space<vmem>>, vector<32x64xf32>,
    return
  }
  func.func @transform_0(%arg0: i32) -> (i32, i32) {
    %c0_i32 = arith.constant 0 : i32
    %c0_i32_0 = arith.constant 0 : i32
    return %arg0, %c0_i32 : i32, i32
  }
  func.func @transform_1(%arg0: i32) -> (i32, i32) {
    %c0_i32 = arith.constant 0 : i32
    %c0_i32_0 = arith.constant 0 : i32
    %c0_i32_1 = arith.constant 0 : i32
    return %c0_i32, %c0_i32_0 : i32, i32
  }
  func.func @transform_2(%arg0: i32) -> (i32, i32) {
    %c0_i32 = arith.constant 0 : i32
    %c0_i32_0 = arith.constant 0 : i32
    %c0_i32_1 = arith.constant 0 : i32
    return %c0_i32, %c0_i32_0 : i32, i32
  }
  func.func @transform_3(%arg0: i32) -> (i32, i32) {
    %c0_i32 = arith.constant 0 : i32
    %c0_i32_0 = arith.constant 0 : i32
    %c0_i32_1 = arith.constant 0 : i32
    return %c0_i32, %c0_i32_0 : i32, i32
  }
  func.func @transform_4(%arg0: i32) -> (i32, i32) {
    %c0_i32 = arith.constant 0 : i32
    %c0_i32_0 = arith.constant 0 : i32
    %c0_i32_1 = arith.constant 0 : i32
    return %c0_i32, %c0_i32_0 : i32, i32
  }
  func.func @transform_5(%arg0: i32) -> (i32, i32) {
    %c0_i32 = arith.constant 0 : i32
    %c0_i32_0 = arith.constant 0 : i32
    return %arg0, %c0_i32 : i32, i32
  }
}

module attributes {stable_mosaic.version = 11 : i64} {
  func.func @_ilc_ctx_kernel(%arg0: i32, %arg1: memref<1x16x64xf32, #tpu.memory_space<vmem>>, %arg2: memref<64x32xf32, #tpu.memory_space<vmem>>, %arg3: memref<1x32xf32, #tpu.memory_space<vmem>>, %arg4: memref<32x32xf32, #tpu.memory_space<vmem>>, %arg5: memref<1x32xf32, #tpu.memory_space<vmem>>, %arg6: memref<64x32xf32, #tpu.memory_space<vmem>>, %arg7: memref<64x32xf32, #tpu.memory_space<vmem>>, %arg8: memref<1x32xf32, #tpu.memory_space<vmem>>, %arg9: memref<32x32xf32, #tpu.memory_space<vmem>>, %arg10: memref<1x32xf32, #tpu.memory_space<vmem>>, %arg11: memref<64x32xf32, #tpu.memory_space<vmem>>, %arg12: memref<64x32xf32, #tpu.memory_space<vmem>>, %arg13: memref<1x32xf32, #tpu.memory_space<vmem>>, %arg14: memref<32x64xf32, #tpu.memory_space<vmem>>, %arg15: memref<1x64xf32, #tpu.memory_space<vmem>>, %arg16: memref<1x16x64xf32, #tpu.memory_space<vmem>>) attributes {dimension_semantics = [#tpu.dimension_semantics<parallel>], iteration_bounds = array<i64: 2>, scalar_prefetch = 0 : i64, scratch_operands = 0 : i64, tpu.core_type = #tpu.core_type<tc>, window_params = [{transform_indices = @transform_0, window_bounds = array<i64: 1, 16, 64>}, {pipeline_mode = #tpu.pipeline_mode<synchronous>, transform_indices = @transform_1, window_bounds = array<i64: 64, 32>}, {pipeline_mode = #tpu.pipeline_mode<synchronous>, transform_indices = @transform_2, window_bounds = array<i64: 1, 32>}, {pipeline_mode = #tpu.pipeline_mode<synchronous>, transform_indices = @transform_3, window_bounds = array<i64: 32, 32>}, {pipeline_mode = #tpu.pipeline_mode<synchronous>, transform_indices = @transform_4, window_bounds = array<i64: 1, 32>}, {pipeline_mode = #tpu.pipeline_mode<synchronous>, transform_indices = @transform_5, window_bounds = array<i64: 64, 32>}, {pipeline_mode = #tpu.pipeline_mode<synchronous>, transform_indices = @transform_6, window_bounds = array<i64: 64, 32>}, {pipeline_mode = #tpu.pipeline_mode<synchronous>, transform_indices = @transform_7, window_bounds = array<i64: 1, 32>}, {pipeline_mode = #tpu.pipeline_mode<synchronous>, transform_indices = @transform_8, window_bounds = array<i64: 32, 32>}, {pipeline_mode = #tpu.pipeline_mode<synchronous>, transform_indices = @transform_9, window_bounds = array<i64: 1, 32>}, {pipeline_mode = #tpu.pipeline_mode<synchronous>, transform_indices = @transform_10, window_bounds = array<i64: 64, 32>}, {pipeline_mode = #tpu.pipeline_mode<synchronous>, transform_indices = @transform_11, window_bounds = array<i64: 64, 32>}, {pipeline_mode = #tpu.pipeline_mode<synchronous>, transform_indices = @transform_12, window_bounds = array<i64: 1, 32>}, {pipeline_mode = #tpu.pipeline_mode<synchronous>, transform_indices = @transform_13, window_bounds = array<i64: 32, 64>}, {pipeline_mode = #tpu.pipeline_mode<synchronous>, transform_indices = @transform_14, window_bounds = array<i64: 1, 64>}, {transform_indices = @transform_15, window_bounds = array<i64: 1, 16, 64>}]} {
    %c0 = arith.constant 0 : index
    %c0_0 = arith.constant 0 : index
    %c0_1 = arith.constant 0 : index
    %0 = vector.load %arg1[%c0, %c0_0, %c0_1] : memref<1x16x64xf32, #tpu.memory_space<vmem>>, vector<1x16x64xf32>
    %1 = vector.shape_cast %0 : vector<1x16x64xf32> to vector<16x64xf32>
    %cst = arith.constant dense<0.000000e+00> : vector<64xf32>
    %2 = vector.multi_reduction <add>, %1, %cst [0] : vector<16x64xf32> to vector<64xf32>
    %3 = vector.shape_cast %2 : vector<64xf32> to vector<1x64xf32>
    %cst_2 = arith.constant 1.600000e+01 : f32
    %4 = vector.broadcast %cst_2 : f32 to vector<1x64xf32>
    %5 = arith.divf %3, %4 : vector<1x64xf32>
    %6 = arith.truncf %1 : vector<16x64xf32> to vector<16x64xbf16>
    %c0_3 = arith.constant 0 : index
    %c0_4 = arith.constant 0 : index
    %7 = vector.load %arg2[%c0_3, %c0_4] : memref<64x32xf32, #tpu.memory_space<vmem>>, vector<64x32xf32>
    %8 = arith.truncf %7 : vector<64x32xf32> to vector<64x32xbf16>
    %cst_5 = arith.constant dense<0.000000e+00> : vector<16x32xf32>
    %9 = tpu.matmul %6, %8, %cst_5 {dimension_numbers = #tpu.dot_dimension_numbers<[1], [0], [0], [1], [0, 0, 1, 1], [], []>} : vector<16x64xbf16>, vector<64x32xbf16>, vector<16x32xf32> -> vector<16x32xf32>
    %c0_6 = arith.constant 0 : index
    %c0_7 = arith.constant 0 : index
    %10 = vector.load %arg3[%c0_6, %c0_7] : memref<1x32xf32, #tpu.memory_space<vmem>>, vector<1x32xf32>
    %11 = vector.broadcast %10 : vector<1x32xf32> to vector<16x32xf32>
    %12 = arith.addf %9, %11 : vector<16x32xf32>
    %cst_8 = arith.constant 0.000000e+00 : f32
    %13 = vector.broadcast %cst_8 : f32 to vector<16x32xf32>
    %14 = arith.maximumf %12, %13 : vector<16x32xf32>
    %15 = arith.truncf %14 : vector<16x32xf32> to vector<16x32xbf16>
    %c0_9 = arith.constant 0 : index
    %c0_10 = arith.constant 0 : index
    %16 = vector.load %arg4[%c0_9, %c0_10] : memref<32x32xf32, #tpu.memory_space<vmem>>, vector<32x32xf32>
    %17 = arith.truncf %16 : vector<32x32xf32> to vector<32x32xbf16>
    %cst_11 = arith.constant dense<0.000000e+00> : vector<16x32xf32>
    %18 = tpu.matmul %15, %17, %cst_11 {dimension_numbers = #tpu.dot_dimension_numbers<[1], [0], [0], [1], [0, 0, 1, 1], [], []>} : vector<16x32xbf16>, vector<32x32xbf16>, vector<16x32xf32> -> vector<16x32xf32>
    %c0_12 = arith.constant 0 : index
    %c0_13 = arith.constant 0 : index
    %19 = vector.load %arg5[%c0_12, %c0_13] : memref<1x32xf32, #tpu.memory_space<vmem>>, vector<1x32xf32>
    %20 = vector.broadcast %19 : vector<1x32xf32> to vector<16x32xf32>
    %21 = arith.addf %18, %20 : vector<16x32xf32>
    %cst_14 = arith.constant 0.000000e+00 : f32
    %22 = vector.broadcast %cst_14 : f32 to vector<16x32xf32>
    %23 = arith.maximumf %21, %22 : vector<16x32xf32>
    %24 = arith.truncf %5 : vector<1x64xf32> to vector<1x64xbf16>
    %c0_15 = arith.constant 0 : index
    %c0_16 = arith.constant 0 : index
    %25 = vector.load %arg6[%c0_15, %c0_16] : memref<64x32xf32, #tpu.memory_space<vmem>>, vector<64x32xf32>
    %26 = arith.truncf %25 : vector<64x32xf32> to vector<64x32xbf16>
    %cst_17 = arith.constant dense<0.000000e+00> : vector<1x32xf32>
    %27 = tpu.matmul %24, %26, %cst_17 {dimension_numbers = #tpu.dot_dimension_numbers<[1], [0], [0], [1], [0, 0, 1, 1], [], []>} : vector<1x64xbf16>, vector<64x32xbf16>, vector<1x32xf32> -> vector<1x32xf32>
    %28 = arith.truncf %1 : vector<16x64xf32> to vector<16x64xbf16>
    %c0_18 = arith.constant 0 : index
    %c0_19 = arith.constant 0 : index
    %29 = vector.load %arg7[%c0_18, %c0_19] : memref<64x32xf32, #tpu.memory_space<vmem>>, vector<64x32xf32>
    %30 = arith.truncf %29 : vector<64x32xf32> to vector<64x32xbf16>
    %cst_20 = arith.constant dense<0.000000e+00> : vector<16x32xf32>
    %31 = tpu.matmul %28, %30, %cst_20 {dimension_numbers = #tpu.dot_dimension_numbers<[1], [0], [0], [1], [0, 0, 1, 1], [], []>} : vector<16x64xbf16>, vector<64x32xbf16>, vector<16x32xf32> -> vector<16x32xf32>
    %32 = vector.broadcast %27 : vector<1x32xf32> to vector<16x32xf32>
    %33 = arith.addf %32, %31 : vector<16x32xf32>
    %c0_21 = arith.constant 0 : index
    %c0_22 = arith.constant 0 : index
    %34 = vector.load %arg8[%c0_21, %c0_22] : memref<1x32xf32, #tpu.memory_space<vmem>>, vector<1x32xf32>
    %35 = vector.broadcast %34 : vector<1x32xf32> to vector<16x32xf32>
    %36 = arith.addf %33, %35 : vector<16x32xf32>
    %cst_23 = arith.constant 0.000000e+00 : f32
    %37 = vector.broadcast %cst_23 : f32 to vector<16x32xf32>
    %38 = arith.maximumf %36, %37 : vector<16x32xf32>
    %39 = arith.truncf %38 : vector<16x32xf32> to vector<16x32xbf16>
    %c0_24 = arith.constant 0 : index
    %c0_25 = arith.constant 0 : index
    %40 = vector.load %arg9[%c0_24, %c0_25] : memref<32x32xf32, #tpu.memory_space<vmem>>, vector<32x32xf32>
    %41 = arith.truncf %40 : vector<32x32xf32> to vector<32x32xbf16>
    %cst_26 = arith.constant dense<0.000000e+00> : vector<16x32xf32>
    %42 = tpu.matmul %39, %41, %cst_26 {dimension_numbers = #tpu.dot_dimension_numbers<[1], [0], [0], [1], [0, 0, 1, 1], [], []>} : vector<16x32xbf16>, vector<32x32xbf16>, vector<16x32xf32> -> vector<16x32xf32>
    %c0_27 = arith.constant 0 : index
    %c0_28 = arith.constant 0 : index
    %43 = vector.load %arg10[%c0_27, %c0_28] : memref<1x32xf32, #tpu.memory_space<vmem>>, vector<1x32xf32>
    %44 = vector.broadcast %43 : vector<1x32xf32> to vector<16x32xf32>
    %45 = arith.addf %42, %44 : vector<16x32xf32>
    %cst_29 = arith.constant 0.000000e+00 : f32
    %46 = vector.broadcast %cst_29 : f32 to vector<16x32xf32>
    %47 = arith.maximumf %45, %46 : vector<16x32xf32>
    %48 = arith.truncf %5 : vector<1x64xf32> to vector<1x64xbf16>
    %c0_30 = arith.constant 0 : index
    %c0_31 = arith.constant 0 : index
    %49 = vector.load %arg11[%c0_30, %c0_31] : memref<64x32xf32, #tpu.memory_space<vmem>>, vector<64x32xf32>
    %50 = arith.truncf %49 : vector<64x32xf32> to vector<64x32xbf16>
    %cst_32 = arith.constant dense<0.000000e+00> : vector<1x32xf32>
    %51 = tpu.matmul %48, %50, %cst_32 {dimension_numbers = #tpu.dot_dimension_numbers<[1], [0], [0], [1], [0, 0, 1, 1], [], []>} : vector<1x64xbf16>, vector<64x32xbf16>, vector<1x32xf32> -> vector<1x32xf32>
    %52 = arith.truncf %1 : vector<16x64xf32> to vector<16x64xbf16>
    %c0_33 = arith.constant 0 : index
    %c0_34 = arith.constant 0 : index
    %53 = vector.load %arg12[%c0_33, %c0_34] : memref<64x32xf32, #tpu.memory_space<vmem>>, vector<64x32xf32>
    %54 = arith.truncf %53 : vector<64x32xf32> to vector<64x32xbf16>
    %cst_35 = arith.constant dense<0.000000e+00> : vector<16x32xf32>
    %55 = tpu.matmul %52, %54, %cst_35 {dimension_numbers = #tpu.dot_dimension_numbers<[1], [0], [0], [1], [0, 0, 1, 1], [], []>} : vector<16x64xbf16>, vector<64x32xbf16>, vector<16x32xf32> -> vector<16x32xf32>
    %56 = vector.broadcast %51 : vector<1x32xf32> to vector<16x32xf32>
    %57 = arith.addf %56, %55 : vector<16x32xf32>
    %c0_36 = arith.constant 0 : index
    %c0_37 = arith.constant 0 : index
    %58 = vector.load %arg13[%c0_36, %c0_37] : memref<1x32xf32, #tpu.memory_space<vmem>>, vector<1x32xf32>
    %59 = vector.broadcast %58 : vector<1x32xf32> to vector<16x32xf32>
    %60 = arith.addf %57, %59 : vector<16x32xf32>
    %cst_38 = arith.constant 0.000000e+00 : f32
    %61 = vector.broadcast %cst_38 : f32 to vector<16x32xf32>
    %62 = arith.maximumf %60, %61 : vector<16x32xf32>
    %63 = arith.truncf %23 : vector<16x32xf32> to vector<16x32xbf16>
    %64 = arith.truncf %47 : vector<16x32xf32> to vector<16x32xbf16>
    %cst_39 = arith.constant dense<0.000000e+00> : vector<16x16xf32>
    %65 = tpu.matmul %63, %64, %cst_39 {dimension_numbers = #tpu.dot_dimension_numbers<[1], [1], [0], [0], [0, 0, 1, 0], [], []>} : vector<16x32xbf16>, vector<16x32xbf16>, vector<16x16xf32> -> vector<16x16xf32>
    %cst_40 = arith.constant 0.176776692 : f32
    %66 = vector.broadcast %cst_40 : f32 to vector<16x16xf32>
    %67 = arith.mulf %65, %66 : vector<16x16xf32>
    %cst_41 = arith.constant dense<0xFF800000> : vector<16xf32>
    %68 = vector.multi_reduction <maximumf>, %67, %cst_41 [1] : vector<16x16xf32> to vector<16xf32>
    %69 = vector.shape_cast %68 : vector<16xf32> to vector<16x1xf32>
    %70 = vector.broadcast %69 : vector<16x1xf32> to vector<16x16xf32>
    %71 = arith.subf %67, %70 : vector<16x16xf32>
    %72 = math.exp %71 : vector<16x16xf32>
    %cst_42 = arith.constant dense<0.000000e+00> : vector<16xf32>
    %73 = vector.multi_reduction <add>, %72, %cst_42 [1] : vector<16x16xf32> to vector<16xf32>
    %74 = vector.shape_cast %73 : vector<16xf32> to vector<16x1xf32>
    %75 = tpu.reciprocal %74 {approx = true} : vector<16x1xf32> -> vector<16x1xf32>
    %76 = vector.broadcast %75 : vector<16x1xf32> to vector<16x16xf32>
    %77 = arith.mulf %72, %76 : vector<16x16xf32>
    %78 = arith.truncf %77 : vector<16x16xf32> to vector<16x16xbf16>
    %79 = arith.truncf %62 : vector<16x32xf32> to vector<16x32xbf16>
    %cst_43 = arith.constant dense<0.000000e+00> : vector<16x32xf32>
    %80 = tpu.matmul %78, %79, %cst_43 {dimension_numbers = #tpu.dot_dimension_numbers<[1], [0], [0], [1], [0, 0, 1, 1], [], []>} : vector<16x16xbf16>, vector<16x32xbf16>, vector<16x32xf32> -> vector<16x32xf32>
    %81 = arith.truncf %80 : vector<16x32xf32> to vector<16x32xbf16>
    %c0_44 = arith.constant 0 : index
    %c0_45 = arith.constant 0 : index
    %82 = vector.load %arg14[%c0_44, %c0_45] : memref<32x64xf32, #tpu.memory_space<vmem>>, vector<32x64xf32>
    %83 = arith.truncf %82 : vector<32x64xf32> to vector<32x64xbf16>
    %cst_46 = arith.constant dense<0.000000e+00> : vector<16x64xf32>
    %84 = tpu.matmul %81, %83, %cst_46 {dimension_numbers = #tpu.dot_dimension_numbers<[1], [0], [0], [1], [0, 0, 1, 1], [], []>} : vector<16x32xbf16>, vector<32x64xbf16>, vector<16x64xf32> -> vector<16x64xf32>
    %c0_47 = arith.constant 0 : index
    %c0_48 = arith.constant 0 : index
    %85 = vector.load %arg15[%c0_47, %c0_48] : memref<1x64xf32, #tpu.memory_space<vmem>>, vector<1x64xf32>
    %86 = vector.broadcast %85 : vector<1x64xf32> to vector<16x64xf32>
    %87 = arith.addf %84, %86 : vector<16x64xf32>
    %cst_49 = arith.constant 0.000000e+00 : f32
    %88 = vector.broadcast %cst_49 : f32 to vector<16x64xf32>
    %89 = arith.maximumf %87, %88 : vector<16x64xf32>
    %c0_50 = arith.constant 0 : index
    %c0_51 = arith.constant 0 : index
    %c0_52 = arith.constant 0 : index
    %90 = vector.load %arg16[%c0_50, %c0_51, %c0_52] : memref<1x16x64xf32, #tpu.memory_space<vmem>>, vector<1x16x64xf32>
    %91 = vector.shape_cast %90 : vector<1x16x64xf32> to vector<16x64xf32>
    %92 = vector.shape_cast %89 : vector<16x64xf32> to vector<1x16x64xf32>
    tpu.vector_store %arg16[%c0_50, %c0_51, %c0_52], %92 {strides = array<i32>} : memref<1x16x64xf32, #tpu.memory_space<vmem>>, vector<1x16x64xf32>,
    return
  }
  func.func @transform_0(%arg0: i32) -> (i32, i32, i32) {
    %c0_i32 = arith.constant 0 : i32
    %c0_i32_0 = arith.constant 0 : i32
    %c0_i32_1 = arith.constant 0 : i32
    return %arg0, %c0_i32, %c0_i32_0 : i32, i32, i32
  }
  func.func @transform_1(%arg0: i32) -> (i32, i32) {
    %c0_i32 = arith.constant 0 : i32
    %c0_i32_0 = arith.constant 0 : i32
    %c0_i32_1 = arith.constant 0 : i32
    return %c0_i32, %c0_i32_0 : i32, i32
  }
  func.func @transform_2(%arg0: i32) -> (i32, i32) {
    %c0_i32 = arith.constant 0 : i32
    %c0_i32_0 = arith.constant 0 : i32
    %c0_i32_1 = arith.constant 0 : i32
    return %c0_i32, %c0_i32_0 : i32, i32
  }
  func.func @transform_3(%arg0: i32) -> (i32, i32) {
    %c0_i32 = arith.constant 0 : i32
    %c0_i32_0 = arith.constant 0 : i32
    %c0_i32_1 = arith.constant 0 : i32
    return %c0_i32, %c0_i32_0 : i32, i32
  }
  func.func @transform_4(%arg0: i32) -> (i32, i32) {
    %c0_i32 = arith.constant 0 : i32
    %c0_i32_0 = arith.constant 0 : i32
    %c0_i32_1 = arith.constant 0 : i32
    return %c0_i32, %c0_i32_0 : i32, i32
  }
  func.func @transform_5(%arg0: i32) -> (i32, i32) {
    %c0_i32 = arith.constant 0 : i32
    %c0_i32_0 = arith.constant 0 : i32
    %c0_i32_1 = arith.constant 0 : i32
    return %c0_i32, %c0_i32_0 : i32, i32
  }
  func.func @transform_6(%arg0: i32) -> (i32, i32) {
    %c0_i32 = arith.constant 0 : i32
    %c0_i32_0 = arith.constant 0 : i32
    %c0_i32_1 = arith.constant 0 : i32
    return %c0_i32, %c0_i32_0 : i32, i32
  }
  func.func @transform_7(%arg0: i32) -> (i32, i32) {
    %c0_i32 = arith.constant 0 : i32
    %c0_i32_0 = arith.constant 0 : i32
    %c0_i32_1 = arith.constant 0 : i32
    return %c0_i32, %c0_i32_0 : i32, i32
  }
  func.func @transform_8(%arg0: i32) -> (i32, i32) {
    %c0_i32 = arith.constant 0 : i32
    %c0_i32_0 = arith.constant 0 : i32
    %c0_i32_1 = arith.constant 0 : i32
    return %c0_i32, %c0_i32_0 : i32, i32
  }
  func.func @transform_9(%arg0: i32) -> (i32, i32) {
    %c0_i32 = arith.constant 0 : i32
    %c0_i32_0 = arith.constant 0 : i32
    %c0_i32_1 = arith.constant 0 : i32
    return %c0_i32, %c0_i32_0 : i32, i32
  }
  func.func @transform_10(%arg0: i32) -> (i32, i32) {
    %c0_i32 = arith.constant 0 : i32
    %c0_i32_0 = arith.constant 0 : i32
    %c0_i32_1 = arith.constant 0 : i32
    return %c0_i32, %c0_i32_0 : i32, i32
  }
  func.func @transform_11(%arg0: i32) -> (i32, i32) {
    %c0_i32 = arith.constant 0 : i32
    %c0_i32_0 = arith.constant 0 : i32
    %c0_i32_1 = arith.constant 0 : i32
    return %c0_i32, %c0_i32_0 : i32, i32
  }
  func.func @transform_12(%arg0: i32) -> (i32, i32) {
    %c0_i32 = arith.constant 0 : i32
    %c0_i32_0 = arith.constant 0 : i32
    %c0_i32_1 = arith.constant 0 : i32
    return %c0_i32, %c0_i32_0 : i32, i32
  }
  func.func @transform_13(%arg0: i32) -> (i32, i32) {
    %c0_i32 = arith.constant 0 : i32
    %c0_i32_0 = arith.constant 0 : i32
    %c0_i32_1 = arith.constant 0 : i32
    return %c0_i32, %c0_i32_0 : i32, i32
  }
  func.func @transform_14(%arg0: i32) -> (i32, i32) {
    %c0_i32 = arith.constant 0 : i32
    %c0_i32_0 = arith.constant 0 : i32
    %c0_i32_1 = arith.constant 0 : i32
    return %c0_i32, %c0_i32_0 : i32, i32
  }
  func.func @transform_15(%arg0: i32) -> (i32, i32, i32) {
    %c0_i32 = arith.constant 0 : i32
    %c0_i32_0 = arith.constant 0 : i32
    %c0_i32_1 = arith.constant 0 : i32
    return %arg0, %c0_i32, %c0_i32_0 : i32, i32, i32
  }
}

module attributes {stable_mosaic.version = 11 : i64} {
  func.func @_slc_ctx_kernel(%arg0: i32, %arg1: memref<1x16x64xf32, #tpu.memory_space<vmem>>, %arg2: memref<1x16x64xf32, #tpu.memory_space<vmem>>, %arg3: memref<64x64xf32, #tpu.memory_space<vmem>>, %arg4: memref<1x64xf32, #tpu.memory_space<vmem>>, %arg5: memref<64x4xf32, #tpu.memory_space<vmem>>, %arg6: memref<1x4xf32, #tpu.memory_space<vmem>>, %arg7: memref<64x32xf32, #tpu.memory_space<vmem>>, %arg8: memref<1x32xf32, #tpu.memory_space<vmem>>, %arg9: memref<32x32xf32, #tpu.memory_space<vmem>>, %arg10: memref<1x32xf32, #tpu.memory_space<vmem>>, %arg11: memref<64x32xf32, #tpu.memory_space<vmem>>, %arg12: memref<1x32xf32, #tpu.memory_space<vmem>>, %arg13: memref<32x32xf32, #tpu.memory_space<vmem>>, %arg14: memref<1x32xf32, #tpu.memory_space<vmem>>, %arg15: memref<64x32xf32, #tpu.memory_space<vmem>>, %arg16: memref<1x32xf32, #tpu.memory_space<vmem>>, %arg17: memref<32x64xf32, #tpu.memory_space<vmem>>, %arg18: memref<1x64xf32, #tpu.memory_space<vmem>>, %arg19: memref<1x16x64xf32, #tpu.memory_space<vmem>>) attributes {dimension_semantics = [#tpu.dimension_semantics<parallel>], iteration_bounds = array<i64: 2>, scalar_prefetch = 0 : i64, scratch_operands = 0 : i64, tpu.core_type = #tpu.core_type<tc>, window_params = [{transform_indices = @transform_0, window_bounds = array<i64: 1, 16, 64>}, {transform_indices = @transform_1, window_bounds = array<i64: 1, 16, 64>}, {pipeline_mode = #tpu.pipeline_mode<synchronous>, transform_indices = @transform_2, window_bounds = array<i64: 64, 64>}, {pipeline_mode = #tpu.pipeline_mode<synchronous>, transform_indices = @transform_3, window_bounds = array<i64: 1, 64>}, {pipeline_mode = #tpu.pipeline_mode<synchronous>, transform_indices = @transform_4, window_bounds = array<i64: 64, 4>}, {pipeline_mode = #tpu.pipeline_mode<synchronous>, transform_indices = @transform_5, window_bounds = array<i64: 1, 4>}, {pipeline_mode = #tpu.pipeline_mode<synchronous>, transform_indices = @transform_6, window_bounds = array<i64: 64, 32>}, {pipeline_mode = #tpu.pipeline_mode<synchronous>, transform_indices = @transform_7, window_bounds = array<i64: 1, 32>}, {pipeline_mode = #tpu.pipeline_mode<synchronous>, transform_indices = @transform_8, window_bounds = array<i64: 32, 32>}, {pipeline_mode = #tpu.pipeline_mode<synchronous>, transform_indices = @transform_9, window_bounds = array<i64: 1, 32>}, {pipeline_mode = #tpu.pipeline_mode<synchronous>, transform_indices = @transform_10, window_bounds = array<i64: 64, 32>}, {pipeline_mode = #tpu.pipeline_mode<synchronous>, transform_indices = @transform_11, window_bounds = array<i64: 1, 32>}, {pipeline_mode = #tpu.pipeline_mode<synchronous>, transform_indices = @transform_12, window_bounds = array<i64: 32, 32>}, {pipeline_mode = #tpu.pipeline_mode<synchronous>, transform_indices = @transform_13, window_bounds = array<i64: 1, 32>}, {pipeline_mode = #tpu.pipeline_mode<synchronous>, transform_indices = @transform_14, window_bounds = array<i64: 64, 32>}, {pipeline_mode = #tpu.pipeline_mode<synchronous>, transform_indices = @transform_15, window_bounds = array<i64: 1, 32>}, {pipeline_mode = #tpu.pipeline_mode<synchronous>, transform_indices = @transform_16, window_bounds = array<i64: 32, 64>}, {pipeline_mode = #tpu.pipeline_mode<synchronous>, transform_indices = @transform_17, window_bounds = array<i64: 1, 64>}, {transform_indices = @transform_18, window_bounds = array<i64: 1, 16, 64>}]} {
    %c0 = arith.constant 0 : index
    %c0_0 = arith.constant 0 : index
    %c0_1 = arith.constant 0 : index
    %0 = vector.load %arg1[%c0, %c0_0, %c0_1] : memref<1x16x64xf32, #tpu.memory_space<vmem>>, vector<1x16x64xf32>
    %1 = vector.shape_cast %0 : vector<1x16x64xf32> to vector<16x64xf32>
    %c0_2 = arith.constant 0 : index
    %c0_3 = arith.constant 0 : index
    %c0_4 = arith.constant 0 : index
    %2 = vector.load %arg2[%c0_2, %c0_3, %c0_4] : memref<1x16x64xf32, #tpu.memory_space<vmem>>, vector<1x16x64xf32>
    %3 = vector.shape_cast %2 : vector<1x16x64xf32> to vector<16x64xf32>
    %4 = arith.truncf %1 : vector<16x64xf32> to vector<16x64xbf16>
    %c0_5 = arith.constant 0 : index
    %c0_6 = arith.constant 0 : index
    %5 = vector.load %arg3[%c0_5, %c0_6] : memref<64x64xf32, #tpu.memory_space<vmem>>, vector<64x64xf32>
    %6 = arith.truncf %5 : vector<64x64xf32> to vector<64x64xbf16>
    %cst = arith.constant dense<0.000000e+00> : vector<16x64xf32>
    %7 = tpu.matmul %4, %6, %cst {dimension_numbers = #tpu.dot_dimension_numbers<[1], [0], [0], [1], [0, 0, 1, 1], [], []>} : vector<16x64xbf16>, vector<64x64xbf16>, vector<16x64xf32> -> vector<16x64xf32>
    %c0_7 = arith.constant 0 : index
    %c0_8 = arith.constant 0 : index
    %8 = vector.load %arg4[%c0_7, %c0_8] : memref<1x64xf32, #tpu.memory_space<vmem>>, vector<1x64xf32>
    %9 = vector.broadcast %8 : vector<1x64xf32> to vector<16x64xf32>
    %10 = arith.addf %7, %9 : vector<16x64xf32>
    %cst_9 = arith.constant 0.000000e+00 : f32
    %11 = vector.broadcast %cst_9 : f32 to vector<16x64xf32>
    %12 = arith.maximumf %10, %11 : vector<16x64xf32>
    %13 = arith.truncf %12 : vector<16x64xf32> to vector<16x64xbf16>
    %c0_10 = arith.constant 0 : index
    %c0_11 = arith.constant 0 : index
    %14 = vector.load %arg5[%c0_10, %c0_11] : memref<64x4xf32, #tpu.memory_space<vmem>>, vector<64x4xf32>
    %15 = arith.truncf %14 : vector<64x4xf32> to vector<64x4xbf16>
    %cst_12 = arith.constant dense<0.000000e+00> : vector<16x4xf32>
    %16 = tpu.matmul %13, %15, %cst_12 {dimension_numbers = #tpu.dot_dimension_numbers<[1], [0], [0], [1], [0, 0, 1, 1], [], []>} : vector<16x64xbf16>, vector<64x4xbf16>, vector<16x4xf32> -> vector<16x4xf32>
    %c0_13 = arith.constant 0 : index
    %c0_14 = arith.constant 0 : index
    %17 = vector.load %arg6[%c0_13, %c0_14] : memref<1x4xf32, #tpu.memory_space<vmem>>, vector<1x4xf32>
    %18 = vector.broadcast %17 : vector<1x4xf32> to vector<16x4xf32>
    %19 = arith.addf %16, %18 : vector<16x4xf32>
    %cst_15 = arith.constant dense<0xFF800000> : vector<16xf32>
    %20 = vector.multi_reduction <maximumf>, %19, %cst_15 [1] : vector<16x4xf32> to vector<16xf32>
    %21 = vector.shape_cast %20 : vector<16xf32> to vector<16x1xf32>
    %22 = tpu.iota {dimensions = array<i32: 1>} : vector<16x4xi32>
    %23 = arith.sitofp %22 : vector<16x4xi32> to vector<16x4xf32>
    %24 = vector.broadcast %21 : vector<16x1xf32> to vector<16x4xf32>
    %25 = arith.cmpf oge, %19, %24 : vector<16x4xf32>
    %cst_16 = arith.constant 4.000000e+00 : f32
    %26 = vector.broadcast %cst_16 : f32 to vector<16x4xf32>
    %27 = arith.select %25, %23, %26 : vector<16x4xi1>, vector<16x4xf32>
    %cst_17 = arith.constant dense<0x7F800000> : vector<16xf32>
    %28 = vector.multi_reduction <minimumf>, %27, %cst_17 [1] : vector<16x4xf32> to vector<16xf32>
    %29 = vector.shape_cast %28 : vector<16xf32> to vector<16x1xf32>
    %30 = vector.broadcast %29 : vector<16x1xf32> to vector<16x4xf32>
    %31 = arith.cmpf oeq, %23, %30 : vector<16x4xf32>
    %32 = arith.extui %31 : vector<16x4xi1> to vector<16x4xi32>
    %33 = arith.sitofp %32 : vector<16x4xi32> to vector<16x4xf32>
    %cst_18 = arith.constant 0.000000e+00 : f32
    %34 = vector.broadcast %cst_18 : f32 to vector<16x4xf32>
    %35 = arith.cmpf ogt, %33, %34 : vector<16x4xf32>
    %cst_19 = arith.constant -1.000000e+09 : f32
    %36 = vector.broadcast %cst_19 : f32 to vector<16x4xf32>
    %37 = arith.select %35, %19, %36 : vector<16x4xi1>, vector<16x4xf32>
    %cst_20 = arith.constant dense<0xFF800000> : vector<4xf32>
    %38 = vector.multi_reduction <maximumf>, %37, %cst_20 [0] : vector<16x4xf32> to vector<4xf32>
    %39 = vector.shape_cast %38 : vector<4xf32> to vector<1x4xf32>
    %40 = vector.broadcast %39 : vector<1x4xf32> to vector<16x4xf32>
    %41 = arith.subf %37, %40 : vector<16x4xf32>
    %42 = math.exp %41 : vector<16x4xf32>
    %43 = arith.mulf %42, %33 : vector<16x4xf32>
    %cst_21 = arith.constant dense<0.000000e+00> : vector<4xf32>
    %44 = vector.multi_reduction <add>, %43, %cst_21 [0] : vector<16x4xf32> to vector<4xf32>
    %45 = vector.shape_cast %44 : vector<4xf32> to vector<1x4xf32>
    %cst_22 = arith.constant 9.99999996E-13 : f32
    %46 = vector.broadcast %cst_22 : f32 to vector<1x4xf32>
    %47 = arith.maximumf %45, %46 : vector<1x4xf32>
    %48 = vector.broadcast %47 : vector<1x4xf32> to vector<16x4xf32>
    %49 = arith.divf %43, %48 : vector<16x4xf32>
    %50 = arith.truncf %33 : vector<16x4xf32> to vector<16x4xbf16>
    %51 = arith.truncf %49 : vector<16x4xf32> to vector<16x4xbf16>
    %cst_23 = arith.constant dense<0.000000e+00> : vector<16x16xf32>
    %52 = tpu.matmul %50, %51, %cst_23 {dimension_numbers = #tpu.dot_dimension_numbers<[1], [1], [0], [0], [0, 0, 1, 0], [], []>} : vector<16x4xbf16>, vector<16x4xbf16>, vector<16x16xf32> -> vector<16x16xf32>
    %53 = arith.truncf %52 : vector<16x16xf32> to vector<16x16xbf16>
    %54 = arith.truncf %1 : vector<16x64xf32> to vector<16x64xbf16>
    %cst_24 = arith.constant dense<0.000000e+00> : vector<16x64xf32>
    %55 = tpu.matmul %53, %54, %cst_24 {dimension_numbers = #tpu.dot_dimension_numbers<[1], [0], [0], [1], [0, 0, 1, 1], [], []>} : vector<16x16xbf16>, vector<16x64xbf16>, vector<16x64xf32> -> vector<16x64xf32>
    %56 = arith.truncf %3 : vector<16x64xf32> to vector<16x64xbf16>
    %c0_25 = arith.constant 0 : index
    %c0_26 = arith.constant 0 : index
    %57 = vector.load %arg7[%c0_25, %c0_26] : memref<64x32xf32, #tpu.memory_space<vmem>>, vector<64x32xf32>
    %58 = arith.truncf %57 : vector<64x32xf32> to vector<64x32xbf16>
    %cst_27 = arith.constant dense<0.000000e+00> : vector<16x32xf32>
    %59 = tpu.matmul %56, %58, %cst_27 {dimension_numbers = #tpu.dot_dimension_numbers<[1], [0], [0], [1], [0, 0, 1, 1], [], []>} : vector<16x64xbf16>, vector<64x32xbf16>, vector<16x32xf32> -> vector<16x32xf32>
    %c0_28 = arith.constant 0 : index
    %c0_29 = arith.constant 0 : index
    %60 = vector.load %arg8[%c0_28, %c0_29] : memref<1x32xf32, #tpu.memory_space<vmem>>, vector<1x32xf32>
    %61 = vector.broadcast %60 : vector<1x32xf32> to vector<16x32xf32>
    %62 = arith.addf %59, %61 : vector<16x32xf32>
    %cst_30 = arith.constant 0.000000e+00 : f32
    %63 = vector.broadcast %cst_30 : f32 to vector<16x32xf32>
    %64 = arith.maximumf %62, %63 : vector<16x32xf32>
    %65 = arith.truncf %64 : vector<16x32xf32> to vector<16x32xbf16>
    %c0_31 = arith.constant 0 : index
    %c0_32 = arith.constant 0 : index
    %66 = vector.load %arg9[%c0_31, %c0_32] : memref<32x32xf32, #tpu.memory_space<vmem>>, vector<32x32xf32>
    %67 = arith.truncf %66 : vector<32x32xf32> to vector<32x32xbf16>
    %cst_33 = arith.constant dense<0.000000e+00> : vector<16x32xf32>
    %68 = tpu.matmul %65, %67, %cst_33 {dimension_numbers = #tpu.dot_dimension_numbers<[1], [0], [0], [1], [0, 0, 1, 1], [], []>} : vector<16x32xbf16>, vector<32x32xbf16>, vector<16x32xf32> -> vector<16x32xf32>
    %c0_34 = arith.constant 0 : index
    %c0_35 = arith.constant 0 : index
    %69 = vector.load %arg10[%c0_34, %c0_35] : memref<1x32xf32, #tpu.memory_space<vmem>>, vector<1x32xf32>
    %70 = vector.broadcast %69 : vector<1x32xf32> to vector<16x32xf32>
    %71 = arith.addf %68, %70 : vector<16x32xf32>
    %cst_36 = arith.constant 0.000000e+00 : f32
    %72 = vector.broadcast %cst_36 : f32 to vector<16x32xf32>
    %73 = arith.maximumf %71, %72 : vector<16x32xf32>
    %74 = arith.truncf %55 : vector<16x64xf32> to vector<16x64xbf16>
    %c0_37 = arith.constant 0 : index
    %c0_38 = arith.constant 0 : index
    %75 = vector.load %arg11[%c0_37, %c0_38] : memref<64x32xf32, #tpu.memory_space<vmem>>, vector<64x32xf32>
    %76 = arith.truncf %75 : vector<64x32xf32> to vector<64x32xbf16>
    %cst_39 = arith.constant dense<0.000000e+00> : vector<16x32xf32>
    %77 = tpu.matmul %74, %76, %cst_39 {dimension_numbers = #tpu.dot_dimension_numbers<[1], [0], [0], [1], [0, 0, 1, 1], [], []>} : vector<16x64xbf16>, vector<64x32xbf16>, vector<16x32xf32> -> vector<16x32xf32>
    %c0_40 = arith.constant 0 : index
    %c0_41 = arith.constant 0 : index
    %78 = vector.load %arg12[%c0_40, %c0_41] : memref<1x32xf32, #tpu.memory_space<vmem>>, vector<1x32xf32>
    %79 = vector.broadcast %78 : vector<1x32xf32> to vector<16x32xf32>
    %80 = arith.addf %77, %79 : vector<16x32xf32>
    %cst_42 = arith.constant 0.000000e+00 : f32
    %81 = vector.broadcast %cst_42 : f32 to vector<16x32xf32>
    %82 = arith.maximumf %80, %81 : vector<16x32xf32>
    %83 = arith.truncf %82 : vector<16x32xf32> to vector<16x32xbf16>
    %c0_43 = arith.constant 0 : index
    %c0_44 = arith.constant 0 : index
    %84 = vector.load %arg13[%c0_43, %c0_44] : memref<32x32xf32, #tpu.memory_space<vmem>>, vector<32x32xf32>
    %85 = arith.truncf %84 : vector<32x32xf32> to vector<32x32xbf16>
    %cst_45 = arith.constant dense<0.000000e+00> : vector<16x32xf32>
    %86 = tpu.matmul %83, %85, %cst_45 {dimension_numbers = #tpu.dot_dimension_numbers<[1], [0], [0], [1], [0, 0, 1, 1], [], []>} : vector<16x32xbf16>, vector<32x32xbf16>, vector<16x32xf32> -> vector<16x32xf32>
    %c0_46 = arith.constant 0 : index
    %c0_47 = arith.constant 0 : index
    %87 = vector.load %arg14[%c0_46, %c0_47] : memref<1x32xf32, #tpu.memory_space<vmem>>, vector<1x32xf32>
    %88 = vector.broadcast %87 : vector<1x32xf32> to vector<16x32xf32>
    %89 = arith.addf %86, %88 : vector<16x32xf32>
    %cst_48 = arith.constant 0.000000e+00 : f32
    %90 = vector.broadcast %cst_48 : f32 to vector<16x32xf32>
    %91 = arith.maximumf %89, %90 : vector<16x32xf32>
    %92 = arith.truncf %55 : vector<16x64xf32> to vector<16x64xbf16>
    %c0_49 = arith.constant 0 : index
    %c0_50 = arith.constant 0 : index
    %93 = vector.load %arg15[%c0_49, %c0_50] : memref<64x32xf32, #tpu.memory_space<vmem>>, vector<64x32xf32>
    %94 = arith.truncf %93 : vector<64x32xf32> to vector<64x32xbf16>
    %cst_51 = arith.constant dense<0.000000e+00> : vector<16x32xf32>
    %95 = tpu.matmul %92, %94, %cst_51 {dimension_numbers = #tpu.dot_dimension_numbers<[1], [0], [0], [1], [0, 0, 1, 1], [], []>} : vector<16x64xbf16>, vector<64x32xbf16>, vector<16x32xf32> -> vector<16x32xf32>
    %c0_52 = arith.constant 0 : index
    %c0_53 = arith.constant 0 : index
    %96 = vector.load %arg16[%c0_52, %c0_53] : memref<1x32xf32, #tpu.memory_space<vmem>>, vector<1x32xf32>
    %97 = vector.broadcast %96 : vector<1x32xf32> to vector<16x32xf32>
    %98 = arith.addf %95, %97 : vector<16x32xf32>
    %cst_54 = arith.constant 0.000000e+00 : f32
    %99 = vector.broadcast %cst_54 : f32 to vector<16x32xf32>
    %100 = arith.maximumf %98, %99 : vector<16x32xf32>
    %101 = arith.truncf %73 : vector<16x32xf32> to vector<16x32xbf16>
    %102 = arith.truncf %91 : vector<16x32xf32> to vector<16x32xbf16>
    %cst_55 = arith.constant dense<0.000000e+00> : vector<16x16xf32>
    %103 = tpu.matmul %101, %102, %cst_55 {dimension_numbers = #tpu.dot_dimension_numbers<[1], [1], [0], [0], [0, 0, 1, 0], [], []>} : vector<16x32xbf16>, vector<16x32xbf16>, vector<16x16xf32> -> vector<16x16xf32>
    %cst_56 = arith.constant 0.176776692 : f32
    %104 = vector.broadcast %cst_56 : f32 to vector<16x16xf32>
    %105 = arith.mulf %103, %104 : vector<16x16xf32>
    %cst_57 = arith.constant dense<0xFF800000> : vector<16xf32>
    %106 = vector.multi_reduction <maximumf>, %105, %cst_57 [1] : vector<16x16xf32> to vector<16xf32>
    %107 = vector.shape_cast %106 : vector<16xf32> to vector<16x1xf32>
    %108 = vector.broadcast %107 : vector<16x1xf32> to vector<16x16xf32>
    %109 = arith.subf %105, %108 : vector<16x16xf32>
    %110 = math.exp %109 : vector<16x16xf32>
    %cst_58 = arith.constant dense<0.000000e+00> : vector<16xf32>
    %111 = vector.multi_reduction <add>, %110, %cst_58 [1] : vector<16x16xf32> to vector<16xf32>
    %112 = vector.shape_cast %111 : vector<16xf32> to vector<16x1xf32>
    %113 = tpu.reciprocal %112 {approx = true} : vector<16x1xf32> -> vector<16x1xf32>
    %114 = vector.broadcast %113 : vector<16x1xf32> to vector<16x16xf32>
    %115 = arith.mulf %110, %114 : vector<16x16xf32>
    %116 = arith.truncf %115 : vector<16x16xf32> to vector<16x16xbf16>
    %117 = arith.truncf %100 : vector<16x32xf32> to vector<16x32xbf16>
    %cst_59 = arith.constant dense<0.000000e+00> : vector<16x32xf32>
    %118 = tpu.matmul %116, %117, %cst_59 {dimension_numbers = #tpu.dot_dimension_numbers<[1], [0], [0], [1], [0, 0, 1, 1], [], []>} : vector<16x16xbf16>, vector<16x32xbf16>, vector<16x32xf32> -> vector<16x32xf32>
    %119 = arith.truncf %118 : vector<16x32xf32> to vector<16x32xbf16>
    %c0_60 = arith.constant 0 : index
    %c0_61 = arith.constant 0 : index
    %120 = vector.load %arg17[%c0_60, %c0_61] : memref<32x64xf32, #tpu.memory_space<vmem>>, vector<32x64xf32>
    %121 = arith.truncf %120 : vector<32x64xf32> to vector<32x64xbf16>
    %cst_62 = arith.constant dense<0.000000e+00> : vector<16x64xf32>
    %122 = tpu.matmul %119, %121, %cst_62 {dimension_numbers = #tpu.dot_dimension_numbers<[1], [0], [0], [1], [0, 0, 1, 1], [], []>} : vector<16x32xbf16>, vector<32x64xbf16>, vector<16x64xf32> -> vector<16x64xf32>
    %c0_63 = arith.constant 0 : index
    %c0_64 = arith.constant 0 : index
    %123 = vector.load %arg18[%c0_63, %c0_64] : memref<1x64xf32, #tpu.memory_space<vmem>>, vector<1x64xf32>
    %124 = vector.broadcast %123 : vector<1x64xf32> to vector<16x64xf32>
    %125 = arith.addf %122, %124 : vector<16x64xf32>
    %cst_65 = arith.constant 0.000000e+00 : f32
    %126 = vector.broadcast %cst_65 : f32 to vector<16x64xf32>
    %127 = arith.maximumf %125, %126 : vector<16x64xf32>
    %c0_66 = arith.constant 0 : index
    %c0_67 = arith.constant 0 : index
    %c0_68 = arith.constant 0 : index
    %128 = vector.load %arg19[%c0_66, %c0_67, %c0_68] : memref<1x16x64xf32, #tpu.memory_space<vmem>>, vector<1x16x64xf32>
    %129 = vector.shape_cast %128 : vector<1x16x64xf32> to vector<16x64xf32>
    %130 = vector.shape_cast %127 : vector<16x64xf32> to vector<1x16x64xf32>
    tpu.vector_store %arg19[%c0_66, %c0_67, %c0_68], %130 {strides = array<i32>} : memref<1x16x64xf32, #tpu.memory_space<vmem>>, vector<1x16x64xf32>,
    return
  }
  func.func @transform_0(%arg0: i32) -> (i32, i32, i32) {
    %c0_i32 = arith.constant 0 : i32
    %c0_i32_0 = arith.constant 0 : i32
    %c0_i32_1 = arith.constant 0 : i32
    return %arg0, %c0_i32, %c0_i32_0 : i32, i32, i32
  }
  func.func @transform_1(%arg0: i32) -> (i32, i32, i32) {
    %c0_i32 = arith.constant 0 : i32
    %c0_i32_0 = arith.constant 0 : i32
    %c0_i32_1 = arith.constant 0 : i32
    return %arg0, %c0_i32, %c0_i32_0 : i32, i32, i32
  }
  func.func @transform_2(%arg0: i32) -> (i32, i32) {
    %c0_i32 = arith.constant 0 : i32
    %c0_i32_0 = arith.constant 0 : i32
    %c0_i32_1 = arith.constant 0 : i32
    return %c0_i32, %c0_i32_0 : i32, i32
  }
  func.func @transform_3(%arg0: i32) -> (i32, i32) {
    %c0_i32 = arith.constant 0 : i32
    %c0_i32_0 = arith.constant 0 : i32
    %c0_i32_1 = arith.constant 0 : i32
    return %c0_i32, %c0_i32_0 : i32, i32
  }
  func.func @transform_4(%arg0: i32) -> (i32, i32) {
    %c0_i32 = arith.constant 0 : i32
    %c0_i32_0 = arith.constant 0 : i32
    %c0_i32_1 = arith.constant 0 : i32
    return %c0_i32, %c0_i32_0 : i32, i32
  }
  func.func @transform_5(%arg0: i32) -> (i32, i32) {
    %c0_i32 = arith.constant 0 : i32
    %c0_i32_0 = arith.constant 0 : i32
    %c0_i32_1 = arith.constant 0 : i32
    return %c0_i32, %c0_i32_0 : i32, i32
  }
  func.func @transform_6(%arg0: i32) -> (i32, i32) {
    %c0_i32 = arith.constant 0 : i32
    %c0_i32_0 = arith.constant 0 : i32
    %c0_i32_1 = arith.constant 0 : i32
    return %c0_i32, %c0_i32_0 : i32, i32
  }
  func.func @transform_7(%arg0: i32) -> (i32, i32) {
    %c0_i32 = arith.constant 0 : i32
    %c0_i32_0 = arith.constant 0 : i32
    %c0_i32_1 = arith.constant 0 : i32
    return %c0_i32, %c0_i32_0 : i32, i32
  }
  func.func @transform_8(%arg0: i32) -> (i32, i32) {
    %c0_i32 = arith.constant 0 : i32
    %c0_i32_0 = arith.constant 0 : i32
    %c0_i32_1 = arith.constant 0 : i32
    return %c0_i32, %c0_i32_0 : i32, i32
  }
  func.func @transform_9(%arg0: i32) -> (i32, i32) {
    %c0_i32 = arith.constant 0 : i32
    %c0_i32_0 = arith.constant 0 : i32
    %c0_i32_1 = arith.constant 0 : i32
    return %c0_i32, %c0_i32_0 : i32, i32
  }
  func.func @transform_10(%arg0: i32) -> (i32, i32) {
    %c0_i32 = arith.constant 0 : i32
    %c0_i32_0 = arith.constant 0 : i32
    %c0_i32_1 = arith.constant 0 : i32
    return %c0_i32, %c0_i32_0 : i32, i32
  }
  func.func @transform_11(%arg0: i32) -> (i32, i32) {
    %c0_i32 = arith.constant 0 : i32
    %c0_i32_0 = arith.constant 0 : i32
    %c0_i32_1 = arith.constant 0 : i32
    return %c0_i32, %c0_i32_0 : i32, i32
  }
  func.func @transform_12(%arg0: i32) -> (i32, i32) {
    %c0_i32 = arith.constant 0 : i32
    %c0_i32_0 = arith.constant 0 : i32
    %c0_i32_1 = arith.constant 0 : i32
    return %c0_i32, %c0_i32_0 : i32, i32
  }
  func.func @transform_13(%arg0: i32) -> (i32, i32) {
    %c0_i32 = arith.constant 0 : i32
    %c0_i32_0 = arith.constant 0 : i32
    %c0_i32_1 = arith.constant 0 : i32
    return %c0_i32, %c0_i32_0 : i32, i32
  }
  func.func @transform_14(%arg0: i32) -> (i32, i32) {
    %c0_i32 = arith.constant 0 : i32
    %c0_i32_0 = arith.constant 0 : i32
    %c0_i32_1 = arith.constant 0 : i32
    return %c0_i32, %c0_i32_0 : i32, i32
  }
  func.func @transform_15(%arg0: i32) -> (i32, i32) {
    %c0_i32 = arith.constant 0 : i32
    %c0_i32_0 = arith.constant 0 : i32
    %c0_i32_1 = arith.constant 0 : i32
    return %c0_i32, %c0_i32_0 : i32, i32
  }
  func.func @transform_16(%arg0: i32) -> (i32, i32) {
    %c0_i32 = arith.constant 0 : i32
    %c0_i32_0 = arith.constant 0 : i32
    %c0_i32_1 = arith.constant 0 : i32
    return %c0_i32, %c0_i32_0 : i32, i32
  }
  func.func @transform_17(%arg0: i32) -> (i32, i32) {
    %c0_i32 = arith.constant 0 : i32
    %c0_i32_0 = arith.constant 0 : i32
    %c0_i32_1 = arith.constant 0 : i32
    return %c0_i32, %c0_i32_0 : i32, i32
  }
  func.func @transform_18(%arg0: i32) -> (i32, i32, i32) {
    %c0_i32 = arith.constant 0 : i32
    %c0_i32_0 = arith.constant 0 : i32
    %c0_i32_1 = arith.constant 0 : i32
    return %arg0, %c0_i32, %c0_i32_0 : i32, i32, i32
  }
}

module attributes {stable_mosaic.version = 11 : i64} {
  func.func @_conv3x3_kernel(%arg0: i32, %arg1: memref<32x128xf32, #tpu.memory_space<vmem>>, %arg2: memref<32x128xf32, #tpu.memory_space<vmem>>, %arg3: memref<32x128xf32, #tpu.memory_space<vmem>>, %arg4: memref<32x128xf32, #tpu.memory_space<vmem>>, %arg5: memref<32x128xf32, #tpu.memory_space<vmem>>, %arg6: memref<32x128xf32, #tpu.memory_space<vmem>>, %arg7: memref<32x128xf32, #tpu.memory_space<vmem>>, %arg8: memref<32x128xf32, #tpu.memory_space<vmem>>, %arg9: memref<32x128xf32, #tpu.memory_space<vmem>>, %arg10: memref<9x128x64xf32, #tpu.memory_space<vmem>>, %arg11: memref<1x64xf32, #tpu.memory_space<vmem>>, %arg12: memref<32x64xf32, #tpu.memory_space<vmem>>) attributes {dimension_semantics = [#tpu.dimension_semantics<parallel>], iteration_bounds = array<i64: 1>, scalar_prefetch = 0 : i64, scratch_operands = 0 : i64, tpu.core_type = #tpu.core_type<tc>, window_params = [{transform_indices = @transform_0, window_bounds = array<i64: 32, 128>}, {transform_indices = @transform_1, window_bounds = array<i64: 32, 128>}, {transform_indices = @transform_2, window_bounds = array<i64: 32, 128>}, {transform_indices = @transform_3, window_bounds = array<i64: 32, 128>}, {transform_indices = @transform_4, window_bounds = array<i64: 32, 128>}, {transform_indices = @transform_5, window_bounds = array<i64: 32, 128>}, {transform_indices = @transform_6, window_bounds = array<i64: 32, 128>}, {transform_indices = @transform_7, window_bounds = array<i64: 32, 128>}, {transform_indices = @transform_8, window_bounds = array<i64: 32, 128>}, {pipeline_mode = #tpu.pipeline_mode<synchronous>, transform_indices = @transform_9, window_bounds = array<i64: 9, 128, 64>}, {pipeline_mode = #tpu.pipeline_mode<synchronous>, transform_indices = @transform_10, window_bounds = array<i64: 1, 64>}, {transform_indices = @transform_11, window_bounds = array<i64: 32, 64>}]} {
    %c0 = arith.constant 0 : index
    %c0_0 = arith.constant 0 : index
    %0 = vector.load %arg1[%c0, %c0_0] : memref<32x128xf32, #tpu.memory_space<vmem>>, vector<32x128xf32>
    %1 = arith.truncf %0 : vector<32x128xf32> to vector<32x128xbf16>
    %c0_1 = arith.constant 0 : index
    %c0_2 = arith.constant 0 : index
    %c0_3 = arith.constant 0 : index
    %2 = vector.load %arg10[%c0_1, %c0_2, %c0_3] : memref<9x128x64xf32, #tpu.memory_space<vmem>>, vector<1x128x64xf32>
    %3 = vector.shape_cast %2 : vector<1x128x64xf32> to vector<128x64xf32>
    %4 = arith.truncf %3 : vector<128x64xf32> to vector<128x64xbf16>
    %cst = arith.constant dense<0.000000e+00> : vector<32x64xf32>
    %5 = tpu.matmul %1, %4, %cst {dimension_numbers = #tpu.dot_dimension_numbers<[1], [0], [0], [1], [0, 0, 1, 1], [], []>} : vector<32x128xbf16>, vector<128x64xbf16>, vector<32x64xf32> -> vector<32x64xf32>
    %c0_4 = arith.constant 0 : index
    %c0_5 = arith.constant 0 : index
    %6 = vector.load %arg2[%c0_4, %c0_5] : memref<32x128xf32, #tpu.memory_space<vmem>>, vector<32x128xf32>
    %7 = arith.truncf %6 : vector<32x128xf32> to vector<32x128xbf16>
    %c1 = arith.constant 1 : index
    %c0_6 = arith.constant 0 : index
    %c0_7 = arith.constant 0 : index
    %8 = vector.load %arg10[%c1, %c0_6, %c0_7] : memref<9x128x64xf32, #tpu.memory_space<vmem>>, vector<1x128x64xf32>
    %9 = vector.shape_cast %8 : vector<1x128x64xf32> to vector<128x64xf32>
    %10 = arith.truncf %9 : vector<128x64xf32> to vector<128x64xbf16>
    %cst_8 = arith.constant dense<0.000000e+00> : vector<32x64xf32>
    %11 = tpu.matmul %7, %10, %cst_8 {dimension_numbers = #tpu.dot_dimension_numbers<[1], [0], [0], [1], [0, 0, 1, 1], [], []>} : vector<32x128xbf16>, vector<128x64xbf16>, vector<32x64xf32> -> vector<32x64xf32>
    %12 = arith.addf %5, %11 : vector<32x64xf32>
    %c0_9 = arith.constant 0 : index
    %c0_10 = arith.constant 0 : index
    %13 = vector.load %arg3[%c0_9, %c0_10] : memref<32x128xf32, #tpu.memory_space<vmem>>, vector<32x128xf32>
    %14 = arith.truncf %13 : vector<32x128xf32> to vector<32x128xbf16>
    %c2 = arith.constant 2 : index
    %c0_11 = arith.constant 0 : index
    %c0_12 = arith.constant 0 : index
    %15 = vector.load %arg10[%c2, %c0_11, %c0_12] : memref<9x128x64xf32, #tpu.memory_space<vmem>>, vector<1x128x64xf32>
    %16 = vector.shape_cast %15 : vector<1x128x64xf32> to vector<128x64xf32>
    %17 = arith.truncf %16 : vector<128x64xf32> to vector<128x64xbf16>
    %cst_13 = arith.constant dense<0.000000e+00> : vector<32x64xf32>
    %18 = tpu.matmul %14, %17, %cst_13 {dimension_numbers = #tpu.dot_dimension_numbers<[1], [0], [0], [1], [0, 0, 1, 1], [], []>} : vector<32x128xbf16>, vector<128x64xbf16>, vector<32x64xf32> -> vector<32x64xf32>
    %19 = arith.addf %12, %18 : vector<32x64xf32>
    %c0_14 = arith.constant 0 : index
    %c0_15 = arith.constant 0 : index
    %20 = vector.load %arg4[%c0_14, %c0_15] : memref<32x128xf32, #tpu.memory_space<vmem>>, vector<32x128xf32>
    %21 = arith.truncf %20 : vector<32x128xf32> to vector<32x128xbf16>
    %c3 = arith.constant 3 : index
    %c0_16 = arith.constant 0 : index
    %c0_17 = arith.constant 0 : index
    %22 = vector.load %arg10[%c3, %c0_16, %c0_17] : memref<9x128x64xf32, #tpu.memory_space<vmem>>, vector<1x128x64xf32>
    %23 = vector.shape_cast %22 : vector<1x128x64xf32> to vector<128x64xf32>
    %24 = arith.truncf %23 : vector<128x64xf32> to vector<128x64xbf16>
    %cst_18 = arith.constant dense<0.000000e+00> : vector<32x64xf32>
    %25 = tpu.matmul %21, %24, %cst_18 {dimension_numbers = #tpu.dot_dimension_numbers<[1], [0], [0], [1], [0, 0, 1, 1], [], []>} : vector<32x128xbf16>, vector<128x64xbf16>, vector<32x64xf32> -> vector<32x64xf32>
    %26 = arith.addf %19, %25 : vector<32x64xf32>
    %c0_19 = arith.constant 0 : index
    %c0_20 = arith.constant 0 : index
    %27 = vector.load %arg5[%c0_19, %c0_20] : memref<32x128xf32, #tpu.memory_space<vmem>>, vector<32x128xf32>
    %28 = arith.truncf %27 : vector<32x128xf32> to vector<32x128xbf16>
    %c4 = arith.constant 4 : index
    %c0_21 = arith.constant 0 : index
    %c0_22 = arith.constant 0 : index
    %29 = vector.load %arg10[%c4, %c0_21, %c0_22] : memref<9x128x64xf32, #tpu.memory_space<vmem>>, vector<1x128x64xf32>
    %30 = vector.shape_cast %29 : vector<1x128x64xf32> to vector<128x64xf32>
    %31 = arith.truncf %30 : vector<128x64xf32> to vector<128x64xbf16>
    %cst_23 = arith.constant dense<0.000000e+00> : vector<32x64xf32>
    %32 = tpu.matmul %28, %31, %cst_23 {dimension_numbers = #tpu.dot_dimension_numbers<[1], [0], [0], [1], [0, 0, 1, 1], [], []>} : vector<32x128xbf16>, vector<128x64xbf16>, vector<32x64xf32> -> vector<32x64xf32>
    %33 = arith.addf %26, %32 : vector<32x64xf32>
    %c0_24 = arith.constant 0 : index
    %c0_25 = arith.constant 0 : index
    %34 = vector.load %arg6[%c0_24, %c0_25] : memref<32x128xf32, #tpu.memory_space<vmem>>, vector<32x128xf32>
    %35 = arith.truncf %34 : vector<32x128xf32> to vector<32x128xbf16>
    %c5 = arith.constant 5 : index
    %c0_26 = arith.constant 0 : index
    %c0_27 = arith.constant 0 : index
    %36 = vector.load %arg10[%c5, %c0_26, %c0_27] : memref<9x128x64xf32, #tpu.memory_space<vmem>>, vector<1x128x64xf32>
    %37 = vector.shape_cast %36 : vector<1x128x64xf32> to vector<128x64xf32>
    %38 = arith.truncf %37 : vector<128x64xf32> to vector<128x64xbf16>
    %cst_28 = arith.constant dense<0.000000e+00> : vector<32x64xf32>
    %39 = tpu.matmul %35, %38, %cst_28 {dimension_numbers = #tpu.dot_dimension_numbers<[1], [0], [0], [1], [0, 0, 1, 1], [], []>} : vector<32x128xbf16>, vector<128x64xbf16>, vector<32x64xf32> -> vector<32x64xf32>
    %40 = arith.addf %33, %39 : vector<32x64xf32>
    %c0_29 = arith.constant 0 : index
    %c0_30 = arith.constant 0 : index
    %41 = vector.load %arg7[%c0_29, %c0_30] : memref<32x128xf32, #tpu.memory_space<vmem>>, vector<32x128xf32>
    %42 = arith.truncf %41 : vector<32x128xf32> to vector<32x128xbf16>
    %c6 = arith.constant 6 : index
    %c0_31 = arith.constant 0 : index
    %c0_32 = arith.constant 0 : index
    %43 = vector.load %arg10[%c6, %c0_31, %c0_32] : memref<9x128x64xf32, #tpu.memory_space<vmem>>, vector<1x128x64xf32>
    %44 = vector.shape_cast %43 : vector<1x128x64xf32> to vector<128x64xf32>
    %45 = arith.truncf %44 : vector<128x64xf32> to vector<128x64xbf16>
    %cst_33 = arith.constant dense<0.000000e+00> : vector<32x64xf32>
    %46 = tpu.matmul %42, %45, %cst_33 {dimension_numbers = #tpu.dot_dimension_numbers<[1], [0], [0], [1], [0, 0, 1, 1], [], []>} : vector<32x128xbf16>, vector<128x64xbf16>, vector<32x64xf32> -> vector<32x64xf32>
    %47 = arith.addf %40, %46 : vector<32x64xf32>
    %c0_34 = arith.constant 0 : index
    %c0_35 = arith.constant 0 : index
    %48 = vector.load %arg8[%c0_34, %c0_35] : memref<32x128xf32, #tpu.memory_space<vmem>>, vector<32x128xf32>
    %49 = arith.truncf %48 : vector<32x128xf32> to vector<32x128xbf16>
    %c7 = arith.constant 7 : index
    %c0_36 = arith.constant 0 : index
    %c0_37 = arith.constant 0 : index
    %50 = vector.load %arg10[%c7, %c0_36, %c0_37] : memref<9x128x64xf32, #tpu.memory_space<vmem>>, vector<1x128x64xf32>
    %51 = vector.shape_cast %50 : vector<1x128x64xf32> to vector<128x64xf32>
    %52 = arith.truncf %51 : vector<128x64xf32> to vector<128x64xbf16>
    %cst_38 = arith.constant dense<0.000000e+00> : vector<32x64xf32>
    %53 = tpu.matmul %49, %52, %cst_38 {dimension_numbers = #tpu.dot_dimension_numbers<[1], [0], [0], [1], [0, 0, 1, 1], [], []>} : vector<32x128xbf16>, vector<128x64xbf16>, vector<32x64xf32> -> vector<32x64xf32>
    %54 = arith.addf %47, %53 : vector<32x64xf32>
    %c0_39 = arith.constant 0 : index
    %c0_40 = arith.constant 0 : index
    %55 = vector.load %arg9[%c0_39, %c0_40] : memref<32x128xf32, #tpu.memory_space<vmem>>, vector<32x128xf32>
    %56 = arith.truncf %55 : vector<32x128xf32> to vector<32x128xbf16>
    %c8 = arith.constant 8 : index
    %c0_41 = arith.constant 0 : index
    %c0_42 = arith.constant 0 : index
    %57 = vector.load %arg10[%c8, %c0_41, %c0_42] : memref<9x128x64xf32, #tpu.memory_space<vmem>>, vector<1x128x64xf32>
    %58 = vector.shape_cast %57 : vector<1x128x64xf32> to vector<128x64xf32>
    %59 = arith.truncf %58 : vector<128x64xf32> to vector<128x64xbf16>
    %cst_43 = arith.constant dense<0.000000e+00> : vector<32x64xf32>
    %60 = tpu.matmul %56, %59, %cst_43 {dimension_numbers = #tpu.dot_dimension_numbers<[1], [0], [0], [1], [0, 0, 1, 1], [], []>} : vector<32x128xbf16>, vector<128x64xbf16>, vector<32x64xf32> -> vector<32x64xf32>
    %61 = arith.addf %54, %60 : vector<32x64xf32>
    %c0_44 = arith.constant 0 : index
    %c0_45 = arith.constant 0 : index
    %62 = vector.load %arg11[%c0_44, %c0_45] : memref<1x64xf32, #tpu.memory_space<vmem>>, vector<1x64xf32>
    %63 = vector.broadcast %62 : vector<1x64xf32> to vector<32x64xf32>
    %64 = arith.addf %61, %63 : vector<32x64xf32>
    %cst_46 = arith.constant 0.000000e+00 : f32
    %65 = vector.broadcast %cst_46 : f32 to vector<32x64xf32>
    %66 = arith.maximumf %64, %65 : vector<32x64xf32>
    %c0_47 = arith.constant 0 : index
    %c0_48 = arith.constant 0 : index
    %67 = vector.load %arg12[%c0_47, %c0_48] : memref<32x64xf32, #tpu.memory_space<vmem>>, vector<32x64xf32>
    tpu.vector_store %arg12[%c0_47, %c0_48], %66 {strides = array<i32>} : memref<32x64xf32, #tpu.memory_space<vmem>>, vector<32x64xf32>,
    return
  }
  func.func @transform_0(%arg0: i32) -> (i32, i32) {
    %c0_i32 = arith.constant 0 : i32
    %c0_i32_0 = arith.constant 0 : i32
    return %arg0, %c0_i32 : i32, i32
  }
  func.func @transform_1(%arg0: i32) -> (i32, i32) {
    %c0_i32 = arith.constant 0 : i32
    %c0_i32_0 = arith.constant 0 : i32
    return %arg0, %c0_i32 : i32, i32
  }
  func.func @transform_2(%arg0: i32) -> (i32, i32) {
    %c0_i32 = arith.constant 0 : i32
    %c0_i32_0 = arith.constant 0 : i32
    return %arg0, %c0_i32 : i32, i32
  }
  func.func @transform_3(%arg0: i32) -> (i32, i32) {
    %c0_i32 = arith.constant 0 : i32
    %c0_i32_0 = arith.constant 0 : i32
    return %arg0, %c0_i32 : i32, i32
  }
  func.func @transform_4(%arg0: i32) -> (i32, i32) {
    %c0_i32 = arith.constant 0 : i32
    %c0_i32_0 = arith.constant 0 : i32
    return %arg0, %c0_i32 : i32, i32
  }
  func.func @transform_5(%arg0: i32) -> (i32, i32) {
    %c0_i32 = arith.constant 0 : i32
    %c0_i32_0 = arith.constant 0 : i32
    return %arg0, %c0_i32 : i32, i32
  }
  func.func @transform_6(%arg0: i32) -> (i32, i32) {
    %c0_i32 = arith.constant 0 : i32
    %c0_i32_0 = arith.constant 0 : i32
    return %arg0, %c0_i32 : i32, i32
  }
  func.func @transform_7(%arg0: i32) -> (i32, i32) {
    %c0_i32 = arith.constant 0 : i32
    %c0_i32_0 = arith.constant 0 : i32
    return %arg0, %c0_i32 : i32, i32
  }
  func.func @transform_8(%arg0: i32) -> (i32, i32) {
    %c0_i32 = arith.constant 0 : i32
    %c0_i32_0 = arith.constant 0 : i32
    return %arg0, %c0_i32 : i32, i32
  }
  func.func @transform_9(%arg0: i32) -> (i32, i32, i32) {
    %c0_i32 = arith.constant 0 : i32
    %c0_i32_0 = arith.constant 0 : i32
    %c0_i32_1 = arith.constant 0 : i32
    %c0_i32_2 = arith.constant 0 : i32
    return %c0_i32, %c0_i32_0, %c0_i32_1 : i32, i32, i32
  }
  func.func @transform_10(%arg0: i32) -> (i32, i32) {
    %c0_i32 = arith.constant 0 : i32
    %c0_i32_0 = arith.constant 0 : i32
    %c0_i32_1 = arith.constant 0 : i32
    return %c0_i32, %c0_i32_0 : i32, i32
  }
  func.func @transform_11(%arg0: i32) -> (i32, i32) {
    %c0_i32 = arith.constant 0 : i32
    %c0_i32_0 = arith.constant 0 : i32
    return %arg0, %c0_i32 : i32, i32
  }
}

module attributes {stable_mosaic.version = 11 : i64} {
  func.func @_conv3x3_kernel(%arg0: i32, %arg1: memref<32x128xf32, #tpu.memory_space<vmem>>, %arg2: memref<32x128xf32, #tpu.memory_space<vmem>>, %arg3: memref<32x128xf32, #tpu.memory_space<vmem>>, %arg4: memref<32x128xf32, #tpu.memory_space<vmem>>, %arg5: memref<32x128xf32, #tpu.memory_space<vmem>>, %arg6: memref<32x128xf32, #tpu.memory_space<vmem>>, %arg7: memref<32x128xf32, #tpu.memory_space<vmem>>, %arg8: memref<32x128xf32, #tpu.memory_space<vmem>>, %arg9: memref<32x128xf32, #tpu.memory_space<vmem>>, %arg10: memref<9x128x16xf32, #tpu.memory_space<vmem>>, %arg11: memref<1x16xf32, #tpu.memory_space<vmem>>, %arg12: memref<32x16xf32, #tpu.memory_space<vmem>>) attributes {dimension_semantics = [#tpu.dimension_semantics<parallel>], iteration_bounds = array<i64: 1>, scalar_prefetch = 0 : i64, scratch_operands = 0 : i64, tpu.core_type = #tpu.core_type<tc>, window_params = [{transform_indices = @transform_0, window_bounds = array<i64: 32, 128>}, {transform_indices = @transform_1, window_bounds = array<i64: 32, 128>}, {transform_indices = @transform_2, window_bounds = array<i64: 32, 128>}, {transform_indices = @transform_3, window_bounds = array<i64: 32, 128>}, {transform_indices = @transform_4, window_bounds = array<i64: 32, 128>}, {transform_indices = @transform_5, window_bounds = array<i64: 32, 128>}, {transform_indices = @transform_6, window_bounds = array<i64: 32, 128>}, {transform_indices = @transform_7, window_bounds = array<i64: 32, 128>}, {transform_indices = @transform_8, window_bounds = array<i64: 32, 128>}, {pipeline_mode = #tpu.pipeline_mode<synchronous>, transform_indices = @transform_9, window_bounds = array<i64: 9, 128, 16>}, {pipeline_mode = #tpu.pipeline_mode<synchronous>, transform_indices = @transform_10, window_bounds = array<i64: 1, 16>}, {transform_indices = @transform_11, window_bounds = array<i64: 32, 16>}]} {
    %c0 = arith.constant 0 : index
    %c0_0 = arith.constant 0 : index
    %0 = vector.load %arg1[%c0, %c0_0] : memref<32x128xf32, #tpu.memory_space<vmem>>, vector<32x128xf32>
    %1 = arith.truncf %0 : vector<32x128xf32> to vector<32x128xbf16>
    %c0_1 = arith.constant 0 : index
    %c0_2 = arith.constant 0 : index
    %c0_3 = arith.constant 0 : index
    %2 = vector.load %arg10[%c0_1, %c0_2, %c0_3] : memref<9x128x16xf32, #tpu.memory_space<vmem>>, vector<1x128x16xf32>
    %3 = vector.shape_cast %2 : vector<1x128x16xf32> to vector<128x16xf32>
    %4 = arith.truncf %3 : vector<128x16xf32> to vector<128x16xbf16>
    %cst = arith.constant dense<0.000000e+00> : vector<32x16xf32>
    %5 = tpu.matmul %1, %4, %cst {dimension_numbers = #tpu.dot_dimension_numbers<[1], [0], [0], [1], [0, 0, 1, 1], [], []>} : vector<32x128xbf16>, vector<128x16xbf16>, vector<32x16xf32> -> vector<32x16xf32>
    %c0_4 = arith.constant 0 : index
    %c0_5 = arith.constant 0 : index
    %6 = vector.load %arg2[%c0_4, %c0_5] : memref<32x128xf32, #tpu.memory_space<vmem>>, vector<32x128xf32>
    %7 = arith.truncf %6 : vector<32x128xf32> to vector<32x128xbf16>
    %c1 = arith.constant 1 : index
    %c0_6 = arith.constant 0 : index
    %c0_7 = arith.constant 0 : index
    %8 = vector.load %arg10[%c1, %c0_6, %c0_7] : memref<9x128x16xf32, #tpu.memory_space<vmem>>, vector<1x128x16xf32>
    %9 = vector.shape_cast %8 : vector<1x128x16xf32> to vector<128x16xf32>
    %10 = arith.truncf %9 : vector<128x16xf32> to vector<128x16xbf16>
    %cst_8 = arith.constant dense<0.000000e+00> : vector<32x16xf32>
    %11 = tpu.matmul %7, %10, %cst_8 {dimension_numbers = #tpu.dot_dimension_numbers<[1], [0], [0], [1], [0, 0, 1, 1], [], []>} : vector<32x128xbf16>, vector<128x16xbf16>, vector<32x16xf32> -> vector<32x16xf32>
    %12 = arith.addf %5, %11 : vector<32x16xf32>
    %c0_9 = arith.constant 0 : index
    %c0_10 = arith.constant 0 : index
    %13 = vector.load %arg3[%c0_9, %c0_10] : memref<32x128xf32, #tpu.memory_space<vmem>>, vector<32x128xf32>
    %14 = arith.truncf %13 : vector<32x128xf32> to vector<32x128xbf16>
    %c2 = arith.constant 2 : index
    %c0_11 = arith.constant 0 : index
    %c0_12 = arith.constant 0 : index
    %15 = vector.load %arg10[%c2, %c0_11, %c0_12] : memref<9x128x16xf32, #tpu.memory_space<vmem>>, vector<1x128x16xf32>
    %16 = vector.shape_cast %15 : vector<1x128x16xf32> to vector<128x16xf32>
    %17 = arith.truncf %16 : vector<128x16xf32> to vector<128x16xbf16>
    %cst_13 = arith.constant dense<0.000000e+00> : vector<32x16xf32>
    %18 = tpu.matmul %14, %17, %cst_13 {dimension_numbers = #tpu.dot_dimension_numbers<[1], [0], [0], [1], [0, 0, 1, 1], [], []>} : vector<32x128xbf16>, vector<128x16xbf16>, vector<32x16xf32> -> vector<32x16xf32>
    %19 = arith.addf %12, %18 : vector<32x16xf32>
    %c0_14 = arith.constant 0 : index
    %c0_15 = arith.constant 0 : index
    %20 = vector.load %arg4[%c0_14, %c0_15] : memref<32x128xf32, #tpu.memory_space<vmem>>, vector<32x128xf32>
    %21 = arith.truncf %20 : vector<32x128xf32> to vector<32x128xbf16>
    %c3 = arith.constant 3 : index
    %c0_16 = arith.constant 0 : index
    %c0_17 = arith.constant 0 : index
    %22 = vector.load %arg10[%c3, %c0_16, %c0_17] : memref<9x128x16xf32, #tpu.memory_space<vmem>>, vector<1x128x16xf32>
    %23 = vector.shape_cast %22 : vector<1x128x16xf32> to vector<128x16xf32>
    %24 = arith.truncf %23 : vector<128x16xf32> to vector<128x16xbf16>
    %cst_18 = arith.constant dense<0.000000e+00> : vector<32x16xf32>
    %25 = tpu.matmul %21, %24, %cst_18 {dimension_numbers = #tpu.dot_dimension_numbers<[1], [0], [0], [1], [0, 0, 1, 1], [], []>} : vector<32x128xbf16>, vector<128x16xbf16>, vector<32x16xf32> -> vector<32x16xf32>
    %26 = arith.addf %19, %25 : vector<32x16xf32>
    %c0_19 = arith.constant 0 : index
    %c0_20 = arith.constant 0 : index
    %27 = vector.load %arg5[%c0_19, %c0_20] : memref<32x128xf32, #tpu.memory_space<vmem>>, vector<32x128xf32>
    %28 = arith.truncf %27 : vector<32x128xf32> to vector<32x128xbf16>
    %c4 = arith.constant 4 : index
    %c0_21 = arith.constant 0 : index
    %c0_22 = arith.constant 0 : index
    %29 = vector.load %arg10[%c4, %c0_21, %c0_22] : memref<9x128x16xf32, #tpu.memory_space<vmem>>, vector<1x128x16xf32>
    %30 = vector.shape_cast %29 : vector<1x128x16xf32> to vector<128x16xf32>
    %31 = arith.truncf %30 : vector<128x16xf32> to vector<128x16xbf16>
    %cst_23 = arith.constant dense<0.000000e+00> : vector<32x16xf32>
    %32 = tpu.matmul %28, %31, %cst_23 {dimension_numbers = #tpu.dot_dimension_numbers<[1], [0], [0], [1], [0, 0, 1, 1], [], []>} : vector<32x128xbf16>, vector<128x16xbf16>, vector<32x16xf32> -> vector<32x16xf32>
    %33 = arith.addf %26, %32 : vector<32x16xf32>
    %c0_24 = arith.constant 0 : index
    %c0_25 = arith.constant 0 : index
    %34 = vector.load %arg6[%c0_24, %c0_25] : memref<32x128xf32, #tpu.memory_space<vmem>>, vector<32x128xf32>
    %35 = arith.truncf %34 : vector<32x128xf32> to vector<32x128xbf16>
    %c5 = arith.constant 5 : index
    %c0_26 = arith.constant 0 : index
    %c0_27 = arith.constant 0 : index
    %36 = vector.load %arg10[%c5, %c0_26, %c0_27] : memref<9x128x16xf32, #tpu.memory_space<vmem>>, vector<1x128x16xf32>
    %37 = vector.shape_cast %36 : vector<1x128x16xf32> to vector<128x16xf32>
    %38 = arith.truncf %37 : vector<128x16xf32> to vector<128x16xbf16>
    %cst_28 = arith.constant dense<0.000000e+00> : vector<32x16xf32>
    %39 = tpu.matmul %35, %38, %cst_28 {dimension_numbers = #tpu.dot_dimension_numbers<[1], [0], [0], [1], [0, 0, 1, 1], [], []>} : vector<32x128xbf16>, vector<128x16xbf16>, vector<32x16xf32> -> vector<32x16xf32>
    %40 = arith.addf %33, %39 : vector<32x16xf32>
    %c0_29 = arith.constant 0 : index
    %c0_30 = arith.constant 0 : index
    %41 = vector.load %arg7[%c0_29, %c0_30] : memref<32x128xf32, #tpu.memory_space<vmem>>, vector<32x128xf32>
    %42 = arith.truncf %41 : vector<32x128xf32> to vector<32x128xbf16>
    %c6 = arith.constant 6 : index
    %c0_31 = arith.constant 0 : index
    %c0_32 = arith.constant 0 : index
    %43 = vector.load %arg10[%c6, %c0_31, %c0_32] : memref<9x128x16xf32, #tpu.memory_space<vmem>>, vector<1x128x16xf32>
    %44 = vector.shape_cast %43 : vector<1x128x16xf32> to vector<128x16xf32>
    %45 = arith.truncf %44 : vector<128x16xf32> to vector<128x16xbf16>
    %cst_33 = arith.constant dense<0.000000e+00> : vector<32x16xf32>
    %46 = tpu.matmul %42, %45, %cst_33 {dimension_numbers = #tpu.dot_dimension_numbers<[1], [0], [0], [1], [0, 0, 1, 1], [], []>} : vector<32x128xbf16>, vector<128x16xbf16>, vector<32x16xf32> -> vector<32x16xf32>
    %47 = arith.addf %40, %46 : vector<32x16xf32>
    %c0_34 = arith.constant 0 : index
    %c0_35 = arith.constant 0 : index
    %48 = vector.load %arg8[%c0_34, %c0_35] : memref<32x128xf32, #tpu.memory_space<vmem>>, vector<32x128xf32>
    %49 = arith.truncf %48 : vector<32x128xf32> to vector<32x128xbf16>
    %c7 = arith.constant 7 : index
    %c0_36 = arith.constant 0 : index
    %c0_37 = arith.constant 0 : index
    %50 = vector.load %arg10[%c7, %c0_36, %c0_37] : memref<9x128x16xf32, #tpu.memory_space<vmem>>, vector<1x128x16xf32>
    %51 = vector.shape_cast %50 : vector<1x128x16xf32> to vector<128x16xf32>
    %52 = arith.truncf %51 : vector<128x16xf32> to vector<128x16xbf16>
    %cst_38 = arith.constant dense<0.000000e+00> : vector<32x16xf32>
    %53 = tpu.matmul %49, %52, %cst_38 {dimension_numbers = #tpu.dot_dimension_numbers<[1], [0], [0], [1], [0, 0, 1, 1], [], []>} : vector<32x128xbf16>, vector<128x16xbf16>, vector<32x16xf32> -> vector<32x16xf32>
    %54 = arith.addf %47, %53 : vector<32x16xf32>
    %c0_39 = arith.constant 0 : index
    %c0_40 = arith.constant 0 : index
    %55 = vector.load %arg9[%c0_39, %c0_40] : memref<32x128xf32, #tpu.memory_space<vmem>>, vector<32x128xf32>
    %56 = arith.truncf %55 : vector<32x128xf32> to vector<32x128xbf16>
    %c8 = arith.constant 8 : index
    %c0_41 = arith.constant 0 : index
    %c0_42 = arith.constant 0 : index
    %57 = vector.load %arg10[%c8, %c0_41, %c0_42] : memref<9x128x16xf32, #tpu.memory_space<vmem>>, vector<1x128x16xf32>
    %58 = vector.shape_cast %57 : vector<1x128x16xf32> to vector<128x16xf32>
    %59 = arith.truncf %58 : vector<128x16xf32> to vector<128x16xbf16>
    %cst_43 = arith.constant dense<0.000000e+00> : vector<32x16xf32>
    %60 = tpu.matmul %56, %59, %cst_43 {dimension_numbers = #tpu.dot_dimension_numbers<[1], [0], [0], [1], [0, 0, 1, 1], [], []>} : vector<32x128xbf16>, vector<128x16xbf16>, vector<32x16xf32> -> vector<32x16xf32>
    %61 = arith.addf %54, %60 : vector<32x16xf32>
    %c0_44 = arith.constant 0 : index
    %c0_45 = arith.constant 0 : index
    %62 = vector.load %arg11[%c0_44, %c0_45] : memref<1x16xf32, #tpu.memory_space<vmem>>, vector<1x16xf32>
    %63 = vector.broadcast %62 : vector<1x16xf32> to vector<32x16xf32>
    %64 = arith.addf %61, %63 : vector<32x16xf32>
    %cst_46 = arith.constant 0.000000e+00 : f32
    %65 = vector.broadcast %cst_46 : f32 to vector<32x16xf32>
    %66 = arith.maximumf %64, %65 : vector<32x16xf32>
    %c0_47 = arith.constant 0 : index
    %c0_48 = arith.constant 0 : index
    %67 = vector.load %arg12[%c0_47, %c0_48] : memref<32x16xf32, #tpu.memory_space<vmem>>, vector<32x16xf32>
    tpu.vector_store %arg12[%c0_47, %c0_48], %66 {strides = array<i32>} : memref<32x16xf32, #tpu.memory_space<vmem>>, vector<32x16xf32>,
    return
  }
  func.func @transform_0(%arg0: i32) -> (i32, i32) {
    %c0_i32 = arith.constant 0 : i32
    %c0_i32_0 = arith.constant 0 : i32
    return %arg0, %c0_i32 : i32, i32
  }
  func.func @transform_1(%arg0: i32) -> (i32, i32) {
    %c0_i32 = arith.constant 0 : i32
    %c0_i32_0 = arith.constant 0 : i32
    return %arg0, %c0_i32 : i32, i32
  }
  func.func @transform_2(%arg0: i32) -> (i32, i32) {
    %c0_i32 = arith.constant 0 : i32
    %c0_i32_0 = arith.constant 0 : i32
    return %arg0, %c0_i32 : i32, i32
  }
  func.func @transform_3(%arg0: i32) -> (i32, i32) {
    %c0_i32 = arith.constant 0 : i32
    %c0_i32_0 = arith.constant 0 : i32
    return %arg0, %c0_i32 : i32, i32
  }
  func.func @transform_4(%arg0: i32) -> (i32, i32) {
    %c0_i32 = arith.constant 0 : i32
    %c0_i32_0 = arith.constant 0 : i32
    return %arg0, %c0_i32 : i32, i32
  }
  func.func @transform_5(%arg0: i32) -> (i32, i32) {
    %c0_i32 = arith.constant 0 : i32
    %c0_i32_0 = arith.constant 0 : i32
    return %arg0, %c0_i32 : i32, i32
  }
  func.func @transform_6(%arg0: i32) -> (i32, i32) {
    %c0_i32 = arith.constant 0 : i32
    %c0_i32_0 = arith.constant 0 : i32
    return %arg0, %c0_i32 : i32, i32
  }
  func.func @transform_7(%arg0: i32) -> (i32, i32) {
    %c0_i32 = arith.constant 0 : i32
    %c0_i32_0 = arith.constant 0 : i32
    return %arg0, %c0_i32 : i32, i32
  }
  func.func @transform_8(%arg0: i32) -> (i32, i32) {
    %c0_i32 = arith.constant 0 : i32
    %c0_i32_0 = arith.constant 0 : i32
    return %arg0, %c0_i32 : i32, i32
  }
  func.func @transform_9(%arg0: i32) -> (i32, i32, i32) {
    %c0_i32 = arith.constant 0 : i32
    %c0_i32_0 = arith.constant 0 : i32
    %c0_i32_1 = arith.constant 0 : i32
    %c0_i32_2 = arith.constant 0 : i32
    return %c0_i32, %c0_i32_0, %c0_i32_1 : i32, i32, i32
  }
  func.func @transform_10(%arg0: i32) -> (i32, i32) {
    %c0_i32 = arith.constant 0 : i32
    %c0_i32_0 = arith.constant 0 : i32
    %c0_i32_1 = arith.constant 0 : i32
    return %c0_i32, %c0_i32_0 : i32, i32
  }
  func.func @transform_11(%arg0: i32) -> (i32, i32) {
    %c0_i32 = arith.constant 0 : i32
    %c0_i32_0 = arith.constant 0 : i32
    return %arg0, %c0_i32 : i32, i32
  }
}

module attributes {stable_mosaic.version = 11 : i64} {
  func.func @_linear_kernel(%arg0: i32, %arg1: memref<32x80xf32, #tpu.memory_space<vmem>>, %arg2: memref<80x32xf32, #tpu.memory_space<vmem>>, %arg3: memref<1x32xf32, #tpu.memory_space<vmem>>, %arg4: memref<32x32xf32, #tpu.memory_space<vmem>>) attributes {dimension_semantics = [#tpu.dimension_semantics<parallel>], iteration_bounds = array<i64: 1>, scalar_prefetch = 0 : i64, scratch_operands = 0 : i64, tpu.core_type = #tpu.core_type<tc>, window_params = [{transform_indices = @transform_0, window_bounds = array<i64: 32, 80>}, {pipeline_mode = #tpu.pipeline_mode<synchronous>, transform_indices = @transform_1, window_bounds = array<i64: 80, 32>}, {pipeline_mode = #tpu.pipeline_mode<synchronous>, transform_indices = @transform_2, window_bounds = array<i64: 1, 32>}, {transform_indices = @transform_3, window_bounds = array<i64: 32, 32>}]} {
    %c0 = arith.constant 0 : index
    %c0_0 = arith.constant 0 : index
    %0 = vector.load %arg1[%c0, %c0_0] : memref<32x80xf32, #tpu.memory_space<vmem>>, vector<32x80xf32>
    %1 = arith.truncf %0 : vector<32x80xf32> to vector<32x80xbf16>
    %c0_1 = arith.constant 0 : index
    %c0_2 = arith.constant 0 : index
    %2 = vector.load %arg2[%c0_1, %c0_2] : memref<80x32xf32, #tpu.memory_space<vmem>>, vector<80x32xf32>
    %3 = arith.truncf %2 : vector<80x32xf32> to vector<80x32xbf16>
    %cst = arith.constant dense<0.000000e+00> : vector<32x32xf32>
    %4 = tpu.matmul %1, %3, %cst {dimension_numbers = #tpu.dot_dimension_numbers<[1], [0], [0], [1], [0, 0, 1, 1], [], []>} : vector<32x80xbf16>, vector<80x32xbf16>, vector<32x32xf32> -> vector<32x32xf32>
    %c0_3 = arith.constant 0 : index
    %c0_4 = arith.constant 0 : index
    %5 = vector.load %arg3[%c0_3, %c0_4] : memref<1x32xf32, #tpu.memory_space<vmem>>, vector<1x32xf32>
    %6 = vector.broadcast %5 : vector<1x32xf32> to vector<32x32xf32>
    %7 = arith.addf %4, %6 : vector<32x32xf32>
    %cst_5 = arith.constant 0.000000e+00 : f32
    %8 = vector.broadcast %cst_5 : f32 to vector<32x32xf32>
    %9 = arith.maximumf %7, %8 : vector<32x32xf32>
    %c0_6 = arith.constant 0 : index
    %c0_7 = arith.constant 0 : index
    %10 = vector.load %arg4[%c0_6, %c0_7] : memref<32x32xf32, #tpu.memory_space<vmem>>, vector<32x32xf32>
    tpu.vector_store %arg4[%c0_6, %c0_7], %9 {strides = array<i32>} : memref<32x32xf32, #tpu.memory_space<vmem>>, vector<32x32xf32>,
    return
  }
  func.func @transform_0(%arg0: i32) -> (i32, i32) {
    %c0_i32 = arith.constant 0 : i32
    %c0_i32_0 = arith.constant 0 : i32
    return %arg0, %c0_i32 : i32, i32
  }
  func.func @transform_1(%arg0: i32) -> (i32, i32) {
    %c0_i32 = arith.constant 0 : i32
    %c0_i32_0 = arith.constant 0 : i32
    %c0_i32_1 = arith.constant 0 : i32
    return %c0_i32, %c0_i32_0 : i32, i32
  }
  func.func @transform_2(%arg0: i32) -> (i32, i32) {
    %c0_i32 = arith.constant 0 : i32
    %c0_i32_0 = arith.constant 0 : i32
    %c0_i32_1 = arith.constant 0 : i32
    return %c0_i32, %c0_i32_0 : i32, i32
  }
  func.func @transform_3(%arg0: i32) -> (i32, i32) {
    %c0_i32 = arith.constant 0 : i32
    %c0_i32_0 = arith.constant 0 : i32
    return %arg0, %c0_i32 : i32, i32
  }
}

module attributes {stable_mosaic.version = 11 : i64} {
  func.func @_linear_kernel(%arg0: i32, %arg1: memref<64x64xf32, #tpu.memory_space<vmem>>, %arg2: memref<64x32xf32, #tpu.memory_space<vmem>>, %arg3: memref<1x32xf32, #tpu.memory_space<vmem>>, %arg4: memref<64x32xf32, #tpu.memory_space<vmem>>) attributes {dimension_semantics = [#tpu.dimension_semantics<parallel>], iteration_bounds = array<i64: 2>, scalar_prefetch = 0 : i64, scratch_operands = 0 : i64, tpu.core_type = #tpu.core_type<tc>, window_params = [{transform_indices = @transform_0, window_bounds = array<i64: 64, 64>}, {pipeline_mode = #tpu.pipeline_mode<synchronous>, transform_indices = @transform_1, window_bounds = array<i64: 64, 32>}, {pipeline_mode = #tpu.pipeline_mode<synchronous>, transform_indices = @transform_2, window_bounds = array<i64: 1, 32>}, {transform_indices = @transform_3, window_bounds = array<i64: 64, 32>}]} {
    %c0 = arith.constant 0 : index
    %c0_0 = arith.constant 0 : index
    %0 = vector.load %arg1[%c0, %c0_0] : memref<64x64xf32, #tpu.memory_space<vmem>>, vector<64x64xf32>
    %1 = arith.truncf %0 : vector<64x64xf32> to vector<64x64xbf16>
    %c0_1 = arith.constant 0 : index
    %c0_2 = arith.constant 0 : index
    %2 = vector.load %arg2[%c0_1, %c0_2] : memref<64x32xf32, #tpu.memory_space<vmem>>, vector<64x32xf32>
    %3 = arith.truncf %2 : vector<64x32xf32> to vector<64x32xbf16>
    %cst = arith.constant dense<0.000000e+00> : vector<64x32xf32>
    %4 = tpu.matmul %1, %3, %cst {dimension_numbers = #tpu.dot_dimension_numbers<[1], [0], [0], [1], [0, 0, 1, 1], [], []>} : vector<64x64xbf16>, vector<64x32xbf16>, vector<64x32xf32> -> vector<64x32xf32>
    %c0_3 = arith.constant 0 : index
    %c0_4 = arith.constant 0 : index
    %5 = vector.load %arg3[%c0_3, %c0_4] : memref<1x32xf32, #tpu.memory_space<vmem>>, vector<1x32xf32>
    %6 = vector.broadcast %5 : vector<1x32xf32> to vector<64x32xf32>
    %7 = arith.addf %4, %6 : vector<64x32xf32>
    %cst_5 = arith.constant 0.000000e+00 : f32
    %8 = vector.broadcast %cst_5 : f32 to vector<64x32xf32>
    %9 = arith.maximumf %7, %8 : vector<64x32xf32>
    %c0_6 = arith.constant 0 : index
    %c0_7 = arith.constant 0 : index
    %10 = vector.load %arg4[%c0_6, %c0_7] : memref<64x32xf32, #tpu.memory_space<vmem>>, vector<64x32xf32>
    tpu.vector_store %arg4[%c0_6, %c0_7], %9 {strides = array<i32>} : memref<64x32xf32, #tpu.memory_space<vmem>>, vector<64x32xf32>,
    return
  }
  func.func @transform_0(%arg0: i32) -> (i32, i32) {
    %c0_i32 = arith.constant 0 : i32
    %c0_i32_0 = arith.constant 0 : i32
    return %arg0, %c0_i32 : i32, i32
  }
  func.func @transform_1(%arg0: i32) -> (i32, i32) {
    %c0_i32 = arith.constant 0 : i32
    %c0_i32_0 = arith.constant 0 : i32
    %c0_i32_1 = arith.constant 0 : i32
    return %c0_i32, %c0_i32_0 : i32, i32
  }
  func.func @transform_2(%arg0: i32) -> (i32, i32) {
    %c0_i32 = arith.constant 0 : i32
    %c0_i32_0 = arith.constant 0 : i32
    %c0_i32_1 = arith.constant 0 : i32
    return %c0_i32, %c0_i32_0 : i32, i32
  }
  func.func @transform_3(%arg0: i32) -> (i32, i32) {
    %c0_i32 = arith.constant 0 : i32
    %c0_i32_0 = arith.constant 0 : i32
    return %arg0, %c0_i32 : i32, i32
  }
}

module attributes {stable_mosaic.version = 11 : i64} {
  func.func @_linear2_kernel(%arg0: i32, %arg1: memref<128x48xf32, #tpu.memory_space<vmem>>, %arg2: memref<48x16xf32, #tpu.memory_space<vmem>>, %arg3: memref<1x16xf32, #tpu.memory_space<vmem>>, %arg4: memref<16x4xf32, #tpu.memory_space<vmem>>, %arg5: memref<1x4xf32, #tpu.memory_space<vmem>>, %arg6: memref<128x4xf32, #tpu.memory_space<vmem>>) attributes {dimension_semantics = [#tpu.dimension_semantics<parallel>], iteration_bounds = array<i64: 4>, scalar_prefetch = 0 : i64, scratch_operands = 0 : i64, tpu.core_type = #tpu.core_type<tc>, window_params = [{transform_indices = @transform_0, window_bounds = array<i64: 128, 48>}, {pipeline_mode = #tpu.pipeline_mode<synchronous>, transform_indices = @transform_1, window_bounds = array<i64: 48, 16>}, {pipeline_mode = #tpu.pipeline_mode<synchronous>, transform_indices = @transform_2, window_bounds = array<i64: 1, 16>}, {pipeline_mode = #tpu.pipeline_mode<synchronous>, transform_indices = @transform_3, window_bounds = array<i64: 16, 4>}, {pipeline_mode = #tpu.pipeline_mode<synchronous>, transform_indices = @transform_4, window_bounds = array<i64: 1, 4>}, {transform_indices = @transform_5, window_bounds = array<i64: 128, 4>}]} {
    %c0 = arith.constant 0 : index
    %c0_0 = arith.constant 0 : index
    %0 = vector.load %arg1[%c0, %c0_0] : memref<128x48xf32, #tpu.memory_space<vmem>>, vector<128x48xf32>
    %1 = arith.truncf %0 : vector<128x48xf32> to vector<128x48xbf16>
    %c0_1 = arith.constant 0 : index
    %c0_2 = arith.constant 0 : index
    %2 = vector.load %arg2[%c0_1, %c0_2] : memref<48x16xf32, #tpu.memory_space<vmem>>, vector<48x16xf32>
    %3 = arith.truncf %2 : vector<48x16xf32> to vector<48x16xbf16>
    %cst = arith.constant dense<0.000000e+00> : vector<128x16xf32>
    %4 = tpu.matmul %1, %3, %cst {dimension_numbers = #tpu.dot_dimension_numbers<[1], [0], [0], [1], [0, 0, 1, 1], [], []>} : vector<128x48xbf16>, vector<48x16xbf16>, vector<128x16xf32> -> vector<128x16xf32>
    %c0_3 = arith.constant 0 : index
    %c0_4 = arith.constant 0 : index
    %5 = vector.load %arg3[%c0_3, %c0_4] : memref<1x16xf32, #tpu.memory_space<vmem>>, vector<1x16xf32>
    %6 = vector.broadcast %5 : vector<1x16xf32> to vector<128x16xf32>
    %7 = arith.addf %4, %6 : vector<128x16xf32>
    %cst_5 = arith.constant 0.000000e+00 : f32
    %8 = vector.broadcast %cst_5 : f32 to vector<128x16xf32>
    %9 = arith.maximumf %7, %8 : vector<128x16xf32>
    %10 = arith.truncf %9 : vector<128x16xf32> to vector<128x16xbf16>
    %c0_6 = arith.constant 0 : index
    %c0_7 = arith.constant 0 : index
    %11 = vector.load %arg4[%c0_6, %c0_7] : memref<16x4xf32, #tpu.memory_space<vmem>>, vector<16x4xf32>
    %12 = arith.truncf %11 : vector<16x4xf32> to vector<16x4xbf16>
    %cst_8 = arith.constant dense<0.000000e+00> : vector<128x4xf32>
    %13 = tpu.matmul %10, %12, %cst_8 {dimension_numbers = #tpu.dot_dimension_numbers<[1], [0], [0], [1], [0, 0, 1, 1], [], []>} : vector<128x16xbf16>, vector<16x4xbf16>, vector<128x4xf32> -> vector<128x4xf32>
    %c0_9 = arith.constant 0 : index
    %c0_10 = arith.constant 0 : index
    %14 = vector.load %arg5[%c0_9, %c0_10] : memref<1x4xf32, #tpu.memory_space<vmem>>, vector<1x4xf32>
    %15 = vector.broadcast %14 : vector<1x4xf32> to vector<128x4xf32>
    %16 = arith.addf %13, %15 : vector<128x4xf32>
    %c0_11 = arith.constant 0 : index
    %c0_12 = arith.constant 0 : index
    %17 = vector.load %arg6[%c0_11, %c0_12] : memref<128x4xf32, #tpu.memory_space<vmem>>, vector<128x4xf32>
    tpu.vector_store %arg6[%c0_11, %c0_12], %16 {strides = array<i32>} : memref<128x4xf32, #tpu.memory_space<vmem>>, vector<128x4xf32>,
    return
  }
  func.func @transform_0(%arg0: i32) -> (i32, i32) {
    %c0_i32 = arith.constant 0 : i32
    %c0_i32_0 = arith.constant 0 : i32
    return %arg0, %c0_i32 : i32, i32
  }
  func.func @transform_1(%arg0: i32) -> (i32, i32) {
    %c0_i32 = arith.constant 0 : i32
    %c0_i32_0 = arith.constant 0 : i32
    %c0_i32_1 = arith.constant 0 : i32
    return %c0_i32, %c0_i32_0 : i32, i32
  }
  func.func @transform_2(%arg0: i32) -> (i32, i32) {
    %c0_i32 = arith.constant 0 : i32
    %c0_i32_0 = arith.constant 0 : i32
    %c0_i32_1 = arith.constant 0 : i32
    return %c0_i32, %c0_i32_0 : i32, i32
  }
  func.func @transform_3(%arg0: i32) -> (i32, i32) {
    %c0_i32 = arith.constant 0 : i32
    %c0_i32_0 = arith.constant 0 : i32
    %c0_i32_1 = arith.constant 0 : i32
    return %c0_i32, %c0_i32_0 : i32, i32
  }
  func.func @transform_4(%arg0: i32) -> (i32, i32) {
    %c0_i32 = arith.constant 0 : i32
    %c0_i32_0 = arith.constant 0 : i32
    %c0_i32_1 = arith.constant 0 : i32
    return %c0_i32, %c0_i32_0 : i32, i32
  }
  func.func @transform_5(%arg0: i32) -> (i32, i32) {
    %c0_i32 = arith.constant 0 : i32
    %c0_i32_0 = arith.constant 0 : i32
    return %arg0, %c0_i32 : i32, i32
  }
}

</mosaic_0001>

<llo_original>
// kernel: swin_deeplab_forward.10
$region0: #{swin_deeplab_forward.10}
  #allocation0 [shape = 'u32[]', space=smem, size = 0x4, offset = 0x4, fixed_abs, tag = 'smem constant byte address 0x4 - core index']
  #allocation1 [shape = 'u32[72,128]{1,0:T(1,128)}', space=vmem, size = 0x9000, scoped, tag = 'internal scratch']
  %s0 = inlined_call_operand.vmem [shape: f32[512,48], index: 0, kind: input, shape index: {}]
  %s1 = inlined_call_operand.vmem [shape: f32[48,16], index: 1, kind: input, shape index: {}]
  %s2 = inlined_call_operand.hbm [shape: f32[1,16], index: 2, kind: input, shape index: {}]
  %s3 = inlined_call_operand.vmem [shape: f32[16,16], index: 3, kind: input, shape index: {}]
  %s4 = inlined_call_operand.hbm [shape: f32[1,16], index: 4, kind: input, shape index: {}]
  %s5 = inlined_call_operand.vmem [shape: f32[512,16], index: 5, kind: output, shape index: {}]
  %s6 = sld [smem:[#allocation0]]
  $region61: #{swin_deeplab_forward.10} parent=0
    _
  %s8 = ssub.s32 1, %s6
  %s9 = scalar_select 0, %s8, %s6
  $region1: #{swin_deeplab_forward.10} parent=0
    #allocation2 [shape = 'u8[512]{0}', space=vmem, size = 0x400, scoped, tag = 'input window, operand 2, single buffered']
    #allocation3 [shape = 's32[2]{0}', space=sflag, size = 0x8, scoped, tag = 'scoped memory for swin_deeplab_forward.10']
    #allocation4 [shape = 'u8[512]{0}', space=vmem, size = 0x400, scoped, tag = 'input window, operand 4, single buffered']
    #allocation5 [shape = 's32[1]{0}', space=sflag, size = 0x4, scoped, tag = 'scoped memory for swin_deeplab_forward.10']
    %10 = vsyncpa [#allocation3], 0
    %11 = vsyncpa [#allocation5], 0
    loop: start=0, step=1, limit=6
    $region2: #{swin_deeplab_forward.10} parent=1 // loop_pre_header
      _
    $region3: #{swin_deeplab_forward.10} parent=1 // loop_header
      %s13 = sphi 0, %s17
      %p14 = scmp.ge.s32.totalorder %s13, 6
      %s23 = sphi 0, %s25
      %s26 = sphi 0, %s23
      %s27 = sphi 0, %s26
      %s43 = sphi 0, %s27
      %s47 = sphi 0, %s47
      %s49 = sphi 0, %s47
      %s50 = sphi 0, %s49
      %s64 = sphi 0, %s50
      %s68 = sphi 0, %s68
      %s70 = sphi 0, %s68
      %s71 = sphi 0, %s70
      %s85 = sphi 0, %s71
      %s89 = sphi 0, %s89
      %s91 = sphi 0, %s89
      %s92 = sphi 0, %s91
      %s106 = sphi 0, %s92
      %s110 = sphi 0, %s110
      %s112 = sphi 0, %s110
      %s113 = sphi 0, %s112
      %s127 = sphi 0, %s113
      %s133 = sphi 0, %s135
      %s136 = sphi 0, %s133
      %s137 = sphi 0, %s136
      %s153 = sphi 0, %s137
    $region4: #{swin_deeplab_forward.10} parent=1 // loop_header_branch
      %16 = sbr.rel (%p14) target = $region8
    $region5: #{swin_deeplab_forward.10} parent=1 // loop_body
      %s18 = ssub.s32 %s13, 1
      %s19 = ssub.s32 %s13, 2
      %s20 = sadd.s32 %s13, 1
      %s21 = ssub.s32 %s13, %s20
      %p22 = scmp.eq.s32.totalorder %s21, 0
      %s24 = sadd.s32 %s23, 1
      %s25 = scalar_select %p22, %s23, %s24
      %p28 = pneg %p22
      %p29 = scmp.eq.s32.totalorder %s13, 3
      %p30 = por %p28, %p29
      %p31 = scmp.ne.s32.totalorder %s23, %s26
      %p32 = scmp.eq.s32.totalorder %s13, 0
      %p33 = por %p31, %p32
      %p34 = scmp.ne.s32.totalorder %s23, %s26
      %p35 = scmp.eq.s32.totalorder %s18, 3
      %p36 = por %p34, %p35
      %p37 = scmp.ne.s32.totalorder %s26, %s27
      %p38 = scmp.eq.s32.totalorder %s18, 0
      %p39 = por %p37, %p38
      %p40 = scmp.ne.s32.totalorder %s26, %s27
      %p41 = scmp.eq.s32.totalorder %s19, 3
      %p42 = por %p40, %p41
      %p44 = scmp.ne.s32.totalorder %s27, %s43
      %p45 = scmp.eq.s32.totalorder %s19, 0
      %p46 = por %p44, %p45
      %s48 = sadd.s32 %s47, 1
      %p51 = scmp.eq.s32.totalorder %s13, 3
      %p52 = scmp.ne.s32.totalorder %s47, %s49
      %p53 = scmp.eq.s32.totalorder %s13, 0
      %p54 = por %p52, %p53
      %p55 = scmp.ne.s32.totalorder %s47, %s49
      %p56 = scmp.eq.s32.totalorder %s18, 3
      %p57 = por %p55, %p56
      %p58 = scmp.ne.s32.totalorder %s49, %s50
      %p59 = scmp.eq.s32.totalorder %s18, 0
      %p60 = por %p58, %p59
      %p61 = scmp.ne.s32.totalorder %s49, %s50
      %p62 = scmp.eq.s32.totalorder %s19, 3
      %p63 = por %p61, %p62
      %p65 = scmp.ne.s32.totalorder %s50, %s64
      %p66 = scmp.eq.s32.totalorder %s19, 0
      %p67 = por %p65, %p66
      %s69 = sadd.s32 %s68, 1
      %p72 = scmp.eq.s32.totalorder %s13, 3
      %p73 = scmp.ne.s32.totalorder %s68, %s70
      %p74 = scmp.eq.s32.totalorder %s13, 0
      %p75 = por %p73, %p74
      %p76 = scmp.ne.s32.totalorder %s68, %s70
      %p77 = scmp.eq.s32.totalorder %s18, 3
      %p78 = por %p76, %p77
      %p79 = scmp.ne.s32.totalorder %s70, %s71
      %p80 = scmp.eq.s32.totalorder %s18, 0
      %p81 = por %p79, %p80
      %p82 = scmp.ne.s32.totalorder %s70, %s71
      %p83 = scmp.eq.s32.totalorder %s19, 3
      %p84 = por %p82, %p83
      %p86 = scmp.ne.s32.totalorder %s71, %s85
      %p87 = scmp.eq.s32.totalorder %s19, 0
      %p88 = por %p86, %p87
      %s90 = sadd.s32 %s89, 1
      %p93 = scmp.eq.s32.totalorder %s13, 3
      %p94 = scmp.ne.s32.totalorder %s89, %s91
      %p95 = scmp.eq.s32.totalorder %s13, 0
      %p96 = por %p94, %p95
      %p97 = scmp.ne.s32.totalorder %s89, %s91
      %p98 = scmp.eq.s32.totalorder %s18, 3
      %p99 = por %p97, %p98
      %p100 = scmp.ne.s32.totalorder %s91, %s92
      %p101 = scmp.eq.s32.totalorder %s18, 0
      %p102 = por %p100, %p101
      %p103 = scmp.ne.s32.totalorder %s91, %s92
      %p104 = scmp.eq.s32.totalorder %s19, 3
      %p105 = por %p103, %p104
      %p107 = scmp.ne.s32.totalorder %s92, %s106
      %p108 = scmp.eq.s32.totalorder %s19, 0
      %p109 = por %p107, %p108
      %s111 = sadd.s32 %s110, 1
      %p114 = scmp.eq.s32.totalorder %s13, 3
      %p115 = scmp.ne.s32.totalorder %s110, %s112
      %p116 = scmp.eq.s32.totalorder %s13, 0
      %p117 = por %p115, %p116
      %p118 = scmp.ne.s32.totalorder %s110, %s112
      %p119 = scmp.eq.s32.totalorder %s18, 3
      %p120 = por %p118, %p119
      %p121 = scmp.ne.s32.totalorder %s112, %s113
      %p122 = scmp.eq.s32.totalorder %s18, 0
      %p123 = por %p121, %p122
      %p124 = scmp.ne.s32.totalorder %s112, %s113
      %p125 = scmp.eq.s32.totalorder %s19, 3
      %p126 = por %p124, %p125
      %p128 = scmp.ne.s32.totalorder %s113, %s127
      %p129 = scmp.eq.s32.totalorder %s19, 0
      %p130 = por %p128, %p129
      %s131 = ssub.s32 %s13, %s20
      %p132 = scmp.eq.s32.totalorder %s131, 0
      %s134 = sadd.s32 %s133, 1
      %s135 = scalar_select %p132, %s133, %s134
      %p138 = pneg %p132
      %p139 = scmp.eq.s32.totalorder %s13, 3
      %p140 = por %p138, %p139
      %p141 = scmp.ne.s32.totalorder %s133, %s136
      %p142 = scmp.eq.s32.totalorder %s13, 0
      %p143 = por %p141, %p142
      %p144 = scmp.ne.s32.totalorder %s133, %s136
      %p145 = scmp.eq.s32.totalorder %s18, 3
      %p146 = por %p144, %p145
      %p147 = scmp.ne.s32.totalorder %s136, %s137
      %p148 = scmp.eq.s32.totalorder %s18, 0
      %p149 = por %p147, %p148
      %p150 = scmp.ne.s32.totalorder %s136, %s137
      %p151 = scmp.eq.s32.totalorder %s19, 3
      %p152 = por %p150, %p151
      %p154 = scmp.ne.s32.totalorder %s137, %s153
      %p155 = scmp.eq.s32.totalorder %s19, 0
      %p156 = por %p154, %p155
      %p157 = scmp.le.s32.totalorder 1, %s13
      %p158 = scmp.lt.s32.totalorder %s13, 5
      %p159 = pnand %p157, %p158
      %p160 = pneg %p159
      // Predicated region
      $region9: #{swin_deeplab_forward.10} parent=5 // pred_check
        _
      $region10: #{swin_deeplab_forward.10} parent=5 // pred_check_branch
        %162 = sbr.rel (%p159) target = $region12
      $region11: #{swin_deeplab_forward.10} parent=5 // pred_region
        %s163 = ssub.s32 %s13, 1
        // Predicated region
        $region13: #{swin_deeplab_forward.10} parent=11 // pred_check
          %p164 = pneg %p60
        $region14: #{swin_deeplab_forward.10} parent=11 // pred_check_branch
          %166 = sbr.rel (%p164) target = $region16
        $region15: #{swin_deeplab_forward.10} parent=11 // pred_region
          _
        $region16: #{swin_deeplab_forward.10} parent=11 // pred_fallthru
          _
        // Predicated region
        $region17: #{swin_deeplab_forward.10} parent=11 // pred_check
          %p167 = pneg %p81
        $region18: #{swin_deeplab_forward.10} parent=11 // pred_check_branch
          %169 = sbr.rel (%p167) target = $region20
        $region19: #{swin_deeplab_forward.10} parent=11 // pred_region
          %171 = vsyncadd [#allocation3], 0
          %s173 = sshll.u32 %s2, 4
          %s174 = int_to_ptr.hbm [resolvable:$true] %s173
          %s175 = sshll.u32 [#allocation2], 4
          %s176 = int_to_ptr.vmem [resolvable:$true] %s175
          %178 = dma.hbm_to_vmem [thread:$0]  %s174, 16, %s176, [#allocation3]
        $region20: #{swin_deeplab_forward.10} parent=11 // pred_fallthru
          _
        // Predicated region
        $region21: #{swin_deeplab_forward.10} parent=11 // pred_check
          %p179 = pneg %p102
        $region22: #{swin_deeplab_forward.10} parent=11 // pred_check_branch
          %181 = sbr.rel (%p179) target = $region24
        $region23: #{swin_deeplab_forward.10} parent=11 // pred_region
          _
        $region24: #{swin_deeplab_forward.10} parent=11 // pred_fallthru
          _
        // Predicated region
        $region25: #{swin_deeplab_forward.10} parent=11 // pred_check
          %p182 = pneg %p123
        $region26: #{swin_deeplab_forward.10} parent=11 // pred_check_branch
          %184 = sbr.rel (%p182) target = $region28
        $region27: #{swin_deeplab_forward.10} parent=11 // pred_region
          %186 = vsyncadd [#allocation5], 0
          %s188 = sshll.u32 %s4, 4
          %s189 = int_to_ptr.hbm [resolvable:$true] %s188
          %s190 = sshll.u32 [#allocation4], 4
          %s191 = int_to_ptr.vmem [resolvable:$true] %s190
          %193 = dma.hbm_to_vmem [thread:$0]  %s189, 16, %s191, [#allocation5]
        $region28: #{swin_deeplab_forward.10} parent=11 // pred_fallthru
          _
      $region12: #{swin_deeplab_forward.10} parent=5 // pred_fallthru
        _
      %p194 = scmp.lt.s32.totalorder %s13, 4
      // Predicated region
      $region29: #{swin_deeplab_forward.10} parent=5 // pred_check
        %p195 = pneg %p194
      $region30: #{swin_deeplab_forward.10} parent=5 // pred_check_branch
        %197 = sbr.rel (%p195) target = $region32
      $region31: #{swin_deeplab_forward.10} parent=5 // pred_region
        // Predicated region
        $region33: #{swin_deeplab_forward.10} parent=31 // pred_check
          %p198 = pneg %p33
        $region34: #{swin_deeplab_forward.10} parent=31 // pred_check_branch
          %200 = sbr.rel (%p198) target = $region36
        $region35: #{swin_deeplab_forward.10} parent=31 // pred_region
          %s201 = smul.u32 16, %s13
          %p202 = scmp.lt.s32.totalorder %s201, 63
          %s203 = scalar_select %p202, %s201, 63
          %s204 = smul.addr %s203, 8
          %s205 = scalar_lea.vmem %s0, %s204
          %s206 = smul.u32 16, %s13
        $region36: #{swin_deeplab_forward.10} parent=31 // pred_fallthru
          _
      $region32: #{swin_deeplab_forward.10} parent=5 // pred_fallthru
        _
      %p207 = scmp.le.s32.totalorder 1, %s13
      %p208 = scmp.lt.s32.totalorder %s13, 5
      %p209 = pnand %p207, %p208
      %p210 = pneg %p209
      // Predicated region
      $region37: #{swin_deeplab_forward.10} parent=5 // pred_check
        _
      $region38: #{swin_deeplab_forward.10} parent=5 // pred_check_branch
        %212 = sbr.rel (%p209) target = $region40
      $region39: #{swin_deeplab_forward.10} parent=5 // pred_region
        %s213 = ssub.s32 %s13, 1
        // Predicated region
        $region41: #{swin_deeplab_forward.10} parent=39 // pred_check
          %p214 = pneg %p81
        $region42: #{swin_deeplab_forward.10} parent=39 // pred_check_branch
          %216 = sbr.rel (%p214) target = $region44
        $region43: #{swin_deeplab_forward.10} parent=39 // pred_region
          %218 = dma.done [#allocation3], 16
        $region44: #{swin_deeplab_forward.10} parent=39 // pred_fallthru
          _
        // Predicated region
        $region45: #{swin_deeplab_forward.10} parent=39 // pred_check
          %p219 = pneg %p123
        $region46: #{swin_deeplab_forward.10} parent=39 // pred_check_branch
          %221 = sbr.rel (%p219) target = $region48
        $region47: #{swin_deeplab_forward.10} parent=39 // pred_region
          %223 = dma.done [#allocation5], 16
        $region48: #{swin_deeplab_forward.10} parent=39 // pred_fallthru
          _
        %s224 = smul.u32 16, %s18
        %p225 = scmp.lt.s32.totalorder %s224, 63
        %s226 = scalar_select %p225, %s224, 63
        %s227 = smul.addr %s226, 8
        %s228 = scalar_lea.vmem %s0, %s227
        %p229 = pneg %p39
        %p230 = pneg %p36
        %p231 = pneg %p60
        %p232 = pneg %p57
        %p233 = pneg %p81
        %p234 = pneg %p78
        %p235 = pneg %p102
        %p236 = pneg %p99
        %p237 = pneg %p123
        %p238 = pneg %p120
        %p239 = pneg %p149
        %p240 = pneg %p146
        %s241 = smul.u32 16, %s18
        %p242 = scmp.lt.s32.totalorder %s241, 63
        %s243 = scalar_select %p242, %s241, 63
        %s244 = smul.addr %s243, 8
        %s245 = scalar_lea.vmem %s5, %s244
        %s246 = smul.u32 16, %s18
        %p247 = scmp.lt.s32.totalorder %s246, 63
        %s248 = scalar_select %p247, %s246, 63
        %s249 = smul.addr %s248, 8
        %s250 = scalar_lea.vmem %s0, %s249
        %s251 = smul.u32 16, %s18
        %s252 = smul.u32 16, %s18
        %p253 = scmp.lt.s32.totalorder %s252, 63
        %s254 = scalar_select %p253, %s252, 63
        %s255 = smul.addr %s254, 8
        %s256 = scalar_lea.vmem %s5, %s255
        %s257 = smul.u32 16, %s18
        %v259 = vld [vmem:[%s250] sm:$0xff]
        %v260 = vld [vmem:[%s250 + $0x8] sm:$0xff]
        %v261 = vld [vmem:[%s250 + $0x10] sm:$0xff]
        %v262 = vld [vmem:[%s250 + $0x18] sm:$0xff]
        %v263 = vld [vmem:[%s250 + $0x20] sm:$0xff]
        %v264 = vld [vmem:[%s250 + $0x28] sm:$0xff]
        %v265 = vld [vmem:[%s250 + $0x30] sm:$0xff]
        %v266 = vld [vmem:[%s250 + $0x38] sm:$0xff]
        %v267 = vld [vmem:[%s250 + $0x40] sm:$0xff]
        %v268 = vld [vmem:[%s250 + $0x48] sm:$0xff]
        %v269 = vld [vmem:[%s250 + $0x50] sm:$0xff]
        %v270 = vld [vmem:[%s250 + $0x58] sm:$0xff]
        %v271 = vld [vmem:[%s250 + $0x60] sm:$0xff]
        %v272 = vld [vmem:[%s250 + $0x68] sm:$0xff]
        %v273 = vld [vmem:[%s250 + $0x70] sm:$0xff]
        %v274 = vld [vmem:[%s250 + $0x78] sm:$0xff]
        %v275 = vpack.c.bf16 %v260, %v259
        %v276 = vpack.c.bf16 %v262, %v261
        %v277 = vpack.c.bf16 %v264, %v263
        %v278 = vpack.c.bf16 %v266, %v265
        %v279 = vpack.c.bf16 %v268, %v267
        %v280 = vpack.c.bf16 %v270, %v269
        %v281 = vpack.c.bf16 %v272, %v271
        %v282 = vpack.c.bf16 %v274, %v273
        %v283 = vld [vmem:[%s1] sm:$0xff]
        %v284 = vld [vmem:[%s1 + $0x8] sm:$0xff]
        %v285 = vld [vmem:[%s1 + $0x10] sm:$0xff]
        %v286 = vld [vmem:[%s1 + $0x18] sm:$0xff]
        %v287 = vld [vmem:[%s1 + $0x20] sm:$0xff]
        %v288 = vld [vmem:[%s1 + $0x28] sm:$0xff]
        %v289 = vpack.c.bf16 %v284, %v283
        %v290 = vpack.c.bf16 %v286, %v285
        %v291 = vpack.c.bf16 %v288, %v287
        %v292 = vld [vmem:[#allocation2] sm:$0x1]
        %v294 = vperm.slane %v292, 0
        %vm296 = vcmask 392192
        %v298 = vsel %vm296, %v275, 0
        %v301 = vsel %vm296, %v276, 0
        %v304 = vsel %vm296, %v277, 0
        %v307 = vsel %vm296, %v278, 0
        %v310 = vsel %vm296, %v279, 0
        %v313 = vsel %vm296, %v280, 0
        %v316 = vsel %vm296, %v281, 0
        %v319 = vsel %vm296, %v282, 0
        %321 = vmatpush.bf16.msra.mxu0 0
        %322 = vmatpush.bf16.msra.mxu0 0
        %323 = vmatpush.bf16.msra.mxu0 0
        %324 = vmatpush.bf16.msra.mxu0 0
        %325 = vmatpush.bf16.msra.mxu0 0
        %326 = vmatpush.bf16.msra.mxu0 %v291
        %327 = vmatpush.bf16.msra.mxu0 %v290
        %328 = vmatpush.bf16.msra.mxu0 %v289
        %329 = vmatmul.bf16.gmra.mxu0 %v298
        %v330 = vpop.f32.mrf.mxu0
        %v331 = vadd.f32 %v294, %v330
        %v332 = vpop.f32.mrf.mxu0
        %v333 = vadd.f32 %v294, %v332
        %334 = vmatmul.bf16.gmra.mxu0 %v301
        %v335 = vpop.f32.mrf.mxu0
        %v336 = vadd.f32 %v294, %v335
        %v337 = vpop.f32.mrf.mxu0
        %v338 = vadd.f32 %v294, %v337
        %339 = vmatmul.bf16.gmra.mxu0 %v304
        %v340 = vpop.f32.mrf.mxu0
        %v341 = vadd.f32 %v294, %v340
        %v342 = vpop.f32.mrf.mxu0
        %v343 = vadd.f32 %v294, %v342
        %344 = vmatmul.bf16.gmra.mxu0 %v307
        %v345 = vpop.f32.mrf.mxu0
        %v346 = vadd.f32 %v294, %v345
        %v347 = vpop.f32.mrf.mxu0
        %v348 = vadd.f32 %v294, %v347
        %349 = vmatmul.bf16.gmra.mxu0 %v310
        %v350 = vpop.f32.mrf.mxu0
        %v351 = vadd.f32 %v294, %v350
        %v352 = vpop.f32.mrf.mxu0
        %v353 = vadd.f32 %v294, %v352
        %354 = vmatmul.bf16.gmra.mxu0 %v313
        %v355 = vpop.f32.mrf.mxu0
        %v356 = vadd.f32 %v294, %v355
        %v357 = vpop.f32.mrf.mxu0
        %v358 = vadd.f32 %v294, %v357
        %359 = vmatmul.bf16.gmra.mxu0 %v316
        %v360 = vpop.f32.mrf.mxu0
        %v361 = vadd.f32 %v294, %v360
        %v362 = vpop.f32.mrf.mxu0
        %v363 = vadd.f32 %v294, %v362
        %364 = vmatmul.bf16.gmra.mxu0 %v319
        %v365 = vpop.f32.mrf.mxu0
        %v366 = vadd.f32 %v294, %v365
        %v367 = vpop.f32.mrf.mxu0
        %v368 = vadd.f32 %v294, %v367
        %369 = vdwg.mxu0
        %v370 = vpack.c.bf16 %v333, %v331
        %v371 = vpack.c.bf16 %v338, %v336
        %v372 = vpack.c.bf16 %v343, %v341
        %v373 = vpack.c.bf16 %v348, %v346
        %v374 = vpack.c.bf16 %v353, %v351
        %v375 = vpack.c.bf16 %v358, %v356
        %v376 = vpack.c.bf16 %v363, %v361
        %v377 = vpack.c.bf16 %v368, %v366
        %v378 = vld [vmem:[%s3] sm:$0xff]
        %v379 = vld [vmem:[%s3 + $0x8] sm:$0xff]
        %v380 = vpack.c.bf16 %v379, %v378
        %v381 = vld [vmem:[#allocation4] sm:$0x1]
        %v383 = vperm.slane %v381, 0
        %vm385 = vcmask 130048
        %v387 = vsel %vm385, %v370, 0
        %v390 = vsel %vm385, %v371, 0
        %v393 = vsel %vm385, %v372, 0
        %v396 = vsel %vm385, %v373, 0
        %v399 = vsel %vm385, %v374, 0
        %v402 = vsel %vm385, %v375, 0
        %v405 = vsel %vm385, %v376, 0
        %v408 = vsel %vm385, %v377, 0
        %410 = vmatpush.bf16.msra.mxu0 0
        %411 = vmatpush.bf16.msra.mxu0 0
        %412 = vmatpush.bf16.msra.mxu0 0
        %413 = vmatpush.bf16.msra.mxu0 0
        %414 = vmatpush.bf16.msra.mxu0 0
        %415 = vmatpush.bf16.msra.mxu0 0
        %416 = vmatpush.bf16.msra.mxu0 0
        %417 = vmatpush.bf16.msra.mxu0 %v380
        %418 = vmatmul.bf16.gmra.mxu0 %v387
        %v419 = vpop.f32.mrf.mxu0
        %v420 = vadd.f32 %v383, %v419
        %v421 = vpop.f32.mrf.mxu0
        %v422 = vadd.f32 %v383, %v421
        %423 = vmatmul.bf16.gmra.mxu0 %v390
        %v424 = vpop.f32.mrf.mxu0
        %v425 = vadd.f32 %v383, %v424
        %v426 = vpop.f32.mrf.mxu0
        %v427 = vadd.f32 %v383, %v426
        %428 = vmatmul.bf16.gmra.mxu0 %v393
        %v429 = vpop.f32.mrf.mxu0
        %v430 = vadd.f32 %v383, %v429
        %v431 = vpop.f32.mrf.mxu0
        %v432 = vadd.f32 %v383, %v431
        %433 = vmatmul.bf16.gmra.mxu0 %v396
        %v434 = vpop.f32.mrf.mxu0
        %v435 = vadd.f32 %v383, %v434
        %v436 = vpop.f32.mrf.mxu0
        %v437 = vadd.f32 %v383, %v436
        %438 = vmatmul.bf16.gmra.mxu0 %v399
        %v439 = vpop.f32.mrf.mxu0
        %v440 = vadd.f32 %v383, %v439
        %v441 = vpop.f32.mrf.mxu0
        %v442 = vadd.f32 %v383, %v441
        %443 = vmatmul.bf16.gmra.mxu0 %v402
        %v444 = vpop.f32.mrf.mxu0
        %v445 = vadd.f32 %v383, %v444
        %v446 = vpop.f32.mrf.mxu0
        %v447 = vadd.f32 %v383, %v446
        %448 = vmatmul.bf16.gmra.mxu0 %v405
        %v449 = vpop.f32.mrf.mxu0
        %v450 = vadd.f32 %v383, %v449
        %v451 = vpop.f32.mrf.mxu0
        %v452 = vadd.f32 %v383, %v451
        %453 = vmatmul.bf16.gmra.mxu0 %v408
        %v454 = vpop.f32.mrf.mxu0
        %v455 = vadd.f32 %v383, %v454
        %v456 = vpop.f32.mrf.mxu0
        %v457 = vadd.f32 %v383, %v456
        %458 = vdwg.mxu0
        %v459 = vmax.f32 %v420, 0.0
        %v460 = vmax.f32 %v422, 0.0
        %v461 = vmax.f32 %v425, 0.0
        %v462 = vmax.f32 %v427, 0.0
        %v463 = vmax.f32 %v430, 0.0
        %v464 = vmax.f32 %v432, 0.0
        %v465 = vmax.f32 %v435, 0.0
        %v466 = vmax.f32 %v437, 0.0
        %v467 = vmax.f32 %v440, 0.0
        %v468 = vmax.f32 %v442, 0.0
        %v469 = vmax.f32 %v445, 0.0
        %v470 = vmax.f32 %v447, 0.0
        %v471 = vmax.f32 %v450, 0.0
        %v472 = vmax.f32 %v452, 0.0
        %v473 = vmax.f32 %v455, 0.0
        %v474 = vmax.f32 %v457, 0.0
        %v475 = vadd.f32 %v331, %v459
        %v476 = vadd.f32 %v333, %v460
        %v477 = vadd.f32 %v336, %v461
        %v478 = vadd.f32 %v338, %v462
        %v479 = vadd.f32 %v341, %v463
        %v480 = vadd.f32 %v343, %v464
        %v481 = vadd.f32 %v346, %v465
        %v482 = vadd.f32 %v348, %v466
        %v483 = vadd.f32 %v351, %v467
        %v484 = vadd.f32 %v353, %v468
        %v485 = vadd.f32 %v356, %v469
        %v486 = vadd.f32 %v358, %v470
        %v487 = vadd.f32 %v361, %v471
        %v488 = vadd.f32 %v363, %v472
        %v489 = vadd.f32 %v366, %v473
        %v490 = vadd.f32 %v368, %v474
        %491 = vst.msk [vmem:[%s256] sm:$0xff] %vm385, %v475
        %492 = vst.msk [vmem:[%s256 + $0x8] sm:$0xff] %vm385, %v476
        %493 = vst.msk [vmem:[%s256 + $0x10] sm:$0xff] %vm385, %v477
        %494 = vst.msk [vmem:[%s256 + $0x18] sm:$0xff] %vm385, %v478
        %495 = vst.msk [vmem:[%s256 + $0x20] sm:$0xff] %vm385, %v479
        %496 = vst.msk [vmem:[%s256 + $0x28] sm:$0xff] %vm385, %v480
        %497 = vst.msk [vmem:[%s256 + $0x30] sm:$0xff] %vm385, %v481
        %498 = vst.msk [vmem:[%s256 + $0x38] sm:$0xff] %vm385, %v482
        %499 = vst.msk [vmem:[%s256 + $0x40] sm:$0xff] %vm385, %v483
        %500 = vst.msk [vmem:[%s256 + $0x48] sm:$0xff] %vm385, %v484
        %501 = vst.msk [vmem:[%s256 + $0x50] sm:$0xff] %vm385, %v485
        %502 = vst.msk [vmem:[%s256 + $0x58] sm:$0xff] %vm385, %v486
        %503 = vst.msk [vmem:[%s256 + $0x60] sm:$0xff] %vm385, %v487
        %504 = vst.msk [vmem:[%s256 + $0x68] sm:$0xff] %vm385, %v488
        %505 = vst.msk [vmem:[%s256 + $0x70] sm:$0xff] %vm385, %v489
        %506 = vst.msk [vmem:[%s256 + $0x78] sm:$0xff] %vm385, %v490
        %s507 = smul.u32 16, %s18
        %p508 = scmp.lt.s32.totalorder %s507, 63
        %s509 = scalar_select %p508, %s507, 63
        %s510 = smul.addr %s509, 8
        %s511 = scalar_lea.vmem %s5, %s510
        // Predicated region
        $region49: #{swin_deeplab_forward.10} parent=39 // pred_check
          %p512 = pneg %p146
        $region50: #{swin_deeplab_forward.10} parent=39 // pred_check_branch
          %514 = sbr.rel (%p512) target = $region52
        $region51: #{swin_deeplab_forward.10} parent=39 // pred_region
          %s515 = smul.u32 16, %s18
        $region52: #{swin_deeplab_forward.10} parent=39 // pred_fallthru
          _
      $region40: #{swin_deeplab_forward.10} parent=5 // pred_fallthru
        _
      %p516 = scmp.le.s32.totalorder 2, %s13
      // Predicated region
      $region53: #{swin_deeplab_forward.10} parent=5 // pred_check
        %p517 = pneg %p516
      $region54: #{swin_deeplab_forward.10} parent=5 // pred_check_branch
        %519 = sbr.rel (%p517) target = $region56
      $region55: #{swin_deeplab_forward.10} parent=5 // pred_region
        %s520 = ssub.s32 %s13, 2
        // Predicated region
        $region57: #{swin_deeplab_forward.10} parent=55 // pred_check
          %p521 = pneg %p152
        $region58: #{swin_deeplab_forward.10} parent=55 // pred_check_branch
          %523 = sbr.rel (%p521) target = $region60
        $region59: #{swin_deeplab_forward.10} parent=55 // pred_region
          %s524 = smul.u32 16, %s19
          %p525 = scmp.lt.s32.totalorder %s524, 63
          %s526 = scalar_select %p525, %s524, 63
          %s527 = smul.addr %s526, 8
          %s528 = scalar_lea.vmem %s5, %s527
        $region60: #{swin_deeplab_forward.10} parent=55 // pred_fallthru
          _
      $region56: #{swin_deeplab_forward.10} parent=5 // pred_fallthru
        _
    $region6: #{swin_deeplab_forward.10} parent=1 // loop_footer
      %s17 = sadd.s32 1, %s13
    $region7: #{swin_deeplab_forward.10} parent=1 // loop_footer_branch
      %12 = sbr.rel target = $region3
    $region8: #{swin_deeplab_forward.10} parent=1 // loop_exit
      _
    %529 = vsyncpa [#allocation3], 1
    %s530 = scalar_lea.sflag [#allocation3], 1
    %531 = vsyncpa %s530, 1
    %532 = vsyncpa [#allocation5], 1

// kernel: swin_deeplab_forward.11
$region0: #{swin_deeplab_forward.11}
  #allocation0 [shape = 'u32[]', space=smem, size = 0x4, offset = 0x4, fixed_abs, tag = 'smem constant byte address 0x4 - core index']
  #allocation1 [shape = 'u32[72,128]{1,0:T(1,128)}', space=vmem, size = 0x9000, scoped, tag = 'internal scratch']
  %s0 = inlined_call_operand.vmem [shape: f32[128,64], index: 0, kind: input, shape index: {}]
  %s1 = inlined_call_operand.vmem [shape: f32[64,32], index: 1, kind: input, shape index: {}]
  %s2 = inlined_call_operand.hbm [shape: f32[1,32], index: 2, kind: input, shape index: {}]
  %s3 = inlined_call_operand.vmem [shape: f32[32,32], index: 3, kind: input, shape index: {}]
  %s4 = inlined_call_operand.hbm [shape: f32[1,32], index: 4, kind: input, shape index: {}]
  %s5 = inlined_call_operand.vmem [shape: f32[128,32], index: 5, kind: output, shape index: {}]
  %s6 = sld [smem:[#allocation0]]
  $region61: #{swin_deeplab_forward.11} parent=0
    _
  %s8 = ssub.s32 1, %s6
  %s9 = scalar_select 0, %s8, %s6
  $region1: #{swin_deeplab_forward.11} parent=0
    #allocation2 [shape = 'u8[512]{0}', space=vmem, size = 0x400, scoped, tag = 'input window, operand 2, single buffered']
    #allocation3 [shape = 's32[2]{0}', space=sflag, size = 0x8, scoped, tag = 'scoped memory for swin_deeplab_forward.11']
    #allocation4 [shape = 'u8[512]{0}', space=vmem, size = 0x400, scoped, tag = 'input window, operand 4, single buffered']
    #allocation5 [shape = 's32[1]{0}', space=sflag, size = 0x4, scoped, tag = 'scoped memory for swin_deeplab_forward.11']
    %10 = vsyncpa [#allocation3], 0
    %11 = vsyncpa [#allocation5], 0
    loop: start=0, step=1, limit=4
    $region2: #{swin_deeplab_forward.11} parent=1 // loop_pre_header
      _
    $region3: #{swin_deeplab_forward.11} parent=1 // loop_header
      %s13 = sphi 0, %s17
      %p14 = scmp.ge.s32.totalorder %s13, 4
      %s23 = sphi 0, %s25
      %s26 = sphi 0, %s23
      %s27 = sphi 0, %s26
      %s43 = sphi 0, %s27
      %s47 = sphi 0, %s47
      %s49 = sphi 0, %s47
      %s50 = sphi 0, %s49
      %s64 = sphi 0, %s50
      %s68 = sphi 0, %s68
      %s70 = sphi 0, %s68
      %s71 = sphi 0, %s70
      %s85 = sphi 0, %s71
      %s89 = sphi 0, %s89
      %s91 = sphi 0, %s89
      %s92 = sphi 0, %s91
      %s106 = sphi 0, %s92
      %s110 = sphi 0, %s110
      %s112 = sphi 0, %s110
      %s113 = sphi 0, %s112
      %s127 = sphi 0, %s113
      %s133 = sphi 0, %s135
      %s136 = sphi 0, %s133
      %s137 = sphi 0, %s136
      %s153 = sphi 0, %s137
    $region4: #{swin_deeplab_forward.11} parent=1 // loop_header_branch
      %16 = sbr.rel (%p14) target = $region8
    $region5: #{swin_deeplab_forward.11} parent=1 // loop_body
      %s18 = ssub.s32 %s13, 1
      %s19 = ssub.s32 %s13, 2
      %s20 = sadd.s32 %s13, 1
      %s21 = ssub.s32 %s13, %s20
      %p22 = scmp.eq.s32.totalorder %s21, 0
      %s24 = sadd.s32 %s23, 1
      %s25 = scalar_select %p22, %s23, %s24
      %p28 = pneg %p22
      %p29 = scmp.eq.s32.totalorder %s13, 1
      %p30 = por %p28, %p29
      %p31 = scmp.ne.s32.totalorder %s23, %s26
      %p32 = scmp.eq.s32.totalorder %s13, 0
      %p33 = por %p31, %p32
      %p34 = scmp.ne.s32.totalorder %s23, %s26
      %p35 = scmp.eq.s32.totalorder %s18, 1
      %p36 = por %p34, %p35
      %p37 = scmp.ne.s32.totalorder %s26, %s27
      %p38 = scmp.eq.s32.totalorder %s18, 0
      %p39 = por %p37, %p38
      %p40 = scmp.ne.s32.totalorder %s26, %s27
      %p41 = scmp.eq.s32.totalorder %s19, 1
      %p42 = por %p40, %p41
      %p44 = scmp.ne.s32.totalorder %s27, %s43
      %p45 = scmp.eq.s32.totalorder %s19, 0
      %p46 = por %p44, %p45
      %s48 = sadd.s32 %s47, 1
      %p51 = scmp.eq.s32.totalorder %s13, 1
      %p52 = scmp.ne.s32.totalorder %s47, %s49
      %p53 = scmp.eq.s32.totalorder %s13, 0
      %p54 = por %p52, %p53
      %p55 = scmp.ne.s32.totalorder %s47, %s49
      %p56 = scmp.eq.s32.totalorder %s18, 1
      %p57 = por %p55, %p56
      %p58 = scmp.ne.s32.totalorder %s49, %s50
      %p59 = scmp.eq.s32.totalorder %s18, 0
      %p60 = por %p58, %p59
      %p61 = scmp.ne.s32.totalorder %s49, %s50
      %p62 = scmp.eq.s32.totalorder %s19, 1
      %p63 = por %p61, %p62
      %p65 = scmp.ne.s32.totalorder %s50, %s64
      %p66 = scmp.eq.s32.totalorder %s19, 0
      %p67 = por %p65, %p66
      %s69 = sadd.s32 %s68, 1
      %p72 = scmp.eq.s32.totalorder %s13, 1
      %p73 = scmp.ne.s32.totalorder %s68, %s70
      %p74 = scmp.eq.s32.totalorder %s13, 0
      %p75 = por %p73, %p74
      %p76 = scmp.ne.s32.totalorder %s68, %s70
      %p77 = scmp.eq.s32.totalorder %s18, 1
      %p78 = por %p76, %p77
      %p79 = scmp.ne.s32.totalorder %s70, %s71
      %p80 = scmp.eq.s32.totalorder %s18, 0
      %p81 = por %p79, %p80
      %p82 = scmp.ne.s32.totalorder %s70, %s71
      %p83 = scmp.eq.s32.totalorder %s19, 1
      %p84 = por %p82, %p83
      %p86 = scmp.ne.s32.totalorder %s71, %s85
      %p87 = scmp.eq.s32.totalorder %s19, 0
      %p88 = por %p86, %p87
      %s90 = sadd.s32 %s89, 1
      %p93 = scmp.eq.s32.totalorder %s13, 1
      %p94 = scmp.ne.s32.totalorder %s89, %s91
      %p95 = scmp.eq.s32.totalorder %s13, 0
      %p96 = por %p94, %p95
      %p97 = scmp.ne.s32.totalorder %s89, %s91
      %p98 = scmp.eq.s32.totalorder %s18, 1
      %p99 = por %p97, %p98
      %p100 = scmp.ne.s32.totalorder %s91, %s92
      %p101 = scmp.eq.s32.totalorder %s18, 0
      %p102 = por %p100, %p101
      %p103 = scmp.ne.s32.totalorder %s91, %s92
      %p104 = scmp.eq.s32.totalorder %s19, 1
      %p105 = por %p103, %p104
      %p107 = scmp.ne.s32.totalorder %s92, %s106
      %p108 = scmp.eq.s32.totalorder %s19, 0
      %p109 = por %p107, %p108
      %s111 = sadd.s32 %s110, 1
      %p114 = scmp.eq.s32.totalorder %s13, 1
      %p115 = scmp.ne.s32.totalorder %s110, %s112
      %p116 = scmp.eq.s32.totalorder %s13, 0
      %p117 = por %p115, %p116
      %p118 = scmp.ne.s32.totalorder %s110, %s112
      %p119 = scmp.eq.s32.totalorder %s18, 1
      %p120 = por %p118, %p119
      %p121 = scmp.ne.s32.totalorder %s112, %s113
      %p122 = scmp.eq.s32.totalorder %s18, 0
      %p123 = por %p121, %p122
      %p124 = scmp.ne.s32.totalorder %s112, %s113
      %p125 = scmp.eq.s32.totalorder %s19, 1
      %p126 = por %p124, %p125
      %p128 = scmp.ne.s32.totalorder %s113, %s127
      %p129 = scmp.eq.s32.totalorder %s19, 0
      %p130 = por %p128, %p129
      %s131 = ssub.s32 %s13, %s20
      %p132 = scmp.eq.s32.totalorder %s131, 0
      %s134 = sadd.s32 %s133, 1
      %s135 = scalar_select %p132, %s133, %s134
      %p138 = pneg %p132
      %p139 = scmp.eq.s32.totalorder %s13, 1
      %p140 = por %p138, %p139
      %p141 = scmp.ne.s32.totalorder %s133, %s136
      %p142 = scmp.eq.s32.totalorder %s13, 0
      %p143 = por %p141, %p142
      %p144 = scmp.ne.s32.totalorder %s133, %s136
      %p145 = scmp.eq.s32.totalorder %s18, 1
      %p146 = por %p144, %p145
      %p147 = scmp.ne.s32.totalorder %s136, %s137
      %p148 = scmp.eq.s32.totalorder %s18, 0
      %p149 = por %p147, %p148
      %p150 = scmp.ne.s32.totalorder %s136, %s137
      %p151 = scmp.eq.s32.totalorder %s19, 1
      %p152 = por %p150, %p151
      %p154 = scmp.ne.s32.totalorder %s137, %s153
      %p155 = scmp.eq.s32.totalorder %s19, 0
      %p156 = por %p154, %p155
      %p157 = scmp.le.s32.totalorder 1, %s13
      %p158 = scmp.lt.s32.totalorder %s13, 3
      %p159 = pnand %p157, %p158
      %p160 = pneg %p159
      // Predicated region
      $region9: #{swin_deeplab_forward.11} parent=5 // pred_check
        _
      $region10: #{swin_deeplab_forward.11} parent=5 // pred_check_branch
        %162 = sbr.rel (%p159) target = $region12
      $region11: #{swin_deeplab_forward.11} parent=5 // pred_region
        %s163 = ssub.s32 %s13, 1
        // Predicated region
        $region13: #{swin_deeplab_forward.11} parent=11 // pred_check
          %p164 = pneg %p60
        $region14: #{swin_deeplab_forward.11} parent=11 // pred_check_branch
          %166 = sbr.rel (%p164) target = $region16
        $region15: #{swin_deeplab_forward.11} parent=11 // pred_region
          _
        $region16: #{swin_deeplab_forward.11} parent=11 // pred_fallthru
          _
        // Predicated region
        $region17: #{swin_deeplab_forward.11} parent=11 // pred_check
          %p167 = pneg %p81
        $region18: #{swin_deeplab_forward.11} parent=11 // pred_check_branch
          %169 = sbr.rel (%p167) target = $region20
        $region19: #{swin_deeplab_forward.11} parent=11 // pred_region
          %171 = vsyncadd [#allocation3], 0
          %s173 = sshll.u32 %s2, 4
          %s174 = int_to_ptr.hbm [resolvable:$true] %s173
          %s175 = sshll.u32 [#allocation2], 4
          %s176 = int_to_ptr.vmem [resolvable:$true] %s175
          %178 = dma.hbm_to_vmem [thread:$0]  %s174, 16, %s176, [#allocation3]
        $region20: #{swin_deeplab_forward.11} parent=11 // pred_fallthru
          _
        // Predicated region
        $region21: #{swin_deeplab_forward.11} parent=11 // pred_check
          %p179 = pneg %p102
        $region22: #{swin_deeplab_forward.11} parent=11 // pred_check_branch
          %181 = sbr.rel (%p179) target = $region24
        $region23: #{swin_deeplab_forward.11} parent=11 // pred_region
          _
        $region24: #{swin_deeplab_forward.11} parent=11 // pred_fallthru
          _
        // Predicated region
        $region25: #{swin_deeplab_forward.11} parent=11 // pred_check
          %p182 = pneg %p123
        $region26: #{swin_deeplab_forward.11} parent=11 // pred_check_branch
          %184 = sbr.rel (%p182) target = $region28
        $region27: #{swin_deeplab_forward.11} parent=11 // pred_region
          %186 = vsyncadd [#allocation5], 0
          %s188 = sshll.u32 %s4, 4
          %s189 = int_to_ptr.hbm [resolvable:$true] %s188
          %s190 = sshll.u32 [#allocation4], 4
          %s191 = int_to_ptr.vmem [resolvable:$true] %s190
          %193 = dma.hbm_to_vmem [thread:$0]  %s189, 16, %s191, [#allocation5]
        $region28: #{swin_deeplab_forward.11} parent=11 // pred_fallthru
          _
      $region12: #{swin_deeplab_forward.11} parent=5 // pred_fallthru
        _
      %p194 = scmp.lt.s32.totalorder %s13, 2
      // Predicated region
      $region29: #{swin_deeplab_forward.11} parent=5 // pred_check
        %p195 = pneg %p194
      $region30: #{swin_deeplab_forward.11} parent=5 // pred_check_branch
        %197 = sbr.rel (%p195) target = $region32
      $region31: #{swin_deeplab_forward.11} parent=5 // pred_region
        // Predicated region
        $region33: #{swin_deeplab_forward.11} parent=31 // pred_check
          %p198 = pneg %p33
        $region34: #{swin_deeplab_forward.11} parent=31 // pred_check_branch
          %200 = sbr.rel (%p198) target = $region36
        $region35: #{swin_deeplab_forward.11} parent=31 // pred_region
          %s201 = smul.u32 8, %s13
          %p202 = scmp.lt.s32.totalorder %s201, 15
          %s203 = scalar_select %p202, %s201, 15
          %s204 = smul.addr %s203, 8
          %s205 = scalar_lea.vmem %s0, %s204
          %s206 = smul.u32 8, %s13
        $region36: #{swin_deeplab_forward.11} parent=31 // pred_fallthru
          _
      $region32: #{swin_deeplab_forward.11} parent=5 // pred_fallthru
        _
      %p207 = scmp.le.s32.totalorder 1, %s13
      %p208 = scmp.lt.s32.totalorder %s13, 3
      %p209 = pnand %p207, %p208
      %p210 = pneg %p209
      // Predicated region
      $region37: #{swin_deeplab_forward.11} parent=5 // pred_check
        _
      $region38: #{swin_deeplab_forward.11} parent=5 // pred_check_branch
        %212 = sbr.rel (%p209) target = $region40
      $region39: #{swin_deeplab_forward.11} parent=5 // pred_region
        %s213 = ssub.s32 %s13, 1
        // Predicated region
        $region41: #{swin_deeplab_forward.11} parent=39 // pred_check
          %p214 = pneg %p81
        $region42: #{swin_deeplab_forward.11} parent=39 // pred_check_branch
          %216 = sbr.rel (%p214) target = $region44
        $region43: #{swin_deeplab_forward.11} parent=39 // pred_region
          %218 = dma.done [#allocation3], 16
        $region44: #{swin_deeplab_forward.11} parent=39 // pred_fallthru
          _
        // Predicated region
        $region45: #{swin_deeplab_forward.11} parent=39 // pred_check
          %p219 = pneg %p123
        $region46: #{swin_deeplab_forward.11} parent=39 // pred_check_branch
          %221 = sbr.rel (%p219) target = $region48
        $region47: #{swin_deeplab_forward.11} parent=39 // pred_region
          %223 = dma.done [#allocation5], 16
        $region48: #{swin_deeplab_forward.11} parent=39 // pred_fallthru
          _
        %s224 = smul.u32 8, %s18
        %p225 = scmp.lt.s32.totalorder %s224, 15
        %s226 = scalar_select %p225, %s224, 15
        %s227 = smul.addr %s226, 8
        %s228 = scalar_lea.vmem %s0, %s227
        %p229 = pneg %p39
        %p230 = pneg %p36
        %p231 = pneg %p60
        %p232 = pneg %p57
        %p233 = pneg %p81
        %p234 = pneg %p78
        %p235 = pneg %p102
        %p236 = pneg %p99
        %p237 = pneg %p123
        %p238 = pneg %p120
        %p239 = pneg %p149
        %p240 = pneg %p146
        %s241 = smul.u32 8, %s18
        %p242 = scmp.lt.s32.totalorder %s241, 15
        %s243 = scalar_select %p242, %s241, 15
        %s244 = smul.addr %s243, 8
        %s245 = scalar_lea.vmem %s5, %s244
        %s246 = smul.u32 8, %s18
        %p247 = scmp.lt.s32.totalorder %s246, 15
        %s248 = scalar_select %p247, %s246, 15
        %s249 = smul.addr %s248, 8
        %s250 = scalar_lea.vmem %s0, %s249
        %s251 = smul.u32 8, %s18
        %s252 = smul.u32 8, %s18
        %p253 = scmp.lt.s32.totalorder %s252, 15
        %s254 = scalar_select %p253, %s252, 15
        %s255 = smul.addr %s254, 8
        %s256 = scalar_lea.vmem %s5, %s255
        %s257 = smul.u32 8, %s18
        %v259 = vld [vmem:[%s250] sm:$0xff]
        %v260 = vld [vmem:[%s250 + $0x8] sm:$0xff]
        %v261 = vld [vmem:[%s250 + $0x10] sm:$0xff]
        %v262 = vld [vmem:[%s250 + $0x18] sm:$0xff]
        %v263 = vld [vmem:[%s250 + $0x20] sm:$0xff]
        %v264 = vld [vmem:[%s250 + $0x28] sm:$0xff]
        %v265 = vld [vmem:[%s250 + $0x30] sm:$0xff]
        %v266 = vld [vmem:[%s250 + $0x38] sm:$0xff]
        %v267 = vpack.c.bf16 %v260, %v259
        %v268 = vpack.c.bf16 %v262, %v261
        %v269 = vpack.c.bf16 %v264, %v263
        %v270 = vpack.c.bf16 %v266, %v265
        %v271 = vld [vmem:[%s1] sm:$0xff]
        %v272 = vld [vmem:[%s1 + $0x8] sm:$0xff]
        %v273 = vld [vmem:[%s1 + $0x10] sm:$0xff]
        %v274 = vld [vmem:[%s1 + $0x18] sm:$0xff]
        %v275 = vld [vmem:[%s1 + $0x20] sm:$0xff]
        %v276 = vld [vmem:[%s1 + $0x28] sm:$0xff]
        %v277 = vld [vmem:[%s1 + $0x30] sm:$0xff]
        %v278 = vld [vmem:[%s1 + $0x38] sm:$0xff]
        %v279 = vpack.c.bf16 %v272, %v271
        %v280 = vpack.c.bf16 %v274, %v273
        %v281 = vpack.c.bf16 %v276, %v275
        %v282 = vpack.c.bf16 %v278, %v277
        %v283 = vld [vmem:[#allocation2] sm:$0x1]
        %v285 = vperm.slane %v283, 0
        %vm287 = vcmask 523264
        %v289 = vsel %vm287, %v267, 0
        %v292 = vsel %vm287, %v268, 0
        %v295 = vsel %vm287, %v269, 0
        %v298 = vsel %vm287, %v270, 0
        %300 = vmatpush.bf16.msra.mxu0 0
        %301 = vmatpush.bf16.msra.mxu0 0
        %302 = vmatpush.bf16.msra.mxu0 0
        %303 = vmatpush.bf16.msra.mxu0 0
        %304 = vmatpush.bf16.msra.mxu0 %v282
        %305 = vmatpush.bf16.msra.mxu0 %v281
        %306 = vmatpush.bf16.msra.mxu0 %v280
        %307 = vmatpush.bf16.msra.mxu0 %v279
        %308 = vmatmul.bf16.gmra.mxu0 %v289
        %v309 = vpop.f32.mrf.mxu0
        %v310 = vadd.f32 %v285, %v309
        %v311 = vpop.f32.mrf.mxu0
        %v312 = vadd.f32 %v285, %v311
        %313 = vmatmul.bf16.gmra.mxu0 %v292
        %v314 = vpop.f32.mrf.mxu0
        %v315 = vadd.f32 %v285, %v314
        %v316 = vpop.f32.mrf.mxu0
        %v317 = vadd.f32 %v285, %v316
        %318 = vmatmul.bf16.gmra.mxu0 %v295
        %v319 = vpop.f32.mrf.mxu0
        %v320 = vadd.f32 %v285, %v319
        %v321 = vpop.f32.mrf.mxu0
        %v322 = vadd.f32 %v285, %v321
        %323 = vmatmul.bf16.gmra.mxu0 %v298
        %v324 = vpop.f32.mrf.mxu0
        %v325 = vadd.f32 %v285, %v324
        %v326 = vpop.f32.mrf.mxu0
        %v327 = vadd.f32 %v285, %v326
        %328 = vdwg.mxu0
        %v329 = vpack.c.bf16 %v312, %v310
        %v330 = vpack.c.bf16 %v317, %v315
        %v331 = vpack.c.bf16 %v322, %v320
        %v332 = vpack.c.bf16 %v327, %v325
        %v333 = vld [vmem:[%s3] sm:$0xff]
        %v334 = vld [vmem:[%s3 + $0x8] sm:$0xff]
        %v335 = vld [vmem:[%s3 + $0x10] sm:$0xff]
        %v336 = vld [vmem:[%s3 + $0x18] sm:$0xff]
        %v337 = vpack.c.bf16 %v334, %v333
        %v338 = vpack.c.bf16 %v336, %v335
        %v339 = vld [vmem:[#allocation4] sm:$0x1]
        %v341 = vperm.slane %v339, 0
        %vm343 = vcmask 261120
        %v345 = vsel %vm343, %v329, 0
        %v348 = vsel %vm343, %v330, 0
        %v351 = vsel %vm343, %v331, 0
        %v354 = vsel %vm343, %v332, 0
        %356 = vmatpush.bf16.msra.mxu0 0
        %357 = vmatpush.bf16.msra.mxu0 0
        %358 = vmatpush.bf16.msra.mxu0 0
        %359 = vmatpush.bf16.msra.mxu0 0
        %360 = vmatpush.bf16.msra.mxu0 0
        %361 = vmatpush.bf16.msra.mxu0 0
        %362 = vmatpush.bf16.msra.mxu0 %v338
        %363 = vmatpush.bf16.msra.mxu0 %v337
        %364 = vmatmul.bf16.gmra.mxu0 %v345
        %v365 = vpop.f32.mrf.mxu0
        %v366 = vadd.f32 %v341, %v365
        %v367 = vpop.f32.mrf.mxu0
        %v368 = vadd.f32 %v341, %v367
        %369 = vmatmul.bf16.gmra.mxu0 %v348
        %v370 = vpop.f32.mrf.mxu0
        %v371 = vadd.f32 %v341, %v370
        %v372 = vpop.f32.mrf.mxu0
        %v373 = vadd.f32 %v341, %v372
        %374 = vmatmul.bf16.gmra.mxu0 %v351
        %v375 = vpop.f32.mrf.mxu0
        %v376 = vadd.f32 %v341, %v375
        %v377 = vpop.f32.mrf.mxu0
        %v378 = vadd.f32 %v341, %v377
        %379 = vmatmul.bf16.gmra.mxu0 %v354
        %v380 = vpop.f32.mrf.mxu0
        %v381 = vadd.f32 %v341, %v380
        %v382 = vpop.f32.mrf.mxu0
        %v383 = vadd.f32 %v341, %v382
        %384 = vdwg.mxu0
        %v385 = vmax.f32 %v366, 0.0
        %v386 = vmax.f32 %v368, 0.0
        %v387 = vmax.f32 %v371, 0.0
        %v388 = vmax.f32 %v373, 0.0
        %v389 = vmax.f32 %v376, 0.0
        %v390 = vmax.f32 %v378, 0.0
        %v391 = vmax.f32 %v381, 0.0
        %v392 = vmax.f32 %v383, 0.0
        %v393 = vadd.f32 %v310, %v385
        %v394 = vadd.f32 %v312, %v386
        %v395 = vadd.f32 %v315, %v387
        %v396 = vadd.f32 %v317, %v388
        %v397 = vadd.f32 %v320, %v389
        %v398 = vadd.f32 %v322, %v390
        %v399 = vadd.f32 %v325, %v391
        %v400 = vadd.f32 %v327, %v392
        %401 = vst.msk [vmem:[%s256] sm:$0xff] %vm343, %v393
        %402 = vst.msk [vmem:[%s256 + $0x8] sm:$0xff] %vm343, %v394
        %403 = vst.msk [vmem:[%s256 + $0x10] sm:$0xff] %vm343, %v395
        %404 = vst.msk [vmem:[%s256 + $0x18] sm:$0xff] %vm343, %v396
        %405 = vst.msk [vmem:[%s256 + $0x20] sm:$0xff] %vm343, %v397
        %406 = vst.msk [vmem:[%s256 + $0x28] sm:$0xff] %vm343, %v398
        %407 = vst.msk [vmem:[%s256 + $0x30] sm:$0xff] %vm343, %v399
        %408 = vst.msk [vmem:[%s256 + $0x38] sm:$0xff] %vm343, %v400
        %s409 = smul.u32 8, %s18
        %p410 = scmp.lt.s32.totalorder %s409, 15
        %s411 = scalar_select %p410, %s409, 15
        %s412 = smul.addr %s411, 8
        %s413 = scalar_lea.vmem %s5, %s412
        // Predicated region
        $region49: #{swin_deeplab_forward.11} parent=39 // pred_check
          %p414 = pneg %p146
        $region50: #{swin_deeplab_forward.11} parent=39 // pred_check_branch
          %416 = sbr.rel (%p414) target = $region52
        $region51: #{swin_deeplab_forward.11} parent=39 // pred_region
          %s417 = smul.u32 8, %s18
        $region52: #{swin_deeplab_forward.11} parent=39 // pred_fallthru
          _
      $region40: #{swin_deeplab_forward.11} parent=5 // pred_fallthru
        _
      %p418 = scmp.le.s32.totalorder 2, %s13
      // Predicated region
      $region53: #{swin_deeplab_forward.11} parent=5 // pred_check
        %p419 = pneg %p418
      $region54: #{swin_deeplab_forward.11} parent=5 // pred_check_branch
        %421 = sbr.rel (%p419) target = $region56
      $region55: #{swin_deeplab_forward.11} parent=5 // pred_region
        %s422 = ssub.s32 %s13, 2
        // Predicated region
        $region57: #{swin_deeplab_forward.11} parent=55 // pred_check
          %p423 = pneg %p152
        $region58: #{swin_deeplab_forward.11} parent=55 // pred_check_branch
          %425 = sbr.rel (%p423) target = $region60
        $region59: #{swin_deeplab_forward.11} parent=55 // pred_region
          %s426 = smul.u32 8, %s19
          %p427 = scmp.lt.s32.totalorder %s426, 15
          %s428 = scalar_select %p427, %s426, 15
          %s429 = smul.addr %s428, 8
          %s430 = scalar_lea.vmem %s5, %s429
        $region60: #{swin_deeplab_forward.11} parent=55 // pred_fallthru
          _
      $region56: #{swin_deeplab_forward.11} parent=5 // pred_fallthru
        _
    $region6: #{swin_deeplab_forward.11} parent=1 // loop_footer
      %s17 = sadd.s32 1, %s13
    $region7: #{swin_deeplab_forward.11} parent=1 // loop_footer_branch
      %12 = sbr.rel target = $region3
    $region8: #{swin_deeplab_forward.11} parent=1 // loop_exit
      _
    %431 = vsyncpa [#allocation3], 1
    %s432 = scalar_lea.sflag [#allocation3], 1
    %433 = vsyncpa %s432, 1
    %434 = vsyncpa [#allocation5], 1

// kernel: swin_deeplab_forward.12
$region0: #{swin_deeplab_forward.12}
  #allocation0 [shape = 'u32[]', space=smem, size = 0x4, offset = 0x4, fixed_abs, tag = 'smem constant byte address 0x4 - core index']
  #allocation1 [shape = 'u32[72,128]{1,0:T(1,128)}', space=vmem, size = 0x9000, scoped, tag = 'internal scratch']
  %s0 = inlined_call_operand.vmem [shape: f32[32,128], index: 0, kind: input, shape index: {}]
  %s1 = inlined_call_operand.vmem [shape: f32[128,64], index: 1, kind: input, shape index: {}]
  %s2 = inlined_call_operand.hbm [shape: f32[1,64], index: 2, kind: input, shape index: {}]
  %s3 = inlined_call_operand.vmem [shape: f32[64,64], index: 3, kind: input, shape index: {}]
  %s4 = inlined_call_operand.hbm [shape: f32[1,64], index: 4, kind: input, shape index: {}]
  %s5 = inlined_call_operand.vmem [shape: f32[32,64], index: 5, kind: output, shape index: {}]
  %s6 = sld [smem:[#allocation0]]
  $region38: #{swin_deeplab_forward.12} parent=0
    _
  %s8 = ssub.s32 1, %s6
  %s9 = scalar_select 0, %s8, %s6
  $region1: #{swin_deeplab_forward.12} parent=0
    #allocation2 [shape = 'u8[512]{0}', space=vmem, size = 0x400, scoped, tag = 'input window, operand 2, single buffered']
    #allocation3 [shape = 's32[1]{0}', space=sflag, size = 0x4, scoped, tag = 'scoped memory for swin_deeplab_forward.12']
    #allocation4 [shape = 'u8[512]{0}', space=vmem, size = 0x400, scoped, tag = 'input window, operand 4, single buffered']
    #allocation5 [shape = 's32[1]{0}', space=sflag, size = 0x4, scoped, tag = 'scoped memory for swin_deeplab_forward.12']
    %10 = vsyncpa [#allocation3], 0
    %11 = vsyncpa [#allocation5], 0
    // Predicated region
    $region2: #{swin_deeplab_forward.12} parent=1 // pred_check
      _
    $region3: #{swin_deeplab_forward.12} parent=1 // pred_check_branch
      %13 = sbr.rel (0) target = $region5
    $region4: #{swin_deeplab_forward.12} parent=1 // pred_region
      _
    $region5: #{swin_deeplab_forward.12} parent=1 // pred_fallthru
      _
    // Predicated region
    $region6: #{swin_deeplab_forward.12} parent=1 // pred_check
      _
    $region7: #{swin_deeplab_forward.12} parent=1 // pred_check_branch
      %15 = sbr.rel (0) target = $region9
    $region8: #{swin_deeplab_forward.12} parent=1 // pred_region
      _
    $region9: #{swin_deeplab_forward.12} parent=1 // pred_fallthru
      _
    // Predicated region
    $region10: #{swin_deeplab_forward.12} parent=1 // pred_check
      _
    $region11: #{swin_deeplab_forward.12} parent=1 // pred_check_branch
      %17 = sbr.rel (0) target = $region13
    $region12: #{swin_deeplab_forward.12} parent=1 // pred_region
      %19 = vsyncadd [#allocation3], 0
      %s21 = sshll.u32 %s2, 4
      %s22 = int_to_ptr.hbm [resolvable:$true] %s21
      %s23 = sshll.u32 [#allocation2], 4
      %s24 = int_to_ptr.vmem [resolvable:$true] %s23
      %26 = dma.hbm_to_vmem [thread:$0]  %s22, 16, %s24, [#allocation3]
    $region13: #{swin_deeplab_forward.12} parent=1 // pred_fallthru
      _
    // Predicated region
    $region14: #{swin_deeplab_forward.12} parent=1 // pred_check
      _
    $region15: #{swin_deeplab_forward.12} parent=1 // pred_check_branch
      %28 = sbr.rel (0) target = $region17
    $region16: #{swin_deeplab_forward.12} parent=1 // pred_region
      _
    $region17: #{swin_deeplab_forward.12} parent=1 // pred_fallthru
      _
    // Predicated region
    $region18: #{swin_deeplab_forward.12} parent=1 // pred_check
      _
    $region19: #{swin_deeplab_forward.12} parent=1 // pred_check_branch
      %30 = sbr.rel (0) target = $region21
    $region20: #{swin_deeplab_forward.12} parent=1 // pred_region
      %32 = vsyncadd [#allocation5], 0
      %s34 = sshll.u32 %s4, 4
      %s35 = int_to_ptr.hbm [resolvable:$true] %s34
      %s36 = sshll.u32 [#allocation4], 4
      %s37 = int_to_ptr.vmem [resolvable:$true] %s36
      %39 = dma.hbm_to_vmem [thread:$0]  %s35, 16, %s37, [#allocation5]
    $region21: #{swin_deeplab_forward.12} parent=1 // pred_fallthru
      _
    // Predicated region
    $region22: #{swin_deeplab_forward.12} parent=1 // pred_check
      _
    $region23: #{swin_deeplab_forward.12} parent=1 // pred_check_branch
      %41 = sbr.rel (0) target = $region25
    $region24: #{swin_deeplab_forward.12} parent=1 // pred_region
      %43 = dma.done [#allocation3], 16
    $region25: #{swin_deeplab_forward.12} parent=1 // pred_fallthru
      _
    // Predicated region
    $region26: #{swin_deeplab_forward.12} parent=1 // pred_check
      _
    $region27: #{swin_deeplab_forward.12} parent=1 // pred_check_branch
      %45 = sbr.rel (0) target = $region29
    $region28: #{swin_deeplab_forward.12} parent=1 // pred_region
      %47 = dma.done [#allocation5], 16
    $region29: #{swin_deeplab_forward.12} parent=1 // pred_fallthru
      _
    %v49 = vld [vmem:[%s0] sm:$0xff]
    %v50 = vld [vmem:[%s0 + $0x8] sm:$0xff]
    %v51 = vld [vmem:[%s0 + $0x10] sm:$0xff]
    %v52 = vld [vmem:[%s0 + $0x18] sm:$0xff]
    %v53 = vpack.c.bf16 %v50, %v49
    %v54 = vpack.c.bf16 %v52, %v51
    %v55 = vld [vmem:[%s1] sm:$0xff]
    %v56 = vld [vmem:[%s1 + $0x8] sm:$0xff]
    %v57 = vld [vmem:[%s1 + $0x10] sm:$0xff]
    %v58 = vld [vmem:[%s1 + $0x18] sm:$0xff]
    %v59 = vld [vmem:[%s1 + $0x20] sm:$0xff]
    %v60 = vld [vmem:[%s1 + $0x28] sm:$0xff]
    %v61 = vld [vmem:[%s1 + $0x30] sm:$0xff]
    %v62 = vld [vmem:[%s1 + $0x38] sm:$0xff]
    %v63 = vld [vmem:[%s1 + $0x40] sm:$0xff]
    %v64 = vld [vmem:[%s1 + $0x48] sm:$0xff]
    %v65 = vld [vmem:[%s1 + $0x50] sm:$0xff]
    %v66 = vld [vmem:[%s1 + $0x58] sm:$0xff]
    %v67 = vld [vmem:[%s1 + $0x60] sm:$0xff]
    %v68 = vld [vmem:[%s1 + $0x68] sm:$0xff]
    %v69 = vld [vmem:[%s1 + $0x70] sm:$0xff]
    %v70 = vld [vmem:[%s1 + $0x78] sm:$0xff]
    %v71 = vpack.c.bf16 %v56, %v55
    %v72 = vpack.c.bf16 %v58, %v57
    %v73 = vpack.c.bf16 %v60, %v59
    %v74 = vpack.c.bf16 %v62, %v61
    %v75 = vpack.c.bf16 %v64, %v63
    %v76 = vpack.c.bf16 %v66, %v65
    %v77 = vpack.c.bf16 %v68, %v67
    %v78 = vpack.c.bf16 %v70, %v69
    %v79 = vld [vmem:[#allocation2] sm:$0x1]
    %v81 = vperm.slane %v79, 0
    %83 = vmatpush.bf16.msra.mxu0 %v78
    %84 = vmatpush.bf16.msra.mxu0 %v77
    %85 = vmatpush.bf16.msra.mxu0 %v76
    %86 = vmatpush.bf16.msra.mxu0 %v75
    %87 = vmatpush.bf16.msra.mxu0 %v74
    %88 = vmatpush.bf16.msra.mxu0 %v73
    %89 = vmatpush.bf16.msra.mxu0 %v72
    %90 = vmatpush.bf16.msra.mxu0 %v71
    %91 = vmatmul.bf16.gmra.mxu0 %v53
    %v92 = vpop.f32.mrf.mxu0
    %v93 = vadd.f32 %v81, %v92
    %v94 = vpop.f32.mrf.mxu0
    %v95 = vadd.f32 %v81, %v94
    %96 = vmatmul.bf16.gmra.mxu0 %v54
    %v97 = vpop.f32.mrf.mxu0
    %v98 = vadd.f32 %v81, %v97
    %v99 = vpop.f32.mrf.mxu0
    %v100 = vadd.f32 %v81, %v99
    %101 = vdwg.mxu0
    %v102 = vpack.c.bf16 %v95, %v93
    %v103 = vpack.c.bf16 %v100, %v98
    %v104 = vld [vmem:[%s3] sm:$0xff]
    %v105 = vld [vmem:[%s3 + $0x8] sm:$0xff]
    %v106 = vld [vmem:[%s3 + $0x10] sm:$0xff]
    %v107 = vld [vmem:[%s3 + $0x18] sm:$0xff]
    %v108 = vld [vmem:[%s3 + $0x20] sm:$0xff]
    %v109 = vld [vmem:[%s3 + $0x28] sm:$0xff]
    %v110 = vld [vmem:[%s3 + $0x30] sm:$0xff]
    %v111 = vld [vmem:[%s3 + $0x38] sm:$0xff]
    %v112 = vpack.c.bf16 %v105, %v104
    %v113 = vpack.c.bf16 %v107, %v106
    %v114 = vpack.c.bf16 %v109, %v108
    %v115 = vpack.c.bf16 %v111, %v110
    %v116 = vld [vmem:[#allocation4] sm:$0x1]
    %v118 = vperm.slane %v116, 0
    %vm120 = vcmask 523264
    %v122 = vsel %vm120, %v102, 0
    %v125 = vsel %vm120, %v103, 0
    %127 = vmatpush.bf16.msra.mxu0 0
    %128 = vmatpush.bf16.msra.mxu0 0
    %129 = vmatpush.bf16.msra.mxu0 0
    %130 = vmatpush.bf16.msra.mxu0 0
    %131 = vmatpush.bf16.msra.mxu0 %v115
    %132 = vmatpush.bf16.msra.mxu0 %v114
    %133 = vmatpush.bf16.msra.mxu0 %v113
    %134 = vmatpush.bf16.msra.mxu0 %v112
    %135 = vmatmul.bf16.gmra.mxu0 %v122
    %v136 = vpop.f32.mrf.mxu0
    %v137 = vadd.f32 %v118, %v136
    %v138 = vpop.f32.mrf.mxu0
    %v139 = vadd.f32 %v118, %v138
    %140 = vmatmul.bf16.gmra.mxu0 %v125
    %v141 = vpop.f32.mrf.mxu0
    %v142 = vadd.f32 %v118, %v141
    %v143 = vpop.f32.mrf.mxu0
    %v144 = vadd.f32 %v118, %v143
    %145 = vdwg.mxu0
    %v146 = vmax.f32 %v137, 0.0
    %v147 = vmax.f32 %v139, 0.0
    %v148 = vmax.f32 %v142, 0.0
    %v149 = vmax.f32 %v144, 0.0
    %v150 = vadd.f32 %v93, %v146
    %v151 = vadd.f32 %v95, %v147
    %v152 = vadd.f32 %v98, %v148
    %v153 = vadd.f32 %v100, %v149
    %154 = vst.msk [vmem:[%s5] sm:$0xff] %vm120, %v150
    %155 = vst.msk [vmem:[%s5 + $0x8] sm:$0xff] %vm120, %v151
    %156 = vst.msk [vmem:[%s5 + $0x10] sm:$0xff] %vm120, %v152
    %157 = vst.msk [vmem:[%s5 + $0x18] sm:$0xff] %vm120, %v153
    // Predicated region
    $region30: #{swin_deeplab_forward.12} parent=1 // pred_check
      _
    $region31: #{swin_deeplab_forward.12} parent=1 // pred_check_branch
      %159 = sbr.rel (0) target = $region33
    $region32: #{swin_deeplab_forward.12} parent=1 // pred_region
      _
    $region33: #{swin_deeplab_forward.12} parent=1 // pred_fallthru
      _
    // Predicated region
    $region34: #{swin_deeplab_forward.12} parent=1 // pred_check
      _
    $region35: #{swin_deeplab_forward.12} parent=1 // pred_check_branch
      %161 = sbr.rel (0) target = $region37
    $region36: #{swin_deeplab_forward.12} parent=1 // pred_region
      _
    $region37: #{swin_deeplab_forward.12} parent=1 // pred_fallthru
      _
    %162 = vsyncpa [#allocation3], 1
    %163 = vsyncpa [#allocation5], 1

// kernel: swin_deeplab_forward.13
$region0: #{swin_deeplab_forward.13}
  #allocation0 [shape = 'u32[]', space=smem, size = 0x4, offset = 0x4, fixed_abs, tag = 'smem constant byte address 0x4 - core index']
  #allocation1 [shape = 'u32[72,128]{1,0:T(1,128)}', space=vmem, size = 0x9000, scoped, tag = 'internal scratch']
  %s0 = inlined_call_operand.vmem [shape: f32[2,16,64], index: 0, kind: input, shape index: {}]
  %s1 = inlined_call_operand.vmem [shape: f32[64,32], index: 1, kind: input, shape index: {}]
  %s2 = inlined_call_operand.hbm [shape: f32[1,32], index: 2, kind: input, shape index: {}]
  %s3 = inlined_call_operand.vmem [shape: f32[32,32], index: 3, kind: input, shape index: {}]
  %s4 = inlined_call_operand.hbm [shape: f32[1,32], index: 4, kind: input, shape index: {}]
  %s5 = inlined_call_operand.vmem [shape: f32[64,32], index: 5, kind: input, shape index: {}]
  %s6 = inlined_call_operand.vmem [shape: f32[64,32], index: 6, kind: input, shape index: {}]
  %s7 = inlined_call_operand.hbm [shape: f32[1,32], index: 7, kind: input, shape index: {}]
  %s8 = inlined_call_operand.vmem [shape: f32[32,32], index: 8, kind: input, shape index: {}]
  %s9 = inlined_call_operand.hbm [shape: f32[1,32], index: 9, kind: input, shape index: {}]
  %s10 = inlined_call_operand.vmem [shape: f32[64,32], index: 10, kind: input, shape index: {}]
  %s11 = inlined_call_operand.vmem [shape: f32[64,32], index: 11, kind: input, shape index: {}]
  %s12 = inlined_call_operand.hbm [shape: f32[1,32], index: 12, kind: input, shape index: {}]
  %s13 = inlined_call_operand.vmem [shape: f32[32,64], index: 13, kind: input, shape index: {}]
  %s14 = inlined_call_operand.hbm [shape: f32[1,64], index: 14, kind: input, shape index: {}]
  %s15 = inlined_call_operand.vmem [shape: f32[2,16,64], index: 15, kind: output, shape index: {}]
  %s16 = sld [smem:[#allocation0]]
  $region117: #{swin_deeplab_forward.13} parent=0
    _
  %s18 = ssub.s32 1, %s16
  %s19 = scalar_select 0, %s18, %s16
  $region1: #{swin_deeplab_forward.13} parent=0
    #allocation2 [shape = 'u8[512]{0}', space=vmem, size = 0x400, scoped, tag = 'input window, operand 2, single buffered']
    #allocation3 [shape = 's32[2]{0}', space=sflag, size = 0x8, scoped, tag = 'scoped memory for swin_deeplab_forward.13']
    #allocation4 [shape = 'u8[512]{0}', space=vmem, size = 0x400, scoped, tag = 'input window, operand 4, single buffered']
    #allocation5 [shape = 's32[1]{0}', space=sflag, size = 0x4, scoped, tag = 'scoped memory for swin_deeplab_forward.13']
    #allocation6 [shape = 'u8[512]{0}', space=vmem, size = 0x400, scoped, tag = 'input window, operand 7, single buffered']
    #allocation7 [shape = 'u8[512]{0}', space=vmem, size = 0x400, scoped, tag = 'input window, operand 9, single buffered']
    #allocation8 [shape = 's32[1]{0}', space=sflag, size = 0x4, scoped, tag = 'scoped memory for swin_deeplab_forward.13']
    #allocation9 [shape = 'u8[512]{0}', space=vmem, size = 0x400, scoped, tag = 'input window, operand 12, single buffered']
    #allocation10 [shape = 'u8[512]{0}', space=vmem, size = 0x400, scoped, tag = 'input window, operand 14, single buffered']
    #allocation11 [shape = 's32[1]{0}', space=sflag, size = 0x4, scoped, tag = 'scoped memory for swin_deeplab_forward.13']
    %20 = vsyncpa [#allocation3], 0
    %21 = vsyncpa [#allocation5], 0
    %22 = vsyncpa [#allocation8], 0
    %23 = vsyncpa [#allocation11], 0
    loop: start=0, step=1, limit=4
    $region2: #{swin_deeplab_forward.13} parent=1 // loop_pre_header
      _
    $region3: #{swin_deeplab_forward.13} parent=1 // loop_header
      %s25 = sphi 0, %s29
      %p26 = scmp.ge.s32.totalorder %s25, 4
      %s35 = sphi 0, %s37
      %s38 = sphi 0, %s35
      %s39 = sphi 0, %s38
      %s55 = sphi 0, %s39
      %s59 = sphi 0, %s59
      %s61 = sphi 0, %s59
      %s62 = sphi 0, %s61
      %s76 = sphi 0, %s62
      %s80 = sphi 0, %s80
      %s82 = sphi 0, %s80
      %s83 = sphi 0, %s82
      %s97 = sphi 0, %s83
      %s101 = sphi 0, %s101
      %s103 = sphi 0, %s101
      %s104 = sphi 0, %s103
      %s118 = sphi 0, %s104
      %s122 = sphi 0, %s122
      %s124 = sphi 0, %s122
      %s125 = sphi 0, %s124
      %s139 = sphi 0, %s125
      %s143 = sphi 0, %s143
      %s145 = sphi 0, %s143
      %s146 = sphi 0, %s145
      %s160 = sphi 0, %s146
      %s164 = sphi 0, %s164
      %s166 = sphi 0, %s164
      %s167 = sphi 0, %s166
      %s181 = sphi 0, %s167
      %s185 = sphi 0, %s185
      %s187 = sphi 0, %s185
      %s188 = sphi 0, %s187
      %s202 = sphi 0, %s188
      %s206 = sphi 0, %s206
      %s208 = sphi 0, %s206
      %s209 = sphi 0, %s208
      %s223 = sphi 0, %s209
      %s227 = sphi 0, %s227
      %s229 = sphi 0, %s227
      %s230 = sphi 0, %s229
      %s244 = sphi 0, %s230
      %s248 = sphi 0, %s248
      %s250 = sphi 0, %s248
      %s251 = sphi 0, %s250
      %s265 = sphi 0, %s251
      %s269 = sphi 0, %s269
      %s271 = sphi 0, %s269
      %s272 = sphi 0, %s271
      %s286 = sphi 0, %s272
      %s290 = sphi 0, %s290
      %s292 = sphi 0, %s290
      %s293 = sphi 0, %s292
      %s307 = sphi 0, %s293
      %s311 = sphi 0, %s311
      %s313 = sphi 0, %s311
      %s314 = sphi 0, %s313
      %s328 = sphi 0, %s314
      %s332 = sphi 0, %s332
      %s334 = sphi 0, %s332
      %s335 = sphi 0, %s334
      %s349 = sphi 0, %s335
      %s355 = sphi 0, %s357
      %s358 = sphi 0, %s355
      %s359 = sphi 0, %s358
      %s375 = sphi 0, %s359
    $region4: #{swin_deeplab_forward.13} parent=1 // loop_header_branch
      %28 = sbr.rel (%p26) target = $region8
    $region5: #{swin_deeplab_forward.13} parent=1 // loop_body
      %s30 = ssub.s32 %s25, 1
      %s31 = ssub.s32 %s25, 2
      %s32 = sadd.s32 %s25, 1
      %s33 = ssub.s32 %s25, %s32
      %p34 = scmp.eq.s32.totalorder %s33, 0
      %s36 = sadd.s32 %s35, 1
      %s37 = scalar_select %p34, %s35, %s36
      %p40 = pneg %p34
      %p41 = scmp.eq.s32.totalorder %s25, 1
      %p42 = por %p40, %p41
      %p43 = scmp.ne.s32.totalorder %s35, %s38
      %p44 = scmp.eq.s32.totalorder %s25, 0
      %p45 = por %p43, %p44
      %p46 = scmp.ne.s32.totalorder %s35, %s38
      %p47 = scmp.eq.s32.totalorder %s30, 1
      %p48 = por %p46, %p47
      %p49 = scmp.ne.s32.totalorder %s38, %s39
      %p50 = scmp.eq.s32.totalorder %s30, 0
      %p51 = por %p49, %p50
      %p52 = scmp.ne.s32.totalorder %s38, %s39
      %p53 = scmp.eq.s32.totalorder %s31, 1
      %p54 = por %p52, %p53
      %p56 = scmp.ne.s32.totalorder %s39, %s55
      %p57 = scmp.eq.s32.totalorder %s31, 0
      %p58 = por %p56, %p57
      %s60 = sadd.s32 %s59, 1
      %p63 = scmp.eq.s32.totalorder %s25, 1
      %p64 = scmp.ne.s32.totalorder %s59, %s61
      %p65 = scmp.eq.s32.totalorder %s25, 0
      %p66 = por %p64, %p65
      %p67 = scmp.ne.s32.totalorder %s59, %s61
      %p68 = scmp.eq.s32.totalorder %s30, 1
      %p69 = por %p67, %p68
      %p70 = scmp.ne.s32.totalorder %s61, %s62
      %p71 = scmp.eq.s32.totalorder %s30, 0
      %p72 = por %p70, %p71
      %p73 = scmp.ne.s32.totalorder %s61, %s62
      %p74 = scmp.eq.s32.totalorder %s31, 1
      %p75 = por %p73, %p74
      %p77 = scmp.ne.s32.totalorder %s62, %s76
      %p78 = scmp.eq.s32.totalorder %s31, 0
      %p79 = por %p77, %p78
      %s81 = sadd.s32 %s80, 1
      %p84 = scmp.eq.s32.totalorder %s25, 1
      %p85 = scmp.ne.s32.totalorder %s80, %s82
      %p86 = scmp.eq.s32.totalorder %s25, 0
      %p87 = por %p85, %p86
      %p88 = scmp.ne.s32.totalorder %s80, %s82
      %p89 = scmp.eq.s32.totalorder %s30, 1
      %p90 = por %p88, %p89
      %p91 = scmp.ne.s32.totalorder %s82, %s83
      %p92 = scmp.eq.s32.totalorder %s30, 0
      %p93 = por %p91, %p92
      %p94 = scmp.ne.s32.totalorder %s82, %s83
      %p95 = scmp.eq.s32.totalorder %s31, 1
      %p96 = por %p94, %p95
      %p98 = scmp.ne.s32.totalorder %s83, %s97
      %p99 = scmp.eq.s32.totalorder %s31, 0
      %p100 = por %p98, %p99
      %s102 = sadd.s32 %s101, 1
      %p105 = scmp.eq.s32.totalorder %s25, 1
      %p106 = scmp.ne.s32.totalorder %s101, %s103
      %p107 = scmp.eq.s32.totalorder %s25, 0
      %p108 = por %p106, %p107
      %p109 = scmp.ne.s32.totalorder %s101, %s103
      %p110 = scmp.eq.s32.totalorder %s30, 1
      %p111 = por %p109, %p110
      %p112 = scmp.ne.s32.totalorder %s103, %s104
      %p113 = scmp.eq.s32.totalorder %s30, 0
      %p114 = por %p112, %p113
      %p115 = scmp.ne.s32.totalorder %s103, %s104
      %p116 = scmp.eq.s32.totalorder %s31, 1
      %p117 = por %p115, %p116
      %p119 = scmp.ne.s32.totalorder %s104, %s118
      %p120 = scmp.eq.s32.totalorder %s31, 0
      %p121 = por %p119, %p120
      %s123 = sadd.s32 %s122, 1
      %p126 = scmp.eq.s32.totalorder %s25, 1
      %p127 = scmp.ne.s32.totalorder %s122, %s124
      %p128 = scmp.eq.s32.totalorder %s25, 0
      %p129 = por %p127, %p128
      %p130 = scmp.ne.s32.totalorder %s122, %s124
      %p131 = scmp.eq.s32.totalorder %s30, 1
      %p132 = por %p130, %p131
      %p133 = scmp.ne.s32.totalorder %s124, %s125
      %p134 = scmp.eq.s32.totalorder %s30, 0
      %p135 = por %p133, %p134
      %p136 = scmp.ne.s32.totalorder %s124, %s125
      %p137 = scmp.eq.s32.totalorder %s31, 1
      %p138 = por %p136, %p137
      %p140 = scmp.ne.s32.totalorder %s125, %s139
      %p141 = scmp.eq.s32.totalorder %s31, 0
      %p142 = por %p140, %p141
      %s144 = sadd.s32 %s143, 1
      %p147 = scmp.eq.s32.totalorder %s25, 1
      %p148 = scmp.ne.s32.totalorder %s143, %s145
      %p149 = scmp.eq.s32.totalorder %s25, 0
      %p150 = por %p148, %p149
      %p151 = scmp.ne.s32.totalorder %s143, %s145
      %p152 = scmp.eq.s32.totalorder %s30, 1
      %p153 = por %p151, %p152
      %p154 = scmp.ne.s32.totalorder %s145, %s146
      %p155 = scmp.eq.s32.totalorder %s30, 0
      %p156 = por %p154, %p155
      %p157 = scmp.ne.s32.totalorder %s145, %s146
      %p158 = scmp.eq.s32.totalorder %s31, 1
      %p159 = por %p157, %p158
      %p161 = scmp.ne.s32.totalorder %s146, %s160
      %p162 = scmp.eq.s32.totalorder %s31, 0
      %p163 = por %p161, %p162
      %s165 = sadd.s32 %s164, 1
      %p168 = scmp.eq.s32.totalorder %s25, 1
      %p169 = scmp.ne.s32.totalorder %s164, %s166
      %p170 = scmp.eq.s32.totalorder %s25, 0
      %p171 = por %p169, %p170
      %p172 = scmp.ne.s32.totalorder %s164, %s166
      %p173 = scmp.eq.s32.totalorder %s30, 1
      %p174 = por %p172, %p173
      %p175 = scmp.ne.s32.totalorder %s166, %s167
      %p176 = scmp.eq.s32.totalorder %s30, 0
      %p177 = por %p175, %p176
      %p178 = scmp.ne.s32.totalorder %s166, %s167
      %p179 = scmp.eq.s32.totalorder %s31, 1
      %p180 = por %p178, %p179
      %p182 = scmp.ne.s32.totalorder %s167, %s181
      %p183 = scmp.eq.s32.totalorder %s31, 0
      %p184 = por %p182, %p183
      %s186 = sadd.s32 %s185, 1
      %p189 = scmp.eq.s32.totalorder %s25, 1
      %p190 = scmp.ne.s32.totalorder %s185, %s187
      %p191 = scmp.eq.s32.totalorder %s25, 0
      %p192 = por %p190, %p191
      %p193 = scmp.ne.s32.totalorder %s185, %s187
      %p194 = scmp.eq.s32.totalorder %s30, 1
      %p195 = por %p193, %p194
      %p196 = scmp.ne.s32.totalorder %s187, %s188
      %p197 = scmp.eq.s32.totalorder %s30, 0
      %p198 = por %p196, %p197
      %p199 = scmp.ne.s32.totalorder %s187, %s188
      %p200 = scmp.eq.s32.totalorder %s31, 1
      %p201 = por %p199, %p200
      %p203 = scmp.ne.s32.totalorder %s188, %s202
      %p204 = scmp.eq.s32.totalorder %s31, 0
      %p205 = por %p203, %p204
      %s207 = sadd.s32 %s206, 1
      %p210 = scmp.eq.s32.totalorder %s25, 1
      %p211 = scmp.ne.s32.totalorder %s206, %s208
      %p212 = scmp.eq.s32.totalorder %s25, 0
      %p213 = por %p211, %p212
      %p214 = scmp.ne.s32.totalorder %s206, %s208
      %p215 = scmp.eq.s32.totalorder %s30, 1
      %p216 = por %p214, %p215
      %p217 = scmp.ne.s32.totalorder %s208, %s209
      %p218 = scmp.eq.s32.totalorder %s30, 0
      %p219 = por %p217, %p218
      %p220 = scmp.ne.s32.totalorder %s208, %s209
      %p221 = scmp.eq.s32.totalorder %s31, 1
      %p222 = por %p220, %p221
      %p224 = scmp.ne.s32.totalorder %s209, %s223
      %p225 = scmp.eq.s32.totalorder %s31, 0
      %p226 = por %p224, %p225
      %s228 = sadd.s32 %s227, 1
      %p231 = scmp.eq.s32.totalorder %s25, 1
      %p232 = scmp.ne.s32.totalorder %s227, %s229
      %p233 = scmp.eq.s32.totalorder %s25, 0
      %p234 = por %p232, %p233
      %p235 = scmp.ne.s32.totalorder %s227, %s229
      %p236 = scmp.eq.s32.totalorder %s30, 1
      %p237 = por %p235, %p236
      %p238 = scmp.ne.s32.totalorder %s229, %s230
      %p239 = scmp.eq.s32.totalorder %s30, 0
      %p240 = por %p238, %p239
      %p241 = scmp.ne.s32.totalorder %s229, %s230
      %p242 = scmp.eq.s32.totalorder %s31, 1
      %p243 = por %p241, %p242
      %p245 = scmp.ne.s32.totalorder %s230, %s244
      %p246 = scmp.eq.s32.totalorder %s31, 0
      %p247 = por %p245, %p246
      %s249 = sadd.s32 %s248, 1
      %p252 = scmp.eq.s32.totalorder %s25, 1
      %p253 = scmp.ne.s32.totalorder %s248, %s250
      %p254 = scmp.eq.s32.totalorder %s25, 0
      %p255 = por %p253, %p254
      %p256 = scmp.ne.s32.totalorder %s248, %s250
      %p257 = scmp.eq.s32.totalorder %s30, 1
      %p258 = por %p256, %p257
      %p259 = scmp.ne.s32.totalorder %s250, %s251
      %p260 = scmp.eq.s32.totalorder %s30, 0
      %p261 = por %p259, %p260
      %p262 = scmp.ne.s32.totalorder %s250, %s251
      %p263 = scmp.eq.s32.totalorder %s31, 1
      %p264 = por %p262, %p263
      %p266 = scmp.ne.s32.totalorder %s251, %s265
      %p267 = scmp.eq.s32.totalorder %s31, 0
      %p268 = por %p266, %p267
      %s270 = sadd.s32 %s269, 1
      %p273 = scmp.eq.s32.totalorder %s25, 1
      %p274 = scmp.ne.s32.totalorder %s269, %s271
      %p275 = scmp.eq.s32.totalorder %s25, 0
      %p276 = por %p274, %p275
      %p277 = scmp.ne.s32.totalorder %s269, %s271
      %p278 = scmp.eq.s32.totalorder %s30, 1
      %p279 = por %p277, %p278
      %p280 = scmp.ne.s32.totalorder %s271, %s272
      %p281 = scmp.eq.s32.totalorder %s30, 0
      %p282 = por %p280, %p281
      %p283 = scmp.ne.s32.totalorder %s271, %s272
      %p284 = scmp.eq.s32.totalorder %s31, 1
      %p285 = por %p283, %p284
      %p287 = scmp.ne.s32.totalorder %s272, %s286
      %p288 = scmp.eq.s32.totalorder %s31, 0
      %p289 = por %p287, %p288
      %s291 = sadd.s32 %s290, 1
      %p294 = scmp.eq.s32.totalorder %s25, 1
      %p295 = scmp.ne.s32.totalorder %s290, %s292
      %p296 = scmp.eq.s32.totalorder %s25, 0
      %p297 = por %p295, %p296
      %p298 = scmp.ne.s32.totalorder %s290, %s292
      %p299 = scmp.eq.s32.totalorder %s30, 1
      %p300 = por %p298, %p299
      %p301 = scmp.ne.s32.totalorder %s292, %s293
      %p302 = scmp.eq.s32.totalorder %s30, 0
      %p303 = por %p301, %p302
      %p304 = scmp.ne.s32.totalorder %s292, %s293
      %p305 = scmp.eq.s32.totalorder %s31, 1
      %p306 = por %p304, %p305
      %p308 = scmp.ne.s32.totalorder %s293, %s307
      %p309 = scmp.eq.s32.totalorder %s31, 0
      %p310 = por %p308, %p309
      %s312 = sadd.s32 %s311, 1
      %p315 = scmp.eq.s32.totalorder %s25, 1
      %p316 = scmp.ne.s32.totalorder %s311, %s313
      %p317 = scmp.eq.s32.totalorder %s25, 0
      %p318 = por %p316, %p317
      %p319 = scmp.ne.s32.totalorder %s311, %s313
      %p320 = scmp.eq.s32.totalorder %s30, 1
      %p321 = por %p319, %p320
      %p322 = scmp.ne.s32.totalorder %s313, %s314
      %p323 = scmp.eq.s32.totalorder %s30, 0
      %p324 = por %p322, %p323
      %p325 = scmp.ne.s32.totalorder %s313, %s314
      %p326 = scmp.eq.s32.totalorder %s31, 1
      %p327 = por %p325, %p326
      %p329 = scmp.ne.s32.totalorder %s314, %s328
      %p330 = scmp.eq.s32.totalorder %s31, 0
      %p331 = por %p329, %p330
      %s333 = sadd.s32 %s332, 1
      %p336 = scmp.eq.s32.totalorder %s25, 1
      %p337 = scmp.ne.s32.totalorder %s332, %s334
      %p338 = scmp.eq.s32.totalorder %s25, 0
      %p339 = por %p337, %p338
      %p340 = scmp.ne.s32.totalorder %s332, %s334
      %p341 = scmp.eq.s32.totalorder %s30, 1
      %p342 = por %p340, %p341
      %p343 = scmp.ne.s32.totalorder %s334, %s335
      %p344 = scmp.eq.s32.totalorder %s30, 0
      %p345 = por %p343, %p344
      %p346 = scmp.ne.s32.totalorder %s334, %s335
      %p347 = scmp.eq.s32.totalorder %s31, 1
      %p348 = por %p346, %p347
      %p350 = scmp.ne.s32.totalorder %s335, %s349
      %p351 = scmp.eq.s32.totalorder %s31, 0
      %p352 = por %p350, %p351
      %s353 = ssub.s32 %s25, %s32
      %p354 = scmp.eq.s32.totalorder %s353, 0
      %s356 = sadd.s32 %s355, 1
      %s357 = scalar_select %p354, %s355, %s356
      %p360 = pneg %p354
      %p361 = scmp.eq.s32.totalorder %s25, 1
      %p362 = por %p360, %p361
      %p363 = scmp.ne.s32.totalorder %s355, %s358
      %p364 = scmp.eq.s32.totalorder %s25, 0
      %p365 = por %p363, %p364
      %p366 = scmp.ne.s32.totalorder %s355, %s358
      %p367 = scmp.eq.s32.totalorder %s30, 1
      %p368 = por %p366, %p367
      %p369 = scmp.ne.s32.totalorder %s358, %s359
      %p370 = scmp.eq.s32.totalorder %s30, 0
      %p371 = por %p369, %p370
      %p372 = scmp.ne.s32.totalorder %s358, %s359
      %p373 = scmp.eq.s32.totalorder %s31, 1
      %p374 = por %p372, %p373
      %p376 = scmp.ne.s32.totalorder %s359, %s375
      %p377 = scmp.eq.s32.totalorder %s31, 0
      %p378 = por %p376, %p377
      %p379 = scmp.le.s32.totalorder 1, %s25
      %p380 = scmp.lt.s32.totalorder %s25, 3
      %p381 = pnand %p379, %p380
      %p382 = pneg %p381
      // Predicated region
      $region9: #{swin_deeplab_forward.13} parent=5 // pred_check
        _
      $region10: #{swin_deeplab_forward.13} parent=5 // pred_check_branch
        %384 = sbr.rel (%p381) target = $region12
      $region11: #{swin_deeplab_forward.13} parent=5 // pred_region
        %s385 = ssub.s32 %s25, 1
        // Predicated region
        $region13: #{swin_deeplab_forward.13} parent=11 // pred_check
          %p386 = pneg %p72
        $region14: #{swin_deeplab_forward.13} parent=11 // pred_check_branch
          %388 = sbr.rel (%p386) target = $region16
        $region15: #{swin_deeplab_forward.13} parent=11 // pred_region
          _
        $region16: #{swin_deeplab_forward.13} parent=11 // pred_fallthru
          _
        // Predicated region
        $region17: #{swin_deeplab_forward.13} parent=11 // pred_check
          %p389 = pneg %p93
        $region18: #{swin_deeplab_forward.13} parent=11 // pred_check_branch
          %391 = sbr.rel (%p389) target = $region20
        $region19: #{swin_deeplab_forward.13} parent=11 // pred_region
          %393 = vsyncadd [#allocation3], 0
          %s395 = sshll.u32 %s2, 4
          %s396 = int_to_ptr.hbm [resolvable:$true] %s395
          %s397 = sshll.u32 [#allocation2], 4
          %s398 = int_to_ptr.vmem [resolvable:$true] %s397
          %400 = dma.hbm_to_vmem [thread:$0]  %s396, 16, %s398, [#allocation3]
        $region20: #{swin_deeplab_forward.13} parent=11 // pred_fallthru
          _
        // Predicated region
        $region21: #{swin_deeplab_forward.13} parent=11 // pred_check
          %p401 = pneg %p114
        $region22: #{swin_deeplab_forward.13} parent=11 // pred_check_branch
          %403 = sbr.rel (%p401) target = $region24
        $region23: #{swin_deeplab_forward.13} parent=11 // pred_region
          _
        $region24: #{swin_deeplab_forward.13} parent=11 // pred_fallthru
          _
        // Predicated region
        $region25: #{swin_deeplab_forward.13} parent=11 // pred_check
          %p404 = pneg %p135
        $region26: #{swin_deeplab_forward.13} parent=11 // pred_check_branch
          %406 = sbr.rel (%p404) target = $region28
        $region27: #{swin_deeplab_forward.13} parent=11 // pred_region
          %408 = vsyncadd [#allocation5], 0
          %s410 = sshll.u32 %s4, 4
          %s411 = int_to_ptr.hbm [resolvable:$true] %s410
          %s412 = sshll.u32 [#allocation4], 4
          %s413 = int_to_ptr.vmem [resolvable:$true] %s412
          %415 = dma.hbm_to_vmem [thread:$0]  %s411, 16, %s413, [#allocation5]
        $region28: #{swin_deeplab_forward.13} parent=11 // pred_fallthru
          _
        // Predicated region
        $region29: #{swin_deeplab_forward.13} parent=11 // pred_check
          %p416 = pneg %p156
        $region30: #{swin_deeplab_forward.13} parent=11 // pred_check_branch
          %418 = sbr.rel (%p416) target = $region32
        $region31: #{swin_deeplab_forward.13} parent=11 // pred_region
          _
        $region32: #{swin_deeplab_forward.13} parent=11 // pred_fallthru
          _
        // Predicated region
        $region33: #{swin_deeplab_forward.13} parent=11 // pred_check
          %p419 = pneg %p177
        $region34: #{swin_deeplab_forward.13} parent=11 // pred_check_branch
          %421 = sbr.rel (%p419) target = $region36
        $region35: #{swin_deeplab_forward.13} parent=11 // pred_region
          _
        $region36: #{swin_deeplab_forward.13} parent=11 // pred_fallthru
          _
        // Predicated region
        $region37: #{swin_deeplab_forward.13} parent=11 // pred_check
          %p422 = pneg %p198
        $region38: #{swin_deeplab_forward.13} parent=11 // pred_check_branch
          %424 = sbr.rel (%p422) target = $region40
        $region39: #{swin_deeplab_forward.13} parent=11 // pred_region
          %426 = vsyncadd [#allocation5], 0
          %s428 = sshll.u32 %s7, 4
          %s429 = int_to_ptr.hbm [resolvable:$true] %s428
          %s430 = sshll.u32 [#allocation6], 4
          %s431 = int_to_ptr.vmem [resolvable:$true] %s430
          %433 = dma.hbm_to_vmem [thread:$0]  %s429, 16, %s431, [#allocation5]
        $region40: #{swin_deeplab_forward.13} parent=11 // pred_fallthru
          _
        // Predicated region
        $region41: #{swin_deeplab_forward.13} parent=11 // pred_check
          %p434 = pneg %p219
        $region42: #{swin_deeplab_forward.13} parent=11 // pred_check_branch
          %436 = sbr.rel (%p434) target = $region44
        $region43: #{swin_deeplab_forward.13} parent=11 // pred_region
          _
        $region44: #{swin_deeplab_forward.13} parent=11 // pred_fallthru
          _
        // Predicated region
        $region45: #{swin_deeplab_forward.13} parent=11 // pred_check
          %p437 = pneg %p240
        $region46: #{swin_deeplab_forward.13} parent=11 // pred_check_branch
          %439 = sbr.rel (%p437) target = $region48
        $region47: #{swin_deeplab_forward.13} parent=11 // pred_region
          %441 = vsyncadd [#allocation8], 0
          %s443 = sshll.u32 %s9, 4
          %s444 = int_to_ptr.hbm [resolvable:$true] %s443
          %s445 = sshll.u32 [#allocation7], 4
          %s446 = int_to_ptr.vmem [resolvable:$true] %s445
          %448 = dma.hbm_to_vmem [thread:$0]  %s444, 16, %s446, [#allocation8]
        $region48: #{swin_deeplab_forward.13} parent=11 // pred_fallthru
          _
        // Predicated region
        $region49: #{swin_deeplab_forward.13} parent=11 // pred_check
          %p449 = pneg %p261
        $region50: #{swin_deeplab_forward.13} parent=11 // pred_check_branch
          %451 = sbr.rel (%p449) target = $region52
        $region51: #{swin_deeplab_forward.13} parent=11 // pred_region
          _
        $region52: #{swin_deeplab_forward.13} parent=11 // pred_fallthru
          _
        // Predicated region
        $region53: #{swin_deeplab_forward.13} parent=11 // pred_check
          %p452 = pneg %p282
        $region54: #{swin_deeplab_forward.13} parent=11 // pred_check_branch
          %454 = sbr.rel (%p452) target = $region56
        $region55: #{swin_deeplab_forward.13} parent=11 // pred_region
          _
        $region56: #{swin_deeplab_forward.13} parent=11 // pred_fallthru
          _
        // Predicated region
        $region57: #{swin_deeplab_forward.13} parent=11 // pred_check
          %p455 = pneg %p303
        $region58: #{swin_deeplab_forward.13} parent=11 // pred_check_branch
          %457 = sbr.rel (%p455) target = $region60
        $region59: #{swin_deeplab_forward.13} parent=11 // pred_region
          %459 = vsyncadd [#allocation8], 0
          %s461 = sshll.u32 %s12, 4
          %s462 = int_to_ptr.hbm [resolvable:$true] %s461
          %s463 = sshll.u32 [#allocation9], 4
          %s464 = int_to_ptr.vmem [resolvable:$true] %s463
          %466 = dma.hbm_to_vmem [thread:$0]  %s462, 16, %s464, [#allocation8]
        $region60: #{swin_deeplab_forward.13} parent=11 // pred_fallthru
          _
        // Predicated region
        $region61: #{swin_deeplab_forward.13} parent=11 // pred_check
          %p467 = pneg %p324
        $region62: #{swin_deeplab_forward.13} parent=11 // pred_check_branch
          %469 = sbr.rel (%p467) target = $region64
        $region63: #{swin_deeplab_forward.13} parent=11 // pred_region
          _
        $region64: #{swin_deeplab_forward.13} parent=11 // pred_fallthru
          _
        // Predicated region
        $region65: #{swin_deeplab_forward.13} parent=11 // pred_check
          %p470 = pneg %p345
        $region66: #{swin_deeplab_forward.13} parent=11 // pred_check_branch
          %472 = sbr.rel (%p470) target = $region68
        $region67: #{swin_deeplab_forward.13} parent=11 // pred_region
          %474 = vsyncadd [#allocation11], 0
          %s476 = sshll.u32 %s14, 4
          %s477 = int_to_ptr.hbm [resolvable:$true] %s476
          %s478 = sshll.u32 [#allocation10], 4
          %s479 = int_to_ptr.vmem [resolvable:$true] %s478
          %481 = dma.hbm_to_vmem [thread:$0]  %s477, 16, %s479, [#allocation11]
        $region68: #{swin_deeplab_forward.13} parent=11 // pred_fallthru
          _
      $region12: #{swin_deeplab_forward.13} parent=5 // pred_fallthru
        _
      %p482 = scmp.lt.s32.totalorder %s25, 2
      // Predicated region
      $region69: #{swin_deeplab_forward.13} parent=5 // pred_check
        %p483 = pneg %p482
      $region70: #{swin_deeplab_forward.13} parent=5 // pred_check_branch
        %485 = sbr.rel (%p483) target = $region72
      $region71: #{swin_deeplab_forward.13} parent=5 // pred_region
        // Predicated region
        $region73: #{swin_deeplab_forward.13} parent=71 // pred_check
          %p486 = pneg %p45
        $region74: #{swin_deeplab_forward.13} parent=71 // pred_check_branch
          %488 = sbr.rel (%p486) target = $region76
        $region75: #{swin_deeplab_forward.13} parent=71 // pred_region
          %p489 = scmp.lt.s32.totalorder %s25, 1
          %s490 = scalar_select %p489, %s25, 1
          %s491 = smul.addr %s490, 2
          %s492 = smul.addr %s491, 8
          %s493 = scalar_lea.vmem %s0, %s492
        $region76: #{swin_deeplab_forward.13} parent=71 // pred_fallthru
          _
      $region72: #{swin_deeplab_forward.13} parent=5 // pred_fallthru
        _
      %p494 = scmp.le.s32.totalorder 1, %s25
      %p495 = scmp.lt.s32.totalorder %s25, 3
      %p496 = pnand %p494, %p495
      %p497 = pneg %p496
      // Predicated region
      $region77: #{swin_deeplab_forward.13} parent=5 // pred_check
        _
      $region78: #{swin_deeplab_forward.13} parent=5 // pred_check_branch
        %499 = sbr.rel (%p496) target = $region80
      $region79: #{swin_deeplab_forward.13} parent=5 // pred_region
        %s500 = ssub.s32 %s25, 1
        // Predicated region
        $region81: #{swin_deeplab_forward.13} parent=79 // pred_check
          %p501 = pneg %p93
        $region82: #{swin_deeplab_forward.13} parent=79 // pred_check_branch
          %503 = sbr.rel (%p501) target = $region84
        $region83: #{swin_deeplab_forward.13} parent=79 // pred_region
          %505 = dma.done [#allocation3], 16
        $region84: #{swin_deeplab_forward.13} parent=79 // pred_fallthru
          _
        // Predicated region
        $region85: #{swin_deeplab_forward.13} parent=79 // pred_check
          %p506 = pneg %p135
        $region86: #{swin_deeplab_forward.13} parent=79 // pred_check_branch
          %508 = sbr.rel (%p506) target = $region88
        $region87: #{swin_deeplab_forward.13} parent=79 // pred_region
          %510 = dma.done [#allocation5], 16
        $region88: #{swin_deeplab_forward.13} parent=79 // pred_fallthru
          _
        // Predicated region
        $region89: #{swin_deeplab_forward.13} parent=79 // pred_check
          %p511 = pneg %p198
        $region90: #{swin_deeplab_forward.13} parent=79 // pred_check_branch
          %513 = sbr.rel (%p511) target = $region92
        $region91: #{swin_deeplab_forward.13} parent=79 // pred_region
          %515 = dma.done [#allocation5], 16
        $region92: #{swin_deeplab_forward.13} parent=79 // pred_fallthru
          _
        // Predicated region
        $region93: #{swin_deeplab_forward.13} parent=79 // pred_check
          %p516 = pneg %p240
        $region94: #{swin_deeplab_forward.13} parent=79 // pred_check_branch
          %518 = sbr.rel (%p516) target = $region96
        $region95: #{swin_deeplab_forward.13} parent=79 // pred_region
          %520 = dma.done [#allocation8], 16
        $region96: #{swin_deeplab_forward.13} parent=79 // pred_fallthru
          _
        // Predicated region
        $region97: #{swin_deeplab_forward.13} parent=79 // pred_check
          %p521 = pneg %p303
        $region98: #{swin_deeplab_forward.13} parent=79 // pred_check_branch
          %523 = sbr.rel (%p521) target = $region100
        $region99: #{swin_deeplab_forward.13} parent=79 // pred_region
          %525 = dma.done [#allocation8], 16
        $region100: #{swin_deeplab_forward.13} parent=79 // pred_fallthru
          _
        // Predicated region
        $region101: #{swin_deeplab_forward.13} parent=79 // pred_check
          %p526 = pneg %p345
        $region102: #{swin_deeplab_forward.13} parent=79 // pred_check_branch
          %528 = sbr.rel (%p526) target = $region104
        $region103: #{swin_deeplab_forward.13} parent=79 // pred_region
          %530 = dma.done [#allocation11], 16
        $region104: #{swin_deeplab_forward.13} parent=79 // pred_fallthru
          _
        %p531 = scmp.lt.s32.totalorder %s30, 1
        %s532 = scalar_select %p531, %s30, 1
        %s533 = smul.addr %s532, 2
        %s534 = smul.addr %s533, 8
        %s535 = scalar_lea.vmem %s0, %s534
        %p536 = pneg %p51
        %p537 = pneg %p48
        %p538 = pneg %p72
        %p539 = pneg %p69
        %p540 = pneg %p93
        %p541 = pneg %p90
        %p542 = pneg %p114
        %p543 = pneg %p111
        %p544 = pneg %p135
        %p545 = pneg %p132
        %p546 = pneg %p156
        %p547 = pneg %p153
        %p548 = pneg %p177
        %p549 = pneg %p174
        %p550 = pneg %p198
        %p551 = pneg %p195
        %p552 = pneg %p219
        %p553 = pneg %p216
        %p554 = pneg %p240
        %p555 = pneg %p237
        %p556 = pneg %p261
        %p557 = pneg %p258
        %p558 = pneg %p282
        %p559 = pneg %p279
        %p560 = pneg %p303
        %p561 = pneg %p300
        %p562 = pneg %p324
        %p563 = pneg %p321
        %p564 = pneg %p345
        %p565 = pneg %p342
        %p566 = pneg %p371
        %p567 = pneg %p368
        %p568 = scmp.lt.s32.totalorder %s30, 1
        %s569 = scalar_select %p568, %s30, 1
        %s570 = smul.addr %s569, 2
        %s571 = smul.addr %s570, 8
        %s572 = scalar_lea.vmem %s15, %s571
        %p573 = scmp.lt.s32.totalorder %s30, 1
        %s574 = scalar_select %p573, %s30, 1
        %s575 = smul.addr %s574, 2
        %s576 = smul.addr %s575, 8
        %s577 = scalar_lea.vmem %s0, %s576
        %p578 = scmp.lt.s32.totalorder %s30, 1
        %s579 = scalar_select %p578, %s30, 1
        %s580 = smul.addr %s579, 2
        %s581 = smul.addr %s580, 8
        %s582 = scalar_lea.vmem %s15, %s581
        %v584 = vld [vmem:[%s577] sm:$0xff]
        %v585 = vld [vmem:[%s577 + $0x8] sm:$0xff]
        %vm586 = vcmask 523264
        %v587 = vsel %vm586, %v584, 0.0
        %v588 = vsel %vm586, %v585, 0.0
        %v589 = vadd.f32 %v587, %v588
        %v590 = vrot.slane %v589, 4
        %v591 = vadd.f32 %v589, %v590
        %v592 = vrot.slane %v591, 2
        %v593 = vadd.f32 %v591, %v592
        %v594 = vrot.slane %v593, 1
        %v595 = vadd.f32 %v593, %v594
        %v596 = vrcp.pop 16.0
        %v597 = vmul.f32 16.0, %v596
        %v598 = vsub.f32 1.0, %v597
        %v599 = vmul.f32 %v596, %v598
        %v600 = vadd.f32 %v596, %v599
        %vm601 = vweird.f32 %v596
        %v602 = vsel %vm601, %v596, %v600
        %v603 = vmul.f32 %v595, %v602
        %v604 = vpack.c.bf16 %v585, %v584
        %v605 = vld [vmem:[%s1] sm:$0xff]
        %v606 = vld [vmem:[%s1 + $0x8] sm:$0xff]
        %v607 = vld [vmem:[%s1 + $0x10] sm:$0xff]
        %v608 = vld [vmem:[%s1 + $0x18] sm:$0xff]
        %v609 = vld [vmem:[%s1 + $0x20] sm:$0xff]
        %v610 = vld [vmem:[%s1 + $0x28] sm:$0xff]
        %v611 = vld [vmem:[%s1 + $0x30] sm:$0xff]
        %v612 = vld [vmem:[%s1 + $0x38] sm:$0xff]
        %v613 = vpack.c.bf16 %v606, %v605
        %v614 = vpack.c.bf16 %v608, %v607
        %v615 = vpack.c.bf16 %v610, %v609
        %v616 = vpack.c.bf16 %v612, %v611
        %v617 = vld [vmem:[#allocation2] sm:$0x1]
        %v619 = vperm.slane %v617, 0
        %v622 = vsel %vm586, %v604, 0
        %624 = vmatpush.bf16.msra.mxu0 0
        %625 = vmatpush.bf16.msra.mxu0 0
        %626 = vmatpush.bf16.msra.mxu0 0
        %627 = vmatpush.bf16.msra.mxu0 0
        %628 = vmatpush.bf16.msra.mxu0 %v616
        %629 = vmatpush.bf16.msra.mxu0 %v615
        %630 = vmatpush.bf16.msra.mxu0 %v614
        %631 = vmatpush.bf16.msra.mxu0 %v613
        %632 = vmatmul.bf16.gmra.mxu0 %v622
        %v633 = vpop.f32.mrf.mxu0
        %v634 = vadd.f32 %v619, %v633
        %v635 = vpop.f32.mrf.mxu0
        %v636 = vadd.f32 %v619, %v635
        %637 = vdwg.mxu0
        %v638 = vmax.f32 %v634, 0.0
        %v639 = vmax.f32 %v636, 0.0
        %v640 = vpack.c.bf16 %v639, %v638
        %v641 = vld [vmem:[%s3] sm:$0xff]
        %v642 = vld [vmem:[%s3 + $0x8] sm:$0xff]
        %v643 = vld [vmem:[%s3 + $0x10] sm:$0xff]
        %v644 = vld [vmem:[%s3 + $0x18] sm:$0xff]
        %v645 = vpack.c.bf16 %v642, %v641
        %v646 = vpack.c.bf16 %v644, %v643
        %v647 = vld [vmem:[#allocation4] sm:$0x1]
        %v649 = vperm.slane %v647, 0
        %vm651 = vcmask 261120
        %v653 = vsel %vm651, %v640, 0
        %655 = vmatpush.bf16.msra.mxu0 0
        %656 = vmatpush.bf16.msra.mxu0 0
        %657 = vmatpush.bf16.msra.mxu0 0
        %658 = vmatpush.bf16.msra.mxu0 0
        %659 = vmatpush.bf16.msra.mxu0 0
        %660 = vmatpush.bf16.msra.mxu0 0
        %661 = vmatpush.bf16.msra.mxu0 %v646
        %662 = vmatpush.bf16.msra.mxu0 %v645
        %663 = vmatmul.bf16.gmra.mxu0 %v653
        %v664 = vpop.f32.mrf.mxu0
        %v665 = vadd.f32 %v649, %v664
        %v666 = vpop.f32.mrf.mxu0
        %v667 = vadd.f32 %v649, %v666
        %668 = vdwg.mxu0
        %v669 = vmax.f32 %v665, 0.0
        %v670 = vmax.f32 %v667, 0.0
        %v671 = vpack.c.bf16 %v603, %v603
        %v672 = vld [vmem:[%s5] sm:$0xff]
        %v673 = vld [vmem:[%s5 + $0x8] sm:$0xff]
        %v674 = vld [vmem:[%s5 + $0x10] sm:$0xff]
        %v675 = vld [vmem:[%s5 + $0x18] sm:$0xff]
        %v676 = vld [vmem:[%s5 + $0x20] sm:$0xff]
        %v677 = vld [vmem:[%s5 + $0x28] sm:$0xff]
        %v678 = vld [vmem:[%s5 + $0x30] sm:$0xff]
        %v679 = vld [vmem:[%s5 + $0x38] sm:$0xff]
        %v680 = vpack.c.bf16 %v673, %v672
        %v681 = vpack.c.bf16 %v675, %v674
        %v682 = vpack.c.bf16 %v677, %v676
        %v683 = vpack.c.bf16 %v679, %v678
        %v685 = vsel %vm586, %v671, 0
        %687 = vmatpush.bf16.msra.mxu0 0
        %688 = vmatpush.bf16.msra.mxu0 0
        %689 = vmatpush.bf16.msra.mxu0 0
        %690 = vmatpush.bf16.msra.mxu0 0
        %691 = vmatpush.bf16.msra.mxu0 %v683
        %692 = vmatpush.bf16.msra.mxu0 %v682
        %693 = vmatpush.bf16.msra.mxu0 %v681
        %694 = vmatpush.bf16.msra.mxu0 %v680
        %695 = vmatmul.bf16.gmra.mxu0 %v685
        %v696 = vpop.f32.mrf.mxu0
        %v697 = vadd.f32 0.0, %v696
        %v698 = vpop.f32.mrf.mxu0
        %699 = vdwg.mxu0
        %v700 = vld [vmem:[%s6] sm:$0xff]
        %v701 = vld [vmem:[%s6 + $0x8] sm:$0xff]
        %v702 = vld [vmem:[%s6 + $0x10] sm:$0xff]
        %v703 = vld [vmem:[%s6 + $0x18] sm:$0xff]
        %v704 = vld [vmem:[%s6 + $0x20] sm:$0xff]
        %v705 = vld [vmem:[%s6 + $0x28] sm:$0xff]
        %v706 = vld [vmem:[%s6 + $0x30] sm:$0xff]
        %v707 = vld [vmem:[%s6 + $0x38] sm:$0xff]
        %v708 = vpack.c.bf16 %v701, %v700
        %v709 = vpack.c.bf16 %v703, %v702
        %v710 = vpack.c.bf16 %v705, %v704
        %v711 = vpack.c.bf16 %v707, %v706
        %712 = vmatpush.bf16.msra.mxu0 0
        %713 = vmatpush.bf16.msra.mxu0 0
        %714 = vmatpush.bf16.msra.mxu0 0
        %715 = vmatpush.bf16.msra.mxu0 0
        %716 = vmatpush.bf16.msra.mxu0 %v711
        %717 = vmatpush.bf16.msra.mxu0 %v710
        %718 = vmatpush.bf16.msra.mxu0 %v709
        %719 = vmatpush.bf16.msra.mxu0 %v708
        %720 = vmatmul.bf16.gmra.mxu0 %v622
        %v721 = vpop.f32.mrf.mxu0
        %v722 = vadd.f32 0.0, %v721
        %v723 = vpop.f32.mrf.mxu0
        %v724 = vadd.f32 0.0, %v723
        %725 = vdwg.mxu0
        %v726 = vperm.slane %v697, 0
        %v727 = vadd.f32 %v726, %v722
        %v728 = vadd.f32 %v726, %v724
        %v729 = vld [vmem:[#allocation6] sm:$0x1]
        %v731 = vperm.slane %v729, 0
        %v733 = vadd.f32 %v727, %v731
        %v734 = vadd.f32 %v728, %v731
        %v735 = vmax.f32 %v733, 0.0
        %v736 = vmax.f32 %v734, 0.0
        %v737 = vpack.c.bf16 %v736, %v735
        %v738 = vld [vmem:[%s8] sm:$0xff]
        %v739 = vld [vmem:[%s8 + $0x8] sm:$0xff]
        %v740 = vld [vmem:[%s8 + $0x10] sm:$0xff]
        %v741 = vld [vmem:[%s8 + $0x18] sm:$0xff]
        %v742 = vpack.c.bf16 %v739, %v738
        %v743 = vpack.c.bf16 %v741, %v740
        %v744 = vld [vmem:[#allocation7] sm:$0x1]
        %v746 = vperm.slane %v744, 0
        %v749 = vsel %vm651, %v737, 0
        %751 = vmatpush.bf16.msra.mxu0 0
        %752 = vmatpush.bf16.msra.mxu0 0
        %753 = vmatpush.bf16.msra.mxu0 0
        %754 = vmatpush.bf16.msra.mxu0 0
        %755 = vmatpush.bf16.msra.mxu0 0
        %756 = vmatpush.bf16.msra.mxu0 0
        %757 = vmatpush.bf16.msra.mxu0 %v743
        %758 = vmatpush.bf16.msra.mxu0 %v742
        %759 = vmatmul.bf16.gmra.mxu0 %v749
        %v760 = vpop.f32.mrf.mxu0
        %v761 = vadd.f32 %v746, %v760
        %v762 = vpop.f32.mrf.mxu0
        %v763 = vadd.f32 %v746, %v762
        %764 = vdwg.mxu0
        %v765 = vmax.f32 %v761, 0.0
        %v766 = vmax.f32 %v763, 0.0
        %v767 = vld [vmem:[%s10] sm:$0xff]
        %v768 = vld [vmem:[%s10 + $0x8] sm:$0xff]
        %v769 = vld [vmem:[%s10 + $0x10] sm:$0xff]
        %v770 = vld [vmem:[%s10 + $0x18] sm:$0xff]
        %v771 = vld [vmem:[%s10 + $0x20] sm:$0xff]
        %v772 = vld [vmem:[%s10 + $0x28] sm:$0xff]
        %v773 = vld [vmem:[%s10 + $0x30] sm:$0xff]
        %v774 = vld [vmem:[%s10 + $0x38] sm:$0xff]
        %v775 = vpack.c.bf16 %v768, %v767
        %v776 = vpack.c.bf16 %v770, %v769
        %v777 = vpack.c.bf16 %v772, %v771
        %v778 = vpack.c.bf16 %v774, %v773
        %779 = vmatpush.bf16.msra.mxu0 0
        %780 = vmatpush.bf16.msra.mxu0 0
        %781 = vmatpush.bf16.msra.mxu0 0
        %782 = vmatpush.bf16.msra.mxu0 0
        %783 = vmatpush.bf16.msra.mxu0 %v778
        %784 = vmatpush.bf16.msra.mxu0 %v777
        %785 = vmatpush.bf16.msra.mxu0 %v776
        %786 = vmatpush.bf16.msra.mxu0 %v775
        %787 = vmatmul.bf16.gmra.mxu0 %v685
        %v788 = vpop.f32.mrf.mxu0
        %v789 = vadd.f32 0.0, %v788
        %v790 = vpop.f32.mrf.mxu0
        %791 = vdwg.mxu0
        %v792 = vld [vmem:[%s11] sm:$0xff]
        %v793 = vld [vmem:[%s11 + $0x8] sm:$0xff]
        %v794 = vld [vmem:[%s11 + $0x10] sm:$0xff]
        %v795 = vld [vmem:[%s11 + $0x18] sm:$0xff]
        %v796 = vld [vmem:[%s11 + $0x20] sm:$0xff]
        %v797 = vld [vmem:[%s11 + $0x28] sm:$0xff]
        %v798 = vld [vmem:[%s11 + $0x30] sm:$0xff]
        %v799 = vld [vmem:[%s11 + $0x38] sm:$0xff]
        %v800 = vpack.c.bf16 %v793, %v792
        %v801 = vpack.c.bf16 %v795, %v794
        %v802 = vpack.c.bf16 %v797, %v796
        %v803 = vpack.c.bf16 %v799, %v798
        %804 = vmatpush.bf16.msra.mxu0 0
        %805 = vmatpush.bf16.msra.mxu0 0
        %806 = vmatpush.bf16.msra.mxu0 0
        %807 = vmatpush.bf16.msra.mxu0 0
        %808 = vmatpush.bf16.msra.mxu0 %v803
        %809 = vmatpush.bf16.msra.mxu0 %v802
        %810 = vmatpush.bf16.msra.mxu0 %v801
        %811 = vmatpush.bf16.msra.mxu0 %v800
        %812 = vmatmul.bf16.gmra.mxu0 %v622
        %v813 = vpop.f32.mrf.mxu0
        %v814 = vadd.f32 0.0, %v813
        %v815 = vpop.f32.mrf.mxu0
        %v816 = vadd.f32 0.0, %v815
        %817 = vdwg.mxu0
        %v818 = vperm.slane %v789, 0
        %v819 = vadd.f32 %v818, %v814
        %v820 = vadd.f32 %v818, %v816
        %v821 = vld [vmem:[#allocation9] sm:$0x1]
        %v823 = vperm.slane %v821, 0
        %v825 = vadd.f32 %v819, %v823
        %v826 = vadd.f32 %v820, %v823
        %v827 = vmax.f32 %v825, 0.0
        %v828 = vmax.f32 %v826, 0.0
        %v829 = vpack.c.bf16 %v670, %v669
        %v830 = vpack.c.bf16 %v766, %v765
        %v832 = vsel %vm651, %v829, 0
        %v835 = vsel %vm651, %v830, 0
        %837 = vmatpush.bf16.xpose.msra.mxu0 0
        %838 = vmatpush.bf16.xpose.msra.mxu0 0
        %839 = vmatpush.bf16.xpose.msra.mxu0 0
        %840 = vmatpush.bf16.xpose.msra.mxu0 0
        %841 = vmatpush.bf16.xpose.msra.mxu0 0
        %842 = vmatpush.bf16.xpose.msra.mxu0 0
        %843 = vmatpush.bf16.xpose.msra.mxu0 0
        %844 = vmatpush.bf16.xpose.msra.mxu0 %v835
        %845 = vmatmul.bf16.gmra.mxu0 %v832
        %v846 = vpop.f32.mrf.mxu0
        %v847 = vadd.f32 0.0, %v846
        %v848 = vpop.f32.mrf.mxu0
        %v849 = vadd.f32 0.0, %v848
        %850 = vdwg.mxu0
        %v851 = vmul.f32 %v847, 0.17677669
        %v852 = vmul.f32 %v849, 0.17677669
        %vm853 = vcmask 130048
        %v854 = vsel %vm853, %v851, -inf
        %855 = vmax.xlane.f32.xlu0 %v854
        %v856 = vpop.xlane.xlu0 %855
        %v857 = vsel %vm853, %v852, -inf
        %858 = vmax.xlane.f32.xlu0 %v857
        %v859 = vpop.xlane.xlu0 %858
        %v860 = vsub.f32 %v851, %v856
        %v861 = vsub.f32 %v852, %v859
        %v862 = vmul.f32 %v860, 1.442695
        %v863 = vpow.pop %v862
        %v864 = vmul.f32 %v861, 1.442695
        %v865 = vpow.pop %v864
        %v866 = vsel %vm853, %v863, 0.0
        %867 = vadd.xlane.f32.xlu0 %v866
        %v868 = vpop.xlane.xlu0 %867
        %v869 = vsel %vm853, %v865, 0.0
        %870 = vadd.xlane.f32.xlu0 %v869
        %v871 = vpop.xlane.xlu0 %870
        %v872 = vrcp.pop %v868
        %v873 = vrcp.pop %v871
        %v874 = vmul.f32 %v863, %v872
        %v875 = vmul.f32 %v865, %v873
        %v876 = vpack.c.bf16 %v875, %v874
        %v877 = vpack.c.bf16 %v828, %v827
        %v879 = vsel %vm853, %v876, 0
        %881 = vmatpush.bf16.msra.mxu0 0
        %882 = vmatpush.bf16.msra.mxu0 0
        %883 = vmatpush.bf16.msra.mxu0 0
        %884 = vmatpush.bf16.msra.mxu0 0
        %885 = vmatpush.bf16.msra.mxu0 0
        %886 = vmatpush.bf16.msra.mxu0 0
        %887 = vmatpush.bf16.msra.mxu0 0
        %888 = vmatpush.bf16.msra.mxu0 %v877
        %889 = vmatmul.bf16.gmra.mxu0 %v879
        %v890 = vpop.f32.mrf.mxu0
        %v891 = vadd.f32 0.0, %v890
        %v892 = vpop.f32.mrf.mxu0
        %v893 = vadd.f32 0.0, %v892
        %894 = vdwg.mxu0
        %v895 = vpack.c.bf16 %v893, %v891
        %v896 = vld [vmem:[%s13] sm:$0xff]
        %v897 = vld [vmem:[%s13 + $0x8] sm:$0xff]
        %v898 = vld [vmem:[%s13 + $0x10] sm:$0xff]
        %v899 = vld [vmem:[%s13 + $0x18] sm:$0xff]
        %v900 = vpack.c.bf16 %v897, %v896
        %v901 = vpack.c.bf16 %v899, %v898
        %v902 = vld [vmem:[#allocation10] sm:$0x1]
        %v904 = vperm.slane %v902, 0
        %v907 = vsel %vm651, %v895, 0
        %909 = vmatpush.bf16.msra.mxu0 0
        %910 = vmatpush.bf16.msra.mxu0 0
        %911 = vmatpush.bf16.msra.mxu0 0
        %912 = vmatpush.bf16.msra.mxu0 0
        %913 = vmatpush.bf16.msra.mxu0 0
        %914 = vmatpush.bf16.msra.mxu0 0
        %915 = vmatpush.bf16.msra.mxu0 %v901
        %916 = vmatpush.bf16.msra.mxu0 %v900
        %917 = vmatmul.bf16.gmra.mxu0 %v907
        %v918 = vpop.f32.mrf.mxu0
        %v919 = vadd.f32 %v904, %v918
        %v920 = vpop.f32.mrf.mxu0
        %v921 = vadd.f32 %v904, %v920
        %922 = vdwg.mxu0
        %v923 = vmax.f32 %v919, 0.0
        %v924 = vmax.f32 %v921, 0.0
        %925 = vst.msk [vmem:[%s582] sm:$0xff] %vm586, %v923
        %926 = vst.msk [vmem:[%s582 + $0x8] sm:$0xff] %vm586, %v924
        %p927 = scmp.lt.s32.totalorder %s30, 1
        %s928 = scalar_select %p927, %s30, 1
        %s929 = smul.addr %s928, 2
        %s930 = smul.addr %s929, 8
        %s931 = scalar_lea.vmem %s15, %s930
        // Predicated region
        $region105: #{swin_deeplab_forward.13} parent=79 // pred_check
          %p932 = pneg %p368
        $region106: #{swin_deeplab_forward.13} parent=79 // pred_check_branch
          %934 = sbr.rel (%p932) target = $region108
        $region107: #{swin_deeplab_forward.13} parent=79 // pred_region
          _
        $region108: #{swin_deeplab_forward.13} parent=79 // pred_fallthru
          _
      $region80: #{swin_deeplab_forward.13} parent=5 // pred_fallthru
        _
      %p935 = scmp.le.s32.totalorder 2, %s25
      // Predicated region
      $region109: #{swin_deeplab_forward.13} parent=5 // pred_check
        %p936 = pneg %p935
      $region110: #{swin_deeplab_forward.13} parent=5 // pred_check_branch
        %938 = sbr.rel (%p936) target = $region112
      $region111: #{swin_deeplab_forward.13} parent=5 // pred_region
        %s939 = ssub.s32 %s25, 2
        // Predicated region
        $region113: #{swin_deeplab_forward.13} parent=111 // pred_check
          %p940 = pneg %p374
        $region114: #{swin_deeplab_forward.13} parent=111 // pred_check_branch
          %942 = sbr.rel (%p940) target = $region116
        $region115: #{swin_deeplab_forward.13} parent=111 // pred_region
          %p943 = scmp.lt.s32.totalorder %s31, 1
          %s944 = scalar_select %p943, %s31, 1
          %s945 = smul.addr %s944, 2
          %s946 = smul.addr %s945, 8
          %s947 = scalar_lea.vmem %s15, %s946
        $region116: #{swin_deeplab_forward.13} parent=111 // pred_fallthru
          _
      $region112: #{swin_deeplab_forward.13} parent=5 // pred_fallthru
        _
    $region6: #{swin_deeplab_forward.13} parent=1 // loop_footer
      %s29 = sadd.s32 1, %s25
    $region7: #{swin_deeplab_forward.13} parent=1 // loop_footer_branch
      %24 = sbr.rel target = $region3
    $region8: #{swin_deeplab_forward.13} parent=1 // loop_exit
      _
    %948 = vsyncpa [#allocation3], 1
    %s949 = scalar_lea.sflag [#allocation3], 1
    %950 = vsyncpa %s949, 1
    %951 = vsyncpa [#allocation5], 1
    %952 = vsyncpa [#allocation8], 1
    %953 = vsyncpa [#allocation11], 1

// kernel: swin_deeplab_forward.14
$region0: #{swin_deeplab_forward.14}
  #allocation0 [shape = 'u32[]', space=smem, size = 0x4, offset = 0x4, fixed_abs, tag = 'smem constant byte address 0x4 - core index']
  #allocation1 [shape = 'u32[72,128]{1,0:T(1,128)}', space=vmem, size = 0x9000, scoped, tag = 'internal scratch']
  %s0 = inlined_call_operand.vmem [shape: f32[32,128], index: 0, kind: input, shape index: {}]
  %s1 = inlined_call_operand.vmem [shape: f32[32,128], index: 1, kind: input, shape index: {}]
  %s2 = inlined_call_operand.vmem [shape: f32[32,128], index: 2, kind: input, shape index: {}]
  %s3 = inlined_call_operand.vmem [shape: f32[32,128], index: 3, kind: input, shape index: {}]
  %s4 = inlined_call_operand.vmem [shape: f32[32,128], index: 4, kind: input, shape index: {}]
  %s5 = inlined_call_operand.vmem [shape: f32[32,128], index: 5, kind: input, shape index: {}]
  %s6 = inlined_call_operand.vmem [shape: f32[32,128], index: 6, kind: input, shape index: {}]
  %s7 = inlined_call_operand.vmem [shape: f32[32,128], index: 7, kind: input, shape index: {}]
  %s8 = inlined_call_operand.vmem [shape: f32[32,128], index: 8, kind: input, shape index: {}]
  %s9 = inlined_call_operand.vmem [shape: f32[9,128,64], index: 9, kind: input, shape index: {}]
  %s10 = inlined_call_operand.hbm [shape: f32[1,64], index: 10, kind: input, shape index: {}]
  %s11 = inlined_call_operand.vmem [shape: f32[32,64], index: 11, kind: output, shape index: {}]
  %s12 = sld [smem:[#allocation0]]
  $region58: #{swin_deeplab_forward.14} parent=0
    _
  %s14 = ssub.s32 1, %s12
  %s15 = scalar_select 0, %s14, %s12
  $region1: #{swin_deeplab_forward.14} parent=0
    #allocation2 [shape = 'u8[512]{0}', space=vmem, size = 0x400, scoped, tag = 'input window, operand 10, single buffered']
    #allocation3 [shape = 's32[1]{0}', space=sflag, size = 0x4, scoped, tag = 'scoped memory for swin_deeplab_forward.14']
    %16 = vsyncpa [#allocation3], 0
    // Predicated region
    $region2: #{swin_deeplab_forward.14} parent=1 // pred_check
      _
    $region3: #{swin_deeplab_forward.14} parent=1 // pred_check_branch
      %18 = sbr.rel (0) target = $region5
    $region4: #{swin_deeplab_forward.14} parent=1 // pred_region
      _
    $region5: #{swin_deeplab_forward.14} parent=1 // pred_fallthru
      _
    // Predicated region
    $region6: #{swin_deeplab_forward.14} parent=1 // pred_check
      _
    $region7: #{swin_deeplab_forward.14} parent=1 // pred_check_branch
      %20 = sbr.rel (0) target = $region9
    $region8: #{swin_deeplab_forward.14} parent=1 // pred_region
      _
    $region9: #{swin_deeplab_forward.14} parent=1 // pred_fallthru
      _
    // Predicated region
    $region10: #{swin_deeplab_forward.14} parent=1 // pred_check
      _
    $region11: #{swin_deeplab_forward.14} parent=1 // pred_check_branch
      %22 = sbr.rel (0) target = $region13
    $region12: #{swin_deeplab_forward.14} parent=1 // pred_region
      _
    $region13: #{swin_deeplab_forward.14} parent=1 // pred_fallthru
      _
    // Predicated region
    $region14: #{swin_deeplab_forward.14} parent=1 // pred_check
      _
    $region15: #{swin_deeplab_forward.14} parent=1 // pred_check_branch
      %24 = sbr.rel (0) target = $region17
    $region16: #{swin_deeplab_forward.14} parent=1 // pred_region
      _
    $region17: #{swin_deeplab_forward.14} parent=1 // pred_fallthru
      _
    // Predicated region
    $region18: #{swin_deeplab_forward.14} parent=1 // pred_check
      _
    $region19: #{swin_deeplab_forward.14} parent=1 // pred_check_branch
      %26 = sbr.rel (0) target = $region21
    $region20: #{swin_deeplab_forward.14} parent=1 // pred_region
      _
    $region21: #{swin_deeplab_forward.14} parent=1 // pred_fallthru
      _
    // Predicated region
    $region22: #{swin_deeplab_forward.14} parent=1 // pred_check
      _
    $region23: #{swin_deeplab_forward.14} parent=1 // pred_check_branch
      %28 = sbr.rel (0) target = $region25
    $region24: #{swin_deeplab_forward.14} parent=1 // pred_region
      _
    $region25: #{swin_deeplab_forward.14} parent=1 // pred_fallthru
      _
    // Predicated region
    $region26: #{swin_deeplab_forward.14} parent=1 // pred_check
      _
    $region27: #{swin_deeplab_forward.14} parent=1 // pred_check_branch
      %30 = sbr.rel (0) target = $region29
    $region28: #{swin_deeplab_forward.14} parent=1 // pred_region
      _
    $region29: #{swin_deeplab_forward.14} parent=1 // pred_fallthru
      _
    // Predicated region
    $region30: #{swin_deeplab_forward.14} parent=1 // pred_check
      _
    $region31: #{swin_deeplab_forward.14} parent=1 // pred_check_branch
      %32 = sbr.rel (0) target = $region33
    $region32: #{swin_deeplab_forward.14} parent=1 // pred_region
      _
    $region33: #{swin_deeplab_forward.14} parent=1 // pred_fallthru
      _
    // Predicated region
    $region34: #{swin_deeplab_forward.14} parent=1 // pred_check
      _
    $region35: #{swin_deeplab_forward.14} parent=1 // pred_check_branch
      %34 = sbr.rel (0) target = $region37
    $region36: #{swin_deeplab_forward.14} parent=1 // pred_region
      _
    $region37: #{swin_deeplab_forward.14} parent=1 // pred_fallthru
      _
    // Predicated region
    $region38: #{swin_deeplab_forward.14} parent=1 // pred_check
      _
    $region39: #{swin_deeplab_forward.14} parent=1 // pred_check_branch
      %36 = sbr.rel (0) target = $region41
    $region40: #{swin_deeplab_forward.14} parent=1 // pred_region
      _
    $region41: #{swin_deeplab_forward.14} parent=1 // pred_fallthru
      _
    // Predicated region
    $region42: #{swin_deeplab_forward.14} parent=1 // pred_check
      _
    $region43: #{swin_deeplab_forward.14} parent=1 // pred_check_branch
      %38 = sbr.rel (0) target = $region45
    $region44: #{swin_deeplab_forward.14} parent=1 // pred_region
      %40 = vsyncadd [#allocation3], 0
      %s42 = sshll.u32 %s10, 4
      %s43 = int_to_ptr.hbm [resolvable:$true] %s42
      %s44 = sshll.u32 [#allocation2], 4
      %s45 = int_to_ptr.vmem [resolvable:$true] %s44
      %47 = dma.hbm_to_vmem [thread:$0]  %s43, 16, %s45, [#allocation3]
    $region45: #{swin_deeplab_forward.14} parent=1 // pred_fallthru
      _
    // Predicated region
    $region46: #{swin_deeplab_forward.14} parent=1 // pred_check
      _
    $region47: #{swin_deeplab_forward.14} parent=1 // pred_check_branch
      %49 = sbr.rel (0) target = $region49
    $region48: #{swin_deeplab_forward.14} parent=1 // pred_region
      %51 = dma.done [#allocation3], 16
    $region49: #{swin_deeplab_forward.14} parent=1 // pred_fallthru
      _
    %v52 = vld [vmem:[%s0] sm:$0xff]
    %v53 = vld [vmem:[%s0 + $0x8] sm:$0xff]
    %v54 = vld [vmem:[%s0 + $0x10] sm:$0xff]
    %v55 = vld [vmem:[%s0 + $0x18] sm:$0xff]
    %v56 = vpack.c.bf16 %v53, %v52
    %v57 = vpack.c.bf16 %v55, %v54
    %v58 = vld [vmem:[%s9] sm:$0xff]
    %v59 = vld [vmem:[%s9 + $0x8] sm:$0xff]
    %v60 = vld [vmem:[%s9 + $0x10] sm:$0xff]
    %v61 = vld [vmem:[%s9 + $0x18] sm:$0xff]
    %v62 = vld [vmem:[%s9 + $0x20] sm:$0xff]
    %v63 = vld [vmem:[%s9 + $0x28] sm:$0xff]
    %v64 = vld [vmem:[%s9 + $0x30] sm:$0xff]
    %v65 = vld [vmem:[%s9 + $0x38] sm:$0xff]
    %v66 = vld [vmem:[%s9 + $0x40] sm:$0xff]
    %v67 = vld [vmem:[%s9 + $0x48] sm:$0xff]
    %v68 = vld [vmem:[%s9 + $0x50] sm:$0xff]
    %v69 = vld [vmem:[%s9 + $0x58] sm:$0xff]
    %v70 = vld [vmem:[%s9 + $0x60] sm:$0xff]
    %v71 = vld [vmem:[%s9 + $0x68] sm:$0xff]
    %v72 = vld [vmem:[%s9 + $0x70] sm:$0xff]
    %v73 = vld [vmem:[%s9 + $0x78] sm:$0xff]
    %v74 = vpack.c.bf16 %v59, %v58
    %v75 = vpack.c.bf16 %v61, %v60
    %v76 = vpack.c.bf16 %v63, %v62
    %v77 = vpack.c.bf16 %v65, %v64
    %v78 = vpack.c.bf16 %v67, %v66
    %v79 = vpack.c.bf16 %v69, %v68
    %v80 = vpack.c.bf16 %v71, %v70
    %v81 = vpack.c.bf16 %v73, %v72
    %v82 = vld [vmem:[%s1] sm:$0xff]
    %v83 = vld [vmem:[%s1 + $0x8] sm:$0xff]
    %v84 = vld [vmem:[%s1 + $0x10] sm:$0xff]
    %v85 = vld [vmem:[%s1 + $0x18] sm:$0xff]
    %v86 = vpack.c.bf16 %v83, %v82
    %v87 = vpack.c.bf16 %v85, %v84
    %s88 = scalar_lea.vmem %s9, 128
    %v89 = vld [vmem:[%s88] sm:$0xff]
    %v90 = vld [vmem:[%s88 + $0x8] sm:$0xff]
    %v91 = vld [vmem:[%s88 + $0x10] sm:$0xff]
    %v92 = vld [vmem:[%s88 + $0x18] sm:$0xff]
    %v93 = vld [vmem:[%s88 + $0x20] sm:$0xff]
    %v94 = vld [vmem:[%s88 + $0x28] sm:$0xff]
    %v95 = vld [vmem:[%s88 + $0x30] sm:$0xff]
    %v96 = vld [vmem:[%s88 + $0x38] sm:$0xff]
    %v97 = vld [vmem:[%s88 + $0x40] sm:$0xff]
    %v98 = vld [vmem:[%s88 + $0x48] sm:$0xff]
    %v99 = vld [vmem:[%s88 + $0x50] sm:$0xff]
    %v100 = vld [vmem:[%s88 + $0x58] sm:$0xff]
    %v101 = vld [vmem:[%s88 + $0x60] sm:$0xff]
    %v102 = vld [vmem:[%s88 + $0x68] sm:$0xff]
    %v103 = vld [vmem:[%s88 + $0x70] sm:$0xff]
    %v104 = vld [vmem:[%s88 + $0x78] sm:$0xff]
    %v105 = vpack.c.bf16 %v90, %v89
    %v106 = vpack.c.bf16 %v92, %v91
    %v107 = vpack.c.bf16 %v94, %v93
    %v108 = vpack.c.bf16 %v96, %v95
    %v109 = vpack.c.bf16 %v98, %v97
    %v110 = vpack.c.bf16 %v100, %v99
    %v111 = vpack.c.bf16 %v102, %v101
    %v112 = vpack.c.bf16 %v104, %v103
    %113 = vmatpush.bf16.msra.mxu0 %v112
    %114 = vmatpush.bf16.msra.mxu0 %v111
    %115 = vmatpush.bf16.msra.mxu0 %v110
    %116 = vmatpush.bf16.msra.mxu0 %v109
    %117 = vmatpush.bf16.msra.mxu0 %v108
    %118 = vmatpush.bf16.msra.mxu0 %v107
    %119 = vmatpush.bf16.msra.mxu0 %v106
    %120 = vmatpush.bf16.msra.mxu0 %v105
    %121 = vmatmul.bf16.gmra.mxu0 %v86
    %v122 = vpop.f32.mrf.mxu0
    %v123 = vadd.f32 0.0, %v122
    %v124 = vpop.f32.mrf.mxu0
    %v125 = vadd.f32 0.0, %v124
    %126 = vmatmul.bf16.gmra.mxu0 %v87
    %v127 = vpop.f32.mrf.mxu0
    %v128 = vadd.f32 0.0, %v127
    %v129 = vpop.f32.mrf.mxu0
    %v130 = vadd.f32 0.0, %v129
    %131 = vdwg.mxu0
    %132 = vmatpush.bf16.msra.mxu0 %v81
    %133 = vmatpush.bf16.msra.mxu0 %v80
    %134 = vmatpush.bf16.msra.mxu0 %v79
    %135 = vmatpush.bf16.msra.mxu0 %v78
    %136 = vmatpush.bf16.msra.mxu0 %v77
    %137 = vmatpush.bf16.msra.mxu0 %v76
    %138 = vmatpush.bf16.msra.mxu0 %v75
    %139 = vmatpush.bf16.msra.mxu0 %v74
    %140 = vmatmul.bf16.gmra.mxu0 %v56
    %v141 = vpop.f32.mrf.mxu0
    %v142 = vadd.f32 %v123, %v141
    %v143 = vpop.f32.mrf.mxu0
    %v144 = vadd.f32 %v125, %v143
    %145 = vmatmul.bf16.gmra.mxu0 %v57
    %v146 = vpop.f32.mrf.mxu0
    %v147 = vadd.f32 %v128, %v146
    %v148 = vpop.f32.mrf.mxu0
    %v149 = vadd.f32 %v130, %v148
    %150 = vdwg.mxu0
    %v151 = vld [vmem:[%s2] sm:$0xff]
    %v152 = vld [vmem:[%s2 + $0x8] sm:$0xff]
    %v153 = vld [vmem:[%s2 + $0x10] sm:$0xff]
    %v154 = vld [vmem:[%s2 + $0x18] sm:$0xff]
    %v155 = vpack.c.bf16 %v152, %v151
    %v156 = vpack.c.bf16 %v154, %v153
    %s157 = scalar_lea.vmem %s9, 256
    %v158 = vld [vmem:[%s157] sm:$0xff]
    %v159 = vld [vmem:[%s157 + $0x8] sm:$0xff]
    %v160 = vld [vmem:[%s157 + $0x10] sm:$0xff]
    %v161 = vld [vmem:[%s157 + $0x18] sm:$0xff]
    %v162 = vld [vmem:[%s157 + $0x20] sm:$0xff]
    %v163 = vld [vmem:[%s157 + $0x28] sm:$0xff]
    %v164 = vld [vmem:[%s157 + $0x30] sm:$0xff]
    %v165 = vld [vmem:[%s157 + $0x38] sm:$0xff]
    %v166 = vld [vmem:[%s157 + $0x40] sm:$0xff]
    %v167 = vld [vmem:[%s157 + $0x48] sm:$0xff]
    %v168 = vld [vmem:[%s157 + $0x50] sm:$0xff]
    %v169 = vld [vmem:[%s157 + $0x58] sm:$0xff]
    %v170 = vld [vmem:[%s157 + $0x60] sm:$0xff]
    %v171 = vld [vmem:[%s157 + $0x68] sm:$0xff]
    %v172 = vld [vmem:[%s157 + $0x70] sm:$0xff]
    %v173 = vld [vmem:[%s157 + $0x78] sm:$0xff]
    %v174 = vpack.c.bf16 %v159, %v158
    %v175 = vpack.c.bf16 %v161, %v160
    %v176 = vpack.c.bf16 %v163, %v162
    %v177 = vpack.c.bf16 %v165, %v164
    %v178 = vpack.c.bf16 %v167, %v166
    %v179 = vpack.c.bf16 %v169, %v168
    %v180 = vpack.c.bf16 %v171, %v170
    %v181 = vpack.c.bf16 %v173, %v172
    %182 = vmatpush.bf16.msra.mxu0 %v181
    %183 = vmatpush.bf16.msra.mxu0 %v180
    %184 = vmatpush.bf16.msra.mxu0 %v179
    %185 = vmatpush.bf16.msra.mxu0 %v178
    %186 = vmatpush.bf16.msra.mxu0 %v177
    %187 = vmatpush.bf16.msra.mxu0 %v176
    %188 = vmatpush.bf16.msra.mxu0 %v175
    %189 = vmatpush.bf16.msra.mxu0 %v174
    %190 = vmatmul.bf16.gmra.mxu0 %v155
    %v191 = vpop.f32.mrf.mxu0
    %v192 = vadd.f32 0.0, %v191
    %v193 = vpop.f32.mrf.mxu0
    %v194 = vadd.f32 0.0, %v193
    %195 = vmatmul.bf16.gmra.mxu0 %v156
    %v196 = vpop.f32.mrf.mxu0
    %v197 = vadd.f32 0.0, %v196
    %v198 = vpop.f32.mrf.mxu0
    %v199 = vadd.f32 0.0, %v198
    %200 = vdwg.mxu0
    %v201 = vadd.f32 %v142, %v192
    %v202 = vadd.f32 %v144, %v194
    %v203 = vadd.f32 %v147, %v197
    %v204 = vadd.f32 %v149, %v199
    %v205 = vld [vmem:[%s3] sm:$0xff]
    %v206 = vld [vmem:[%s3 + $0x8] sm:$0xff]
    %v207 = vld [vmem:[%s3 + $0x10] sm:$0xff]
    %v208 = vld [vmem:[%s3 + $0x18] sm:$0xff]
    %v209 = vpack.c.bf16 %v206, %v205
    %v210 = vpack.c.bf16 %v208, %v207
    %s211 = scalar_lea.vmem %s9, 384
    %v212 = vld [vmem:[%s211] sm:$0xff]
    %v213 = vld [vmem:[%s211 + $0x8] sm:$0xff]
    %v214 = vld [vmem:[%s211 + $0x10] sm:$0xff]
    %v215 = vld [vmem:[%s211 + $0x18] sm:$0xff]
    %v216 = vld [vmem:[%s211 + $0x20] sm:$0xff]
    %v217 = vld [vmem:[%s211 + $0x28] sm:$0xff]
    %v218 = vld [vmem:[%s211 + $0x30] sm:$0xff]
    %v219 = vld [vmem:[%s211 + $0x38] sm:$0xff]
    %v220 = vld [vmem:[%s211 + $0x40] sm:$0xff]
    %v221 = vld [vmem:[%s211 + $0x48] sm:$0xff]
    %v222 = vld [vmem:[%s211 + $0x50] sm:$0xff]
    %v223 = vld [vmem:[%s211 + $0x58] sm:$0xff]
    %v224 = vld [vmem:[%s211 + $0x60] sm:$0xff]
    %v225 = vld [vmem:[%s211 + $0x68] sm:$0xff]
    %v226 = vld [vmem:[%s211 + $0x70] sm:$0xff]
    %v227 = vld [vmem:[%s211 + $0x78] sm:$0xff]
    %v228 = vpack.c.bf16 %v213, %v212
    %v229 = vpack.c.bf16 %v215, %v214
    %v230 = vpack.c.bf16 %v217, %v216
    %v231 = vpack.c.bf16 %v219, %v218
    %v232 = vpack.c.bf16 %v221, %v220
    %v233 = vpack.c.bf16 %v223, %v222
    %v234 = vpack.c.bf16 %v225, %v224
    %v235 = vpack.c.bf16 %v227, %v226
    %236 = vmatpush.bf16.msra.mxu0 %v235
    %237 = vmatpush.bf16.msra.mxu0 %v234
    %238 = vmatpush.bf16.msra.mxu0 %v233
    %239 = vmatpush.bf16.msra.mxu0 %v232
    %240 = vmatpush.bf16.msra.mxu0 %v231
    %241 = vmatpush.bf16.msra.mxu0 %v230
    %242 = vmatpush.bf16.msra.mxu0 %v229
    %243 = vmatpush.bf16.msra.mxu0 %v228
    %244 = vmatmul.bf16.gmra.mxu0 %v209
    %v245 = vpop.f32.mrf.mxu0
    %v246 = vadd.f32 0.0, %v245
    %v247 = vpop.f32.mrf.mxu0
    %v248 = vadd.f32 0.0, %v247
    %249 = vmatmul.bf16.gmra.mxu0 %v210
    %v250 = vpop.f32.mrf.mxu0
    %v251 = vadd.f32 0.0, %v250
    %v252 = vpop.f32.mrf.mxu0
    %v253 = vadd.f32 0.0, %v252
    %254 = vdwg.mxu0
    %v255 = vadd.f32 %v201, %v246
    %v256 = vadd.f32 %v202, %v248
    %v257 = vadd.f32 %v203, %v251
    %v258 = vadd.f32 %v204, %v253
    %v259 = vld [vmem:[%s4] sm:$0xff]
    %v260 = vld [vmem:[%s4 + $0x8] sm:$0xff]
    %v261 = vld [vmem:[%s4 + $0x10] sm:$0xff]
    %v262 = vld [vmem:[%s4 + $0x18] sm:$0xff]
    %v263 = vpack.c.bf16 %v260, %v259
    %v264 = vpack.c.bf16 %v262, %v261
    %s265 = scalar_lea.vmem %s9, 512
    %v266 = vld [vmem:[%s265] sm:$0xff]
    %v267 = vld [vmem:[%s265 + $0x8] sm:$0xff]
    %v268 = vld [vmem:[%s265 + $0x10] sm:$0xff]
    %v269 = vld [vmem:[%s265 + $0x18] sm:$0xff]
    %v270 = vld [vmem:[%s265 + $0x20] sm:$0xff]
    %v271 = vld [vmem:[%s265 + $0x28] sm:$0xff]
    %v272 = vld [vmem:[%s265 + $0x30] sm:$0xff]
    %v273 = vld [vmem:[%s265 + $0x38] sm:$0xff]
    %v274 = vld [vmem:[%s265 + $0x40] sm:$0xff]
    %v275 = vld [vmem:[%s265 + $0x48] sm:$0xff]
    %v276 = vld [vmem:[%s265 + $0x50] sm:$0xff]
    %v277 = vld [vmem:[%s265 + $0x58] sm:$0xff]
    %v278 = vld [vmem:[%s265 + $0x60] sm:$0xff]
    %v279 = vld [vmem:[%s265 + $0x68] sm:$0xff]
    %v280 = vld [vmem:[%s265 + $0x70] sm:$0xff]
    %v281 = vld [vmem:[%s265 + $0x78] sm:$0xff]
    %v282 = vpack.c.bf16 %v267, %v266
    %v283 = vpack.c.bf16 %v269, %v268
    %v284 = vpack.c.bf16 %v271, %v270
    %v285 = vpack.c.bf16 %v273, %v272
    %v286 = vpack.c.bf16 %v275, %v274
    %v287 = vpack.c.bf16 %v277, %v276
    %v288 = vpack.c.bf16 %v279, %v278
    %v289 = vpack.c.bf16 %v281, %v280
    %290 = vmatpush.bf16.msra.mxu0 %v289
    %291 = vmatpush.bf16.msra.mxu0 %v288
    %292 = vmatpush.bf16.msra.mxu0 %v287
    %293 = vmatpush.bf16.msra.mxu0 %v286
    %294 = vmatpush.bf16.msra.mxu0 %v285
    %295 = vmatpush.bf16.msra.mxu0 %v284
    %296 = vmatpush.bf16.msra.mxu0 %v283
    %297 = vmatpush.bf16.msra.mxu0 %v282
    %298 = vmatmul.bf16.gmra.mxu0 %v263
    %v299 = vpop.f32.mrf.mxu0
    %v300 = vadd.f32 0.0, %v299
    %v301 = vpop.f32.mrf.mxu0
    %v302 = vadd.f32 0.0, %v301
    %303 = vmatmul.bf16.gmra.mxu0 %v264
    %v304 = vpop.f32.mrf.mxu0
    %v305 = vadd.f32 0.0, %v304
    %v306 = vpop.f32.mrf.mxu0
    %v307 = vadd.f32 0.0, %v306
    %308 = vdwg.mxu0
    %v309 = vadd.f32 %v255, %v300
    %v310 = vadd.f32 %v256, %v302
    %v311 = vadd.f32 %v257, %v305
    %v312 = vadd.f32 %v258, %v307
    %v313 = vld [vmem:[%s5] sm:$0xff]
    %v314 = vld [vmem:[%s5 + $0x8] sm:$0xff]
    %v315 = vld [vmem:[%s5 + $0x10] sm:$0xff]
    %v316 = vld [vmem:[%s5 + $0x18] sm:$0xff]
    %v317 = vpack.c.bf16 %v314, %v313
    %v318 = vpack.c.bf16 %v316, %v315
    %s319 = scalar_lea.vmem %s9, 640
    %v320 = vld [vmem:[%s319] sm:$0xff]
    %v321 = vld [vmem:[%s319 + $0x8] sm:$0xff]
    %v322 = vld [vmem:[%s319 + $0x10] sm:$0xff]
    %v323 = vld [vmem:[%s319 + $0x18] sm:$0xff]
    %v324 = vld [vmem:[%s319 + $0x20] sm:$0xff]
    %v325 = vld [vmem:[%s319 + $0x28] sm:$0xff]
    %v326 = vld [vmem:[%s319 + $0x30] sm:$0xff]
    %v327 = vld [vmem:[%s319 + $0x38] sm:$0xff]
    %v328 = vld [vmem:[%s319 + $0x40] sm:$0xff]
    %v329 = vld [vmem:[%s319 + $0x48] sm:$0xff]
    %v330 = vld [vmem:[%s319 + $0x50] sm:$0xff]
    %v331 = vld [vmem:[%s319 + $0x58] sm:$0xff]
    %v332 = vld [vmem:[%s319 + $0x60] sm:$0xff]
    %v333 = vld [vmem:[%s319 + $0x68] sm:$0xff]
    %v334 = vld [vmem:[%s319 + $0x70] sm:$0xff]
    %v335 = vld [vmem:[%s319 + $0x78] sm:$0xff]
    %v336 = vpack.c.bf16 %v321, %v320
    %v337 = vpack.c.bf16 %v323, %v322
    %v338 = vpack.c.bf16 %v325, %v324
    %v339 = vpack.c.bf16 %v327, %v326
    %v340 = vpack.c.bf16 %v329, %v328
    %v341 = vpack.c.bf16 %v331, %v330
    %v342 = vpack.c.bf16 %v333, %v332
    %v343 = vpack.c.bf16 %v335, %v334
    %344 = vmatpush.bf16.msra.mxu0 %v343
    %345 = vmatpush.bf16.msra.mxu0 %v342
    %346 = vmatpush.bf16.msra.mxu0 %v341
    %347 = vmatpush.bf16.msra.mxu0 %v340
    %348 = vmatpush.bf16.msra.mxu0 %v339
    %349 = vmatpush.bf16.msra.mxu0 %v338
    %350 = vmatpush.bf16.msra.mxu0 %v337
    %351 = vmatpush.bf16.msra.mxu0 %v336
    %352 = vmatmul.bf16.gmra.mxu0 %v317
    %v353 = vpop.f32.mrf.mxu0
    %v354 = vadd.f32 0.0, %v353
    %v355 = vpop.f32.mrf.mxu0
    %v356 = vadd.f32 0.0, %v355
    %357 = vmatmul.bf16.gmra.mxu0 %v318
    %v358 = vpop.f32.mrf.mxu0
    %v359 = vadd.f32 0.0, %v358
    %v360 = vpop.f32.mrf.mxu0
    %v361 = vadd.f32 0.0, %v360
    %362 = vdwg.mxu0
    %v363 = vadd.f32 %v309, %v354
    %v364 = vadd.f32 %v310, %v356
    %v365 = vadd.f32 %v311, %v359
    %v366 = vadd.f32 %v312, %v361
    %v367 = vld [vmem:[%s6] sm:$0xff]
    %v368 = vld [vmem:[%s6 + $0x8] sm:$0xff]
    %v369 = vld [vmem:[%s6 + $0x10] sm:$0xff]
    %v370 = vld [vmem:[%s6 + $0x18] sm:$0xff]
    %v371 = vpack.c.bf16 %v368, %v367
    %v372 = vpack.c.bf16 %v370, %v369
    %s373 = scalar_lea.vmem %s9, 768
    %v374 = vld [vmem:[%s373] sm:$0xff]
    %v375 = vld [vmem:[%s373 + $0x8] sm:$0xff]
    %v376 = vld [vmem:[%s373 + $0x10] sm:$0xff]
    %v377 = vld [vmem:[%s373 + $0x18] sm:$0xff]
    %v378 = vld [vmem:[%s373 + $0x20] sm:$0xff]
    %v379 = vld [vmem:[%s373 + $0x28] sm:$0xff]
    %v380 = vld [vmem:[%s373 + $0x30] sm:$0xff]
    %v381 = vld [vmem:[%s373 + $0x38] sm:$0xff]
    %v382 = vld [vmem:[%s373 + $0x40] sm:$0xff]
    %v383 = vld [vmem:[%s373 + $0x48] sm:$0xff]
    %v384 = vld [vmem:[%s373 + $0x50] sm:$0xff]
    %v385 = vld [vmem:[%s373 + $0x58] sm:$0xff]
    %v386 = vld [vmem:[%s373 + $0x60] sm:$0xff]
    %v387 = vld [vmem:[%s373 + $0x68] sm:$0xff]
    %v388 = vld [vmem:[%s373 + $0x70] sm:$0xff]
    %v389 = vld [vmem:[%s373 + $0x78] sm:$0xff]
    %v390 = vpack.c.bf16 %v375, %v374
    %v391 = vpack.c.bf16 %v377, %v376
    %v392 = vpack.c.bf16 %v379, %v378
    %v393 = vpack.c.bf16 %v381, %v380
    %v394 = vpack.c.bf16 %v383, %v382
    %v395 = vpack.c.bf16 %v385, %v384
    %v396 = vpack.c.bf16 %v387, %v386
    %v397 = vpack.c.bf16 %v389, %v388
    %398 = vmatpush.bf16.msra.mxu0 %v397
    %399 = vmatpush.bf16.msra.mxu0 %v396
    %400 = vmatpush.bf16.msra.mxu0 %v395
    %401 = vmatpush.bf16.msra.mxu0 %v394
    %402 = vmatpush.bf16.msra.mxu0 %v393
    %403 = vmatpush.bf16.msra.mxu0 %v392
    %404 = vmatpush.bf16.msra.mxu0 %v391
    %405 = vmatpush.bf16.msra.mxu0 %v390
    %406 = vmatmul.bf16.gmra.mxu0 %v371
    %v407 = vpop.f32.mrf.mxu0
    %v408 = vadd.f32 0.0, %v407
    %v409 = vpop.f32.mrf.mxu0
    %v410 = vadd.f32 0.0, %v409
    %411 = vmatmul.bf16.gmra.mxu0 %v372
    %v412 = vpop.f32.mrf.mxu0
    %v413 = vadd.f32 0.0, %v412
    %v414 = vpop.f32.mrf.mxu0
    %v415 = vadd.f32 0.0, %v414
    %416 = vdwg.mxu0
    %v417 = vadd.f32 %v363, %v408
    %v418 = vadd.f32 %v364, %v410
    %v419 = vadd.f32 %v365, %v413
    %v420 = vadd.f32 %v366, %v415
    %v421 = vld [vmem:[%s7] sm:$0xff]
    %v422 = vld [vmem:[%s7 + $0x8] sm:$0xff]
    %v423 = vld [vmem:[%s7 + $0x10] sm:$0xff]
    %v424 = vld [vmem:[%s7 + $0x18] sm:$0xff]
    %v425 = vpack.c.bf16 %v422, %v421
    %v426 = vpack.c.bf16 %v424, %v423
    %s427 = scalar_lea.vmem %s9, 896
    %v428 = vld [vmem:[%s427] sm:$0xff]
    %v429 = vld [vmem:[%s427 + $0x8] sm:$0xff]
    %v430 = vld [vmem:[%s427 + $0x10] sm:$0xff]
    %v431 = vld [vmem:[%s427 + $0x18] sm:$0xff]
    %v432 = vld [vmem:[%s427 + $0x20] sm:$0xff]
    %v433 = vld [vmem:[%s427 + $0x28] sm:$0xff]
    %v434 = vld [vmem:[%s427 + $0x30] sm:$0xff]
    %v435 = vld [vmem:[%s427 + $0x38] sm:$0xff]
    %v436 = vld [vmem:[%s427 + $0x40] sm:$0xff]
    %v437 = vld [vmem:[%s427 + $0x48] sm:$0xff]
    %v438 = vld [vmem:[%s427 + $0x50] sm:$0xff]
    %v439 = vld [vmem:[%s427 + $0x58] sm:$0xff]
    %v440 = vld [vmem:[%s427 + $0x60] sm:$0xff]
    %v441 = vld [vmem:[%s427 + $0x68] sm:$0xff]
    %v442 = vld [vmem:[%s427 + $0x70] sm:$0xff]
    %v443 = vld [vmem:[%s427 + $0x78] sm:$0xff]
    %v444 = vpack.c.bf16 %v429, %v428
    %v445 = vpack.c.bf16 %v431, %v430
    %v446 = vpack.c.bf16 %v433, %v432
    %v447 = vpack.c.bf16 %v435, %v434
    %v448 = vpack.c.bf16 %v437, %v436
    %v449 = vpack.c.bf16 %v439, %v438
    %v450 = vpack.c.bf16 %v441, %v440
    %v451 = vpack.c.bf16 %v443, %v442
    %452 = vmatpush.bf16.msra.mxu0 %v451
    %453 = vmatpush.bf16.msra.mxu0 %v450
    %454 = vmatpush.bf16.msra.mxu0 %v449
    %455 = vmatpush.bf16.msra.mxu0 %v448
    %456 = vmatpush.bf16.msra.mxu0 %v447
    %457 = vmatpush.bf16.msra.mxu0 %v446
    %458 = vmatpush.bf16.msra.mxu0 %v445
    %459 = vmatpush.bf16.msra.mxu0 %v444
    %460 = vmatmul.bf16.gmra.mxu0 %v425
    %v461 = vpop.f32.mrf.mxu0
    %v462 = vadd.f32 0.0, %v461
    %v463 = vpop.f32.mrf.mxu0
    %v464 = vadd.f32 0.0, %v463
    %465 = vmatmul.bf16.gmra.mxu0 %v426
    %v466 = vpop.f32.mrf.mxu0
    %v467 = vadd.f32 0.0, %v466
    %v468 = vpop.f32.mrf.mxu0
    %v469 = vadd.f32 0.0, %v468
    %470 = vdwg.mxu0
    %v471 = vadd.f32 %v417, %v462
    %v472 = vadd.f32 %v418, %v464
    %v473 = vadd.f32 %v419, %v467
    %v474 = vadd.f32 %v420, %v469
    %v475 = vld [vmem:[%s8] sm:$0xff]
    %v476 = vld [vmem:[%s8 + $0x8] sm:$0xff]
    %v477 = vld [vmem:[%s8 + $0x10] sm:$0xff]
    %v478 = vld [vmem:[%s8 + $0x18] sm:$0xff]
    %v479 = vpack.c.bf16 %v476, %v475
    %v480 = vpack.c.bf16 %v478, %v477
    %s481 = scalar_lea.vmem %s9, 1024
    %v482 = vld [vmem:[%s481] sm:$0xff]
    %v483 = vld [vmem:[%s481 + $0x8] sm:$0xff]
    %v484 = vld [vmem:[%s481 + $0x10] sm:$0xff]
    %v485 = vld [vmem:[%s481 + $0x18] sm:$0xff]
    %v486 = vld [vmem:[%s481 + $0x20] sm:$0xff]
    %v487 = vld [vmem:[%s481 + $0x28] sm:$0xff]
    %v488 = vld [vmem:[%s481 + $0x30] sm:$0xff]
    %v489 = vld [vmem:[%s481 + $0x38] sm:$0xff]
    %v490 = vld [vmem:[%s481 + $0x40] sm:$0xff]
    %v491 = vld [vmem:[%s481 + $0x48] sm:$0xff]
    %v492 = vld [vmem:[%s481 + $0x50] sm:$0xff]
    %v493 = vld [vmem:[%s481 + $0x58] sm:$0xff]
    %v494 = vld [vmem:[%s481 + $0x60] sm:$0xff]
    %v495 = vld [vmem:[%s481 + $0x68] sm:$0xff]
    %v496 = vld [vmem:[%s481 + $0x70] sm:$0xff]
    %v497 = vld [vmem:[%s481 + $0x78] sm:$0xff]
    %v498 = vpack.c.bf16 %v483, %v482
    %v499 = vpack.c.bf16 %v485, %v484
    %v500 = vpack.c.bf16 %v487, %v486
    %v501 = vpack.c.bf16 %v489, %v488
    %v502 = vpack.c.bf16 %v491, %v490
    %v503 = vpack.c.bf16 %v493, %v492
    %v504 = vpack.c.bf16 %v495, %v494
    %v505 = vpack.c.bf16 %v497, %v496
    %506 = vmatpush.bf16.msra.mxu0 %v505
    %507 = vmatpush.bf16.msra.mxu0 %v504
    %508 = vmatpush.bf16.msra.mxu0 %v503
    %509 = vmatpush.bf16.msra.mxu0 %v502
    %510 = vmatpush.bf16.msra.mxu0 %v501
    %511 = vmatpush.bf16.msra.mxu0 %v500
    %512 = vmatpush.bf16.msra.mxu0 %v499
    %513 = vmatpush.bf16.msra.mxu0 %v498
    %514 = vmatmul.bf16.gmra.mxu0 %v479
    %v515 = vpop.f32.mrf.mxu0
    %v516 = vadd.f32 0.0, %v515
    %v517 = vpop.f32.mrf.mxu0
    %v518 = vadd.f32 0.0, %v517
    %519 = vmatmul.bf16.gmra.mxu0 %v480
    %v520 = vpop.f32.mrf.mxu0
    %v521 = vadd.f32 0.0, %v520
    %v522 = vpop.f32.mrf.mxu0
    %v523 = vadd.f32 0.0, %v522
    %524 = vdwg.mxu0
    %v525 = vadd.f32 %v471, %v516
    %v526 = vadd.f32 %v472, %v518
    %v527 = vadd.f32 %v473, %v521
    %v528 = vadd.f32 %v474, %v523
    %v529 = vld [vmem:[#allocation2] sm:$0x1]
    %v531 = vperm.slane %v529, 0
    %v533 = vadd.f32 %v525, %v531
    %v534 = vadd.f32 %v526, %v531
    %v535 = vadd.f32 %v527, %v531
    %v536 = vadd.f32 %v528, %v531
    %v537 = vmax.f32 %v533, 0.0
    %v538 = vmax.f32 %v534, 0.0
    %v539 = vmax.f32 %v535, 0.0
    %v540 = vmax.f32 %v536, 0.0
    %vm541 = vcmask 523264
    %542 = vst.msk [vmem:[%s11] sm:$0xff] %vm541, %v537
    %543 = vst.msk [vmem:[%s11 + $0x8] sm:$0xff] %vm541, %v538
    %544 = vst.msk [vmem:[%s11 + $0x10] sm:$0xff] %vm541, %v539
    %545 = vst.msk [vmem:[%s11 + $0x18] sm:$0xff] %vm541, %v540
    // Predicated region
    $region50: #{swin_deeplab_forward.14} parent=1 // pred_check
      _
    $region51: #{swin_deeplab_forward.14} parent=1 // pred_check_branch
      %547 = sbr.rel (0) target = $region53
    $region52: #{swin_deeplab_forward.14} parent=1 // pred_region
      _
    $region53: #{swin_deeplab_forward.14} parent=1 // pred_fallthru
      _
    // Predicated region
    $region54: #{swin_deeplab_forward.14} parent=1 // pred_check
      _
    $region55: #{swin_deeplab_forward.14} parent=1 // pred_check_branch
      %549 = sbr.rel (0) target = $region57
    $region56: #{swin_deeplab_forward.14} parent=1 // pred_region
      _
    $region57: #{swin_deeplab_forward.14} parent=1 // pred_fallthru
      _
    %550 = vsyncpa [#allocation3], 1

// kernel: swin_deeplab_forward.15
$region0: #{swin_deeplab_forward.15}
  #allocation0 [shape = 'u32[]', space=smem, size = 0x4, offset = 0x4, fixed_abs, tag = 'smem constant byte address 0x4 - core index']
  #allocation1 [shape = 'u32[72,128]{1,0:T(1,128)}', space=vmem, size = 0x9000, scoped, tag = 'internal scratch']
  %s0 = inlined_call_operand.vmem [shape: f32[2,16,64], index: 0, kind: input, shape index: {}]
  %s1 = inlined_call_operand.vmem [shape: f32[2,16,64], index: 1, kind: input, shape index: {}]
  %s2 = inlined_call_operand.vmem [shape: f32[64,64], index: 2, kind: input, shape index: {}]
  %s3 = inlined_call_operand.vmem [shape: f32[1,64], index: 3, kind: input, shape index: {}]
  %s4 = inlined_call_operand.vmem [shape: f32[64,4], index: 4, kind: input, shape index: {}]
  %s5 = inlined_call_operand.vmem [shape: f32[1,4], index: 5, kind: input, shape index: {}]
  %s6 = inlined_call_operand.vmem [shape: f32[64,32], index: 6, kind: input, shape index: {}]
  %s7 = inlined_call_operand.vmem [shape: f32[1,32], index: 7, kind: input, shape index: {}]
  %s8 = inlined_call_operand.vmem [shape: f32[32,32], index: 8, kind: input, shape index: {}]
  %s9 = inlined_call_operand.vmem [shape: f32[1,32], index: 9, kind: input, shape index: {}]
  %s10 = inlined_call_operand.vmem [shape: f32[64,32], index: 10, kind: input, shape index: {}]
  %s11 = inlined_call_operand.vmem [shape: f32[1,32], index: 11, kind: input, shape index: {}]
  %s12 = inlined_call_operand.vmem [shape: f32[32,32], index: 12, kind: input, shape index: {}]
  %s13 = inlined_call_operand.vmem [shape: f32[1,32], index: 13, kind: input, shape index: {}]
  %s14 = inlined_call_operand.vmem [shape: f32[64,32], index: 14, kind: input, shape index: {}]
  %s15 = inlined_call_operand.vmem [shape: f32[1,32], index: 15, kind: input, shape index: {}]
  %s16 = inlined_call_operand.vmem [shape: f32[32,64], index: 16, kind: input, shape index: {}]
  %s17 = inlined_call_operand.hbm [shape: f32[1,64], index: 17, kind: input, shape index: {}]
  %s18 = inlined_call_operand.vmem [shape: f32[2,16,64], index: 18, kind: output, shape index: {}]
  %s19 = sld [smem:[#allocation0]]
  $region109: #{swin_deeplab_forward.15} parent=0
    _
  %s21 = ssub.s32 1, %s19
  %s22 = scalar_select 0, %s21, %s19
  $region1: #{swin_deeplab_forward.15} parent=0
    #allocation2 [shape = 'u8[512]{0}', space=vmem, size = 0x400, scoped, tag = 'input window, operand 17, single buffered']
    #allocation3 [shape = 's32[2]{0}', space=sflag, size = 0x8, scoped, tag = 'scoped memory for swin_deeplab_forward.15']
    %23 = vsyncpa [#allocation3], 0
    loop: start=0, step=1, limit=4
    $region2: #{swin_deeplab_forward.15} parent=1 // loop_pre_header
      _
    $region3: #{swin_deeplab_forward.15} parent=1 // loop_header
      %s25 = sphi 0, %s29
      %p26 = scmp.ge.s32.totalorder %s25, 4
      %s35 = sphi 0, %s37
      %s38 = sphi 0, %s35
      %s39 = sphi 0, %s38
      %s55 = sphi 0, %s39
      %s61 = sphi 0, %s63
      %s64 = sphi 0, %s61
      %s65 = sphi 0, %s64
      %s81 = sphi 0, %s65
      %s85 = sphi 0, %s85
      %s87 = sphi 0, %s85
      %s88 = sphi 0, %s87
      %s102 = sphi 0, %s88
      %s106 = sphi 0, %s106
      %s108 = sphi 0, %s106
      %s109 = sphi 0, %s108
      %s123 = sphi 0, %s109
      %s127 = sphi 0, %s127
      %s129 = sphi 0, %s127
      %s130 = sphi 0, %s129
      %s144 = sphi 0, %s130
      %s148 = sphi 0, %s148
      %s150 = sphi 0, %s148
      %s151 = sphi 0, %s150
      %s165 = sphi 0, %s151
      %s169 = sphi 0, %s169
      %s171 = sphi 0, %s169
      %s172 = sphi 0, %s171
      %s186 = sphi 0, %s172
      %s190 = sphi 0, %s190
      %s192 = sphi 0, %s190
      %s193 = sphi 0, %s192
      %s207 = sphi 0, %s193
      %s211 = sphi 0, %s211
      %s213 = sphi 0, %s211
      %s214 = sphi 0, %s213
      %s228 = sphi 0, %s214
      %s232 = sphi 0, %s232
      %s234 = sphi 0, %s232
      %s235 = sphi 0, %s234
      %s249 = sphi 0, %s235
      %s253 = sphi 0, %s253
      %s255 = sphi 0, %s253
      %s256 = sphi 0, %s255
      %s270 = sphi 0, %s256
      %s274 = sphi 0, %s274
      %s276 = sphi 0, %s274
      %s277 = sphi 0, %s276
      %s291 = sphi 0, %s277
      %s295 = sphi 0, %s295
      %s297 = sphi 0, %s295
      %s298 = sphi 0, %s297
      %s312 = sphi 0, %s298
      %s316 = sphi 0, %s316
      %s318 = sphi 0, %s316
      %s319 = sphi 0, %s318
      %s333 = sphi 0, %s319
      %s337 = sphi 0, %s337
      %s339 = sphi 0, %s337
      %s340 = sphi 0, %s339
      %s354 = sphi 0, %s340
      %s358 = sphi 0, %s358
      %s360 = sphi 0, %s358
      %s361 = sphi 0, %s360
      %s375 = sphi 0, %s361
      %s379 = sphi 0, %s379
      %s381 = sphi 0, %s379
      %s382 = sphi 0, %s381
      %s396 = sphi 0, %s382
      %s400 = sphi 0, %s400
      %s402 = sphi 0, %s400
      %s403 = sphi 0, %s402
      %s417 = sphi 0, %s403
      %s423 = sphi 0, %s425
      %s426 = sphi 0, %s423
      %s427 = sphi 0, %s426
      %s443 = sphi 0, %s427
    $region4: #{swin_deeplab_forward.15} parent=1 // loop_header_branch
      %28 = sbr.rel (%p26) target = $region8
    $region5: #{swin_deeplab_forward.15} parent=1 // loop_body
      %s30 = ssub.s32 %s25, 1
      %s31 = ssub.s32 %s25, 2
      %s32 = sadd.s32 %s25, 1
      %s33 = ssub.s32 %s25, %s32
      %p34 = scmp.eq.s32.totalorder %s33, 0
      %s36 = sadd.s32 %s35, 1
      %s37 = scalar_select %p34, %s35, %s36
      %p40 = pneg %p34
      %p41 = scmp.eq.s32.totalorder %s25, 1
      %p42 = por %p40, %p41
      %p43 = scmp.ne.s32.totalorder %s35, %s38
      %p44 = scmp.eq.s32.totalorder %s25, 0
      %p45 = por %p43, %p44
      %p46 = scmp.ne.s32.totalorder %s35, %s38
      %p47 = scmp.eq.s32.totalorder %s30, 1
      %p48 = por %p46, %p47
      %p49 = scmp.ne.s32.totalorder %s38, %s39
      %p50 = scmp.eq.s32.totalorder %s30, 0
      %p51 = por %p49, %p50
      %p52 = scmp.ne.s32.totalorder %s38, %s39
      %p53 = scmp.eq.s32.totalorder %s31, 1
      %p54 = por %p52, %p53
      %p56 = scmp.ne.s32.totalorder %s39, %s55
      %p57 = scmp.eq.s32.totalorder %s31, 0
      %p58 = por %p56, %p57
      %s59 = ssub.s32 %s25, %s32
      %p60 = scmp.eq.s32.totalorder %s59, 0
      %s62 = sadd.s32 %s61, 1
      %s63 = scalar_select %p60, %s61, %s62
      %p66 = pneg %p60
      %p67 = scmp.eq.s32.totalorder %s25, 1
      %p68 = por %p66, %p67
      %p69 = scmp.ne.s32.totalorder %s61, %s64
      %p70 = scmp.eq.s32.totalorder %s25, 0
      %p71 = por %p69, %p70
      %p72 = scmp.ne.s32.totalorder %s61, %s64
      %p73 = scmp.eq.s32.totalorder %s30, 1
      %p74 = por %p72, %p73
      %p75 = scmp.ne.s32.totalorder %s64, %s65
      %p76 = scmp.eq.s32.totalorder %s30, 0
      %p77 = por %p75, %p76
      %p78 = scmp.ne.s32.totalorder %s64, %s65
      %p79 = scmp.eq.s32.totalorder %s31, 1
      %p80 = por %p78, %p79
      %p82 = scmp.ne.s32.totalorder %s65, %s81
      %p83 = scmp.eq.s32.totalorder %s31, 0
      %p84 = por %p82, %p83
      %s86 = sadd.s32 %s85, 1
      %p89 = scmp.eq.s32.totalorder %s25, 1
      %p90 = scmp.ne.s32.totalorder %s85, %s87
      %p91 = scmp.eq.s32.totalorder %s25, 0
      %p92 = por %p90, %p91
      %p93 = scmp.ne.s32.totalorder %s85, %s87
      %p94 = scmp.eq.s32.totalorder %s30, 1
      %p95 = por %p93, %p94
      %p96 = scmp.ne.s32.totalorder %s87, %s88
      %p97 = scmp.eq.s32.totalorder %s30, 0
      %p98 = por %p96, %p97
      %p99 = scmp.ne.s32.totalorder %s87, %s88
      %p100 = scmp.eq.s32.totalorder %s31, 1
      %p101 = por %p99, %p100
      %p103 = scmp.ne.s32.totalorder %s88, %s102
      %p104 = scmp.eq.s32.totalorder %s31, 0
      %p105 = por %p103, %p104
      %s107 = sadd.s32 %s106, 1
      %p110 = scmp.eq.s32.totalorder %s25, 1
      %p111 = scmp.ne.s32.totalorder %s106, %s108
      %p112 = scmp.eq.s32.totalorder %s25, 0
      %p113 = por %p111, %p112
      %p114 = scmp.ne.s32.totalorder %s106, %s108
      %p115 = scmp.eq.s32.totalorder %s30, 1
      %p116 = por %p114, %p115
      %p117 = scmp.ne.s32.totalorder %s108, %s109
      %p118 = scmp.eq.s32.totalorder %s30, 0
      %p119 = por %p117, %p118
      %p120 = scmp.ne.s32.totalorder %s108, %s109
      %p121 = scmp.eq.s32.totalorder %s31, 1
      %p122 = por %p120, %p121
      %p124 = scmp.ne.s32.totalorder %s109, %s123
      %p125 = scmp.eq.s32.totalorder %s31, 0
      %p126 = por %p124, %p125
      %s128 = sadd.s32 %s127, 1
      %p131 = scmp.eq.s32.totalorder %s25, 1
      %p132 = scmp.ne.s32.totalorder %s127, %s129
      %p133 = scmp.eq.s32.totalorder %s25, 0
      %p134 = por %p132, %p133
      %p135 = scmp.ne.s32.totalorder %s127, %s129
      %p136 = scmp.eq.s32.totalorder %s30, 1
      %p137 = por %p135, %p136
      %p138 = scmp.ne.s32.totalorder %s129, %s130
      %p139 = scmp.eq.s32.totalorder %s30, 0
      %p140 = por %p138, %p139
      %p141 = scmp.ne.s32.totalorder %s129, %s130
      %p142 = scmp.eq.s32.totalorder %s31, 1
      %p143 = por %p141, %p142
      %p145 = scmp.ne.s32.totalorder %s130, %s144
      %p146 = scmp.eq.s32.totalorder %s31, 0
      %p147 = por %p145, %p146
      %s149 = sadd.s32 %s148, 1
      %p152 = scmp.eq.s32.totalorder %s25, 1
      %p153 = scmp.ne.s32.totalorder %s148, %s150
      %p154 = scmp.eq.s32.totalorder %s25, 0
      %p155 = por %p153, %p154
      %p156 = scmp.ne.s32.totalorder %s148, %s150
      %p157 = scmp.eq.s32.totalorder %s30, 1
      %p158 = por %p156, %p157
      %p159 = scmp.ne.s32.totalorder %s150, %s151
      %p160 = scmp.eq.s32.totalorder %s30, 0
      %p161 = por %p159, %p160
      %p162 = scmp.ne.s32.totalorder %s150, %s151
      %p163 = scmp.eq.s32.totalorder %s31, 1
      %p164 = por %p162, %p163
      %p166 = scmp.ne.s32.totalorder %s151, %s165
      %p167 = scmp.eq.s32.totalorder %s31, 0
      %p168 = por %p166, %p167
      %s170 = sadd.s32 %s169, 1
      %p173 = scmp.eq.s32.totalorder %s25, 1
      %p174 = scmp.ne.s32.totalorder %s169, %s171
      %p175 = scmp.eq.s32.totalorder %s25, 0
      %p176 = por %p174, %p175
      %p177 = scmp.ne.s32.totalorder %s169, %s171
      %p178 = scmp.eq.s32.totalorder %s30, 1
      %p179 = por %p177, %p178
      %p180 = scmp.ne.s32.totalorder %s171, %s172
      %p181 = scmp.eq.s32.totalorder %s30, 0
      %p182 = por %p180, %p181
      %p183 = scmp.ne.s32.totalorder %s171, %s172
      %p184 = scmp.eq.s32.totalorder %s31, 1
      %p185 = por %p183, %p184
      %p187 = scmp.ne.s32.totalorder %s172, %s186
      %p188 = scmp.eq.s32.totalorder %s31, 0
      %p189 = por %p187, %p188
      %s191 = sadd.s32 %s190, 1
      %p194 = scmp.eq.s32.totalorder %s25, 1
      %p195 = scmp.ne.s32.totalorder %s190, %s192
      %p196 = scmp.eq.s32.totalorder %s25, 0
      %p197 = por %p195, %p196
      %p198 = scmp.ne.s32.totalorder %s190, %s192
      %p199 = scmp.eq.s32.totalorder %s30, 1
      %p200 = por %p198, %p199
      %p201 = scmp.ne.s32.totalorder %s192, %s193
      %p202 = scmp.eq.s32.totalorder %s30, 0
      %p203 = por %p201, %p202
      %p204 = scmp.ne.s32.totalorder %s192, %s193
      %p205 = scmp.eq.s32.totalorder %s31, 1
      %p206 = por %p204, %p205
      %p208 = scmp.ne.s32.totalorder %s193, %s207
      %p209 = scmp.eq.s32.totalorder %s31, 0
      %p210 = por %p208, %p209
      %s212 = sadd.s32 %s211, 1
      %p215 = scmp.eq.s32.totalorder %s25, 1
      %p216 = scmp.ne.s32.totalorder %s211, %s213
      %p217 = scmp.eq.s32.totalorder %s25, 0
      %p218 = por %p216, %p217
      %p219 = scmp.ne.s32.totalorder %s211, %s213
      %p220 = scmp.eq.s32.totalorder %s30, 1
      %p221 = por %p219, %p220
      %p222 = scmp.ne.s32.totalorder %s213, %s214
      %p223 = scmp.eq.s32.totalorder %s30, 0
      %p224 = por %p222, %p223
      %p225 = scmp.ne.s32.totalorder %s213, %s214
      %p226 = scmp.eq.s32.totalorder %s31, 1
      %p227 = por %p225, %p226
      %p229 = scmp.ne.s32.totalorder %s214, %s228
      %p230 = scmp.eq.s32.totalorder %s31, 0
      %p231 = por %p229, %p230
      %s233 = sadd.s32 %s232, 1
      %p236 = scmp.eq.s32.totalorder %s25, 1
      %p237 = scmp.ne.s32.totalorder %s232, %s234
      %p238 = scmp.eq.s32.totalorder %s25, 0
      %p239 = por %p237, %p238
      %p240 = scmp.ne.s32.totalorder %s232, %s234
      %p241 = scmp.eq.s32.totalorder %s30, 1
      %p242 = por %p240, %p241
      %p243 = scmp.ne.s32.totalorder %s234, %s235
      %p244 = scmp.eq.s32.totalorder %s30, 0
      %p245 = por %p243, %p244
      %p246 = scmp.ne.s32.totalorder %s234, %s235
      %p247 = scmp.eq.s32.totalorder %s31, 1
      %p248 = por %p246, %p247
      %p250 = scmp.ne.s32.totalorder %s235, %s249
      %p251 = scmp.eq.s32.totalorder %s31, 0
      %p252 = por %p250, %p251
      %s254 = sadd.s32 %s253, 1
      %p257 = scmp.eq.s32.totalorder %s25, 1
      %p258 = scmp.ne.s32.totalorder %s253, %s255
      %p259 = scmp.eq.s32.totalorder %s25, 0
      %p260 = por %p258, %p259
      %p261 = scmp.ne.s32.totalorder %s253, %s255
      %p262 = scmp.eq.s32.totalorder %s30, 1
      %p263 = por %p261, %p262
      %p264 = scmp.ne.s32.totalorder %s255, %s256
      %p265 = scmp.eq.s32.totalorder %s30, 0
      %p266 = por %p264, %p265
      %p267 = scmp.ne.s32.totalorder %s255, %s256
      %p268 = scmp.eq.s32.totalorder %s31, 1
      %p269 = por %p267, %p268
      %p271 = scmp.ne.s32.totalorder %s256, %s270
      %p272 = scmp.eq.s32.totalorder %s31, 0
      %p273 = por %p271, %p272
      %s275 = sadd.s32 %s274, 1
      %p278 = scmp.eq.s32.totalorder %s25, 1
      %p279 = scmp.ne.s32.totalorder %s274, %s276
      %p280 = scmp.eq.s32.totalorder %s25, 0
      %p281 = por %p279, %p280
      %p282 = scmp.ne.s32.totalorder %s274, %s276
      %p283 = scmp.eq.s32.totalorder %s30, 1
      %p284 = por %p282, %p283
      %p285 = scmp.ne.s32.totalorder %s276, %s277
      %p286 = scmp.eq.s32.totalorder %s30, 0
      %p287 = por %p285, %p286
      %p288 = scmp.ne.s32.totalorder %s276, %s277
      %p289 = scmp.eq.s32.totalorder %s31, 1
      %p290 = por %p288, %p289
      %p292 = scmp.ne.s32.totalorder %s277, %s291
      %p293 = scmp.eq.s32.totalorder %s31, 0
      %p294 = por %p292, %p293
      %s296 = sadd.s32 %s295, 1
      %p299 = scmp.eq.s32.totalorder %s25, 1
      %p300 = scmp.ne.s32.totalorder %s295, %s297
      %p301 = scmp.eq.s32.totalorder %s25, 0
      %p302 = por %p300, %p301
      %p303 = scmp.ne.s32.totalorder %s295, %s297
      %p304 = scmp.eq.s32.totalorder %s30, 1
      %p305 = por %p303, %p304
      %p306 = scmp.ne.s32.totalorder %s297, %s298
      %p307 = scmp.eq.s32.totalorder %s30, 0
      %p308 = por %p306, %p307
      %p309 = scmp.ne.s32.totalorder %s297, %s298
      %p310 = scmp.eq.s32.totalorder %s31, 1
      %p311 = por %p309, %p310
      %p313 = scmp.ne.s32.totalorder %s298, %s312
      %p314 = scmp.eq.s32.totalorder %s31, 0
      %p315 = por %p313, %p314
      %s317 = sadd.s32 %s316, 1
      %p320 = scmp.eq.s32.totalorder %s25, 1
      %p321 = scmp.ne.s32.totalorder %s316, %s318
      %p322 = scmp.eq.s32.totalorder %s25, 0
      %p323 = por %p321, %p322
      %p324 = scmp.ne.s32.totalorder %s316, %s318
      %p325 = scmp.eq.s32.totalorder %s30, 1
      %p326 = por %p324, %p325
      %p327 = scmp.ne.s32.totalorder %s318, %s319
      %p328 = scmp.eq.s32.totalorder %s30, 0
      %p329 = por %p327, %p328
      %p330 = scmp.ne.s32.totalorder %s318, %s319
      %p331 = scmp.eq.s32.totalorder %s31, 1
      %p332 = por %p330, %p331
      %p334 = scmp.ne.s32.totalorder %s319, %s333
      %p335 = scmp.eq.s32.totalorder %s31, 0
      %p336 = por %p334, %p335
      %s338 = sadd.s32 %s337, 1
      %p341 = scmp.eq.s32.totalorder %s25, 1
      %p342 = scmp.ne.s32.totalorder %s337, %s339
      %p343 = scmp.eq.s32.totalorder %s25, 0
      %p344 = por %p342, %p343
      %p345 = scmp.ne.s32.totalorder %s337, %s339
      %p346 = scmp.eq.s32.totalorder %s30, 1
      %p347 = por %p345, %p346
      %p348 = scmp.ne.s32.totalorder %s339, %s340
      %p349 = scmp.eq.s32.totalorder %s30, 0
      %p350 = por %p348, %p349
      %p351 = scmp.ne.s32.totalorder %s339, %s340
      %p352 = scmp.eq.s32.totalorder %s31, 1
      %p353 = por %p351, %p352
      %p355 = scmp.ne.s32.totalorder %s340, %s354
      %p356 = scmp.eq.s32.totalorder %s31, 0
      %p357 = por %p355, %p356
      %s359 = sadd.s32 %s358, 1
      %p362 = scmp.eq.s32.totalorder %s25, 1
      %p363 = scmp.ne.s32.totalorder %s358, %s360
      %p364 = scmp.eq.s32.totalorder %s25, 0
      %p365 = por %p363, %p364
      %p366 = scmp.ne.s32.totalorder %s358, %s360
      %p367 = scmp.eq.s32.totalorder %s30, 1
      %p368 = por %p366, %p367
      %p369 = scmp.ne.s32.totalorder %s360, %s361
      %p370 = scmp.eq.s32.totalorder %s30, 0
      %p371 = por %p369, %p370
      %p372 = scmp.ne.s32.totalorder %s360, %s361
      %p373 = scmp.eq.s32.totalorder %s31, 1
      %p374 = por %p372, %p373
      %p376 = scmp.ne.s32.totalorder %s361, %s375
      %p377 = scmp.eq.s32.totalorder %s31, 0
      %p378 = por %p376, %p377
      %s380 = sadd.s32 %s379, 1
      %p383 = scmp.eq.s32.totalorder %s25, 1
      %p384 = scmp.ne.s32.totalorder %s379, %s381
      %p385 = scmp.eq.s32.totalorder %s25, 0
      %p386 = por %p384, %p385
      %p387 = scmp.ne.s32.totalorder %s379, %s381
      %p388 = scmp.eq.s32.totalorder %s30, 1
      %p389 = por %p387, %p388
      %p390 = scmp.ne.s32.totalorder %s381, %s382
      %p391 = scmp.eq.s32.totalorder %s30, 0
      %p392 = por %p390, %p391
      %p393 = scmp.ne.s32.totalorder %s381, %s382
      %p394 = scmp.eq.s32.totalorder %s31, 1
      %p395 = por %p393, %p394
      %p397 = scmp.ne.s32.totalorder %s382, %s396
      %p398 = scmp.eq.s32.totalorder %s31, 0
      %p399 = por %p397, %p398
      %s401 = sadd.s32 %s400, 1
      %p404 = scmp.eq.s32.totalorder %s25, 1
      %p405 = scmp.ne.s32.totalorder %s400, %s402
      %p406 = scmp.eq.s32.totalorder %s25, 0
      %p407 = por %p405, %p406
      %p408 = scmp.ne.s32.totalorder %s400, %s402
      %p409 = scmp.eq.s32.totalorder %s30, 1
      %p410 = por %p408, %p409
      %p411 = scmp.ne.s32.totalorder %s402, %s403
      %p412 = scmp.eq.s32.totalorder %s30, 0
      %p413 = por %p411, %p412
      %p414 = scmp.ne.s32.totalorder %s402, %s403
      %p415 = scmp.eq.s32.totalorder %s31, 1
      %p416 = por %p414, %p415
      %p418 = scmp.ne.s32.totalorder %s403, %s417
      %p419 = scmp.eq.s32.totalorder %s31, 0
      %p420 = por %p418, %p419
      %s421 = ssub.s32 %s25, %s32
      %p422 = scmp.eq.s32.totalorder %s421, 0
      %s424 = sadd.s32 %s423, 1
      %s425 = scalar_select %p422, %s423, %s424
      %p428 = pneg %p422
      %p429 = scmp.eq.s32.totalorder %s25, 1
      %p430 = por %p428, %p429
      %p431 = scmp.ne.s32.totalorder %s423, %s426
      %p432 = scmp.eq.s32.totalorder %s25, 0
      %p433 = por %p431, %p432
      %p434 = scmp.ne.s32.totalorder %s423, %s426
      %p435 = scmp.eq.s32.totalorder %s30, 1
      %p436 = por %p434, %p435
      %p437 = scmp.ne.s32.totalorder %s426, %s427
      %p438 = scmp.eq.s32.totalorder %s30, 0
      %p439 = por %p437, %p438
      %p440 = scmp.ne.s32.totalorder %s426, %s427
      %p441 = scmp.eq.s32.totalorder %s31, 1
      %p442 = por %p440, %p441
      %p444 = scmp.ne.s32.totalorder %s427, %s443
      %p445 = scmp.eq.s32.totalorder %s31, 0
      %p446 = por %p444, %p445
      %p447 = scmp.le.s32.totalorder 1, %s25
      %p448 = scmp.lt.s32.totalorder %s25, 3
      %p449 = pnand %p447, %p448
      %p450 = pneg %p449
      // Predicated region
      $region9: #{swin_deeplab_forward.15} parent=5 // pred_check
        _
      $region10: #{swin_deeplab_forward.15} parent=5 // pred_check_branch
        %452 = sbr.rel (%p449) target = $region12
      $region11: #{swin_deeplab_forward.15} parent=5 // pred_region
        %s453 = ssub.s32 %s25, 1
        // Predicated region
        $region13: #{swin_deeplab_forward.15} parent=11 // pred_check
          %p454 = pneg %p98
        $region14: #{swin_deeplab_forward.15} parent=11 // pred_check_branch
          %456 = sbr.rel (%p454) target = $region16
        $region15: #{swin_deeplab_forward.15} parent=11 // pred_region
          _
        $region16: #{swin_deeplab_forward.15} parent=11 // pred_fallthru
          _
        // Predicated region
        $region17: #{swin_deeplab_forward.15} parent=11 // pred_check
          %p457 = pneg %p119
        $region18: #{swin_deeplab_forward.15} parent=11 // pred_check_branch
          %459 = sbr.rel (%p457) target = $region20
        $region19: #{swin_deeplab_forward.15} parent=11 // pred_region
          _
        $region20: #{swin_deeplab_forward.15} parent=11 // pred_fallthru
          _
        // Predicated region
        $region21: #{swin_deeplab_forward.15} parent=11 // pred_check
          %p460 = pneg %p140
        $region22: #{swin_deeplab_forward.15} parent=11 // pred_check_branch
          %462 = sbr.rel (%p460) target = $region24
        $region23: #{swin_deeplab_forward.15} parent=11 // pred_region
          _
        $region24: #{swin_deeplab_forward.15} parent=11 // pred_fallthru
          _
        // Predicated region
        $region25: #{swin_deeplab_forward.15} parent=11 // pred_check
          %p463 = pneg %p161
        $region26: #{swin_deeplab_forward.15} parent=11 // pred_check_branch
          %465 = sbr.rel (%p463) target = $region28
        $region27: #{swin_deeplab_forward.15} parent=11 // pred_region
          _
        $region28: #{swin_deeplab_forward.15} parent=11 // pred_fallthru
          _
        // Predicated region
        $region29: #{swin_deeplab_forward.15} parent=11 // pred_check
          %p466 = pneg %p182
        $region30: #{swin_deeplab_forward.15} parent=11 // pred_check_branch
          %468 = sbr.rel (%p466) target = $region32
        $region31: #{swin_deeplab_forward.15} parent=11 // pred_region
          _
        $region32: #{swin_deeplab_forward.15} parent=11 // pred_fallthru
          _
        // Predicated region
        $region33: #{swin_deeplab_forward.15} parent=11 // pred_check
          %p469 = pneg %p203
        $region34: #{swin_deeplab_forward.15} parent=11 // pred_check_branch
          %471 = sbr.rel (%p469) target = $region36
        $region35: #{swin_deeplab_forward.15} parent=11 // pred_region
          _
        $region36: #{swin_deeplab_forward.15} parent=11 // pred_fallthru
          _
        // Predicated region
        $region37: #{swin_deeplab_forward.15} parent=11 // pred_check
          %p472 = pneg %p224
        $region38: #{swin_deeplab_forward.15} parent=11 // pred_check_branch
          %474 = sbr.rel (%p472) target = $region40
        $region39: #{swin_deeplab_forward.15} parent=11 // pred_region
          _
        $region40: #{swin_deeplab_forward.15} parent=11 // pred_fallthru
          _
        // Predicated region
        $region41: #{swin_deeplab_forward.15} parent=11 // pred_check
          %p475 = pneg %p245
        $region42: #{swin_deeplab_forward.15} parent=11 // pred_check_branch
          %477 = sbr.rel (%p475) target = $region44
        $region43: #{swin_deeplab_forward.15} parent=11 // pred_region
          _
        $region44: #{swin_deeplab_forward.15} parent=11 // pred_fallthru
          _
        // Predicated region
        $region45: #{swin_deeplab_forward.15} parent=11 // pred_check
          %p478 = pneg %p266
        $region46: #{swin_deeplab_forward.15} parent=11 // pred_check_branch
          %480 = sbr.rel (%p478) target = $region48
        $region47: #{swin_deeplab_forward.15} parent=11 // pred_region
          _
        $region48: #{swin_deeplab_forward.15} parent=11 // pred_fallthru
          _
        // Predicated region
        $region49: #{swin_deeplab_forward.15} parent=11 // pred_check
          %p481 = pneg %p287
        $region50: #{swin_deeplab_forward.15} parent=11 // pred_check_branch
          %483 = sbr.rel (%p481) target = $region52
        $region51: #{swin_deeplab_forward.15} parent=11 // pred_region
          _
        $region52: #{swin_deeplab_forward.15} parent=11 // pred_fallthru
          _
        // Predicated region
        $region53: #{swin_deeplab_forward.15} parent=11 // pred_check
          %p484 = pneg %p308
        $region54: #{swin_deeplab_forward.15} parent=11 // pred_check_branch
          %486 = sbr.rel (%p484) target = $region56
        $region55: #{swin_deeplab_forward.15} parent=11 // pred_region
          _
        $region56: #{swin_deeplab_forward.15} parent=11 // pred_fallthru
          _
        // Predicated region
        $region57: #{swin_deeplab_forward.15} parent=11 // pred_check
          %p487 = pneg %p329
        $region58: #{swin_deeplab_forward.15} parent=11 // pred_check_branch
          %489 = sbr.rel (%p487) target = $region60
        $region59: #{swin_deeplab_forward.15} parent=11 // pred_region
          _
        $region60: #{swin_deeplab_forward.15} parent=11 // pred_fallthru
          _
        // Predicated region
        $region61: #{swin_deeplab_forward.15} parent=11 // pred_check
          %p490 = pneg %p350
        $region62: #{swin_deeplab_forward.15} parent=11 // pred_check_branch
          %492 = sbr.rel (%p490) target = $region64
        $region63: #{swin_deeplab_forward.15} parent=11 // pred_region
          _
        $region64: #{swin_deeplab_forward.15} parent=11 // pred_fallthru
          _
        // Predicated region
        $region65: #{swin_deeplab_forward.15} parent=11 // pred_check
          %p493 = pneg %p371
        $region66: #{swin_deeplab_forward.15} parent=11 // pred_check_branch
          %495 = sbr.rel (%p493) target = $region68
        $region67: #{swin_deeplab_forward.15} parent=11 // pred_region
          _
        $region68: #{swin_deeplab_forward.15} parent=11 // pred_fallthru
          _
        // Predicated region
        $region69: #{swin_deeplab_forward.15} parent=11 // pred_check
          %p496 = pneg %p392
        $region70: #{swin_deeplab_forward.15} parent=11 // pred_check_branch
          %498 = sbr.rel (%p496) target = $region72
        $region71: #{swin_deeplab_forward.15} parent=11 // pred_region
          _
        $region72: #{swin_deeplab_forward.15} parent=11 // pred_fallthru
          _
        // Predicated region
        $region73: #{swin_deeplab_forward.15} parent=11 // pred_check
          %p499 = pneg %p413
        $region74: #{swin_deeplab_forward.15} parent=11 // pred_check_branch
          %501 = sbr.rel (%p499) target = $region76
        $region75: #{swin_deeplab_forward.15} parent=11 // pred_region
          %503 = vsyncadd [#allocation3], 0
          %s505 = sshll.u32 %s17, 4
          %s506 = int_to_ptr.hbm [resolvable:$true] %s505
          %s507 = sshll.u32 [#allocation2], 4
          %s508 = int_to_ptr.vmem [resolvable:$true] %s507
          %510 = dma.hbm_to_vmem [thread:$0]  %s506, 16, %s508, [#allocation3]
        $region76: #{swin_deeplab_forward.15} parent=11 // pred_fallthru
          _
      $region12: #{swin_deeplab_forward.15} parent=5 // pred_fallthru
        _
      %p511 = scmp.lt.s32.totalorder %s25, 2
      // Predicated region
      $region77: #{swin_deeplab_forward.15} parent=5 // pred_check
        %p512 = pneg %p511
      $region78: #{swin_deeplab_forward.15} parent=5 // pred_check_branch
        %514 = sbr.rel (%p512) target = $region80
      $region79: #{swin_deeplab_forward.15} parent=5 // pred_region
        // Predicated region
        $region81: #{swin_deeplab_forward.15} parent=79 // pred_check
          %p515 = pneg %p45
        $region82: #{swin_deeplab_forward.15} parent=79 // pred_check_branch
          %517 = sbr.rel (%p515) target = $region84
        $region83: #{swin_deeplab_forward.15} parent=79 // pred_region
          %p518 = scmp.lt.s32.totalorder %s25, 1
          %s519 = scalar_select %p518, %s25, 1
          %s520 = smul.addr %s519, 2
          %s521 = smul.addr %s520, 8
          %s522 = scalar_lea.vmem %s0, %s521
        $region84: #{swin_deeplab_forward.15} parent=79 // pred_fallthru
          _
        // Predicated region
        $region85: #{swin_deeplab_forward.15} parent=79 // pred_check
          %p523 = pneg %p71
        $region86: #{swin_deeplab_forward.15} parent=79 // pred_check_branch
          %525 = sbr.rel (%p523) target = $region88
        $region87: #{swin_deeplab_forward.15} parent=79 // pred_region
          %p526 = scmp.lt.s32.totalorder %s25, 1
          %s527 = scalar_select %p526, %s25, 1
          %s528 = smul.addr %s527, 2
          %s529 = smul.addr %s528, 8
          %s530 = scalar_lea.vmem %s1, %s529
        $region88: #{swin_deeplab_forward.15} parent=79 // pred_fallthru
          _
      $region80: #{swin_deeplab_forward.15} parent=5 // pred_fallthru
        _
      %p531 = scmp.le.s32.totalorder 1, %s25
      %p532 = scmp.lt.s32.totalorder %s25, 3
      %p533 = pnand %p531, %p532
      %p534 = pneg %p533
      // Predicated region
      $region89: #{swin_deeplab_forward.15} parent=5 // pred_check
        _
      $region90: #{swin_deeplab_forward.15} parent=5 // pred_check_branch
        %536 = sbr.rel (%p533) target = $region92
      $region91: #{swin_deeplab_forward.15} parent=5 // pred_region
        %s537 = ssub.s32 %s25, 1
        // Predicated region
        $region93: #{swin_deeplab_forward.15} parent=91 // pred_check
          %p538 = pneg %p413
        $region94: #{swin_deeplab_forward.15} parent=91 // pred_check_branch
          %540 = sbr.rel (%p538) target = $region96
        $region95: #{swin_deeplab_forward.15} parent=91 // pred_region
          %542 = dma.done [#allocation3], 16
        $region96: #{swin_deeplab_forward.15} parent=91 // pred_fallthru
          _
        %p543 = scmp.lt.s32.totalorder %s30, 1
        %s544 = scalar_select %p543, %s30, 1
        %s545 = smul.addr %s544, 2
        %s546 = smul.addr %s545, 8
        %s547 = scalar_lea.vmem %s0, %s546
        %p548 = pneg %p51
        %p549 = pneg %p48
        %p550 = scmp.lt.s32.totalorder %s30, 1
        %s551 = scalar_select %p550, %s30, 1
        %s552 = smul.addr %s551, 2
        %s553 = smul.addr %s552, 8
        %s554 = scalar_lea.vmem %s1, %s553
        %p555 = pneg %p77
        %p556 = pneg %p74
        %p557 = pneg %p98
        %p558 = pneg %p95
        %p559 = pneg %p119
        %p560 = pneg %p116
        %p561 = pneg %p140
        %p562 = pneg %p137
        %p563 = pneg %p161
        %p564 = pneg %p158
        %p565 = pneg %p182
        %p566 = pneg %p179
        %p567 = pneg %p203
        %p568 = pneg %p200
        %p569 = pneg %p224
        %p570 = pneg %p221
        %p571 = pneg %p245
        %p572 = pneg %p242
        %p573 = pneg %p266
        %p574 = pneg %p263
        %p575 = pneg %p287
        %p576 = pneg %p284
        %p577 = pneg %p308
        %p578 = pneg %p305
        %p579 = pneg %p329
        %p580 = pneg %p326
        %p581 = pneg %p350
        %p582 = pneg %p347
        %p583 = pneg %p371
        %p584 = pneg %p368
        %p585 = pneg %p392
        %p586 = pneg %p389
        %p587 = pneg %p413
        %p588 = pneg %p410
        %p589 = pneg %p439
        %p590 = pneg %p436
        %p591 = scmp.lt.s32.totalorder %s30, 1
        %s592 = scalar_select %p591, %s30, 1
        %s593 = smul.addr %s592, 2
        %s594 = smul.addr %s593, 8
        %s595 = scalar_lea.vmem %s18, %s594
        %p596 = scmp.lt.s32.totalorder %s30, 1
        %s597 = scalar_select %p596, %s30, 1
        %s598 = smul.addr %s597, 2
        %s599 = smul.addr %s598, 8
        %s600 = scalar_lea.vmem %s0, %s599
        %p601 = scmp.lt.s32.totalorder %s30, 1
        %s602 = scalar_select %p601, %s30, 1
        %s603 = smul.addr %s602, 2
        %s604 = smul.addr %s603, 8
        %s605 = scalar_lea.vmem %s1, %s604
        %p606 = scmp.lt.s32.totalorder %s30, 1
        %s607 = scalar_select %p606, %s30, 1
        %s608 = smul.addr %s607, 2
        %s609 = smul.addr %s608, 8
        %s610 = scalar_lea.vmem %s18, %s609
        %v612 = vld [vmem:[%s600] sm:$0xff]
        %v613 = vld [vmem:[%s600 + $0x8] sm:$0xff]
        %v614 = vld [vmem:[%s605] sm:$0xff]
        %v615 = vld [vmem:[%s605 + $0x8] sm:$0xff]
        %v616 = vpack.c.bf16 %v613, %v612
        %v617 = vld [vmem:[%s2] sm:$0xff]
        %v618 = vld [vmem:[%s2 + $0x8] sm:$0xff]
        %v619 = vld [vmem:[%s2 + $0x10] sm:$0xff]
        %v620 = vld [vmem:[%s2 + $0x18] sm:$0xff]
        %v621 = vld [vmem:[%s2 + $0x20] sm:$0xff]
        %v622 = vld [vmem:[%s2 + $0x28] sm:$0xff]
        %v623 = vld [vmem:[%s2 + $0x30] sm:$0xff]
        %v624 = vld [vmem:[%s2 + $0x38] sm:$0xff]
        %v625 = vpack.c.bf16 %v618, %v617
        %v626 = vpack.c.bf16 %v620, %v619
        %v627 = vpack.c.bf16 %v622, %v621
        %v628 = vpack.c.bf16 %v624, %v623
        %v629 = vld [vmem:[%s3] sm:$0x1]
        %v631 = vperm.slane %v629, 0
        %vm633 = vcmask 523264
        %v635 = vsel %vm633, %v616, 0
        %637 = vmatpush.bf16.msra.mxu0 0
        %638 = vmatpush.bf16.msra.mxu0 0
        %639 = vmatpush.bf16.msra.mxu0 0
        %640 = vmatpush.bf16.msra.mxu0 0
        %641 = vmatpush.bf16.msra.mxu0 %v628
        %642 = vmatpush.bf16.msra.mxu0 %v627
        %643 = vmatpush.bf16.msra.mxu0 %v626
        %644 = vmatpush.bf16.msra.mxu0 %v625
        %645 = vmatmul.bf16.gmra.mxu0 %v635
        %v646 = vpop.f32.mrf.mxu0
        %v647 = vadd.f32 %v631, %v646
        %v648 = vpop.f32.mrf.mxu0
        %v649 = vadd.f32 %v631, %v648
        %650 = vdwg.mxu0
        %v651 = vmax.f32 %v647, 0.0
        %v652 = vmax.f32 %v649, 0.0
        %v653 = vpack.c.bf16 %v652, %v651
        %v654 = vld [vmem:[%s4] sm:$0xff]
        %v655 = vld [vmem:[%s4 + $0x8] sm:$0xff]
        %v656 = vld [vmem:[%s4 + $0x10] sm:$0xff]
        %v657 = vld [vmem:[%s4 + $0x18] sm:$0xff]
        %v658 = vld [vmem:[%s4 + $0x20] sm:$0xff]
        %v659 = vld [vmem:[%s4 + $0x28] sm:$0xff]
        %v660 = vld [vmem:[%s4 + $0x30] sm:$0xff]
        %v661 = vld [vmem:[%s4 + $0x38] sm:$0xff]
        %v662 = vpack.c.bf16 %v655, %v654
        %v663 = vpack.c.bf16 %v657, %v656
        %v664 = vpack.c.bf16 %v659, %v658
        %v665 = vpack.c.bf16 %v661, %v660
        %v666 = vld [vmem:[%s5] sm:$0x1]
        %v668 = vperm.slane %v666, 0
        %v671 = vsel %vm633, %v653, 0
        %673 = vmatpush.bf16.msra.mxu0 0
        %674 = vmatpush.bf16.msra.mxu0 0
        %675 = vmatpush.bf16.msra.mxu0 0
        %676 = vmatpush.bf16.msra.mxu0 0
        %677 = vmatpush.bf16.msra.mxu0 %v665
        %678 = vmatpush.bf16.msra.mxu0 %v664
        %679 = vmatpush.bf16.msra.mxu0 %v663
        %680 = vmatpush.bf16.msra.mxu0 %v662
        %681 = vmatmul.bf16.gmra.mxu0 %v671
        %v682 = vpop.f32.mrf.mxu0
        %v683 = vadd.f32 %v668, %v682
        %v684 = vpop.f32.mrf.mxu0
        %v685 = vadd.f32 %v668, %v684
        %686 = vdwg.mxu0
        %vm687 = vcmask 31744
        %v688 = vsel %vm687, %v683, -inf
        %689 = vmax.xlane.f32.xlu0 %v688
        %v690 = vpop.xlane.xlu0 %689
        %v691 = vsel %vm687, %v685, -inf
        %692 = vmax.xlane.f32.xlu0 %v691
        %v693 = vpop.xlane.xlu0 %692
        %v694 = vlaneseq
        %v695 = vand.u32 %v694, 127
        %v696 = vcvt.s32.f32 %v695
        %vm697 = vcmp.ge.f32.partialorder %v683, %v690
        %vm698 = vcmp.ge.f32.partialorder %v685, %v693
        %v699 = vsel %vm697, %v696, 4.0
        %v700 = vsel %vm698, %v696, 4.0
        %v701 = vsel %vm687, %v699, inf
        %702 = vmin.xlane.f32.xlu0 %v701
        %v703 = vpop.xlane.xlu0 %702
        %v704 = vsel %vm687, %v700, inf
        %705 = vmin.xlane.f32.xlu0 %v704
        %v706 = vpop.xlane.xlu0 %705
        %vm707 = vcmp.eq.f32.partialorder %v696, %v703
        %vm708 = vcmp.eq.f32.partialorder %v696, %v706
        %v709 = vsel %vm707, 1, 0
        %v710 = vsel %vm708, 1, 0
        %v711 = vcvt.s32.f32 %v709
        %v712 = vcvt.s32.f32 %v710
        %vm713 = vcmp.gt.f32.partialorder %v711, 0.0
        %vm714 = vcmp.gt.f32.partialorder %v712, 0.0
        %v715 = vsel %vm713, %v683, -1e+09
        %v716 = vsel %vm714, %v685, -1e+09
        %v717 = vsel %vm687, %v715, -inf
        %v718 = vsel %vm687, %v716, -inf
        %v719 = vmax.f32 %v717, %v718
        %v720 = vrot.slane %v719, 4
        %v721 = vmax.f32 %v719, %v720
        %v722 = vrot.slane %v721, 2
        %v723 = vmax.f32 %v721, %v722
        %v724 = vrot.slane %v723, 1
        %v725 = vmax.f32 %v723, %v724
        %v726 = vsub.f32 %v715, %v725
        %v727 = vsub.f32 %v716, %v725
        %v728 = vmul.f32 %v726, 1.442695
        %v729 = vpow.pop %v728
        %v730 = vmul.f32 %v727, 1.442695
        %v731 = vpow.pop %v730
        %v732 = vmul.f32 %v729, %v711
        %v733 = vmul.f32 %v731, %v712
        %v734 = vsel %vm687, %v732, 0.0
        %v735 = vsel %vm687, %v733, 0.0
        %v736 = vadd.f32 %v734, %v735
        %v737 = vrot.slane %v736, 4
        %v738 = vadd.f32 %v736, %v737
        %v739 = vrot.slane %v738, 2
        %v740 = vadd.f32 %v738, %v739
        %v741 = vrot.slane %v740, 1
        %v742 = vadd.f32 %v740, %v741
        %v743 = vmax.f32 %v742, 1e-12
        %v744 = vrcp.pop %v743
        %v745 = vmul.f32 %v743, %v744
        %v746 = vsub.f32 1.0, %v745
        %v747 = vmul.f32 %v744, %v746
        %v748 = vadd.f32 %v744, %v747
        %vm749 = vweird.f32 %v743
        %vm750 = vweird.f32 %v744
        %vm751 = vmor %vm749, %vm750
        %v752 = vsel %vm751, %v744, %v748
        %v753 = vand.u32 2147483647, %v743
        %vm754 = vcmp.eq.f32.partialorder %v753, 8.507059e+37
        %v755 = vand.u32 %v743, 2147483648
        %v756 = vor.u32 1.1754944e-38, %v755
        %v757 = vsel %vm754, %v756, %v752
        %v758 = vmul.f32 %v732, %v757
        %v759 = vmul.f32 %v733, %v757
        %v760 = vpack.c.bf16 %v712, %v711
        %v761 = vpack.c.bf16 %v759, %v758
        %v763 = vsel %vm687, %v760, 0
        %v766 = vsel %vm687, %v761, 0
        %768 = vmatpush.bf16.xpose.msra.mxu0 0
        %769 = vmatpush.bf16.xpose.msra.mxu0 0
        %770 = vmatpush.bf16.xpose.msra.mxu0 0
        %771 = vmatpush.bf16.xpose.msra.mxu0 0
        %772 = vmatpush.bf16.xpose.msra.mxu0 0
        %773 = vmatpush.bf16.xpose.msra.mxu0 0
        %774 = vmatpush.bf16.xpose.msra.mxu0 0
        %775 = vmatpush.bf16.xpose.msra.mxu0 %v766
        %776 = vmatmul.bf16.gmra.mxu0 %v763
        %v777 = vpop.f32.mrf.mxu0
        %v778 = vadd.f32 0.0, %v777
        %v779 = vpop.f32.mrf.mxu0
        %v780 = vadd.f32 0.0, %v779
        %781 = vdwg.mxu0
        %v782 = vpack.c.bf16 %v780, %v778
        %vm783 = vcmask 130048
        %v785 = vsel %vm783, %v782, 0
        %787 = vmatpush.bf16.msra.mxu0 0
        %788 = vmatpush.bf16.msra.mxu0 0
        %789 = vmatpush.bf16.msra.mxu0 0
        %790 = vmatpush.bf16.msra.mxu0 0
        %791 = vmatpush.bf16.msra.mxu0 0
        %792 = vmatpush.bf16.msra.mxu0 0
        %793 = vmatpush.bf16.msra.mxu0 0
        %794 = vmatpush.bf16.msra.mxu0 %v616
        %795 = vmatmul.bf16.gmra.mxu0 %v785
        %v796 = vpop.f32.mrf.mxu0
        %v797 = vadd.f32 0.0, %v796
        %v798 = vpop.f32.mrf.mxu0
        %v799 = vadd.f32 0.0, %v798
        %800 = vdwg.mxu0
        %v801 = vpack.c.bf16 %v615, %v614
        %v802 = vld [vmem:[%s6] sm:$0xff]
        %v803 = vld [vmem:[%s6 + $0x8] sm:$0xff]
        %v804 = vld [vmem:[%s6 + $0x10] sm:$0xff]
        %v805 = vld [vmem:[%s6 + $0x18] sm:$0xff]
        %v806 = vld [vmem:[%s6 + $0x20] sm:$0xff]
        %v807 = vld [vmem:[%s6 + $0x28] sm:$0xff]
        %v808 = vld [vmem:[%s6 + $0x30] sm:$0xff]
        %v809 = vld [vmem:[%s6 + $0x38] sm:$0xff]
        %v810 = vpack.c.bf16 %v803, %v802
        %v811 = vpack.c.bf16 %v805, %v804
        %v812 = vpack.c.bf16 %v807, %v806
        %v813 = vpack.c.bf16 %v809, %v808
        %v814 = vld [vmem:[%s7] sm:$0x1]
        %v816 = vperm.slane %v814, 0
        %v819 = vsel %vm633, %v801, 0
        %821 = vmatpush.bf16.msra.mxu0 0
        %822 = vmatpush.bf16.msra.mxu0 0
        %823 = vmatpush.bf16.msra.mxu0 0
        %824 = vmatpush.bf16.msra.mxu0 0
        %825 = vmatpush.bf16.msra.mxu0 %v813
        %826 = vmatpush.bf16.msra.mxu0 %v812
        %827 = vmatpush.bf16.msra.mxu0 %v811
        %828 = vmatpush.bf16.msra.mxu0 %v810
        %829 = vmatmul.bf16.gmra.mxu0 %v819
        %v830 = vpop.f32.mrf.mxu0
        %v831 = vadd.f32 %v816, %v830
        %v832 = vpop.f32.mrf.mxu0
        %v833 = vadd.f32 %v816, %v832
        %834 = vdwg.mxu0
        %v835 = vmax.f32 %v831, 0.0
        %v836 = vmax.f32 %v833, 0.0
        %v837 = vpack.c.bf16 %v836, %v835
        %v838 = vld [vmem:[%s8] sm:$0xff]
        %v839 = vld [vmem:[%s8 + $0x8] sm:$0xff]
        %v840 = vld [vmem:[%s8 + $0x10] sm:$0xff]
        %v841 = vld [vmem:[%s8 + $0x18] sm:$0xff]
        %v842 = vpack.c.bf16 %v839, %v838
        %v843 = vpack.c.bf16 %v841, %v840
        %v844 = vld [vmem:[%s9] sm:$0x1]
        %v846 = vperm.slane %v844, 0
        %vm848 = vcmask 261120
        %v850 = vsel %vm848, %v837, 0
        %852 = vmatpush.bf16.msra.mxu0 0
        %853 = vmatpush.bf16.msra.mxu0 0
        %854 = vmatpush.bf16.msra.mxu0 0
        %855 = vmatpush.bf16.msra.mxu0 0
        %856 = vmatpush.bf16.msra.mxu0 0
        %857 = vmatpush.bf16.msra.mxu0 0
        %858 = vmatpush.bf16.msra.mxu0 %v843
        %859 = vmatpush.bf16.msra.mxu0 %v842
        %860 = vmatmul.bf16.gmra.mxu0 %v850
        %v861 = vpop.f32.mrf.mxu0
        %v862 = vadd.f32 %v846, %v861
        %v863 = vpop.f32.mrf.mxu0
        %v864 = vadd.f32 %v846, %v863
        %865 = vdwg.mxu0
        %v866 = vmax.f32 %v862, 0.0
        %v867 = vmax.f32 %v864, 0.0
        %v868 = vpack.c.bf16 %v799, %v797
        %v869 = vld [vmem:[%s10] sm:$0xff]
        %v870 = vld [vmem:[%s10 + $0x8] sm:$0xff]
        %v871 = vld [vmem:[%s10 + $0x10] sm:$0xff]
        %v872 = vld [vmem:[%s10 + $0x18] sm:$0xff]
        %v873 = vld [vmem:[%s10 + $0x20] sm:$0xff]
        %v874 = vld [vmem:[%s10 + $0x28] sm:$0xff]
        %v875 = vld [vmem:[%s10 + $0x30] sm:$0xff]
        %v876 = vld [vmem:[%s10 + $0x38] sm:$0xff]
        %v877 = vpack.c.bf16 %v870, %v869
        %v878 = vpack.c.bf16 %v872, %v871
        %v879 = vpack.c.bf16 %v874, %v873
        %v880 = vpack.c.bf16 %v876, %v875
        %v881 = vld [vmem:[%s11] sm:$0x1]
        %v883 = vperm.slane %v881, 0
        %v886 = vsel %vm633, %v868, 0
        %888 = vmatpush.bf16.msra.mxu0 0
        %889 = vmatpush.bf16.msra.mxu0 0
        %890 = vmatpush.bf16.msra.mxu0 0
        %891 = vmatpush.bf16.msra.mxu0 0
        %892 = vmatpush.bf16.msra.mxu0 %v880
        %893 = vmatpush.bf16.msra.mxu0 %v879
        %894 = vmatpush.bf16.msra.mxu0 %v878
        %895 = vmatpush.bf16.msra.mxu0 %v877
        %896 = vmatmul.bf16.gmra.mxu0 %v886
        %v897 = vpop.f32.mrf.mxu0
        %v898 = vadd.f32 %v883, %v897
        %v899 = vpop.f32.mrf.mxu0
        %v900 = vadd.f32 %v883, %v899
        %901 = vdwg.mxu0
        %v902 = vmax.f32 %v898, 0.0
        %v903 = vmax.f32 %v900, 0.0
        %v904 = vpack.c.bf16 %v903, %v902
        %v905 = vld [vmem:[%s12] sm:$0xff]
        %v906 = vld [vmem:[%s12 + $0x8] sm:$0xff]
        %v907 = vld [vmem:[%s12 + $0x10] sm:$0xff]
        %v908 = vld [vmem:[%s12 + $0x18] sm:$0xff]
        %v909 = vpack.c.bf16 %v906, %v905
        %v910 = vpack.c.bf16 %v908, %v907
        %v911 = vld [vmem:[%s13] sm:$0x1]
        %v913 = vperm.slane %v911, 0
        %v916 = vsel %vm848, %v904, 0
        %918 = vmatpush.bf16.msra.mxu0 0
        %919 = vmatpush.bf16.msra.mxu0 0
        %920 = vmatpush.bf16.msra.mxu0 0
        %921 = vmatpush.bf16.msra.mxu0 0
        %922 = vmatpush.bf16.msra.mxu0 0
        %923 = vmatpush.bf16.msra.mxu0 0
        %924 = vmatpush.bf16.msra.mxu0 %v910
        %925 = vmatpush.bf16.msra.mxu0 %v909
        %926 = vmatmul.bf16.gmra.mxu0 %v916
        %v927 = vpop.f32.mrf.mxu0
        %v928 = vadd.f32 %v913, %v927
        %v929 = vpop.f32.mrf.mxu0
        %v930 = vadd.f32 %v913, %v929
        %931 = vdwg.mxu0
        %v932 = vmax.f32 %v928, 0.0
        %v933 = vmax.f32 %v930, 0.0
        %v934 = vld [vmem:[%s14] sm:$0xff]
        %v935 = vld [vmem:[%s14 + $0x8] sm:$0xff]
        %v936 = vld [vmem:[%s14 + $0x10] sm:$0xff]
        %v937 = vld [vmem:[%s14 + $0x18] sm:$0xff]
        %v938 = vld [vmem:[%s14 + $0x20] sm:$0xff]
        %v939 = vld [vmem:[%s14 + $0x28] sm:$0xff]
        %v940 = vld [vmem:[%s14 + $0x30] sm:$0xff]
        %v941 = vld [vmem:[%s14 + $0x38] sm:$0xff]
        %v942 = vpack.c.bf16 %v935, %v934
        %v943 = vpack.c.bf16 %v937, %v936
        %v944 = vpack.c.bf16 %v939, %v938
        %v945 = vpack.c.bf16 %v941, %v940
        %v946 = vld [vmem:[%s15] sm:$0x1]
        %v948 = vperm.slane %v946, 0
        %950 = vmatpush.bf16.msra.mxu0 0
        %951 = vmatpush.bf16.msra.mxu0 0
        %952 = vmatpush.bf16.msra.mxu0 0
        %953 = vmatpush.bf16.msra.mxu0 0
        %954 = vmatpush.bf16.msra.mxu0 %v945
        %955 = vmatpush.bf16.msra.mxu0 %v944
        %956 = vmatpush.bf16.msra.mxu0 %v943
        %957 = vmatpush.bf16.msra.mxu0 %v942
        %958 = vmatmul.bf16.gmra.mxu0 %v886
        %v959 = vpop.f32.mrf.mxu0
        %v960 = vadd.f32 %v948, %v959
        %v961 = vpop.f32.mrf.mxu0
        %v962 = vadd.f32 %v948, %v961
        %963 = vdwg.mxu0
        %v964 = vmax.f32 %v960, 0.0
        %v965 = vmax.f32 %v962, 0.0
        %v966 = vpack.c.bf16 %v867, %v866
        %v967 = vpack.c.bf16 %v933, %v932
        %v969 = vsel %vm848, %v966, 0
        %v972 = vsel %vm848, %v967, 0
        %974 = vmatpush.bf16.xpose.msra.mxu0 0
        %975 = vmatpush.bf16.xpose.msra.mxu0 0
        %976 = vmatpush.bf16.xpose.msra.mxu0 0
        %977 = vmatpush.bf16.xpose.msra.mxu0 0
        %978 = vmatpush.bf16.xpose.msra.mxu0 0
        %979 = vmatpush.bf16.xpose.msra.mxu0 0
        %980 = vmatpush.bf16.xpose.msra.mxu0 0
        %981 = vmatpush.bf16.xpose.msra.mxu0 %v972
        %982 = vmatmul.bf16.gmra.mxu0 %v969
        %v983 = vpop.f32.mrf.mxu0
        %v984 = vadd.f32 0.0, %v983
        %v985 = vpop.f32.mrf.mxu0
        %v986 = vadd.f32 0.0, %v985
        %987 = vdwg.mxu0
        %v988 = vmul.f32 %v984, 0.17677669
        %v989 = vmul.f32 %v986, 0.17677669
        %v990 = vsel %vm783, %v988, -inf
        %991 = vmax.xlane.f32.xlu0 %v990
        %v992 = vpop.xlane.xlu0 %991
        %v993 = vsel %vm783, %v989, -inf
        %994 = vmax.xlane.f32.xlu0 %v993
        %v995 = vpop.xlane.xlu0 %994
        %v996 = vsub.f32 %v988, %v992
        %v997 = vsub.f32 %v989, %v995
        %v998 = vmul.f32 %v996, 1.442695
        %v999 = vpow.pop %v998
        %v1000 = vmul.f32 %v997, 1.442695
        %v1001 = vpow.pop %v1000
        %v1002 = vsel %vm783, %v999, 0.0
        %1003 = vadd.xlane.f32.xlu0 %v1002
        %v1004 = vpop.xlane.xlu0 %1003
        %v1005 = vsel %vm783, %v1001, 0.0
        %1006 = vadd.xlane.f32.xlu0 %v1005
        %v1007 = vpop.xlane.xlu0 %1006
        %v1008 = vrcp.pop %v1004
        %v1009 = vrcp.pop %v1007
        %v1010 = vmul.f32 %v999, %v1008
        %v1011 = vmul.f32 %v1001, %v1009
        %v1012 = vpack.c.bf16 %v1011, %v1010
        %v1013 = vpack.c.bf16 %v965, %v964
        %v1015 = vsel %vm783, %v1012, 0
        %1017 = vmatpush.bf16.msra.mxu0 0
        %1018 = vmatpush.bf16.msra.mxu0 0
        %1019 = vmatpush.bf16.msra.mxu0 0
        %1020 = vmatpush.bf16.msra.mxu0 0
        %1021 = vmatpush.bf16.msra.mxu0 0
        %1022 = vmatpush.bf16.msra.mxu0 0
        %1023 = vmatpush.bf16.msra.mxu0 0
        %1024 = vmatpush.bf16.msra.mxu0 %v1013
        %1025 = vmatmul.bf16.gmra.mxu0 %v1015
        %v1026 = vpop.f32.mrf.mxu0
        %v1027 = vadd.f32 0.0, %v1026
        %v1028 = vpop.f32.mrf.mxu0
        %v1029 = vadd.f32 0.0, %v1028
        %1030 = vdwg.mxu0
        %v1031 = vpack.c.bf16 %v1029, %v1027
        %v1032 = vld [vmem:[%s16] sm:$0xff]
        %v1033 = vld [vmem:[%s16 + $0x8] sm:$0xff]
        %v1034 = vld [vmem:[%s16 + $0x10] sm:$0xff]
        %v1035 = vld [vmem:[%s16 + $0x18] sm:$0xff]
        %v1036 = vpack.c.bf16 %v1033, %v1032
        %v1037 = vpack.c.bf16 %v1035, %v1034
        %v1038 = vld [vmem:[#allocation2] sm:$0x1]
        %v1040 = vperm.slane %v1038, 0
        %v1043 = vsel %vm848, %v1031, 0
        %1045 = vmatpush.bf16.msra.mxu0 0
        %1046 = vmatpush.bf16.msra.mxu0 0
        %1047 = vmatpush.bf16.msra.mxu0 0
        %1048 = vmatpush.bf16.msra.mxu0 0
        %1049 = vmatpush.bf16.msra.mxu0 0
        %1050 = vmatpush.bf16.msra.mxu0 0
        %1051 = vmatpush.bf16.msra.mxu0 %v1037
        %1052 = vmatpush.bf16.msra.mxu0 %v1036
        %1053 = vmatmul.bf16.gmra.mxu0 %v1043
        %v1054 = vpop.f32.mrf.mxu0
        %v1055 = vadd.f32 %v1040, %v1054
        %v1056 = vpop.f32.mrf.mxu0
        %v1057 = vadd.f32 %v1040, %v1056
        %1058 = vdwg.mxu0
        %v1059 = vmax.f32 %v1055, 0.0
        %v1060 = vmax.f32 %v1057, 0.0
        %1061 = vst.msk [vmem:[%s610] sm:$0xff] %vm633, %v1059
        %1062 = vst.msk [vmem:[%s610 + $0x8] sm:$0xff] %vm633, %v1060
        %p1063 = scmp.lt.s32.totalorder %s30, 1
        %s1064 = scalar_select %p1063, %s30, 1
        %s1065 = smul.addr %s1064, 2
        %s1066 = smul.addr %s1065, 8
        %s1067 = scalar_lea.vmem %s18, %s1066
        // Predicated region
        $region97: #{swin_deeplab_forward.15} parent=91 // pred_check
          %p1068 = pneg %p436
        $region98: #{swin_deeplab_forward.15} parent=91 // pred_check_branch
          %1070 = sbr.rel (%p1068) target = $region100
        $region99: #{swin_deeplab_forward.15} parent=91 // pred_region
          _
        $region100: #{swin_deeplab_forward.15} parent=91 // pred_fallthru
          _
      $region92: #{swin_deeplab_forward.15} parent=5 // pred_fallthru
        _
      %p1071 = scmp.le.s32.totalorder 2, %s25
      // Predicated region
      $region101: #{swin_deeplab_forward.15} parent=5 // pred_check
        %p1072 = pneg %p1071
      $region102: #{swin_deeplab_forward.15} parent=5 // pred_check_branch
        %1074 = sbr.rel (%p1072) target = $region104
      $region103: #{swin_deeplab_forward.15} parent=5 // pred_region
        %s1075 = ssub.s32 %s25, 2
        // Predicated region
        $region105: #{swin_deeplab_forward.15} parent=103 // pred_check
          %p1076 = pneg %p442
        $region106: #{swin_deeplab_forward.15} parent=103 // pred_check_branch
          %1078 = sbr.rel (%p1076) target = $region108
        $region107: #{swin_deeplab_forward.15} parent=103 // pred_region
          %p1079 = scmp.lt.s32.totalorder %s31, 1
          %s1080 = scalar_select %p1079, %s31, 1
          %s1081 = smul.addr %s1080, 2
          %s1082 = smul.addr %s1081, 8
          %s1083 = scalar_lea.vmem %s18, %s1082
        $region108: #{swin_deeplab_forward.15} parent=103 // pred_fallthru
          _
      $region104: #{swin_deeplab_forward.15} parent=5 // pred_fallthru
        _
    $region6: #{swin_deeplab_forward.15} parent=1 // loop_footer
      %s29 = sadd.s32 1, %s25
    $region7: #{swin_deeplab_forward.15} parent=1 // loop_footer_branch
      %24 = sbr.rel target = $region3
    $region8: #{swin_deeplab_forward.15} parent=1 // loop_exit
      _
    %1084 = vsyncpa [#allocation3], 1
    %s1085 = scalar_lea.sflag [#allocation3], 1
    %1086 = vsyncpa %s1085, 1

// kernel: swin_deeplab_forward.16
$region0: #{swin_deeplab_forward.16}
  #allocation0 [shape = 'u32[]', space=smem, size = 0x4, offset = 0x4, fixed_abs, tag = 'smem constant byte address 0x4 - core index']
  #allocation1 [shape = 'u32[72,128]{1,0:T(1,128)}', space=vmem, size = 0x9000, scoped, tag = 'internal scratch']
  %s0 = inlined_call_operand.vmem [shape: f32[32,128], index: 0, kind: input, shape index: {}]
  %s1 = inlined_call_operand.vmem [shape: f32[32,128], index: 1, kind: input, shape index: {}]
  %s2 = inlined_call_operand.vmem [shape: f32[32,128], index: 2, kind: input, shape index: {}]
  %s3 = inlined_call_operand.vmem [shape: f32[32,128], index: 3, kind: input, shape index: {}]
  %s4 = inlined_call_operand.vmem [shape: f32[32,128], index: 4, kind: input, shape index: {}]
  %s5 = inlined_call_operand.vmem [shape: f32[32,128], index: 5, kind: input, shape index: {}]
  %s6 = inlined_call_operand.vmem [shape: f32[32,128], index: 6, kind: input, shape index: {}]
  %s7 = inlined_call_operand.vmem [shape: f32[32,128], index: 7, kind: input, shape index: {}]
  %s8 = inlined_call_operand.vmem [shape: f32[32,128], index: 8, kind: input, shape index: {}]
  %s9 = inlined_call_operand.vmem [shape: f32[9,128,16], index: 9, kind: input, shape index: {}]
  %s10 = inlined_call_operand.vmem [shape: f32[1,16], index: 10, kind: input, shape index: {}]
  %s11 = inlined_call_operand.vmem [shape: f32[32,16], index: 11, kind: output, shape index: {}]
  %s12 = sld [smem:[#allocation0]]
  $region54: #{swin_deeplab_forward.16} parent=0
    _
  %s14 = ssub.s32 1, %s12
  %s15 = scalar_select 0, %s14, %s12
  // Predicated region
  $region2: #{swin_deeplab_forward.16} parent=0 // pred_check
    _
  $region3: #{swin_deeplab_forward.16} parent=0 // pred_check_branch
    %17 = sbr.rel (0) target = $region5
  $region4: #{swin_deeplab_forward.16} parent=0 // pred_region
    _
  $region5: #{swin_deeplab_forward.16} parent=0 // pred_fallthru
    _
  // Predicated region
  $region6: #{swin_deeplab_forward.16} parent=0 // pred_check
    _
  $region7: #{swin_deeplab_forward.16} parent=0 // pred_check_branch
    %19 = sbr.rel (0) target = $region9
  $region8: #{swin_deeplab_forward.16} parent=0 // pred_region
    _
  $region9: #{swin_deeplab_forward.16} parent=0 // pred_fallthru
    _
  // Predicated region
  $region10: #{swin_deeplab_forward.16} parent=0 // pred_check
    _
  $region11: #{swin_deeplab_forward.16} parent=0 // pred_check_branch
    %21 = sbr.rel (0) target = $region13
  $region12: #{swin_deeplab_forward.16} parent=0 // pred_region
    _
  $region13: #{swin_deeplab_forward.16} parent=0 // pred_fallthru
    _
  // Predicated region
  $region14: #{swin_deeplab_forward.16} parent=0 // pred_check
    _
  $region15: #{swin_deeplab_forward.16} parent=0 // pred_check_branch
    %23 = sbr.rel (0) target = $region17
  $region16: #{swin_deeplab_forward.16} parent=0 // pred_region
    _
  $region17: #{swin_deeplab_forward.16} parent=0 // pred_fallthru
    _
  // Predicated region
  $region18: #{swin_deeplab_forward.16} parent=0 // pred_check
    _
  $region19: #{swin_deeplab_forward.16} parent=0 // pred_check_branch
    %25 = sbr.rel (0) target = $region21
  $region20: #{swin_deeplab_forward.16} parent=0 // pred_region
    _
  $region21: #{swin_deeplab_forward.16} parent=0 // pred_fallthru
    _
  // Predicated region
  $region22: #{swin_deeplab_forward.16} parent=0 // pred_check
    _
  $region23: #{swin_deeplab_forward.16} parent=0 // pred_check_branch
    %27 = sbr.rel (0) target = $region25
  $region24: #{swin_deeplab_forward.16} parent=0 // pred_region
    _
  $region25: #{swin_deeplab_forward.16} parent=0 // pred_fallthru
    _
  // Predicated region
  $region26: #{swin_deeplab_forward.16} parent=0 // pred_check
    _
  $region27: #{swin_deeplab_forward.16} parent=0 // pred_check_branch
    %29 = sbr.rel (0) target = $region29
  $region28: #{swin_deeplab_forward.16} parent=0 // pred_region
    _
  $region29: #{swin_deeplab_forward.16} parent=0 // pred_fallthru
    _
  // Predicated region
  $region30: #{swin_deeplab_forward.16} parent=0 // pred_check
    _
  $region31: #{swin_deeplab_forward.16} parent=0 // pred_check_branch
    %31 = sbr.rel (0) target = $region33
  $region32: #{swin_deeplab_forward.16} parent=0 // pred_region
    _
  $region33: #{swin_deeplab_forward.16} parent=0 // pred_fallthru
    _
  // Predicated region
  $region34: #{swin_deeplab_forward.16} parent=0 // pred_check
    _
  $region35: #{swin_deeplab_forward.16} parent=0 // pred_check_branch
    %33 = sbr.rel (0) target = $region37
  $region36: #{swin_deeplab_forward.16} parent=0 // pred_region
    _
  $region37: #{swin_deeplab_forward.16} parent=0 // pred_fallthru
    _
  // Predicated region
  $region38: #{swin_deeplab_forward.16} parent=0 // pred_check
    _
  $region39: #{swin_deeplab_forward.16} parent=0 // pred_check_branch
    %35 = sbr.rel (0) target = $region41
  $region40: #{swin_deeplab_forward.16} parent=0 // pred_region
    _
  $region41: #{swin_deeplab_forward.16} parent=0 // pred_fallthru
    _
  // Predicated region
  $region42: #{swin_deeplab_forward.16} parent=0 // pred_check
    _
  $region43: #{swin_deeplab_forward.16} parent=0 // pred_check_branch
    %37 = sbr.rel (0) target = $region45
  $region44: #{swin_deeplab_forward.16} parent=0 // pred_region
    _
  $region45: #{swin_deeplab_forward.16} parent=0 // pred_fallthru
    _
  %v38 = vld [vmem:[%s0] sm:$0xff]
  %v39 = vld [vmem:[%s0 + $0x8] sm:$0xff]
  %v40 = vld [vmem:[%s0 + $0x10] sm:$0xff]
  %v41 = vld [vmem:[%s0 + $0x18] sm:$0xff]
  %v42 = vpack.c.bf16 %v39, %v38
  %v43 = vpack.c.bf16 %v41, %v40
  %v44 = vld [vmem:[%s9] sm:$0xff]
  %v45 = vld [vmem:[%s9 + $0x8] sm:$0xff]
  %v46 = vld [vmem:[%s9 + $0x10] sm:$0xff]
  %v47 = vld [vmem:[%s9 + $0x18] sm:$0xff]
  %v48 = vld [vmem:[%s9 + $0x20] sm:$0xff]
  %v49 = vld [vmem:[%s9 + $0x28] sm:$0xff]
  %v50 = vld [vmem:[%s9 + $0x30] sm:$0xff]
  %v51 = vld [vmem:[%s9 + $0x38] sm:$0xff]
  %v52 = vld [vmem:[%s9 + $0x40] sm:$0xff]
  %v53 = vld [vmem:[%s9 + $0x48] sm:$0xff]
  %v54 = vld [vmem:[%s9 + $0x50] sm:$0xff]
  %v55 = vld [vmem:[%s9 + $0x58] sm:$0xff]
  %v56 = vld [vmem:[%s9 + $0x60] sm:$0xff]
  %v57 = vld [vmem:[%s9 + $0x68] sm:$0xff]
  %v58 = vld [vmem:[%s9 + $0x70] sm:$0xff]
  %v59 = vld [vmem:[%s9 + $0x78] sm:$0xff]
  %v60 = vpack.c.bf16 %v45, %v44
  %v61 = vpack.c.bf16 %v47, %v46
  %v62 = vpack.c.bf16 %v49, %v48
  %v63 = vpack.c.bf16 %v51, %v50
  %v64 = vpack.c.bf16 %v53, %v52
  %v65 = vpack.c.bf16 %v55, %v54
  %v66 = vpack.c.bf16 %v57, %v56
  %v67 = vpack.c.bf16 %v59, %v58
  %v68 = vld [vmem:[%s1] sm:$0xff]
  %v69 = vld [vmem:[%s1 + $0x8] sm:$0xff]
  %v70 = vld [vmem:[%s1 + $0x10] sm:$0xff]
  %v71 = vld [vmem:[%s1 + $0x18] sm:$0xff]
  %v72 = vpack.c.bf16 %v69, %v68
  %v73 = vpack.c.bf16 %v71, %v70
  %s74 = scalar_lea.vmem %s9, 128
  %v75 = vld [vmem:[%s74] sm:$0xff]
  %v76 = vld [vmem:[%s74 + $0x8] sm:$0xff]
  %v77 = vld [vmem:[%s74 + $0x10] sm:$0xff]
  %v78 = vld [vmem:[%s74 + $0x18] sm:$0xff]
  %v79 = vld [vmem:[%s74 + $0x20] sm:$0xff]
  %v80 = vld [vmem:[%s74 + $0x28] sm:$0xff]
  %v81 = vld [vmem:[%s74 + $0x30] sm:$0xff]
  %v82 = vld [vmem:[%s74 + $0x38] sm:$0xff]
  %v83 = vld [vmem:[%s74 + $0x40] sm:$0xff]
  %v84 = vld [vmem:[%s74 + $0x48] sm:$0xff]
  %v85 = vld [vmem:[%s74 + $0x50] sm:$0xff]
  %v86 = vld [vmem:[%s74 + $0x58] sm:$0xff]
  %v87 = vld [vmem:[%s74 + $0x60] sm:$0xff]
  %v88 = vld [vmem:[%s74 + $0x68] sm:$0xff]
  %v89 = vld [vmem:[%s74 + $0x70] sm:$0xff]
  %v90 = vld [vmem:[%s74 + $0x78] sm:$0xff]
  %v91 = vpack.c.bf16 %v76, %v75
  %v92 = vpack.c.bf16 %v78, %v77
  %v93 = vpack.c.bf16 %v80, %v79
  %v94 = vpack.c.bf16 %v82, %v81
  %v95 = vpack.c.bf16 %v84, %v83
  %v96 = vpack.c.bf16 %v86, %v85
  %v97 = vpack.c.bf16 %v88, %v87
  %v98 = vpack.c.bf16 %v90, %v89
  %99 = vmatpush.bf16.msra.mxu0 %v98
  %100 = vmatpush.bf16.msra.mxu0 %v97
  %101 = vmatpush.bf16.msra.mxu0 %v96
  %102 = vmatpush.bf16.msra.mxu0 %v95
  %103 = vmatpush.bf16.msra.mxu0 %v94
  %104 = vmatpush.bf16.msra.mxu0 %v93
  %105 = vmatpush.bf16.msra.mxu0 %v92
  %106 = vmatpush.bf16.msra.mxu0 %v91
  %107 = vmatmul.bf16.gmra.mxu0 %v72
  %v108 = vpop.f32.mrf.mxu0
  %v109 = vadd.f32 0.0, %v108
  %v110 = vpop.f32.mrf.mxu0
  %v111 = vadd.f32 0.0, %v110
  %112 = vmatmul.bf16.gmra.mxu0 %v73
  %v113 = vpop.f32.mrf.mxu0
  %v114 = vadd.f32 0.0, %v113
  %v115 = vpop.f32.mrf.mxu0
  %v116 = vadd.f32 0.0, %v115
  %117 = vdwg.mxu0
  %118 = vmatpush.bf16.msra.mxu0 %v67
  %119 = vmatpush.bf16.msra.mxu0 %v66
  %120 = vmatpush.bf16.msra.mxu0 %v65
  %121 = vmatpush.bf16.msra.mxu0 %v64
  %122 = vmatpush.bf16.msra.mxu0 %v63
  %123 = vmatpush.bf16.msra.mxu0 %v62
  %124 = vmatpush.bf16.msra.mxu0 %v61
  %125 = vmatpush.bf16.msra.mxu0 %v60
  %126 = vmatmul.bf16.gmra.mxu0 %v42
  %v127 = vpop.f32.mrf.mxu0
  %v128 = vadd.f32 %v109, %v127
  %v129 = vpop.f32.mrf.mxu0
  %v130 = vadd.f32 %v111, %v129
  %131 = vmatmul.bf16.gmra.mxu0 %v43
  %v132 = vpop.f32.mrf.mxu0
  %v133 = vadd.f32 %v114, %v132
  %v134 = vpop.f32.mrf.mxu0
  %v135 = vadd.f32 %v116, %v134
  %136 = vdwg.mxu0
  %v137 = vld [vmem:[%s2] sm:$0xff]
  %v138 = vld [vmem:[%s2 + $0x8] sm:$0xff]
  %v139 = vld [vmem:[%s2 + $0x10] sm:$0xff]
  %v140 = vld [vmem:[%s2 + $0x18] sm:$0xff]
  %v141 = vpack.c.bf16 %v138, %v137
  %v142 = vpack.c.bf16 %v140, %v139
  %s143 = scalar_lea.vmem %s9, 256
  %v144 = vld [vmem:[%s143] sm:$0xff]
  %v145 = vld [vmem:[%s143 + $0x8] sm:$0xff]
  %v146 = vld [vmem:[%s143 + $0x10] sm:$0xff]
  %v147 = vld [vmem:[%s143 + $0x18] sm:$0xff]
  %v148 = vld [vmem:[%s143 + $0x20] sm:$0xff]
  %v149 = vld [vmem:[%s143 + $0x28] sm:$0xff]
  %v150 = vld [vmem:[%s143 + $0x30] sm:$0xff]
  %v151 = vld [vmem:[%s143 + $0x38] sm:$0xff]
  %v152 = vld [vmem:[%s143 + $0x40] sm:$0xff]
  %v153 = vld [vmem:[%s143 + $0x48] sm:$0xff]
  %v154 = vld [vmem:[%s143 + $0x50] sm:$0xff]
  %v155 = vld [vmem:[%s143 + $0x58] sm:$0xff]
  %v156 = vld [vmem:[%s143 + $0x60] sm:$0xff]
  %v157 = vld [vmem:[%s143 + $0x68] sm:$0xff]
  %v158 = vld [vmem:[%s143 + $0x70] sm:$0xff]
  %v159 = vld [vmem:[%s143 + $0x78] sm:$0xff]
  %v160 = vpack.c.bf16 %v145, %v144
  %v161 = vpack.c.bf16 %v147, %v146
  %v162 = vpack.c.bf16 %v149, %v148
  %v163 = vpack.c.bf16 %v151, %v150
  %v164 = vpack.c.bf16 %v153, %v152
  %v165 = vpack.c.bf16 %v155, %v154
  %v166 = vpack.c.bf16 %v157, %v156
  %v167 = vpack.c.bf16 %v159, %v158
  %168 = vmatpush.bf16.msra.mxu0 %v167
  %169 = vmatpush.bf16.msra.mxu0 %v166
  %170 = vmatpush.bf16.msra.mxu0 %v165
  %171 = vmatpush.bf16.msra.mxu0 %v164
  %172 = vmatpush.bf16.msra.mxu0 %v163
  %173 = vmatpush.bf16.msra.mxu0 %v162
  %174 = vmatpush.bf16.msra.mxu0 %v161
  %175 = vmatpush.bf16.msra.mxu0 %v160
  %176 = vmatmul.bf16.gmra.mxu0 %v141
  %v177 = vpop.f32.mrf.mxu0
  %v178 = vadd.f32 0.0, %v177
  %v179 = vpop.f32.mrf.mxu0
  %v180 = vadd.f32 0.0, %v179
  %181 = vmatmul.bf16.gmra.mxu0 %v142
  %v182 = vpop.f32.mrf.mxu0
  %v183 = vadd.f32 0.0, %v182
  %v184 = vpop.f32.mrf.mxu0
  %v185 = vadd.f32 0.0, %v184
  %186 = vdwg.mxu0
  %v187 = vadd.f32 %v128, %v178
  %v188 = vadd.f32 %v130, %v180
  %v189 = vadd.f32 %v133, %v183
  %v190 = vadd.f32 %v135, %v185
  %v191 = vld [vmem:[%s3] sm:$0xff]
  %v192 = vld [vmem:[%s3 + $0x8] sm:$0xff]
  %v193 = vld [vmem:[%s3 + $0x10] sm:$0xff]
  %v194 = vld [vmem:[%s3 + $0x18] sm:$0xff]
  %v195 = vpack.c.bf16 %v192, %v191
  %v196 = vpack.c.bf16 %v194, %v193
  %s197 = scalar_lea.vmem %s9, 384
  %v198 = vld [vmem:[%s197] sm:$0xff]
  %v199 = vld [vmem:[%s197 + $0x8] sm:$0xff]
  %v200 = vld [vmem:[%s197 + $0x10] sm:$0xff]
  %v201 = vld [vmem:[%s197 + $0x18] sm:$0xff]
  %v202 = vld [vmem:[%s197 + $0x20] sm:$0xff]
  %v203 = vld [vmem:[%s197 + $0x28] sm:$0xff]
  %v204 = vld [vmem:[%s197 + $0x30] sm:$0xff]
  %v205 = vld [vmem:[%s197 + $0x38] sm:$0xff]
  %v206 = vld [vmem:[%s197 + $0x40] sm:$0xff]
  %v207 = vld [vmem:[%s197 + $0x48] sm:$0xff]
  %v208 = vld [vmem:[%s197 + $0x50] sm:$0xff]
  %v209 = vld [vmem:[%s197 + $0x58] sm:$0xff]
  %v210 = vld [vmem:[%s197 + $0x60] sm:$0xff]
  %v211 = vld [vmem:[%s197 + $0x68] sm:$0xff]
  %v212 = vld [vmem:[%s197 + $0x70] sm:$0xff]
  %v213 = vld [vmem:[%s197 + $0x78] sm:$0xff]
  %v214 = vpack.c.bf16 %v199, %v198
  %v215 = vpack.c.bf16 %v201, %v200
  %v216 = vpack.c.bf16 %v203, %v202
  %v217 = vpack.c.bf16 %v205, %v204
  %v218 = vpack.c.bf16 %v207, %v206
  %v219 = vpack.c.bf16 %v209, %v208
  %v220 = vpack.c.bf16 %v211, %v210
  %v221 = vpack.c.bf16 %v213, %v212
  %222 = vmatpush.bf16.msra.mxu0 %v221
  %223 = vmatpush.bf16.msra.mxu0 %v220
  %224 = vmatpush.bf16.msra.mxu0 %v219
  %225 = vmatpush.bf16.msra.mxu0 %v218
  %226 = vmatpush.bf16.msra.mxu0 %v217
  %227 = vmatpush.bf16.msra.mxu0 %v216
  %228 = vmatpush.bf16.msra.mxu0 %v215
  %229 = vmatpush.bf16.msra.mxu0 %v214
  %230 = vmatmul.bf16.gmra.mxu0 %v195
  %v231 = vpop.f32.mrf.mxu0
  %v232 = vadd.f32 0.0, %v231
  %v233 = vpop.f32.mrf.mxu0
  %v234 = vadd.f32 0.0, %v233
  %235 = vmatmul.bf16.gmra.mxu0 %v196
  %v236 = vpop.f32.mrf.mxu0
  %v237 = vadd.f32 0.0, %v236
  %v238 = vpop.f32.mrf.mxu0
  %v239 = vadd.f32 0.0, %v238
  %240 = vdwg.mxu0
  %v241 = vadd.f32 %v187, %v232
  %v242 = vadd.f32 %v188, %v234
  %v243 = vadd.f32 %v189, %v237
  %v244 = vadd.f32 %v190, %v239
  %v245 = vld [vmem:[%s4] sm:$0xff]
  %v246 = vld [vmem:[%s4 + $0x8] sm:$0xff]
  %v247 = vld [vmem:[%s4 + $0x10] sm:$0xff]
  %v248 = vld [vmem:[%s4 + $0x18] sm:$0xff]
  %v249 = vpack.c.bf16 %v246, %v245
  %v250 = vpack.c.bf16 %v248, %v247
  %s251 = scalar_lea.vmem %s9, 512
  %v252 = vld [vmem:[%s251] sm:$0xff]
  %v253 = vld [vmem:[%s251 + $0x8] sm:$0xff]
  %v254 = vld [vmem:[%s251 + $0x10] sm:$0xff]
  %v255 = vld [vmem:[%s251 + $0x18] sm:$0xff]
  %v256 = vld [vmem:[%s251 + $0x20] sm:$0xff]
  %v257 = vld [vmem:[%s251 + $0x28] sm:$0xff]
  %v258 = vld [vmem:[%s251 + $0x30] sm:$0xff]
  %v259 = vld [vmem:[%s251 + $0x38] sm:$0xff]
  %v260 = vld [vmem:[%s251 + $0x40] sm:$0xff]
  %v261 = vld [vmem:[%s251 + $0x48] sm:$0xff]
  %v262 = vld [vmem:[%s251 + $0x50] sm:$0xff]
  %v263 = vld [vmem:[%s251 + $0x58] sm:$0xff]
  %v264 = vld [vmem:[%s251 + $0x60] sm:$0xff]
  %v265 = vld [vmem:[%s251 + $0x68] sm:$0xff]
  %v266 = vld [vmem:[%s251 + $0x70] sm:$0xff]
  %v267 = vld [vmem:[%s251 + $0x78] sm:$0xff]
  %v268 = vpack.c.bf16 %v253, %v252
  %v269 = vpack.c.bf16 %v255, %v254
  %v270 = vpack.c.bf16 %v257, %v256
  %v271 = vpack.c.bf16 %v259, %v258
  %v272 = vpack.c.bf16 %v261, %v260
  %v273 = vpack.c.bf16 %v263, %v262
  %v274 = vpack.c.bf16 %v265, %v264
  %v275 = vpack.c.bf16 %v267, %v266
  %276 = vmatpush.bf16.msra.mxu0 %v275
  %277 = vmatpush.bf16.msra.mxu0 %v274
  %278 = vmatpush.bf16.msra.mxu0 %v273
  %279 = vmatpush.bf16.msra.mxu0 %v272
  %280 = vmatpush.bf16.msra.mxu0 %v271
  %281 = vmatpush.bf16.msra.mxu0 %v270
  %282 = vmatpush.bf16.msra.mxu0 %v269
  %283 = vmatpush.bf16.msra.mxu0 %v268
  %284 = vmatmul.bf16.gmra.mxu0 %v249
  %v285 = vpop.f32.mrf.mxu0
  %v286 = vadd.f32 0.0, %v285
  %v287 = vpop.f32.mrf.mxu0
  %v288 = vadd.f32 0.0, %v287
  %289 = vmatmul.bf16.gmra.mxu0 %v250
  %v290 = vpop.f32.mrf.mxu0
  %v291 = vadd.f32 0.0, %v290
  %v292 = vpop.f32.mrf.mxu0
  %v293 = vadd.f32 0.0, %v292
  %294 = vdwg.mxu0
  %v295 = vadd.f32 %v241, %v286
  %v296 = vadd.f32 %v242, %v288
  %v297 = vadd.f32 %v243, %v291
  %v298 = vadd.f32 %v244, %v293
  %v299 = vld [vmem:[%s5] sm:$0xff]
  %v300 = vld [vmem:[%s5 + $0x8] sm:$0xff]
  %v301 = vld [vmem:[%s5 + $0x10] sm:$0xff]
  %v302 = vld [vmem:[%s5 + $0x18] sm:$0xff]
  %v303 = vpack.c.bf16 %v300, %v299
  %v304 = vpack.c.bf16 %v302, %v301
  %s305 = scalar_lea.vmem %s9, 640
  %v306 = vld [vmem:[%s305] sm:$0xff]
  %v307 = vld [vmem:[%s305 + $0x8] sm:$0xff]
  %v308 = vld [vmem:[%s305 + $0x10] sm:$0xff]
  %v309 = vld [vmem:[%s305 + $0x18] sm:$0xff]
  %v310 = vld [vmem:[%s305 + $0x20] sm:$0xff]
  %v311 = vld [vmem:[%s305 + $0x28] sm:$0xff]
  %v312 = vld [vmem:[%s305 + $0x30] sm:$0xff]
  %v313 = vld [vmem:[%s305 + $0x38] sm:$0xff]
  %v314 = vld [vmem:[%s305 + $0x40] sm:$0xff]
  %v315 = vld [vmem:[%s305 + $0x48] sm:$0xff]
  %v316 = vld [vmem:[%s305 + $0x50] sm:$0xff]
  %v317 = vld [vmem:[%s305 + $0x58] sm:$0xff]
  %v318 = vld [vmem:[%s305 + $0x60] sm:$0xff]
  %v319 = vld [vmem:[%s305 + $0x68] sm:$0xff]
  %v320 = vld [vmem:[%s305 + $0x70] sm:$0xff]
  %v321 = vld [vmem:[%s305 + $0x78] sm:$0xff]
  %v322 = vpack.c.bf16 %v307, %v306
  %v323 = vpack.c.bf16 %v309, %v308
  %v324 = vpack.c.bf16 %v311, %v310
  %v325 = vpack.c.bf16 %v313, %v312
  %v326 = vpack.c.bf16 %v315, %v314
  %v327 = vpack.c.bf16 %v317, %v316
  %v328 = vpack.c.bf16 %v319, %v318
  %v329 = vpack.c.bf16 %v321, %v320
  %330 = vmatpush.bf16.msra.mxu0 %v329
  %331 = vmatpush.bf16.msra.mxu0 %v328
  %332 = vmatpush.bf16.msra.mxu0 %v327
  %333 = vmatpush.bf16.msra.mxu0 %v326
  %334 = vmatpush.bf16.msra.mxu0 %v325
  %335 = vmatpush.bf16.msra.mxu0 %v324
  %336 = vmatpush.bf16.msra.mxu0 %v323
  %337 = vmatpush.bf16.msra.mxu0 %v322
  %338 = vmatmul.bf16.gmra.mxu0 %v303
  %v339 = vpop.f32.mrf.mxu0
  %v340 = vadd.f32 0.0, %v339
  %v341 = vpop.f32.mrf.mxu0
  %v342 = vadd.f32 0.0, %v341
  %343 = vmatmul.bf16.gmra.mxu0 %v304
  %v344 = vpop.f32.mrf.mxu0
  %v345 = vadd.f32 0.0, %v344
  %v346 = vpop.f32.mrf.mxu0
  %v347 = vadd.f32 0.0, %v346
  %348 = vdwg.mxu0
  %v349 = vadd.f32 %v295, %v340
  %v350 = vadd.f32 %v296, %v342
  %v351 = vadd.f32 %v297, %v345
  %v352 = vadd.f32 %v298, %v347
  %v353 = vld [vmem:[%s6] sm:$0xff]
  %v354 = vld [vmem:[%s6 + $0x8] sm:$0xff]
  %v355 = vld [vmem:[%s6 + $0x10] sm:$0xff]
  %v356 = vld [vmem:[%s6 + $0x18] sm:$0xff]
  %v357 = vpack.c.bf16 %v354, %v353
  %v358 = vpack.c.bf16 %v356, %v355
  %s359 = scalar_lea.vmem %s9, 768
  %v360 = vld [vmem:[%s359] sm:$0xff]
  %v361 = vld [vmem:[%s359 + $0x8] sm:$0xff]
  %v362 = vld [vmem:[%s359 + $0x10] sm:$0xff]
  %v363 = vld [vmem:[%s359 + $0x18] sm:$0xff]
  %v364 = vld [vmem:[%s359 + $0x20] sm:$0xff]
  %v365 = vld [vmem:[%s359 + $0x28] sm:$0xff]
  %v366 = vld [vmem:[%s359 + $0x30] sm:$0xff]
  %v367 = vld [vmem:[%s359 + $0x38] sm:$0xff]
  %v368 = vld [vmem:[%s359 + $0x40] sm:$0xff]
  %v369 = vld [vmem:[%s359 + $0x48] sm:$0xff]
  %v370 = vld [vmem:[%s359 + $0x50] sm:$0xff]
  %v371 = vld [vmem:[%s359 + $0x58] sm:$0xff]
  %v372 = vld [vmem:[%s359 + $0x60] sm:$0xff]
  %v373 = vld [vmem:[%s359 + $0x68] sm:$0xff]
  %v374 = vld [vmem:[%s359 + $0x70] sm:$0xff]
  %v375 = vld [vmem:[%s359 + $0x78] sm:$0xff]
  %v376 = vpack.c.bf16 %v361, %v360
  %v377 = vpack.c.bf16 %v363, %v362
  %v378 = vpack.c.bf16 %v365, %v364
  %v379 = vpack.c.bf16 %v367, %v366
  %v380 = vpack.c.bf16 %v369, %v368
  %v381 = vpack.c.bf16 %v371, %v370
  %v382 = vpack.c.bf16 %v373, %v372
  %v383 = vpack.c.bf16 %v375, %v374
  %384 = vmatpush.bf16.msra.mxu0 %v383
  %385 = vmatpush.bf16.msra.mxu0 %v382
  %386 = vmatpush.bf16.msra.mxu0 %v381
  %387 = vmatpush.bf16.msra.mxu0 %v380
  %388 = vmatpush.bf16.msra.mxu0 %v379
  %389 = vmatpush.bf16.msra.mxu0 %v378
  %390 = vmatpush.bf16.msra.mxu0 %v377
  %391 = vmatpush.bf16.msra.mxu0 %v376
  %392 = vmatmul.bf16.gmra.mxu0 %v357
  %v393 = vpop.f32.mrf.mxu0
  %v394 = vadd.f32 0.0, %v393
  %v395 = vpop.f32.mrf.mxu0
  %v396 = vadd.f32 0.0, %v395
  %397 = vmatmul.bf16.gmra.mxu0 %v358
  %v398 = vpop.f32.mrf.mxu0
  %v399 = vadd.f32 0.0, %v398
  %v400 = vpop.f32.mrf.mxu0
  %v401 = vadd.f32 0.0, %v400
  %402 = vdwg.mxu0
  %v403 = vadd.f32 %v349, %v394
  %v404 = vadd.f32 %v350, %v396
  %v405 = vadd.f32 %v351, %v399
  %v406 = vadd.f32 %v352, %v401
  %v407 = vld [vmem:[%s7] sm:$0xff]
  %v408 = vld [vmem:[%s7 + $0x8] sm:$0xff]
  %v409 = vld [vmem:[%s7 + $0x10] sm:$0xff]
  %v410 = vld [vmem:[%s7 + $0x18] sm:$0xff]
  %v411 = vpack.c.bf16 %v408, %v407
  %v412 = vpack.c.bf16 %v410, %v409
  %s413 = scalar_lea.vmem %s9, 896
  %v414 = vld [vmem:[%s413] sm:$0xff]
  %v415 = vld [vmem:[%s413 + $0x8] sm:$0xff]
  %v416 = vld [vmem:[%s413 + $0x10] sm:$0xff]
  %v417 = vld [vmem:[%s413 + $0x18] sm:$0xff]
  %v418 = vld [vmem:[%s413 + $0x20] sm:$0xff]
  %v419 = vld [vmem:[%s413 + $0x28] sm:$0xff]
  %v420 = vld [vmem:[%s413 + $0x30] sm:$0xff]
  %v421 = vld [vmem:[%s413 + $0x38] sm:$0xff]
  %v422 = vld [vmem:[%s413 + $0x40] sm:$0xff]
  %v423 = vld [vmem:[%s413 + $0x48] sm:$0xff]
  %v424 = vld [vmem:[%s413 + $0x50] sm:$0xff]
  %v425 = vld [vmem:[%s413 + $0x58] sm:$0xff]
  %v426 = vld [vmem:[%s413 + $0x60] sm:$0xff]
  %v427 = vld [vmem:[%s413 + $0x68] sm:$0xff]
  %v428 = vld [vmem:[%s413 + $0x70] sm:$0xff]
  %v429 = vld [vmem:[%s413 + $0x78] sm:$0xff]
  %v430 = vpack.c.bf16 %v415, %v414
  %v431 = vpack.c.bf16 %v417, %v416
  %v432 = vpack.c.bf16 %v419, %v418
  %v433 = vpack.c.bf16 %v421, %v420
  %v434 = vpack.c.bf16 %v423, %v422
  %v435 = vpack.c.bf16 %v425, %v424
  %v436 = vpack.c.bf16 %v427, %v426
  %v437 = vpack.c.bf16 %v429, %v428
  %438 = vmatpush.bf16.msra.mxu0 %v437
  %439 = vmatpush.bf16.msra.mxu0 %v436
  %440 = vmatpush.bf16.msra.mxu0 %v435
  %441 = vmatpush.bf16.msra.mxu0 %v434
  %442 = vmatpush.bf16.msra.mxu0 %v433
  %443 = vmatpush.bf16.msra.mxu0 %v432
  %444 = vmatpush.bf16.msra.mxu0 %v431
  %445 = vmatpush.bf16.msra.mxu0 %v430
  %446 = vmatmul.bf16.gmra.mxu0 %v411
  %v447 = vpop.f32.mrf.mxu0
  %v448 = vadd.f32 0.0, %v447
  %v449 = vpop.f32.mrf.mxu0
  %v450 = vadd.f32 0.0, %v449
  %451 = vmatmul.bf16.gmra.mxu0 %v412
  %v452 = vpop.f32.mrf.mxu0
  %v453 = vadd.f32 0.0, %v452
  %v454 = vpop.f32.mrf.mxu0
  %v455 = vadd.f32 0.0, %v454
  %456 = vdwg.mxu0
  %v457 = vadd.f32 %v403, %v448
  %v458 = vadd.f32 %v404, %v450
  %v459 = vadd.f32 %v405, %v453
  %v460 = vadd.f32 %v406, %v455
  %v461 = vld [vmem:[%s8] sm:$0xff]
  %v462 = vld [vmem:[%s8 + $0x8] sm:$0xff]
  %v463 = vld [vmem:[%s8 + $0x10] sm:$0xff]
  %v464 = vld [vmem:[%s8 + $0x18] sm:$0xff]
  %v465 = vpack.c.bf16 %v462, %v461
  %v466 = vpack.c.bf16 %v464, %v463
  %s467 = scalar_lea.vmem %s9, 1024
  %v468 = vld [vmem:[%s467] sm:$0xff]
  %v469 = vld [vmem:[%s467 + $0x8] sm:$0xff]
  %v470 = vld [vmem:[%s467 + $0x10] sm:$0xff]
  %v471 = vld [vmem:[%s467 + $0x18] sm:$0xff]
  %v472 = vld [vmem:[%s467 + $0x20] sm:$0xff]
  %v473 = vld [vmem:[%s467 + $0x28] sm:$0xff]
  %v474 = vld [vmem:[%s467 + $0x30] sm:$0xff]
  %v475 = vld [vmem:[%s467 + $0x38] sm:$0xff]
  %v476 = vld [vmem:[%s467 + $0x40] sm:$0xff]
  %v477 = vld [vmem:[%s467 + $0x48] sm:$0xff]
  %v478 = vld [vmem:[%s467 + $0x50] sm:$0xff]
  %v479 = vld [vmem:[%s467 + $0x58] sm:$0xff]
  %v480 = vld [vmem:[%s467 + $0x60] sm:$0xff]
  %v481 = vld [vmem:[%s467 + $0x68] sm:$0xff]
  %v482 = vld [vmem:[%s467 + $0x70] sm:$0xff]
  %v483 = vld [vmem:[%s467 + $0x78] sm:$0xff]
  %v484 = vpack.c.bf16 %v469, %v468
  %v485 = vpack.c.bf16 %v471, %v470
  %v486 = vpack.c.bf16 %v473, %v472
  %v487 = vpack.c.bf16 %v475, %v474
  %v488 = vpack.c.bf16 %v477, %v476
  %v489 = vpack.c.bf16 %v479, %v478
  %v490 = vpack.c.bf16 %v481, %v480
  %v491 = vpack.c.bf16 %v483, %v482
  %492 = vmatpush.bf16.msra.mxu0 %v491
  %493 = vmatpush.bf16.msra.mxu0 %v490
  %494 = vmatpush.bf16.msra.mxu0 %v489
  %495 = vmatpush.bf16.msra.mxu0 %v488
  %496 = vmatpush.bf16.msra.mxu0 %v487
  %497 = vmatpush.bf16.msra.mxu0 %v486
  %498 = vmatpush.bf16.msra.mxu0 %v485
  %499 = vmatpush.bf16.msra.mxu0 %v484
  %500 = vmatmul.bf16.gmra.mxu0 %v465
  %v501 = vpop.f32.mrf.mxu0
  %v502 = vadd.f32 0.0, %v501
  %v503 = vpop.f32.mrf.mxu0
  %v504 = vadd.f32 0.0, %v503
  %505 = vmatmul.bf16.gmra.mxu0 %v466
  %v506 = vpop.f32.mrf.mxu0
  %v507 = vadd.f32 0.0, %v506
  %v508 = vpop.f32.mrf.mxu0
  %v509 = vadd.f32 0.0, %v508
  %510 = vdwg.mxu0
  %v511 = vadd.f32 %v457, %v502
  %v512 = vadd.f32 %v458, %v504
  %v513 = vadd.f32 %v459, %v507
  %v514 = vadd.f32 %v460, %v509
  %v515 = vld [vmem:[%s10] sm:$0x1]
  %v517 = vperm.slane %v515, 0
  %v519 = vadd.f32 %v511, %v517
  %v520 = vadd.f32 %v512, %v517
  %v521 = vadd.f32 %v513, %v517
  %v522 = vadd.f32 %v514, %v517
  %v523 = vmax.f32 %v519, 0.0
  %v524 = vmax.f32 %v520, 0.0
  %v525 = vmax.f32 %v521, 0.0
  %v526 = vmax.f32 %v522, 0.0
  %vm527 = vcmask 130048
  %528 = vst.msk [vmem:[%s11] sm:$0xff] %vm527, %v523
  %529 = vst.msk [vmem:[%s11 + $0x8] sm:$0xff] %vm527, %v524
  %530 = vst.msk [vmem:[%s11 + $0x10] sm:$0xff] %vm527, %v525
  %531 = vst.msk [vmem:[%s11 + $0x18] sm:$0xff] %vm527, %v526
  // Predicated region
  $region46: #{swin_deeplab_forward.16} parent=0 // pred_check
    _
  $region47: #{swin_deeplab_forward.16} parent=0 // pred_check_branch
    %533 = sbr.rel (0) target = $region49
  $region48: #{swin_deeplab_forward.16} parent=0 // pred_region
    _
  $region49: #{swin_deeplab_forward.16} parent=0 // pred_fallthru
    _
  // Predicated region
  $region50: #{swin_deeplab_forward.16} parent=0 // pred_check
    _
  $region51: #{swin_deeplab_forward.16} parent=0 // pred_check_branch
    %535 = sbr.rel (0) target = $region53
  $region52: #{swin_deeplab_forward.16} parent=0 // pred_region
    _
  $region53: #{swin_deeplab_forward.16} parent=0 // pred_fallthru
    _

// kernel: swin_deeplab_forward.17
$region0: #{swin_deeplab_forward.17}
  #allocation0 [shape = 'u32[]', space=smem, size = 0x4, offset = 0x4, fixed_abs, tag = 'smem constant byte address 0x4 - core index']
  #allocation1 [shape = 'u32[72,128]{1,0:T(1,128)}', space=vmem, size = 0x9000, scoped, tag = 'internal scratch']
  %s0 = inlined_call_operand.vmem [shape: f32[32,80], index: 0, kind: input, shape index: {}]
  %s1 = inlined_call_operand.vmem [shape: f32[80,32], index: 1, kind: input, shape index: {}]
  %s2 = inlined_call_operand.vmem [shape: f32[1,32], index: 2, kind: input, shape index: {}]
  %s3 = inlined_call_operand.vmem [shape: f32[32,32], index: 3, kind: output, shape index: {}]
  %s4 = sld [smem:[#allocation0]]
  $region22: #{swin_deeplab_forward.17} parent=0
    _
  %s6 = ssub.s32 1, %s4
  %s7 = scalar_select 0, %s6, %s4
  // Predicated region
  $region2: #{swin_deeplab_forward.17} parent=0 // pred_check
    _
  $region3: #{swin_deeplab_forward.17} parent=0 // pred_check_branch
    %9 = sbr.rel (0) target = $region5
  $region4: #{swin_deeplab_forward.17} parent=0 // pred_region
    _
  $region5: #{swin_deeplab_forward.17} parent=0 // pred_fallthru
    _
  // Predicated region
  $region6: #{swin_deeplab_forward.17} parent=0 // pred_check
    _
  $region7: #{swin_deeplab_forward.17} parent=0 // pred_check_branch
    %11 = sbr.rel (0) target = $region9
  $region8: #{swin_deeplab_forward.17} parent=0 // pred_region
    _
  $region9: #{swin_deeplab_forward.17} parent=0 // pred_fallthru
    _
  // Predicated region
  $region10: #{swin_deeplab_forward.17} parent=0 // pred_check
    _
  $region11: #{swin_deeplab_forward.17} parent=0 // pred_check_branch
    %13 = sbr.rel (0) target = $region13
  $region12: #{swin_deeplab_forward.17} parent=0 // pred_region
    _
  $region13: #{swin_deeplab_forward.17} parent=0 // pred_fallthru
    _
  %v15 = vld [vmem:[%s0] sm:$0xff]
  %v16 = vld [vmem:[%s0 + $0x8] sm:$0xff]
  %v17 = vld [vmem:[%s0 + $0x10] sm:$0xff]
  %v18 = vld [vmem:[%s0 + $0x18] sm:$0xff]
  %v19 = vpack.c.bf16 %v16, %v15
  %v20 = vpack.c.bf16 %v18, %v17
  %v21 = vld [vmem:[%s1] sm:$0xff]
  %v22 = vld [vmem:[%s1 + $0x8] sm:$0xff]
  %v23 = vld [vmem:[%s1 + $0x10] sm:$0xff]
  %v24 = vld [vmem:[%s1 + $0x18] sm:$0xff]
  %v25 = vld [vmem:[%s1 + $0x20] sm:$0xff]
  %v26 = vld [vmem:[%s1 + $0x28] sm:$0xff]
  %v27 = vld [vmem:[%s1 + $0x30] sm:$0xff]
  %v28 = vld [vmem:[%s1 + $0x38] sm:$0xff]
  %v29 = vld [vmem:[%s1 + $0x40] sm:$0xff]
  %v30 = vld [vmem:[%s1 + $0x48] sm:$0xff]
  %v31 = vpack.c.bf16 %v22, %v21
  %v32 = vpack.c.bf16 %v24, %v23
  %v33 = vpack.c.bf16 %v26, %v25
  %v34 = vpack.c.bf16 %v28, %v27
  %v35 = vpack.c.bf16 %v30, %v29
  %v36 = vld [vmem:[%s2] sm:$0x1]
  %v38 = vperm.slane %v36, 0
  %vm40 = vcmask 654336
  %v42 = vsel %vm40, %v19, 0
  %v45 = vsel %vm40, %v20, 0
  %47 = vmatpush.bf16.msra.mxu0 0
  %48 = vmatpush.bf16.msra.mxu0 0
  %49 = vmatpush.bf16.msra.mxu0 0
  %50 = vmatpush.bf16.msra.mxu0 %v35
  %51 = vmatpush.bf16.msra.mxu0 %v34
  %52 = vmatpush.bf16.msra.mxu0 %v33
  %53 = vmatpush.bf16.msra.mxu0 %v32
  %54 = vmatpush.bf16.msra.mxu0 %v31
  %55 = vmatmul.bf16.gmra.mxu0 %v42
  %v56 = vpop.f32.mrf.mxu0
  %v57 = vadd.f32 %v38, %v56
  %v58 = vpop.f32.mrf.mxu0
  %v59 = vadd.f32 %v38, %v58
  %60 = vmatmul.bf16.gmra.mxu0 %v45
  %v61 = vpop.f32.mrf.mxu0
  %v62 = vadd.f32 %v38, %v61
  %v63 = vpop.f32.mrf.mxu0
  %v64 = vadd.f32 %v38, %v63
  %65 = vdwg.mxu0
  %v66 = vmax.f32 %v57, 0.0
  %v67 = vmax.f32 %v59, 0.0
  %v68 = vmax.f32 %v62, 0.0
  %v69 = vmax.f32 %v64, 0.0
  %vm70 = vcmask 261120
  %71 = vst.msk [vmem:[%s3] sm:$0xff] %vm70, %v66
  %72 = vst.msk [vmem:[%s3 + $0x8] sm:$0xff] %vm70, %v67
  %73 = vst.msk [vmem:[%s3 + $0x10] sm:$0xff] %vm70, %v68
  %74 = vst.msk [vmem:[%s3 + $0x18] sm:$0xff] %vm70, %v69
  // Predicated region
  $region14: #{swin_deeplab_forward.17} parent=0 // pred_check
    _
  $region15: #{swin_deeplab_forward.17} parent=0 // pred_check_branch
    %76 = sbr.rel (0) target = $region17
  $region16: #{swin_deeplab_forward.17} parent=0 // pred_region
    _
  $region17: #{swin_deeplab_forward.17} parent=0 // pred_fallthru
    _
  // Predicated region
  $region18: #{swin_deeplab_forward.17} parent=0 // pred_check
    _
  $region19: #{swin_deeplab_forward.17} parent=0 // pred_check_branch
    %78 = sbr.rel (0) target = $region21
  $region20: #{swin_deeplab_forward.17} parent=0 // pred_region
    _
  $region21: #{swin_deeplab_forward.17} parent=0 // pred_fallthru
    _

// kernel: swin_deeplab_forward.18
$region0: #{swin_deeplab_forward.18}
  #allocation0 [shape = 'u32[]', space=smem, size = 0x4, offset = 0x4, fixed_abs, tag = 'smem constant byte address 0x4 - core index']
  #allocation1 [shape = 'u32[72,128]{1,0:T(1,128)}', space=vmem, size = 0x9000, scoped, tag = 'internal scratch']
  %s0 = inlined_call_operand.vmem [shape: f32[128,64], index: 0, kind: input, shape index: {}]
  %s1 = inlined_call_operand.vmem [shape: f32[64,32], index: 1, kind: input, shape index: {}]
  %s2 = inlined_call_operand.vmem [shape: f32[1,32], index: 2, kind: input, shape index: {}]
  %s3 = inlined_call_operand.vmem [shape: f32[128,32], index: 3, kind: output, shape index: {}]
  %s4 = sld [smem:[#allocation0]]
  $region45: #{swin_deeplab_forward.18} parent=0
    _
  %s6 = ssub.s32 1, %s4
  %s7 = scalar_select 0, %s6, %s4
  loop: start=0, step=1, limit=4
  $region2: #{swin_deeplab_forward.18} parent=0 // loop_pre_header
    _
  $region3: #{swin_deeplab_forward.18} parent=0 // loop_header
    %s9 = sphi 0, %s13
    %p10 = scmp.ge.s32.totalorder %s9, 4
    %s19 = sphi 0, %s21
    %s22 = sphi 0, %s19
    %s23 = sphi 0, %s22
    %s39 = sphi 0, %s23
    %s43 = sphi 0, %s43
    %s45 = sphi 0, %s43
    %s46 = sphi 0, %s45
    %s60 = sphi 0, %s46
    %s64 = sphi 0, %s64
    %s66 = sphi 0, %s64
    %s67 = sphi 0, %s66
    %s81 = sphi 0, %s67
    %s87 = sphi 0, %s89
    %s90 = sphi 0, %s87
    %s91 = sphi 0, %s90
    %s107 = sphi 0, %s91
  $region4: #{swin_deeplab_forward.18} parent=0 // loop_header_branch
    %12 = sbr.rel (%p10) target = $region8
  $region5: #{swin_deeplab_forward.18} parent=0 // loop_body
    %s14 = ssub.s32 %s9, 1
    %s15 = ssub.s32 %s9, 2
    %s16 = sadd.s32 %s9, 1
    %s17 = ssub.s32 %s9, %s16
    %p18 = scmp.eq.s32.totalorder %s17, 0
    %s20 = sadd.s32 %s19, 1
    %s21 = scalar_select %p18, %s19, %s20
    %p24 = pneg %p18
    %p25 = scmp.eq.s32.totalorder %s9, 1
    %p26 = por %p24, %p25
    %p27 = scmp.ne.s32.totalorder %s19, %s22
    %p28 = scmp.eq.s32.totalorder %s9, 0
    %p29 = por %p27, %p28
    %p30 = scmp.ne.s32.totalorder %s19, %s22
    %p31 = scmp.eq.s32.totalorder %s14, 1
    %p32 = por %p30, %p31
    %p33 = scmp.ne.s32.totalorder %s22, %s23
    %p34 = scmp.eq.s32.totalorder %s14, 0
    %p35 = por %p33, %p34
    %p36 = scmp.ne.s32.totalorder %s22, %s23
    %p37 = scmp.eq.s32.totalorder %s15, 1
    %p38 = por %p36, %p37
    %p40 = scmp.ne.s32.totalorder %s23, %s39
    %p41 = scmp.eq.s32.totalorder %s15, 0
    %p42 = por %p40, %p41
    %s44 = sadd.s32 %s43, 1
    %p47 = scmp.eq.s32.totalorder %s9, 1
    %p48 = scmp.ne.s32.totalorder %s43, %s45
    %p49 = scmp.eq.s32.totalorder %s9, 0
    %p50 = por %p48, %p49
    %p51 = scmp.ne.s32.totalorder %s43, %s45
    %p52 = scmp.eq.s32.totalorder %s14, 1
    %p53 = por %p51, %p52
    %p54 = scmp.ne.s32.totalorder %s45, %s46
    %p55 = scmp.eq.s32.totalorder %s14, 0
    %p56 = por %p54, %p55
    %p57 = scmp.ne.s32.totalorder %s45, %s46
    %p58 = scmp.eq.s32.totalorder %s15, 1
    %p59 = por %p57, %p58
    %p61 = scmp.ne.s32.totalorder %s46, %s60
    %p62 = scmp.eq.s32.totalorder %s15, 0
    %p63 = por %p61, %p62
    %s65 = sadd.s32 %s64, 1
    %p68 = scmp.eq.s32.totalorder %s9, 1
    %p69 = scmp.ne.s32.totalorder %s64, %s66
    %p70 = scmp.eq.s32.totalorder %s9, 0
    %p71 = por %p69, %p70
    %p72 = scmp.ne.s32.totalorder %s64, %s66
    %p73 = scmp.eq.s32.totalorder %s14, 1
    %p74 = por %p72, %p73
    %p75 = scmp.ne.s32.totalorder %s66, %s67
    %p76 = scmp.eq.s32.totalorder %s14, 0
    %p77 = por %p75, %p76
    %p78 = scmp.ne.s32.totalorder %s66, %s67
    %p79 = scmp.eq.s32.totalorder %s15, 1
    %p80 = por %p78, %p79
    %p82 = scmp.ne.s32.totalorder %s67, %s81
    %p83 = scmp.eq.s32.totalorder %s15, 0
    %p84 = por %p82, %p83
    %s85 = ssub.s32 %s9, %s16
    %p86 = scmp.eq.s32.totalorder %s85, 0
    %s88 = sadd.s32 %s87, 1
    %s89 = scalar_select %p86, %s87, %s88
    %p92 = pneg %p86
    %p93 = scmp.eq.s32.totalorder %s9, 1
    %p94 = por %p92, %p93
    %p95 = scmp.ne.s32.totalorder %s87, %s90
    %p96 = scmp.eq.s32.totalorder %s9, 0
    %p97 = por %p95, %p96
    %p98 = scmp.ne.s32.totalorder %s87, %s90
    %p99 = scmp.eq.s32.totalorder %s14, 1
    %p100 = por %p98, %p99
    %p101 = scmp.ne.s32.totalorder %s90, %s91
    %p102 = scmp.eq.s32.totalorder %s14, 0
    %p103 = por %p101, %p102
    %p104 = scmp.ne.s32.totalorder %s90, %s91
    %p105 = scmp.eq.s32.totalorder %s15, 1
    %p106 = por %p104, %p105
    %p108 = scmp.ne.s32.totalorder %s91, %s107
    %p109 = scmp.eq.s32.totalorder %s15, 0
    %p110 = por %p108, %p109
    %p111 = scmp.le.s32.totalorder 1, %s9
    %p112 = scmp.lt.s32.totalorder %s9, 3
    %p113 = pnand %p111, %p112
    %p114 = pneg %p113
    // Predicated region
    $region9: #{swin_deeplab_forward.18} parent=5 // pred_check
      _
    $region10: #{swin_deeplab_forward.18} parent=5 // pred_check_branch
      %116 = sbr.rel (%p113) target = $region12
    $region11: #{swin_deeplab_forward.18} parent=5 // pred_region
      %s117 = ssub.s32 %s9, 1
      // Predicated region
      $region13: #{swin_deeplab_forward.18} parent=11 // pred_check
        %p118 = pneg %p56
      $region14: #{swin_deeplab_forward.18} parent=11 // pred_check_branch
        %120 = sbr.rel (%p118) target = $region16
      $region15: #{swin_deeplab_forward.18} parent=11 // pred_region
        _
      $region16: #{swin_deeplab_forward.18} parent=11 // pred_fallthru
        _
      // Predicated region
      $region17: #{swin_deeplab_forward.18} parent=11 // pred_check
        %p121 = pneg %p77
      $region18: #{swin_deeplab_forward.18} parent=11 // pred_check_branch
        %123 = sbr.rel (%p121) target = $region20
      $region19: #{swin_deeplab_forward.18} parent=11 // pred_region
        _
      $region20: #{swin_deeplab_forward.18} parent=11 // pred_fallthru
        _
    $region12: #{swin_deeplab_forward.18} parent=5 // pred_fallthru
      _
    %p124 = scmp.lt.s32.totalorder %s9, 2
    // Predicated region
    $region21: #{swin_deeplab_forward.18} parent=5 // pred_check
      %p125 = pneg %p124
    $region22: #{swin_deeplab_forward.18} parent=5 // pred_check_branch
      %127 = sbr.rel (%p125) target = $region24
    $region23: #{swin_deeplab_forward.18} parent=5 // pred_region
      // Predicated region
      $region25: #{swin_deeplab_forward.18} parent=23 // pred_check
        %p128 = pneg %p29
      $region26: #{swin_deeplab_forward.18} parent=23 // pred_check_branch
        %130 = sbr.rel (%p128) target = $region28
      $region27: #{swin_deeplab_forward.18} parent=23 // pred_region
        %s131 = smul.u32 8, %s9
        %p132 = scmp.lt.s32.totalorder %s131, 15
        %s133 = scalar_select %p132, %s131, 15
        %s134 = smul.addr %s133, 8
        %s135 = scalar_lea.vmem %s0, %s134
        %s136 = smul.u32 8, %s9
      $region28: #{swin_deeplab_forward.18} parent=23 // pred_fallthru
        _
    $region24: #{swin_deeplab_forward.18} parent=5 // pred_fallthru
      _
    %p137 = scmp.le.s32.totalorder 1, %s9
    %p138 = scmp.lt.s32.totalorder %s9, 3
    %p139 = pnand %p137, %p138
    %p140 = pneg %p139
    // Predicated region
    $region29: #{swin_deeplab_forward.18} parent=5 // pred_check
      _
    $region30: #{swin_deeplab_forward.18} parent=5 // pred_check_branch
      %142 = sbr.rel (%p139) target = $region32
    $region31: #{swin_deeplab_forward.18} parent=5 // pred_region
      %s143 = ssub.s32 %s9, 1
      %s144 = smul.u32 8, %s14
      %p145 = scmp.lt.s32.totalorder %s144, 15
      %s146 = scalar_select %p145, %s144, 15
      %s147 = smul.addr %s146, 8
      %s148 = scalar_lea.vmem %s0, %s147
      %p149 = pneg %p35
      %p150 = pneg %p32
      %p151 = pneg %p56
      %p152 = pneg %p53
      %p153 = pneg %p77
      %p154 = pneg %p74
      %p155 = pneg %p103
      %p156 = pneg %p100
      %s157 = smul.u32 8, %s14
      %p158 = scmp.lt.s32.totalorder %s157, 15
      %s159 = scalar_select %p158, %s157, 15
      %s160 = smul.addr %s159, 8
      %s161 = scalar_lea.vmem %s3, %s160
      %s162 = smul.u32 8, %s14
      %p163 = scmp.lt.s32.totalorder %s162, 15
      %s164 = scalar_select %p163, %s162, 15
      %s165 = smul.addr %s164, 8
      %s166 = scalar_lea.vmem %s0, %s165
      %s167 = smul.u32 8, %s14
      %s168 = smul.u32 8, %s14
      %p169 = scmp.lt.s32.totalorder %s168, 15
      %s170 = scalar_select %p169, %s168, 15
      %s171 = smul.addr %s170, 8
      %s172 = scalar_lea.vmem %s3, %s171
      %s173 = smul.u32 8, %s14
      %v175 = vld [vmem:[%s166] sm:$0xff]
      %v176 = vld [vmem:[%s166 + $0x8] sm:$0xff]
      %v177 = vld [vmem:[%s166 + $0x10] sm:$0xff]
      %v178 = vld [vmem:[%s166 + $0x18] sm:$0xff]
      %v179 = vld [vmem:[%s166 + $0x20] sm:$0xff]
      %v180 = vld [vmem:[%s166 + $0x28] sm:$0xff]
      %v181 = vld [vmem:[%s166 + $0x30] sm:$0xff]
      %v182 = vld [vmem:[%s166 + $0x38] sm:$0xff]
      %v183 = vpack.c.bf16 %v176, %v175
      %v184 = vpack.c.bf16 %v178, %v177
      %v185 = vpack.c.bf16 %v180, %v179
      %v186 = vpack.c.bf16 %v182, %v181
      %v187 = vld [vmem:[%s1] sm:$0xff]
      %v188 = vld [vmem:[%s1 + $0x8] sm:$0xff]
      %v189 = vld [vmem:[%s1 + $0x10] sm:$0xff]
      %v190 = vld [vmem:[%s1 + $0x18] sm:$0xff]
      %v191 = vld [vmem:[%s1 + $0x20] sm:$0xff]
      %v192 = vld [vmem:[%s1 + $0x28] sm:$0xff]
      %v193 = vld [vmem:[%s1 + $0x30] sm:$0xff]
      %v194 = vld [vmem:[%s1 + $0x38] sm:$0xff]
      %v195 = vpack.c.bf16 %v188, %v187
      %v196 = vpack.c.bf16 %v190, %v189
      %v197 = vpack.c.bf16 %v192, %v191
      %v198 = vpack.c.bf16 %v194, %v193
      %v199 = vld [vmem:[%s2] sm:$0x1]
      %v201 = vperm.slane %v199, 0
      %vm203 = vcmask 523264
      %v205 = vsel %vm203, %v183, 0
      %v208 = vsel %vm203, %v184, 0
      %v211 = vsel %vm203, %v185, 0
      %v214 = vsel %vm203, %v186, 0
      %216 = vmatpush.bf16.msra.mxu0 0
      %217 = vmatpush.bf16.msra.mxu0 0
      %218 = vmatpush.bf16.msra.mxu0 0
      %219 = vmatpush.bf16.msra.mxu0 0
      %220 = vmatpush.bf16.msra.mxu0 %v198
      %221 = vmatpush.bf16.msra.mxu0 %v197
      %222 = vmatpush.bf16.msra.mxu0 %v196
      %223 = vmatpush.bf16.msra.mxu0 %v195
      %224 = vmatmul.bf16.gmra.mxu0 %v205
      %v225 = vpop.f32.mrf.mxu0
      %v226 = vadd.f32 %v201, %v225
      %v227 = vpop.f32.mrf.mxu0
      %v228 = vadd.f32 %v201, %v227
      %229 = vmatmul.bf16.gmra.mxu0 %v208
      %v230 = vpop.f32.mrf.mxu0
      %v231 = vadd.f32 %v201, %v230
      %v232 = vpop.f32.mrf.mxu0
      %v233 = vadd.f32 %v201, %v232
      %234 = vmatmul.bf16.gmra.mxu0 %v211
      %v235 = vpop.f32.mrf.mxu0
      %v236 = vadd.f32 %v201, %v235
      %v237 = vpop.f32.mrf.mxu0
      %v238 = vadd.f32 %v201, %v237
      %239 = vmatmul.bf16.gmra.mxu0 %v214
      %v240 = vpop.f32.mrf.mxu0
      %v241 = vadd.f32 %v201, %v240
      %v242 = vpop.f32.mrf.mxu0
      %v243 = vadd.f32 %v201, %v242
      %244 = vdwg.mxu0
      %v245 = vmax.f32 %v226, 0.0
      %v246 = vmax.f32 %v228, 0.0
      %v247 = vmax.f32 %v231, 0.0
      %v248 = vmax.f32 %v233, 0.0
      %v249 = vmax.f32 %v236, 0.0
      %v250 = vmax.f32 %v238, 0.0
      %v251 = vmax.f32 %v241, 0.0
      %v252 = vmax.f32 %v243, 0.0
      %vm253 = vcmask 261120
      %254 = vst.msk [vmem:[%s172] sm:$0xff] %vm253, %v245
      %255 = vst.msk [vmem:[%s172 + $0x8] sm:$0xff] %vm253, %v246
      %256 = vst.msk [vmem:[%s172 + $0x10] sm:$0xff] %vm253, %v247
      %257 = vst.msk [vmem:[%s172 + $0x18] sm:$0xff] %vm253, %v248
      %258 = vst.msk [vmem:[%s172 + $0x20] sm:$0xff] %vm253, %v249
      %259 = vst.msk [vmem:[%s172 + $0x28] sm:$0xff] %vm253, %v250
      %260 = vst.msk [vmem:[%s172 + $0x30] sm:$0xff] %vm253, %v251
      %261 = vst.msk [vmem:[%s172 + $0x38] sm:$0xff] %vm253, %v252
      %s262 = smul.u32 8, %s14
      %p263 = scmp.lt.s32.totalorder %s262, 15
      %s264 = scalar_select %p263, %s262, 15
      %s265 = smul.addr %s264, 8
      %s266 = scalar_lea.vmem %s3, %s265
      // Predicated region
      $region33: #{swin_deeplab_forward.18} parent=31 // pred_check
        %p267 = pneg %p100
      $region34: #{swin_deeplab_forward.18} parent=31 // pred_check_branch
        %269 = sbr.rel (%p267) target = $region36
      $region35: #{swin_deeplab_forward.18} parent=31 // pred_region
        %s270 = smul.u32 8, %s14
      $region36: #{swin_deeplab_forward.18} parent=31 // pred_fallthru
        _
    $region32: #{swin_deeplab_forward.18} parent=5 // pred_fallthru
      _
    %p271 = scmp.le.s32.totalorder 2, %s9
    // Predicated region
    $region37: #{swin_deeplab_forward.18} parent=5 // pred_check
      %p272 = pneg %p271
    $region38: #{swin_deeplab_forward.18} parent=5 // pred_check_branch
      %274 = sbr.rel (%p272) target = $region40
    $region39: #{swin_deeplab_forward.18} parent=5 // pred_region
      %s275 = ssub.s32 %s9, 2
      // Predicated region
      $region41: #{swin_deeplab_forward.18} parent=39 // pred_check
        %p276 = pneg %p106
      $region42: #{swin_deeplab_forward.18} parent=39 // pred_check_branch
        %278 = sbr.rel (%p276) target = $region44
      $region43: #{swin_deeplab_forward.18} parent=39 // pred_region
        %s279 = smul.u32 8, %s15
        %p280 = scmp.lt.s32.totalorder %s279, 15
        %s281 = scalar_select %p280, %s279, 15
        %s282 = smul.addr %s281, 8
        %s283 = scalar_lea.vmem %s3, %s282
      $region44: #{swin_deeplab_forward.18} parent=39 // pred_fallthru
        _
    $region40: #{swin_deeplab_forward.18} parent=5 // pred_fallthru
      _
  $region6: #{swin_deeplab_forward.18} parent=0 // loop_footer
    %s13 = sadd.s32 1, %s9
  $region7: #{swin_deeplab_forward.18} parent=0 // loop_footer_branch
    %8 = sbr.rel target = $region3
  $region8: #{swin_deeplab_forward.18} parent=0 // loop_exit
    _

// kernel: swin_deeplab_forward.19
$region0: #{swin_deeplab_forward.19}
  #allocation0 [shape = 'u32[]', space=smem, size = 0x4, offset = 0x4, fixed_abs, tag = 'smem constant byte address 0x4 - core index']
  #allocation1 [shape = 'u32[72,128]{1,0:T(1,128)}', space=vmem, size = 0x9000, scoped, tag = 'internal scratch']
  %s0 = inlined_call_operand.vmem [shape: f32[512,48], index: 0, kind: input, shape index: {}]
  %s1 = inlined_call_operand.vmem [shape: f32[48,16], index: 1, kind: input, shape index: {}]
  %s2 = inlined_call_operand.vmem [shape: f32[1,16], index: 2, kind: input, shape index: {}]
  %s3 = inlined_call_operand.vmem [shape: f32[16,4], index: 3, kind: input, shape index: {}]
  %s4 = inlined_call_operand.vmem [shape: f32[1,4], index: 4, kind: input, shape index: {}]
  %s5 = inlined_call_operand.vmem [shape: f32[512,4], index: 5, kind: output, shape index: {}]
  %s6 = sld [smem:[#allocation0]]
  $region53: #{swin_deeplab_forward.19} parent=0
    _
  %s8 = ssub.s32 1, %s6
  %s9 = scalar_select 0, %s8, %s6
  loop: start=0, step=1, limit=6
  $region2: #{swin_deeplab_forward.19} parent=0 // loop_pre_header
    _
  $region3: #{swin_deeplab_forward.19} parent=0 // loop_header
    %s11 = sphi 0, %s15
    %p12 = scmp.ge.s32.totalorder %s11, 6
    %s21 = sphi 0, %s23
    %s24 = sphi 0, %s21
    %s25 = sphi 0, %s24
    %s41 = sphi 0, %s25
    %s45 = sphi 0, %s45
    %s47 = sphi 0, %s45
    %s48 = sphi 0, %s47
    %s62 = sphi 0, %s48
    %s66 = sphi 0, %s66
    %s68 = sphi 0, %s66
    %s69 = sphi 0, %s68
    %s83 = sphi 0, %s69
    %s87 = sphi 0, %s87
    %s89 = sphi 0, %s87
    %s90 = sphi 0, %s89
    %s104 = sphi 0, %s90
    %s108 = sphi 0, %s108
    %s110 = sphi 0, %s108
    %s111 = sphi 0, %s110
    %s125 = sphi 0, %s111
    %s131 = sphi 0, %s133
    %s134 = sphi 0, %s131
    %s135 = sphi 0, %s134
    %s151 = sphi 0, %s135
  $region4: #{swin_deeplab_forward.19} parent=0 // loop_header_branch
    %14 = sbr.rel (%p12) target = $region8
  $region5: #{swin_deeplab_forward.19} parent=0 // loop_body
    %s16 = ssub.s32 %s11, 1
    %s17 = ssub.s32 %s11, 2
    %s18 = sadd.s32 %s11, 1
    %s19 = ssub.s32 %s11, %s18
    %p20 = scmp.eq.s32.totalorder %s19, 0
    %s22 = sadd.s32 %s21, 1
    %s23 = scalar_select %p20, %s21, %s22
    %p26 = pneg %p20
    %p27 = scmp.eq.s32.totalorder %s11, 3
    %p28 = por %p26, %p27
    %p29 = scmp.ne.s32.totalorder %s21, %s24
    %p30 = scmp.eq.s32.totalorder %s11, 0
    %p31 = por %p29, %p30
    %p32 = scmp.ne.s32.totalorder %s21, %s24
    %p33 = scmp.eq.s32.totalorder %s16, 3
    %p34 = por %p32, %p33
    %p35 = scmp.ne.s32.totalorder %s24, %s25
    %p36 = scmp.eq.s32.totalorder %s16, 0
    %p37 = por %p35, %p36
    %p38 = scmp.ne.s32.totalorder %s24, %s25
    %p39 = scmp.eq.s32.totalorder %s17, 3
    %p40 = por %p38, %p39
    %p42 = scmp.ne.s32.totalorder %s25, %s41
    %p43 = scmp.eq.s32.totalorder %s17, 0
    %p44 = por %p42, %p43
    %s46 = sadd.s32 %s45, 1
    %p49 = scmp.eq.s32.totalorder %s11, 3
    %p50 = scmp.ne.s32.totalorder %s45, %s47
    %p51 = scmp.eq.s32.totalorder %s11, 0
    %p52 = por %p50, %p51
    %p53 = scmp.ne.s32.totalorder %s45, %s47
    %p54 = scmp.eq.s32.totalorder %s16, 3
    %p55 = por %p53, %p54
    %p56 = scmp.ne.s32.totalorder %s47, %s48
    %p57 = scmp.eq.s32.totalorder %s16, 0
    %p58 = por %p56, %p57
    %p59 = scmp.ne.s32.totalorder %s47, %s48
    %p60 = scmp.eq.s32.totalorder %s17, 3
    %p61 = por %p59, %p60
    %p63 = scmp.ne.s32.totalorder %s48, %s62
    %p64 = scmp.eq.s32.totalorder %s17, 0
    %p65 = por %p63, %p64
    %s67 = sadd.s32 %s66, 1
    %p70 = scmp.eq.s32.totalorder %s11, 3
    %p71 = scmp.ne.s32.totalorder %s66, %s68
    %p72 = scmp.eq.s32.totalorder %s11, 0
    %p73 = por %p71, %p72
    %p74 = scmp.ne.s32.totalorder %s66, %s68
    %p75 = scmp.eq.s32.totalorder %s16, 3
    %p76 = por %p74, %p75
    %p77 = scmp.ne.s32.totalorder %s68, %s69
    %p78 = scmp.eq.s32.totalorder %s16, 0
    %p79 = por %p77, %p78
    %p80 = scmp.ne.s32.totalorder %s68, %s69
    %p81 = scmp.eq.s32.totalorder %s17, 3
    %p82 = por %p80, %p81
    %p84 = scmp.ne.s32.totalorder %s69, %s83
    %p85 = scmp.eq.s32.totalorder %s17, 0
    %p86 = por %p84, %p85
    %s88 = sadd.s32 %s87, 1
    %p91 = scmp.eq.s32.totalorder %s11, 3
    %p92 = scmp.ne.s32.totalorder %s87, %s89
    %p93 = scmp.eq.s32.totalorder %s11, 0
    %p94 = por %p92, %p93
    %p95 = scmp.ne.s32.totalorder %s87, %s89
    %p96 = scmp.eq.s32.totalorder %s16, 3
    %p97 = por %p95, %p96
    %p98 = scmp.ne.s32.totalorder %s89, %s90
    %p99 = scmp.eq.s32.totalorder %s16, 0
    %p100 = por %p98, %p99
    %p101 = scmp.ne.s32.totalorder %s89, %s90
    %p102 = scmp.eq.s32.totalorder %s17, 3
    %p103 = por %p101, %p102
    %p105 = scmp.ne.s32.totalorder %s90, %s104
    %p106 = scmp.eq.s32.totalorder %s17, 0
    %p107 = por %p105, %p106
    %s109 = sadd.s32 %s108, 1
    %p112 = scmp.eq.s32.totalorder %s11, 3
    %p113 = scmp.ne.s32.totalorder %s108, %s110
    %p114 = scmp.eq.s32.totalorder %s11, 0
    %p115 = por %p113, %p114
    %p116 = scmp.ne.s32.totalorder %s108, %s110
    %p117 = scmp.eq.s32.totalorder %s16, 3
    %p118 = por %p116, %p117
    %p119 = scmp.ne.s32.totalorder %s110, %s111
    %p120 = scmp.eq.s32.totalorder %s16, 0
    %p121 = por %p119, %p120
    %p122 = scmp.ne.s32.totalorder %s110, %s111
    %p123 = scmp.eq.s32.totalorder %s17, 3
    %p124 = por %p122, %p123
    %p126 = scmp.ne.s32.totalorder %s111, %s125
    %p127 = scmp.eq.s32.totalorder %s17, 0
    %p128 = por %p126, %p127
    %s129 = ssub.s32 %s11, %s18
    %p130 = scmp.eq.s32.totalorder %s129, 0
    %s132 = sadd.s32 %s131, 1
    %s133 = scalar_select %p130, %s131, %s132
    %p136 = pneg %p130
    %p137 = scmp.eq.s32.totalorder %s11, 3
    %p138 = por %p136, %p137
    %p139 = scmp.ne.s32.totalorder %s131, %s134
    %p140 = scmp.eq.s32.totalorder %s11, 0
    %p141 = por %p139, %p140
    %p142 = scmp.ne.s32.totalorder %s131, %s134
    %p143 = scmp.eq.s32.totalorder %s16, 3
    %p144 = por %p142, %p143
    %p145 = scmp.ne.s32.totalorder %s134, %s135
    %p146 = scmp.eq.s32.totalorder %s16, 0
    %p147 = por %p145, %p146
    %p148 = scmp.ne.s32.totalorder %s134, %s135
    %p149 = scmp.eq.s32.totalorder %s17, 3
    %p150 = por %p148, %p149
    %p152 = scmp.ne.s32.totalorder %s135, %s151
    %p153 = scmp.eq.s32.totalorder %s17, 0
    %p154 = por %p152, %p153
    %p155 = scmp.le.s32.totalorder 1, %s11
    %p156 = scmp.lt.s32.totalorder %s11, 5
    %p157 = pnand %p155, %p156
    %p158 = pneg %p157
    // Predicated region
    $region9: #{swin_deeplab_forward.19} parent=5 // pred_check
      _
    $region10: #{swin_deeplab_forward.19} parent=5 // pred_check_branch
      %160 = sbr.rel (%p157) target = $region12
    $region11: #{swin_deeplab_forward.19} parent=5 // pred_region
      %s161 = ssub.s32 %s11, 1
      // Predicated region
      $region13: #{swin_deeplab_forward.19} parent=11 // pred_check
        %p162 = pneg %p58
      $region14: #{swin_deeplab_forward.19} parent=11 // pred_check_branch
        %164 = sbr.rel (%p162) target = $region16
      $region15: #{swin_deeplab_forward.19} parent=11 // pred_region
        _
      $region16: #{swin_deeplab_forward.19} parent=11 // pred_fallthru
        _
      // Predicated region
      $region17: #{swin_deeplab_forward.19} parent=11 // pred_check
        %p165 = pneg %p79
      $region18: #{swin_deeplab_forward.19} parent=11 // pred_check_branch
        %167 = sbr.rel (%p165) target = $region20
      $region19: #{swin_deeplab_forward.19} parent=11 // pred_region
        _
      $region20: #{swin_deeplab_forward.19} parent=11 // pred_fallthru
        _
      // Predicated region
      $region21: #{swin_deeplab_forward.19} parent=11 // pred_check
        %p168 = pneg %p100
      $region22: #{swin_deeplab_forward.19} parent=11 // pred_check_branch
        %170 = sbr.rel (%p168) target = $region24
      $region23: #{swin_deeplab_forward.19} parent=11 // pred_region
        _
      $region24: #{swin_deeplab_forward.19} parent=11 // pred_fallthru
        _
      // Predicated region
      $region25: #{swin_deeplab_forward.19} parent=11 // pred_check
        %p171 = pneg %p121
      $region26: #{swin_deeplab_forward.19} parent=11 // pred_check_branch
        %173 = sbr.rel (%p171) target = $region28
      $region27: #{swin_deeplab_forward.19} parent=11 // pred_region
        _
      $region28: #{swin_deeplab_forward.19} parent=11 // pred_fallthru
        _
    $region12: #{swin_deeplab_forward.19} parent=5 // pred_fallthru
      _
    %p174 = scmp.lt.s32.totalorder %s11, 4
    // Predicated region
    $region29: #{swin_deeplab_forward.19} parent=5 // pred_check
      %p175 = pneg %p174
    $region30: #{swin_deeplab_forward.19} parent=5 // pred_check_branch
      %177 = sbr.rel (%p175) target = $region32
    $region31: #{swin_deeplab_forward.19} parent=5 // pred_region
      // Predicated region
      $region33: #{swin_deeplab_forward.19} parent=31 // pred_check
        %p178 = pneg %p31
      $region34: #{swin_deeplab_forward.19} parent=31 // pred_check_branch
        %180 = sbr.rel (%p178) target = $region36
      $region35: #{swin_deeplab_forward.19} parent=31 // pred_region
        %s181 = smul.u32 16, %s11
        %p182 = scmp.lt.s32.totalorder %s181, 63
        %s183 = scalar_select %p182, %s181, 63
        %s184 = smul.addr %s183, 8
        %s185 = scalar_lea.vmem %s0, %s184
        %s186 = smul.u32 16, %s11
      $region36: #{swin_deeplab_forward.19} parent=31 // pred_fallthru
        _
    $region32: #{swin_deeplab_forward.19} parent=5 // pred_fallthru
      _
    %p187 = scmp.le.s32.totalorder 1, %s11
    %p188 = scmp.lt.s32.totalorder %s11, 5
    %p189 = pnand %p187, %p188
    %p190 = pneg %p189
    // Predicated region
    $region37: #{swin_deeplab_forward.19} parent=5 // pred_check
      _
    $region38: #{swin_deeplab_forward.19} parent=5 // pred_check_branch
      %192 = sbr.rel (%p189) target = $region40
    $region39: #{swin_deeplab_forward.19} parent=5 // pred_region
      %s193 = ssub.s32 %s11, 1
      %s194 = smul.u32 16, %s16
      %p195 = scmp.lt.s32.totalorder %s194, 63
      %s196 = scalar_select %p195, %s194, 63
      %s197 = smul.addr %s196, 8
      %s198 = scalar_lea.vmem %s0, %s197
      %p199 = pneg %p37
      %p200 = pneg %p34
      %p201 = pneg %p58
      %p202 = pneg %p55
      %p203 = pneg %p79
      %p204 = pneg %p76
      %p205 = pneg %p100
      %p206 = pneg %p97
      %p207 = pneg %p121
      %p208 = pneg %p118
      %p209 = pneg %p147
      %p210 = pneg %p144
      %s211 = smul.u32 16, %s16
      %p212 = scmp.lt.s32.totalorder %s211, 63
      %s213 = scalar_select %p212, %s211, 63
      %s214 = smul.addr %s213, 8
      %s215 = scalar_lea.vmem %s5, %s214
      %s216 = smul.u32 16, %s16
      %p217 = scmp.lt.s32.totalorder %s216, 63
      %s218 = scalar_select %p217, %s216, 63
      %s219 = smul.addr %s218, 8
      %s220 = scalar_lea.vmem %s0, %s219
      %s221 = smul.u32 16, %s16
      %s222 = smul.u32 16, %s16
      %p223 = scmp.lt.s32.totalorder %s222, 63
      %s224 = scalar_select %p223, %s222, 63
      %s225 = smul.addr %s224, 8
      %s226 = scalar_lea.vmem %s5, %s225
      %s227 = smul.u32 16, %s16
      %v229 = vld [vmem:[%s220] sm:$0xff]
      %v230 = vld [vmem:[%s220 + $0x8] sm:$0xff]
      %v231 = vld [vmem:[%s220 + $0x10] sm:$0xff]
      %v232 = vld [vmem:[%s220 + $0x18] sm:$0xff]
      %v233 = vld [vmem:[%s220 + $0x20] sm:$0xff]
      %v234 = vld [vmem:[%s220 + $0x28] sm:$0xff]
      %v235 = vld [vmem:[%s220 + $0x30] sm:$0xff]
      %v236 = vld [vmem:[%s220 + $0x38] sm:$0xff]
      %v237 = vld [vmem:[%s220 + $0x40] sm:$0xff]
      %v238 = vld [vmem:[%s220 + $0x48] sm:$0xff]
      %v239 = vld [vmem:[%s220 + $0x50] sm:$0xff]
      %v240 = vld [vmem:[%s220 + $0x58] sm:$0xff]
      %v241 = vld [vmem:[%s220 + $0x60] sm:$0xff]
      %v242 = vld [vmem:[%s220 + $0x68] sm:$0xff]
      %v243 = vld [vmem:[%s220 + $0x70] sm:$0xff]
      %v244 = vld [vmem:[%s220 + $0x78] sm:$0xff]
      %v245 = vpack.c.bf16 %v230, %v229
      %v246 = vpack.c.bf16 %v232, %v231
      %v247 = vpack.c.bf16 %v234, %v233
      %v248 = vpack.c.bf16 %v236, %v235
      %v249 = vpack.c.bf16 %v238, %v237
      %v250 = vpack.c.bf16 %v240, %v239
      %v251 = vpack.c.bf16 %v242, %v241
      %v252 = vpack.c.bf16 %v244, %v243
      %v253 = vld [vmem:[%s1] sm:$0xff]
      %v254 = vld [vmem:[%s1 + $0x8] sm:$0xff]
      %v255 = vld [vmem:[%s1 + $0x10] sm:$0xff]
      %v256 = vld [vmem:[%s1 + $0x18] sm:$0xff]
      %v257 = vld [vmem:[%s1 + $0x20] sm:$0xff]
      %v258 = vld [vmem:[%s1 + $0x28] sm:$0xff]
      %v259 = vpack.c.bf16 %v254, %v253
      %v260 = vpack.c.bf16 %v256, %v255
      %v261 = vpack.c.bf16 %v258, %v257
      %v262 = vld [vmem:[%s2] sm:$0x1]
      %v264 = vperm.slane %v262, 0
      %vm266 = vcmask 392192
      %v268 = vsel %vm266, %v245, 0
      %v271 = vsel %vm266, %v246, 0
      %v274 = vsel %vm266, %v247, 0
      %v277 = vsel %vm266, %v248, 0
      %v280 = vsel %vm266, %v249, 0
      %v283 = vsel %vm266, %v250, 0
      %v286 = vsel %vm266, %v251, 0
      %v289 = vsel %vm266, %v252, 0
      %291 = vmatpush.bf16.msra.mxu0 0
      %292 = vmatpush.bf16.msra.mxu0 0
      %293 = vmatpush.bf16.msra.mxu0 0
      %294 = vmatpush.bf16.msra.mxu0 0
      %295 = vmatpush.bf16.msra.mxu0 0
      %296 = vmatpush.bf16.msra.mxu0 %v261
      %297 = vmatpush.bf16.msra.mxu0 %v260
      %298 = vmatpush.bf16.msra.mxu0 %v259
      %299 = vmatmul.bf16.gmra.mxu0 %v268
      %v300 = vpop.f32.mrf.mxu0
      %v301 = vadd.f32 %v264, %v300
      %v302 = vpop.f32.mrf.mxu0
      %v303 = vadd.f32 %v264, %v302
      %304 = vmatmul.bf16.gmra.mxu0 %v271
      %v305 = vpop.f32.mrf.mxu0
      %v306 = vadd.f32 %v264, %v305
      %v307 = vpop.f32.mrf.mxu0
      %v308 = vadd.f32 %v264, %v307
      %309 = vmatmul.bf16.gmra.mxu0 %v274
      %v310 = vpop.f32.mrf.mxu0
      %v311 = vadd.f32 %v264, %v310
      %v312 = vpop.f32.mrf.mxu0
      %v313 = vadd.f32 %v264, %v312
      %314 = vmatmul.bf16.gmra.mxu0 %v277
      %v315 = vpop.f32.mrf.mxu0
      %v316 = vadd.f32 %v264, %v315
      %v317 = vpop.f32.mrf.mxu0
      %v318 = vadd.f32 %v264, %v317
      %319 = vmatmul.bf16.gmra.mxu0 %v280
      %v320 = vpop.f32.mrf.mxu0
      %v321 = vadd.f32 %v264, %v320
      %v322 = vpop.f32.mrf.mxu0
      %v323 = vadd.f32 %v264, %v322
      %324 = vmatmul.bf16.gmra.mxu0 %v283
      %v325 = vpop.f32.mrf.mxu0
      %v326 = vadd.f32 %v264, %v325
      %v327 = vpop.f32.mrf.mxu0
      %v328 = vadd.f32 %v264, %v327
      %329 = vmatmul.bf16.gmra.mxu0 %v286
      %v330 = vpop.f32.mrf.mxu0
      %v331 = vadd.f32 %v264, %v330
      %v332 = vpop.f32.mrf.mxu0
      %v333 = vadd.f32 %v264, %v332
      %334 = vmatmul.bf16.gmra.mxu0 %v289
      %v335 = vpop.f32.mrf.mxu0
      %v336 = vadd.f32 %v264, %v335
      %v337 = vpop.f32.mrf.mxu0
      %v338 = vadd.f32 %v264, %v337
      %339 = vdwg.mxu0
      %v340 = vmax.f32 %v301, 0.0
      %v341 = vmax.f32 %v303, 0.0
      %v342 = vmax.f32 %v306, 0.0
      %v343 = vmax.f32 %v308, 0.0
      %v344 = vmax.f32 %v311, 0.0
      %v345 = vmax.f32 %v313, 0.0
      %v346 = vmax.f32 %v316, 0.0
      %v347 = vmax.f32 %v318, 0.0
      %v348 = vmax.f32 %v321, 0.0
      %v349 = vmax.f32 %v323, 0.0
      %v350 = vmax.f32 %v326, 0.0
      %v351 = vmax.f32 %v328, 0.0
      %v352 = vmax.f32 %v331, 0.0
      %v353 = vmax.f32 %v333, 0.0
      %v354 = vmax.f32 %v336, 0.0
      %v355 = vmax.f32 %v338, 0.0
      %v356 = vpack.c.bf16 %v341, %v340
      %v357 = vpack.c.bf16 %v343, %v342
      %v358 = vpack.c.bf16 %v345, %v344
      %v359 = vpack.c.bf16 %v347, %v346
      %v360 = vpack.c.bf16 %v349, %v348
      %v361 = vpack.c.bf16 %v351, %v350
      %v362 = vpack.c.bf16 %v353, %v352
      %v363 = vpack.c.bf16 %v355, %v354
      %v364 = vld [vmem:[%s3] sm:$0xff]
      %v365 = vld [vmem:[%s3 + $0x8] sm:$0xff]
      %v366 = vpack.c.bf16 %v365, %v364
      %v367 = vld [vmem:[%s4] sm:$0x1]
      %v369 = vperm.slane %v367, 0
      %vm371 = vcmask 130048
      %v373 = vsel %vm371, %v356, 0
      %v376 = vsel %vm371, %v357, 0
      %v379 = vsel %vm371, %v358, 0
      %v382 = vsel %vm371, %v359, 0
      %v385 = vsel %vm371, %v360, 0
      %v388 = vsel %vm371, %v361, 0
      %v391 = vsel %vm371, %v362, 0
      %v394 = vsel %vm371, %v363, 0
      %396 = vmatpush.bf16.msra.mxu0 0
      %397 = vmatpush.bf16.msra.mxu0 0
      %398 = vmatpush.bf16.msra.mxu0 0
      %399 = vmatpush.bf16.msra.mxu0 0
      %400 = vmatpush.bf16.msra.mxu0 0
      %401 = vmatpush.bf16.msra.mxu0 0
      %402 = vmatpush.bf16.msra.mxu0 0
      %403 = vmatpush.bf16.msra.mxu0 %v366
      %404 = vmatmul.bf16.gmra.mxu0 %v373
      %v405 = vpop.f32.mrf.mxu0
      %v406 = vadd.f32 %v369, %v405
      %v407 = vpop.f32.mrf.mxu0
      %v408 = vadd.f32 %v369, %v407
      %409 = vmatmul.bf16.gmra.mxu0 %v376
      %v410 = vpop.f32.mrf.mxu0
      %v411 = vadd.f32 %v369, %v410
      %v412 = vpop.f32.mrf.mxu0
      %v413 = vadd.f32 %v369, %v412
      %414 = vmatmul.bf16.gmra.mxu0 %v379
      %v415 = vpop.f32.mrf.mxu0
      %v416 = vadd.f32 %v369, %v415
      %v417 = vpop.f32.mrf.mxu0
      %v418 = vadd.f32 %v369, %v417
      %419 = vmatmul.bf16.gmra.mxu0 %v382
      %v420 = vpop.f32.mrf.mxu0
      %v421 = vadd.f32 %v369, %v420
      %v422 = vpop.f32.mrf.mxu0
      %v423 = vadd.f32 %v369, %v422
      %424 = vmatmul.bf16.gmra.mxu0 %v385
      %v425 = vpop.f32.mrf.mxu0
      %v426 = vadd.f32 %v369, %v425
      %v427 = vpop.f32.mrf.mxu0
      %v428 = vadd.f32 %v369, %v427
      %429 = vmatmul.bf16.gmra.mxu0 %v388
      %v430 = vpop.f32.mrf.mxu0
      %v431 = vadd.f32 %v369, %v430
      %v432 = vpop.f32.mrf.mxu0
      %v433 = vadd.f32 %v369, %v432
      %434 = vmatmul.bf16.gmra.mxu0 %v391
      %v435 = vpop.f32.mrf.mxu0
      %v436 = vadd.f32 %v369, %v435
      %v437 = vpop.f32.mrf.mxu0
      %v438 = vadd.f32 %v369, %v437
      %439 = vmatmul.bf16.gmra.mxu0 %v394
      %v440 = vpop.f32.mrf.mxu0
      %v441 = vadd.f32 %v369, %v440
      %v442 = vpop.f32.mrf.mxu0
      %v443 = vadd.f32 %v369, %v442
      %444 = vdwg.mxu0
      %vm445 = vcmask 31744
      %446 = vst.msk [vmem:[%s226] sm:$0xff] %vm445, %v406
      %447 = vst.msk [vmem:[%s226 + $0x8] sm:$0xff] %vm445, %v408
      %448 = vst.msk [vmem:[%s226 + $0x10] sm:$0xff] %vm445, %v411
      %449 = vst.msk [vmem:[%s226 + $0x18] sm:$0xff] %vm445, %v413
      %450 = vst.msk [vmem:[%s226 + $0x20] sm:$0xff] %vm445, %v416
      %451 = vst.msk [vmem:[%s226 + $0x28] sm:$0xff] %vm445, %v418
      %452 = vst.msk [vmem:[%s226 + $0x30] sm:$0xff] %vm445, %v421
      %453 = vst.msk [vmem:[%s226 + $0x38] sm:$0xff] %vm445, %v423
      %454 = vst.msk [vmem:[%s226 + $0x40] sm:$0xff] %vm445, %v426
      %455 = vst.msk [vmem:[%s226 + $0x48] sm:$0xff] %vm445, %v428
      %456 = vst.msk [vmem:[%s226 + $0x50] sm:$0xff] %vm445, %v431
      %457 = vst.msk [vmem:[%s226 + $0x58] sm:$0xff] %vm445, %v433
      %458 = vst.msk [vmem:[%s226 + $0x60] sm:$0xff] %vm445, %v436
      %459 = vst.msk [vmem:[%s226 + $0x68] sm:$0xff] %vm445, %v438
      %460 = vst.msk [vmem:[%s226 + $0x70] sm:$0xff] %vm445, %v441
      %461 = vst.msk [vmem:[%s226 + $0x78] sm:$0xff] %vm445, %v443
      %s462 = smul.u32 16, %s16
      %p463 = scmp.lt.s32.totalorder %s462, 63
      %s464 = scalar_select %p463, %s462, 63
      %s465 = smul.addr %s464, 8
      %s466 = scalar_lea.vmem %s5, %s465
      // Predicated region
      $region41: #{swin_deeplab_forward.19} parent=39 // pred_check
        %p467 = pneg %p144
      $region42: #{swin_deeplab_forward.19} parent=39 // pred_check_branch
        %469 = sbr.rel (%p467) target = $region44
      $region43: #{swin_deeplab_forward.19} parent=39 // pred_region
        %s470 = smul.u32 16, %s16
      $region44: #{swin_deeplab_forward.19} parent=39 // pred_fallthru
        _
    $region40: #{swin_deeplab_forward.19} parent=5 // pred_fallthru
      _
    %p471 = scmp.le.s32.totalorder 2, %s11
    // Predicated region
    $region45: #{swin_deeplab_forward.19} parent=5 // pred_check
      %p472 = pneg %p471
    $region46: #{swin_deeplab_forward.19} parent=5 // pred_check_branch
      %474 = sbr.rel (%p472) target = $region48
    $region47: #{swin_deeplab_forward.19} parent=5 // pred_region
      %s475 = ssub.s32 %s11, 2
      // Predicated region
      $region49: #{swin_deeplab_forward.19} parent=47 // pred_check
        %p476 = pneg %p150
      $region50: #{swin_deeplab_forward.19} parent=47 // pred_check_branch
        %478 = sbr.rel (%p476) target = $region52
      $region51: #{swin_deeplab_forward.19} parent=47 // pred_region
        %s479 = smul.u32 16, %s17
        %p480 = scmp.lt.s32.totalorder %s479, 63
        %s481 = scalar_select %p480, %s479, 63
        %s482 = smul.addr %s481, 8
        %s483 = scalar_lea.vmem %s5, %s482
      $region52: #{swin_deeplab_forward.19} parent=47 // pred_fallthru
        _
    $region48: #{swin_deeplab_forward.19} parent=5 // pred_fallthru
      _
  $region6: #{swin_deeplab_forward.19} parent=0 // loop_footer
    %s15 = sadd.s32 1, %s11
  $region7: #{swin_deeplab_forward.19} parent=0 // loop_footer_branch
    %10 = sbr.rel target = $region3
  $region8: #{swin_deeplab_forward.19} parent=0 // loop_exit
    _

</llo_original>
